<compile_context>
chip_gen: v6e
topology: v6e:2x2x1
jax: 0.10.0
libtpu: 0.0.40
codegen_flags: <defaults>
</compile_context>

<pallas_src>
import math

import jax
import jax.numpy as jnp
from jax import lax
from jax.experimental import pallas as pl
from jax.experimental.pallas import tpu as pltpu

DIM = 32                 # channels == transformer embed dim
FFN_DIM = 64
NUM_HEADS = 4
HEAD_DIM = DIM // NUM_HEADS
NLAYERS = 2
H = 8
W = 8                    # power of two (used for the bitwise column-index trick)
S = H * W
LN_EPS = 1e-5
BN_EPS = 1e-5
ATTN_SCALE = 1.0 / math.sqrt(HEAD_DIM)

# ---- vector-bank row layout (all rows are (DIM,) per-channel vectors) ----
R_DW_B, R_BN1_S, R_BN1_B, R_PW_B, R_BN2_S, R_BN2_B = range(6)
R_LAYER0 = 6
RO_LN1_W, RO_LN1_B, RO_BQ, RO_BK, RO_B_ATTN, RO_LN2_W, RO_LN2_B, RO_B2 = range(8)
ROWS_PER_LAYER = 8
NVEC = R_LAYER0 + NLAYERS * ROWS_PER_LAYER          # 22


# ----------------------------- shared math helpers ----------------------------

def _gelu(x):
    # exact (erf-based) GELU, matching nn.GELU() default
    return 0.5 * x * (1.0 + lax.erf(x * (1.0 / math.sqrt(2.0))))


def _layer_norm(x, w, b):
    mu = jnp.mean(x, axis=-1, keepdims=True)
    xc = x - mu
    var = jnp.mean(xc * xc, axis=-1, keepdims=True)
    return xc * lax.rsqrt(var + LN_EPS) * w + b


def _shift_flat(x, off):
    """y[s] = x[(s + off) mod S]; wrapped rows are masked out by the caller.

    Written as slice+concat (unambiguous semantics); pltpu.roll is an
    alternative that maps to the XLU, but at (64, 32) this is in the noise.
    """
    if off == 0:
        return x
    return jnp.concatenate([x[off:], x[:off]], axis=0)


# ------------------------------ fused Pallas kernel ----------------------------

def mobilevit_kernel(x_ref, dww_ref, pww_ref, wq_ref, wk_ref, wvo_ref,
                     w1_ref, w2_ref, vecs_ref, b1_ref, o_ref):
    """One batch element: local_rep -> 2 transformer layers -> residual add."""
    x = x_ref[0]                      # (S, DIM) input, NHWC flattened
    vecs = vecs_ref[...]              # (NVEC, DIM) all per-channel vectors
    dww = dww_ref[...]                # (9, DIM)   depthwise taps, row = kh*3+kw
    b1 = b1_ref[...]                  # (NLAYERS, FFN_DIM)

    def vrow(i):                      # (1, DIM) view of vector-bank row i
        return vecs[i:i + 1, :]

    # ---- 3x3 depthwise conv (padding=1) + BN1, on the flattened (S, C) layout ----
    s_idx = lax.broadcasted_iota(jnp.int32, (S, 1), 0)
    w_idx = jnp.bitwise_and(s_idx, W - 1)             # s % W  (W is a power of two)

    acc = x * dww[4:5, :]                             # center tap (kh=1, kw=1)
    for kh in range(3):
        for kw in range(3):
            if kh == 1 and kw == 1:
                continue
            dh, dw = kh - 1, kw - 1
            shifted = _shift_flat(x, dh * W + dw)
            valid = ((s_idx >= (-dh) * W) & (s_idx < (H - dh) * W) &   # row in range
                     (w_idx >= -dw) & (w_idx < W - dw))                # col in range
            tap = kh * 3 + kw
            acc = acc + jnp.where(valid, shifted, 0.0) * dww[tap:tap + 1, :]
    y = acc + vrow(R_DW_B)
    y = y * vrow(R_BN1_S) + vrow(R_BN1_B)                              # BN1 (eval)

    # ---- 1x1 conv (channel matmul) + BN2 + GELU ----
    y = jnp.dot(y, pww_ref[...], preferred_element_type=jnp.float32) + vrow(R_PW_B)
    x_local = _gelu(y * vrow(R_BN2_S) + vrow(R_BN2_B))                 # (S, DIM)

    # ---- 2 x pre-norm transformer encoder layers ----
    c_idx = lax.broadcasted_iota(jnp.int32, (1, DIM), 1)               # lane index
    xt = x_local
    for l in range(NLAYERS):
        base = R_LAYER0 + l * ROWS_PER_LAYER

        # multi-head self attention
        xn = _layer_norm(xt, vrow(base + RO_LN1_W), vrow(base + RO_LN1_B))
        q = jnp.dot(xn, wq_ref[l], preferred_element_type=jnp.float32) + vrow(base + RO_BQ)
        k = jnp.dot(xn, wk_ref[l], preferred_element_type=jnp.float32) + vrow(base + RO_BK)

        attn = jnp.zeros((S, DIM), jnp.float32)
        for h in range(NUM_HEADS):
            # head selection as a lane mask (avoids width-8 lane-slice relayouts):
            # (q*mask_h) @ k^T == q_h @ k_h^T
            hm = (c_idx >= h * HEAD_DIM) & (c_idx < (h + 1) * HEAD_DIM)
            qm = jnp.where(hm, q, 0.0)
            s = lax.dot_general(qm, k, (((1,), (1,)), ((), ())),
                                preferred_element_type=jnp.float32) * ATTN_SCALE
            m = jnp.max(s, axis=-1, keepdims=True)
            p = jnp.exp(s - m)
            p = p * pl.reciprocal(jnp.sum(p, axis=-1, keepdims=True), approx=True)
            # V and the output projection are folded host-side: wvo_h = Wv_h @ Wo_h
            vproj = jnp.dot(xn, wvo_ref[l * NUM_HEADS + h],
                            preferred_element_type=jnp.float32)
            attn = attn + jnp.dot(p, vproj, preferred_element_type=jnp.float32)
        xt = xt + attn + vrow(base + RO_B_ATTN)        # combined bias: bv @ Wo + bo

        # feed-forward
        xn2 = _layer_norm(xt, vrow(base + RO_LN2_W), vrow(base + RO_LN2_B))
        hdn = _gelu(jnp.dot(xn2, w1_ref[l], preferred_element_type=jnp.float32)
                    + b1[l:l + 1, :])
        xt = xt + jnp.dot(hdn, w2_ref[l], preferred_element_type=jnp.float32) \
                + vrow(base + RO_B2)

    o_ref[0] = x_local + xt                            # x + x_trans


# ----------------------------------- wrapper -----------------------------------

def _full_spec(shape):
    nd = len(shape)
    return pl.BlockSpec(shape, lambda i, _nd=nd: (0,) * _nd)


def mobilevit_block(x_nchw, packed):
    """Forward pass matching MobileViTBlock.forward (inference semantics)."""
    b = x_nchw.shape[0]
    x_seq = jnp.transpose(x_nchw, (0, 2, 3, 1)).reshape(b, S, DIM).astype(jnp.float32)

    weights = (packed['dww'], packed['pww'], packed['wq'], packed['wk'],
               packed['wvo'], packed['w1'], packed['w2'], packed['vecs'], packed['b1'])

    # advisory cost estimate (keeps XLA from over-serializing around the call)
    mm = lambda m, k, n: 2 * m * k * n
    per_layer = (2 * mm(S, DIM, DIM)
                 + NUM_HEADS * (mm(S, DIM, DIM) + mm(S, DIM, S) + mm(S, S, DIM))
                 + mm(S, DIM, FFN_DIM) + mm(S, FFN_DIM, DIM))
    flops = b * (9 * 2 * S * DIM + mm(S, DIM, DIM) + NLAYERS * per_layer)
    transcendentals = b * (NLAYERS * NUM_HEADS * S * (S + 1)
                           + S * DIM + NLAYERS * (S * FFN_DIM + 2 * S))
    bytes_accessed = b * 2 * S * DIM * 4 + 4 * sum(int(w.size) for w in weights)

    out = pl.pallas_call(
        mobilevit_kernel,
        out_shape=jax.ShapeDtypeStruct((b, S, DIM), jnp.float32),
        grid=(b,),
        in_specs=[pl.BlockSpec((1, S, DIM), lambda i: (i, 0, 0))]
                 + [_full_spec(w.shape) for w in weights],
        out_specs=pl.BlockSpec((1, S, DIM), lambda i: (i, 0, 0)),
        compiler_params=pltpu.CompilerParams(dimension_semantics=("parallel",)),
        cost_estimate=pl.CostEstimate(flops=flops, transcendentals=transcendentals,
                                      bytes_accessed=bytes_accessed),
    )(x_seq, *weights)
    return out.reshape(b, H, W, DIM).transpose(0, 3, 1, 2)     # back to NCHW


# -------------------- deterministic parameters (raw + packed) -------------------

def init_raw_params(key):
    ks = iter(jax.random.split(key, 64))
    std = 0.05

    def nrm(shape, s=std):
        return (s * jax.random.normal(next(ks), shape)).astype(jnp.float32)

    raw = {
        # depthwise Conv2d(dim, dim, 3, padding=1, groups=dim): weight as (3,3,C)
        'dw_w': nrm((3, 3, DIM)),
        'dw_b': nrm((DIM,)),
        # pointwise Conv2d(dim, dim, 1): weight stored (C_in, C_out) -> x @ W
        'pw_w': nrm((DIM, DIM)),
        'pw_b': nrm((DIM,)),
    }
    # BatchNorm2d (eval): scale = gamma / sqrt(var + eps); bias = beta - mean * scale
    for name in ('bn1', 'bn2'):
        gamma = 1.0 + nrm((DIM,), 0.1)
        beta = nrm((DIM,), 0.1)
        r_mean = jnp.zeros((DIM,), jnp.float32)
        r_var = jnp.ones((DIM,), jnp.float32)
        scale = gamma / jnp.sqrt(r_var + BN_EPS)
        raw[name + '_s'] = scale
        raw[name + '_b'] = beta - r_mean * scale

    layers = []
    for _ in range(NLAYERS):
        layers.append({
            'ln1_w': jnp.ones((DIM,), jnp.float32),
            'ln1_b': jnp.zeros((DIM,), jnp.float32),
            # MHA projections stored pre-transposed (x @ W)
            'wq': nrm((DIM, DIM)), 'wk': nrm((DIM, DIM)), 'wv': nrm((DIM, DIM)),
            'bq': nrm((DIM,)), 'bk': nrm((DIM,)), 'bv': nrm((DIM,)),
            'wo': nrm((DIM, DIM)), 'bo': nrm((DIM,)),
            'ln2_w': jnp.ones((DIM,), jnp.float32),
            'ln2_b': jnp.zeros((DIM,), jnp.float32),
            'w1': nrm((DIM, FFN_DIM)), 'b1': nrm((FFN_DIM,)),
            'w2': nrm((FFN_DIM, DIM)), 'b2': nrm((DIM,)),
        })
    raw['layers'] = layers
    return raw


def pack_params(raw):
    """Pack raw weights into the few lane-dense arrays the fused kernel expects."""
    vec_rows = [raw['dw_b'], raw['bn1_s'], raw['bn1_b'],
                raw['pw_b'], raw['bn2_s'], raw['bn2_b']]
    wq, wk, wvo, w1, w2, b1 = [], [], [], [], [], []
    for lp in raw['layers']:
        # fold V-projection + output projection per head; fold both biases
        b_attn = lp['bv'] @ lp['wo'] + lp['bo']
        vec_rows += [lp['ln1_w'], lp['ln1_b'], lp['bq'], lp['bk'], b_attn,
                     lp['ln2_w'], lp['ln2_b'], lp['b2']]
        wq.append(lp['wq'])
        wk.append(lp['wk'])
        for h in range(NUM_HEADS):
            sl = slice(h * HEAD_DIM, (h + 1) * HEAD_DIM)
            wvo.append(lp['wv'][:, sl] @ lp['wo'][sl, :])
        w1.append(lp['w1'])
        w2.append(lp['w2'])
        b1.append(lp['b1'])
    return {
        'dww': raw['dw_w'].reshape(9, DIM),
        'pww': raw['pw_w'],
        'wq': jnp.stack(wq),          # (NLAYERS, DIM, DIM)
        'wk': jnp.stack(wk),          # (NLAYERS, DIM, DIM)
        'wvo': jnp.stack(wvo),        # (NLAYERS*NUM_HEADS, DIM, DIM)
        'w1': jnp.stack(w1),          # (NLAYERS, DIM, FFN_DIM)
        'w2': jnp.stack(w2),          # (NLAYERS, FFN_DIM, DIM)
        'vecs': jnp.stack(vec_rows),  # (NVEC, DIM)
        'b1': jnp.stack(b1),          # (NLAYERS, FFN_DIM)
    }


# --------------------------- pure-JAX reference model ---------------------------

def mobilevit_ref(x_nchw, raw):
    """Straightforward JAX transcription of the PyTorch module (eval semantics)."""
    b = x_nchw.shape[0]
    x = jnp.transpose(x_nchw, (0, 2, 3, 1)).astype(jnp.float32)      # NHWC
    xp = jnp.pad(x, ((0, 0), (1, 1), (1, 1), (0, 0)))
    acc = jnp.zeros_like(x)
    for kh in range(3):
        for kw in range(3):
            acc = acc + xp[:, kh:kh + H, kw:kw + W, :] * raw['dw_w'][kh, kw]
    acc = (acc + raw['dw_b']) * raw['bn1_s'] + raw['bn1_b']
    y = acc.reshape(b, S, DIM) @ raw['pw_w'] + raw['pw_b']
    x_local = _gelu(y * raw['bn2_s'] + raw['bn2_b'])

    xt = x_local
    for lp in raw['layers']:
        xn = _layer_norm(xt, lp['ln1_w'], lp['ln1_b'])
        q = xn @ lp['wq'] + lp['bq']
        k = xn @ lp['wk'] + lp['bk']
        v = xn @ lp['wv'] + lp['bv']
        heads = []
        for h in range(NUM_HEADS):
            sl = slice(h * HEAD_DIM, (h + 1) * HEAD_DIM)
            s = jnp.einsum('bqd,bkd->bqk', q[..., sl], k[..., sl]) * ATTN_SCALE
            p = jax.nn.softmax(s, axis=-1)
            heads.append(jnp.einsum('bqk,bkd->bqd', p, v[..., sl]))
        attn = jnp.concatenate(heads, axis=-1) @ lp['wo'] + lp['bo']
        xt = xt + attn
        xn2 = _layer_norm(xt, lp['ln2_w'], lp['ln2_b'])
        xt = xt + _gelu(xn2 @ lp['w1'] + lp['b1']) @ lp['w2'] + lp['b2']

    out = x_local + xt
    return out.reshape(b, H, W, DIM).transpose(0, 3, 1, 2)


# ------------------------------------- main -------------------------------------

if __name__ == "__main__":
    key = jax.random.PRNGKey(0)
    kx, kp = jax.random.split(key)
    x = jax.random.normal(kx, (2, DIM, H, W), dtype=jnp.float32)     # NCHW like PyTorch
    raw = init_raw_params(kp)
    packed = pack_params(raw)

    y = jax.jit(mobilevit_block)(x, packed)
    jax.block_until_ready(y)
    assert y.shape == x.shape and y.dtype == jnp.float32

    # sanity-check against the pure-JAX reference (loose tol: approx reciprocal
    # in the softmax and EUP transcendental approximations)
    y_ref = mobilevit_ref(x, raw)
    max_err = float(jnp.max(jnp.abs(y - y_ref)))
    if max_err > 5e-3:
        raise AssertionError(f"kernel/reference mismatch: max abs err {max_err:.3e}")

    print("KERNEL_OK")
</pallas_src>

<mosaic_0001>
module attributes {stable_mosaic.version = 11 : i64} {
  func.func @mobilevit_kernel(%arg0: i32, %arg1: memref<1x64x32xf32, #tpu.memory_space<vmem>>, %arg2: memref<9x32xf32, #tpu.memory_space<vmem>>, %arg3: memref<32x32xf32, #tpu.memory_space<vmem>>, %arg4: memref<2x32x32xf32, #tpu.memory_space<vmem>>, %arg5: memref<2x32x32xf32, #tpu.memory_space<vmem>>, %arg6: memref<8x32x32xf32, #tpu.memory_space<vmem>>, %arg7: memref<2x32x64xf32, #tpu.memory_space<vmem>>, %arg8: memref<2x64x32xf32, #tpu.memory_space<vmem>>, %arg9: memref<22x32xf32, #tpu.memory_space<vmem>>, %arg10: memref<2x64xf32, #tpu.memory_space<vmem>>, %arg11: memref<1x64x32xf32, #tpu.memory_space<vmem>>) attributes {dimension_semantics = [#tpu.dimension_semantics<parallel>], iteration_bounds = array<i64: 2>, scalar_prefetch = 0 : i64, scratch_operands = 0 : i64, tpu.core_type = #tpu.core_type<tc>, window_params = [{transform_indices = @transform_0, window_bounds = array<i64: 1, 64, 32>}, {pipeline_mode = #tpu.pipeline_mode<synchronous>, transform_indices = @transform_1, window_bounds = array<i64: 9, 32>}, {pipeline_mode = #tpu.pipeline_mode<synchronous>, transform_indices = @transform_2, window_bounds = array<i64: 32, 32>}, {pipeline_mode = #tpu.pipeline_mode<synchronous>, transform_indices = @transform_3, window_bounds = array<i64: 2, 32, 32>}, {pipeline_mode = #tpu.pipeline_mode<synchronous>, transform_indices = @transform_4, window_bounds = array<i64: 2, 32, 32>}, {pipeline_mode = #tpu.pipeline_mode<synchronous>, transform_indices = @transform_5, window_bounds = array<i64: 8, 32, 32>}, {pipeline_mode = #tpu.pipeline_mode<synchronous>, transform_indices = @transform_6, window_bounds = array<i64: 2, 32, 64>}, {pipeline_mode = #tpu.pipeline_mode<synchronous>, transform_indices = @transform_7, window_bounds = array<i64: 2, 64, 32>}, {pipeline_mode = #tpu.pipeline_mode<synchronous>, transform_indices = @transform_8, window_bounds = array<i64: 22, 32>}, {pipeline_mode = #tpu.pipeline_mode<synchronous>, transform_indices = @transform_9, window_bounds = array<i64: 2, 64>}, {transform_indices = @transform_10, window_bounds = array<i64: 1, 64, 32>}]} {
    %c0 = arith.constant 0 : index
    %c0_0 = arith.constant 0 : index
    %c0_1 = arith.constant 0 : index
    %0 = vector.load %arg1[%c0, %c0_0, %c0_1] : memref<1x64x32xf32, #tpu.memory_space<vmem>>, vector<1x64x32xf32>
    %1 = vector.shape_cast %0 : vector<1x64x32xf32> to vector<64x32xf32>
    %c0_2 = arith.constant 0 : index
    %c0_3 = arith.constant 0 : index
    %2 = vector.load %arg9[%c0_2, %c0_3] : memref<22x32xf32, #tpu.memory_space<vmem>>, vector<22x32xf32>
    %c0_4 = arith.constant 0 : index
    %c0_5 = arith.constant 0 : index
    %3 = vector.load %arg2[%c0_4, %c0_5] : memref<9x32xf32, #tpu.memory_space<vmem>>, vector<9x32xf32>
    %c0_6 = arith.constant 0 : index
    %c0_7 = arith.constant 0 : index
    %4 = vector.load %arg10[%c0_6, %c0_7] : memref<2x64xf32, #tpu.memory_space<vmem>>, vector<2x64xf32>
    %5 = tpu.iota {dimensions = array<i32: 0>} : vector<64x1xi32>
    %c7_i32 = arith.constant 7 : i32
    %6 = vector.broadcast %c7_i32 : i32 to vector<64x1xi32>
    %7 = arith.andi %5, %6 : vector<64x1xi32>
    %8 = vector.extract_strided_slice %3 {offsets = [4, 0], sizes = [1, 32], strides = [1, 1]} : vector<9x32xf32> to vector<1x32xf32>
    %9 = vector.broadcast %8 : vector<1x32xf32> to vector<64x32xf32>
    %10 = arith.mulf %1, %9 : vector<64x32xf32>
    %11 = vector.extract_strided_slice %1 {offsets = [55, 0], sizes = [9, 32], strides = [1, 1]} : vector<64x32xf32> to vector<9x32xf32>
    %12 = vector.extract_strided_slice %1 {offsets = [0, 0], sizes = [55, 32], strides = [1, 1]} : vector<64x32xf32> to vector<55x32xf32>
    %13 = tpu.concatenate %11, %12 in 0 : vector<9x32xf32>, vector<55x32xf32> -> vector<64x32xf32>
    %c8_i32 = arith.constant 8 : i32
    %14 = vector.broadcast %c8_i32 : i32 to vector<64x1xi32>
    %15 = arith.cmpi sge, %5, %14 : vector<64x1xi32>
    %c72_i32 = arith.constant 72 : i32
    %16 = vector.broadcast %c72_i32 : i32 to vector<64x1xi32>
    %17 = arith.cmpi slt, %5, %16 : vector<64x1xi32>
    %18 = arith.andi %15, %17 : vector<64x1xi1>
    %c1_i32 = arith.constant 1 : i32
    %19 = vector.broadcast %c1_i32 : i32 to vector<64x1xi32>
    %20 = arith.cmpi sge, %7, %19 : vector<64x1xi32>
    %21 = arith.andi %18, %20 : vector<64x1xi1>
    %c9_i32 = arith.constant 9 : i32
    %22 = vector.broadcast %c9_i32 : i32 to vector<64x1xi32>
    %23 = arith.cmpi slt, %7, %22 : vector<64x1xi32>
    %24 = arith.andi %21, %23 : vector<64x1xi1>
    %cst = arith.constant 0.000000e+00 : f32
    %25 = vector.shape_cast %24 : vector<64x1xi1> to vector<64x1xi1>
    %26 = vector.broadcast %25 : vector<64x1xi1> to vector<64x32xi1>
    %27 = vector.broadcast %cst : f32 to vector<64x32xf32>
    %28 = arith.select %26, %13, %27 : vector<64x32xi1>, vector<64x32xf32>
    %29 = vector.extract_strided_slice %3 {offsets = [0, 0], sizes = [1, 32], strides = [1, 1]} : vector<9x32xf32> to vector<1x32xf32>
    %30 = vector.broadcast %29 : vector<1x32xf32> to vector<64x32xf32>
    %31 = arith.mulf %28, %30 : vector<64x32xf32>
    %32 = arith.addf %10, %31 : vector<64x32xf32>
    %33 = vector.extract_strided_slice %1 {offsets = [56, 0], sizes = [8, 32], strides = [1, 1]} : vector<64x32xf32> to vector<8x32xf32>
    %34 = vector.extract_strided_slice %1 {offsets = [0, 0], sizes = [56, 32], strides = [1, 1]} : vector<64x32xf32> to vector<56x32xf32>
    %35 = tpu.concatenate %33, %34 in 0 : vector<8x32xf32>, vector<56x32xf32> -> vector<64x32xf32>
    %c8_i32_8 = arith.constant 8 : i32
    %36 = vector.broadcast %c8_i32_8 : i32 to vector<64x1xi32>
    %37 = arith.cmpi sge, %5, %36 : vector<64x1xi32>
    %c72_i32_9 = arith.constant 72 : i32
    %38 = vector.broadcast %c72_i32_9 : i32 to vector<64x1xi32>
    %39 = arith.cmpi slt, %5, %38 : vector<64x1xi32>
    %40 = arith.andi %37, %39 : vector<64x1xi1>
    %c0_i32 = arith.constant 0 : i32
    %41 = vector.broadcast %c0_i32 : i32 to vector<64x1xi32>
    %42 = arith.cmpi sge, %7, %41 : vector<64x1xi32>
    %43 = arith.andi %40, %42 : vector<64x1xi1>
    %c8_i32_10 = arith.constant 8 : i32
    %44 = vector.broadcast %c8_i32_10 : i32 to vector<64x1xi32>
    %45 = arith.cmpi slt, %7, %44 : vector<64x1xi32>
    %46 = arith.andi %43, %45 : vector<64x1xi1>
    %cst_11 = arith.constant 0.000000e+00 : f32
    %47 = vector.shape_cast %46 : vector<64x1xi1> to vector<64x1xi1>
    %48 = vector.broadcast %47 : vector<64x1xi1> to vector<64x32xi1>
    %49 = vector.broadcast %cst_11 : f32 to vector<64x32xf32>
    %50 = arith.select %48, %35, %49 : vector<64x32xi1>, vector<64x32xf32>
    %51 = vector.extract_strided_slice %3 {offsets = [1, 0], sizes = [1, 32], strides = [1, 1]} : vector<9x32xf32> to vector<1x32xf32>
    %52 = vector.broadcast %51 : vector<1x32xf32> to vector<64x32xf32>
    %53 = arith.mulf %50, %52 : vector<64x32xf32>
    %54 = arith.addf %32, %53 : vector<64x32xf32>
    %55 = vector.extract_strided_slice %1 {offsets = [57, 0], sizes = [7, 32], strides = [1, 1]} : vector<64x32xf32> to vector<7x32xf32>
    %56 = vector.extract_strided_slice %1 {offsets = [0, 0], sizes = [57, 32], strides = [1, 1]} : vector<64x32xf32> to vector<57x32xf32>
    %57 = tpu.concatenate %55, %56 in 0 : vector<7x32xf32>, vector<57x32xf32> -> vector<64x32xf32>
    %c8_i32_12 = arith.constant 8 : i32
    %58 = vector.broadcast %c8_i32_12 : i32 to vector<64x1xi32>
    %59 = arith.cmpi sge, %5, %58 : vector<64x1xi32>
    %c72_i32_13 = arith.constant 72 : i32
    %60 = vector.broadcast %c72_i32_13 : i32 to vector<64x1xi32>
    %61 = arith.cmpi slt, %5, %60 : vector<64x1xi32>
    %62 = arith.andi %59, %61 : vector<64x1xi1>
    %c-1_i32 = arith.constant -1 : i32
    %63 = vector.broadcast %c-1_i32 : i32 to vector<64x1xi32>
    %64 = arith.cmpi sge, %7, %63 : vector<64x1xi32>
    %65 = arith.andi %62, %64 : vector<64x1xi1>
    %c7_i32_14 = arith.constant 7 : i32
    %66 = vector.broadcast %c7_i32_14 : i32 to vector<64x1xi32>
    %67 = arith.cmpi slt, %7, %66 : vector<64x1xi32>
    %68 = arith.andi %65, %67 : vector<64x1xi1>
    %cst_15 = arith.constant 0.000000e+00 : f32
    %69 = vector.shape_cast %68 : vector<64x1xi1> to vector<64x1xi1>
    %70 = vector.broadcast %69 : vector<64x1xi1> to vector<64x32xi1>
    %71 = vector.broadcast %cst_15 : f32 to vector<64x32xf32>
    %72 = arith.select %70, %57, %71 : vector<64x32xi1>, vector<64x32xf32>
    %73 = vector.extract_strided_slice %3 {offsets = [2, 0], sizes = [1, 32], strides = [1, 1]} : vector<9x32xf32> to vector<1x32xf32>
    %74 = vector.broadcast %73 : vector<1x32xf32> to vector<64x32xf32>
    %75 = arith.mulf %72, %74 : vector<64x32xf32>
    %76 = arith.addf %54, %75 : vector<64x32xf32>
    %77 = vector.extract_strided_slice %1 {offsets = [63, 0], sizes = [1, 32], strides = [1, 1]} : vector<64x32xf32> to vector<1x32xf32>
    %78 = vector.extract_strided_slice %1 {offsets = [0, 0], sizes = [63, 32], strides = [1, 1]} : vector<64x32xf32> to vector<63x32xf32>
    %79 = tpu.concatenate %77, %78 in 0 : vector<1x32xf32>, vector<63x32xf32> -> vector<64x32xf32>
    %c0_i32_16 = arith.constant 0 : i32
    %80 = vector.broadcast %c0_i32_16 : i32 to vector<64x1xi32>
    %81 = arith.cmpi sge, %5, %80 : vector<64x1xi32>
    %c64_i32 = arith.constant 64 : i32
    %82 = vector.broadcast %c64_i32 : i32 to vector<64x1xi32>
    %83 = arith.cmpi slt, %5, %82 : vector<64x1xi32>
    %84 = arith.andi %81, %83 : vector<64x1xi1>
    %c1_i32_17 = arith.constant 1 : i32
    %85 = vector.broadcast %c1_i32_17 : i32 to vector<64x1xi32>
    %86 = arith.cmpi sge, %7, %85 : vector<64x1xi32>
    %87 = arith.andi %84, %86 : vector<64x1xi1>
    %c9_i32_18 = arith.constant 9 : i32
    %88 = vector.broadcast %c9_i32_18 : i32 to vector<64x1xi32>
    %89 = arith.cmpi slt, %7, %88 : vector<64x1xi32>
    %90 = arith.andi %87, %89 : vector<64x1xi1>
    %cst_19 = arith.constant 0.000000e+00 : f32
    %91 = vector.shape_cast %90 : vector<64x1xi1> to vector<64x1xi1>
    %92 = vector.broadcast %91 : vector<64x1xi1> to vector<64x32xi1>
    %93 = vector.broadcast %cst_19 : f32 to vector<64x32xf32>
    %94 = arith.select %92, %79, %93 : vector<64x32xi1>, vector<64x32xf32>
    %95 = vector.extract_strided_slice %3 {offsets = [3, 0], sizes = [1, 32], strides = [1, 1]} : vector<9x32xf32> to vector<1x32xf32>
    %96 = vector.broadcast %95 : vector<1x32xf32> to vector<64x32xf32>
    %97 = arith.mulf %94, %96 : vector<64x32xf32>
    %98 = arith.addf %76, %97 : vector<64x32xf32>
    %99 = vector.extract_strided_slice %1 {offsets = [1, 0], sizes = [63, 32], strides = [1, 1]} : vector<64x32xf32> to vector<63x32xf32>
    %100 = vector.extract_strided_slice %1 {offsets = [0, 0], sizes = [1, 32], strides = [1, 1]} : vector<64x32xf32> to vector<1x32xf32>
    %101 = tpu.concatenate %99, %100 in 0 : vector<63x32xf32>, vector<1x32xf32> -> vector<64x32xf32>
    %c0_i32_20 = arith.constant 0 : i32
    %102 = vector.broadcast %c0_i32_20 : i32 to vector<64x1xi32>
    %103 = arith.cmpi sge, %5, %102 : vector<64x1xi32>
    %c64_i32_21 = arith.constant 64 : i32
    %104 = vector.broadcast %c64_i32_21 : i32 to vector<64x1xi32>
    %105 = arith.cmpi slt, %5, %104 : vector<64x1xi32>
    %106 = arith.andi %103, %105 : vector<64x1xi1>
    %c-1_i32_22 = arith.constant -1 : i32
    %107 = vector.broadcast %c-1_i32_22 : i32 to vector<64x1xi32>
    %108 = arith.cmpi sge, %7, %107 : vector<64x1xi32>
    %109 = arith.andi %106, %108 : vector<64x1xi1>
    %c7_i32_23 = arith.constant 7 : i32
    %110 = vector.broadcast %c7_i32_23 : i32 to vector<64x1xi32>
    %111 = arith.cmpi slt, %7, %110 : vector<64x1xi32>
    %112 = arith.andi %109, %111 : vector<64x1xi1>
    %cst_24 = arith.constant 0.000000e+00 : f32
    %113 = vector.shape_cast %112 : vector<64x1xi1> to vector<64x1xi1>
    %114 = vector.broadcast %113 : vector<64x1xi1> to vector<64x32xi1>
    %115 = vector.broadcast %cst_24 : f32 to vector<64x32xf32>
    %116 = arith.select %114, %101, %115 : vector<64x32xi1>, vector<64x32xf32>
    %117 = vector.extract_strided_slice %3 {offsets = [5, 0], sizes = [1, 32], strides = [1, 1]} : vector<9x32xf32> to vector<1x32xf32>
    %118 = vector.broadcast %117 : vector<1x32xf32> to vector<64x32xf32>
    %119 = arith.mulf %116, %118 : vector<64x32xf32>
    %120 = arith.addf %98, %119 : vector<64x32xf32>
    %121 = vector.extract_strided_slice %1 {offsets = [7, 0], sizes = [57, 32], strides = [1, 1]} : vector<64x32xf32> to vector<57x32xf32>
    %122 = vector.extract_strided_slice %1 {offsets = [0, 0], sizes = [7, 32], strides = [1, 1]} : vector<64x32xf32> to vector<7x32xf32>
    %123 = tpu.concatenate %121, %122 in 0 : vector<57x32xf32>, vector<7x32xf32> -> vector<64x32xf32>
    %c-8_i32 = arith.constant -8 : i32
    %124 = vector.broadcast %c-8_i32 : i32 to vector<64x1xi32>
    %125 = arith.cmpi sge, %5, %124 : vector<64x1xi32>
    %c56_i32 = arith.constant 56 : i32
    %126 = vector.broadcast %c56_i32 : i32 to vector<64x1xi32>
    %127 = arith.cmpi slt, %5, %126 : vector<64x1xi32>
    %128 = arith.andi %125, %127 : vector<64x1xi1>
    %c1_i32_25 = arith.constant 1 : i32
    %129 = vector.broadcast %c1_i32_25 : i32 to vector<64x1xi32>
    %130 = arith.cmpi sge, %7, %129 : vector<64x1xi32>
    %131 = arith.andi %128, %130 : vector<64x1xi1>
    %c9_i32_26 = arith.constant 9 : i32
    %132 = vector.broadcast %c9_i32_26 : i32 to vector<64x1xi32>
    %133 = arith.cmpi slt, %7, %132 : vector<64x1xi32>
    %134 = arith.andi %131, %133 : vector<64x1xi1>
    %cst_27 = arith.constant 0.000000e+00 : f32
    %135 = vector.shape_cast %134 : vector<64x1xi1> to vector<64x1xi1>
    %136 = vector.broadcast %135 : vector<64x1xi1> to vector<64x32xi1>
    %137 = vector.broadcast %cst_27 : f32 to vector<64x32xf32>
    %138 = arith.select %136, %123, %137 : vector<64x32xi1>, vector<64x32xf32>
    %139 = vector.extract_strided_slice %3 {offsets = [6, 0], sizes = [1, 32], strides = [1, 1]} : vector<9x32xf32> to vector<1x32xf32>
    %140 = vector.broadcast %139 : vector<1x32xf32> to vector<64x32xf32>
    %141 = arith.mulf %138, %140 : vector<64x32xf32>
    %142 = arith.addf %120, %141 : vector<64x32xf32>
    %143 = vector.extract_strided_slice %1 {offsets = [8, 0], sizes = [56, 32], strides = [1, 1]} : vector<64x32xf32> to vector<56x32xf32>
    %144 = vector.extract_strided_slice %1 {offsets = [0, 0], sizes = [8, 32], strides = [1, 1]} : vector<64x32xf32> to vector<8x32xf32>
    %145 = tpu.concatenate %143, %144 in 0 : vector<56x32xf32>, vector<8x32xf32> -> vector<64x32xf32>
    %c-8_i32_28 = arith.constant -8 : i32
    %146 = vector.broadcast %c-8_i32_28 : i32 to vector<64x1xi32>
    %147 = arith.cmpi sge, %5, %146 : vector<64x1xi32>
    %c56_i32_29 = arith.constant 56 : i32
    %148 = vector.broadcast %c56_i32_29 : i32 to vector<64x1xi32>
    %149 = arith.cmpi slt, %5, %148 : vector<64x1xi32>
    %150 = arith.andi %147, %149 : vector<64x1xi1>
    %c0_i32_30 = arith.constant 0 : i32
    %151 = vector.broadcast %c0_i32_30 : i32 to vector<64x1xi32>
    %152 = arith.cmpi sge, %7, %151 : vector<64x1xi32>
    %153 = arith.andi %150, %152 : vector<64x1xi1>
    %c8_i32_31 = arith.constant 8 : i32
    %154 = vector.broadcast %c8_i32_31 : i32 to vector<64x1xi32>
    %155 = arith.cmpi slt, %7, %154 : vector<64x1xi32>
    %156 = arith.andi %153, %155 : vector<64x1xi1>
    %cst_32 = arith.constant 0.000000e+00 : f32
    %157 = vector.shape_cast %156 : vector<64x1xi1> to vector<64x1xi1>
    %158 = vector.broadcast %157 : vector<64x1xi1> to vector<64x32xi1>
    %159 = vector.broadcast %cst_32 : f32 to vector<64x32xf32>
    %160 = arith.select %158, %145, %159 : vector<64x32xi1>, vector<64x32xf32>
    %161 = vector.extract_strided_slice %3 {offsets = [7, 0], sizes = [1, 32], strides = [1, 1]} : vector<9x32xf32> to vector<1x32xf32>
    %162 = vector.broadcast %161 : vector<1x32xf32> to vector<64x32xf32>
    %163 = arith.mulf %160, %162 : vector<64x32xf32>
    %164 = arith.addf %142, %163 : vector<64x32xf32>
    %165 = vector.extract_strided_slice %1 {offsets = [9, 0], sizes = [55, 32], strides = [1, 1]} : vector<64x32xf32> to vector<55x32xf32>
    %166 = vector.extract_strided_slice %1 {offsets = [0, 0], sizes = [9, 32], strides = [1, 1]} : vector<64x32xf32> to vector<9x32xf32>
    %167 = tpu.concatenate %165, %166 in 0 : vector<55x32xf32>, vector<9x32xf32> -> vector<64x32xf32>
    %c-8_i32_33 = arith.constant -8 : i32
    %168 = vector.broadcast %c-8_i32_33 : i32 to vector<64x1xi32>
    %169 = arith.cmpi sge, %5, %168 : vector<64x1xi32>
    %c56_i32_34 = arith.constant 56 : i32
    %170 = vector.broadcast %c56_i32_34 : i32 to vector<64x1xi32>
    %171 = arith.cmpi slt, %5, %170 : vector<64x1xi32>
    %172 = arith.andi %169, %171 : vector<64x1xi1>
    %c-1_i32_35 = arith.constant -1 : i32
    %173 = vector.broadcast %c-1_i32_35 : i32 to vector<64x1xi32>
    %174 = arith.cmpi sge, %7, %173 : vector<64x1xi32>
    %175 = arith.andi %172, %174 : vector<64x1xi1>
    %c7_i32_36 = arith.constant 7 : i32
    %176 = vector.broadcast %c7_i32_36 : i32 to vector<64x1xi32>
    %177 = arith.cmpi slt, %7, %176 : vector<64x1xi32>
    %178 = arith.andi %175, %177 : vector<64x1xi1>
    %cst_37 = arith.constant 0.000000e+00 : f32
    %179 = vector.shape_cast %178 : vector<64x1xi1> to vector<64x1xi1>
    %180 = vector.broadcast %179 : vector<64x1xi1> to vector<64x32xi1>
    %181 = vector.broadcast %cst_37 : f32 to vector<64x32xf32>
    %182 = arith.select %180, %167, %181 : vector<64x32xi1>, vector<64x32xf32>
    %183 = vector.extract_strided_slice %3 {offsets = [8, 0], sizes = [1, 32], strides = [1, 1]} : vector<9x32xf32> to vector<1x32xf32>
    %184 = vector.broadcast %183 : vector<1x32xf32> to vector<64x32xf32>
    %185 = arith.mulf %182, %184 : vector<64x32xf32>
    %186 = arith.addf %164, %185 : vector<64x32xf32>
    %187 = vector.extract_strided_slice %2 {offsets = [0, 0], sizes = [1, 32], strides = [1, 1]} : vector<22x32xf32> to vector<1x32xf32>
    %188 = vector.broadcast %187 : vector<1x32xf32> to vector<64x32xf32>
    %189 = arith.addf %186, %188 : vector<64x32xf32>
    %190 = vector.extract_strided_slice %2 {offsets = [1, 0], sizes = [1, 32], strides = [1, 1]} : vector<22x32xf32> to vector<1x32xf32>
    %191 = vector.broadcast %190 : vector<1x32xf32> to vector<64x32xf32>
    %192 = arith.mulf %189, %191 : vector<64x32xf32>
    %193 = vector.extract_strided_slice %2 {offsets = [2, 0], sizes = [1, 32], strides = [1, 1]} : vector<22x32xf32> to vector<1x32xf32>
    %194 = vector.broadcast %193 : vector<1x32xf32> to vector<64x32xf32>
    %195 = arith.addf %192, %194 : vector<64x32xf32>
    %c0_38 = arith.constant 0 : index
    %c0_39 = arith.constant 0 : index
    %196 = vector.load %arg3[%c0_38, %c0_39] : memref<32x32xf32, #tpu.memory_space<vmem>>, vector<32x32xf32>
    %cst_40 = arith.constant dense<0.000000e+00> : vector<64x32xf32>
    %197 = tpu.matmul %195, %196, %cst_40 {dimension_numbers = #tpu.dot_dimension_numbers<[1], [0], [0], [1], [0, 0, 1, 1], [], []>} : vector<64x32xf32>, vector<32x32xf32>, vector<64x32xf32> -> vector<64x32xf32>
    %198 = vector.extract_strided_slice %2 {offsets = [3, 0], sizes = [1, 32], strides = [1, 1]} : vector<22x32xf32> to vector<1x32xf32>
    %199 = vector.broadcast %198 : vector<1x32xf32> to vector<64x32xf32>
    %200 = arith.addf %197, %199 : vector<64x32xf32>
    %201 = vector.extract_strided_slice %2 {offsets = [4, 0], sizes = [1, 32], strides = [1, 1]} : vector<22x32xf32> to vector<1x32xf32>
    %202 = vector.broadcast %201 : vector<1x32xf32> to vector<64x32xf32>
    %203 = arith.mulf %200, %202 : vector<64x32xf32>
    %204 = vector.extract_strided_slice %2 {offsets = [5, 0], sizes = [1, 32], strides = [1, 1]} : vector<22x32xf32> to vector<1x32xf32>
    %205 = vector.broadcast %204 : vector<1x32xf32> to vector<64x32xf32>
    %206 = arith.addf %203, %205 : vector<64x32xf32>
    %cst_41 = arith.constant 5.000000e-01 : f32
    %207 = vector.broadcast %cst_41 : f32 to vector<64x32xf32>
    %208 = arith.mulf %207, %206 : vector<64x32xf32>
    %cst_42 = arith.constant 0.707106769 : f32
    %209 = vector.broadcast %cst_42 : f32 to vector<64x32xf32>
    %210 = arith.mulf %206, %209 : vector<64x32xf32>
    %211 = math.erf %210 : vector<64x32xf32>
    %cst_43 = arith.constant 1.000000e+00 : f32
    %212 = vector.broadcast %cst_43 : f32 to vector<64x32xf32>
    %213 = arith.addf %212, %211 : vector<64x32xf32>
    %214 = arith.mulf %208, %213 : vector<64x32xf32>
    %215 = tpu.iota {dimensions = array<i32: 1>} : vector<1x32xi32>
    %216 = vector.extract_strided_slice %2 {offsets = [6, 0], sizes = [1, 32], strides = [1, 1]} : vector<22x32xf32> to vector<1x32xf32>
    %217 = vector.extract_strided_slice %2 {offsets = [7, 0], sizes = [1, 32], strides = [1, 1]} : vector<22x32xf32> to vector<1x32xf32>
    %cst_44 = arith.constant dense<0.000000e+00> : vector<64xf32>
    %218 = vector.multi_reduction <add>, %214, %cst_44 [1] : vector<64x32xf32> to vector<64xf32>
    %219 = vector.shape_cast %218 : vector<64xf32> to vector<64x1xf32>
    %cst_45 = arith.constant 3.200000e+01 : f32
    %220 = vector.broadcast %cst_45 : f32 to vector<64x1xf32>
    %221 = arith.divf %219, %220 : vector<64x1xf32>
    %222 = vector.broadcast %221 : vector<64x1xf32> to vector<64x32xf32>
    %223 = arith.subf %214, %222 : vector<64x32xf32>
    %224 = arith.mulf %223, %223 : vector<64x32xf32>
    %cst_46 = arith.constant dense<0.000000e+00> : vector<64xf32>
    %225 = vector.multi_reduction <add>, %224, %cst_46 [1] : vector<64x32xf32> to vector<64xf32>
    %226 = vector.shape_cast %225 : vector<64xf32> to vector<64x1xf32>
    %cst_47 = arith.constant 3.200000e+01 : f32
    %227 = vector.broadcast %cst_47 : f32 to vector<64x1xf32>
    %228 = arith.divf %226, %227 : vector<64x1xf32>
    %cst_48 = arith.constant 9.99999974E-6 : f32
    %229 = vector.broadcast %cst_48 : f32 to vector<64x1xf32>
    %230 = arith.addf %228, %229 : vector<64x1xf32>
    %231 = math.rsqrt %230 : vector<64x1xf32>
    %232 = vector.broadcast %231 : vector<64x1xf32> to vector<64x32xf32>
    %233 = arith.mulf %223, %232 : vector<64x32xf32>
    %234 = vector.broadcast %216 : vector<1x32xf32> to vector<64x32xf32>
    %235 = arith.mulf %233, %234 : vector<64x32xf32>
    %236 = vector.broadcast %217 : vector<1x32xf32> to vector<64x32xf32>
    %237 = arith.addf %235, %236 : vector<64x32xf32>
    %c0_49 = arith.constant 0 : index
    %c0_50 = arith.constant 0 : index
    %c0_51 = arith.constant 0 : index
    %238 = vector.load %arg4[%c0_49, %c0_50, %c0_51] : memref<2x32x32xf32, #tpu.memory_space<vmem>>, vector<1x32x32xf32>
    %239 = vector.shape_cast %238 : vector<1x32x32xf32> to vector<32x32xf32>
    %cst_52 = arith.constant dense<0.000000e+00> : vector<64x32xf32>
    %240 = tpu.matmul %237, %239, %cst_52 {dimension_numbers = #tpu.dot_dimension_numbers<[1], [0], [0], [1], [0, 0, 1, 1], [], []>} : vector<64x32xf32>, vector<32x32xf32>, vector<64x32xf32> -> vector<64x32xf32>
    %241 = vector.extract_strided_slice %2 {offsets = [8, 0], sizes = [1, 32], strides = [1, 1]} : vector<22x32xf32> to vector<1x32xf32>
    %242 = vector.broadcast %241 : vector<1x32xf32> to vector<64x32xf32>
    %243 = arith.addf %240, %242 : vector<64x32xf32>
    %c0_53 = arith.constant 0 : index
    %c0_54 = arith.constant 0 : index
    %c0_55 = arith.constant 0 : index
    %244 = vector.load %arg5[%c0_53, %c0_54, %c0_55] : memref<2x32x32xf32, #tpu.memory_space<vmem>>, vector<1x32x32xf32>
    %245 = vector.shape_cast %244 : vector<1x32x32xf32> to vector<32x32xf32>
    %cst_56 = arith.constant dense<0.000000e+00> : vector<64x32xf32>
    %246 = tpu.matmul %237, %245, %cst_56 {dimension_numbers = #tpu.dot_dimension_numbers<[1], [0], [0], [1], [0, 0, 1, 1], [], []>} : vector<64x32xf32>, vector<32x32xf32>, vector<64x32xf32> -> vector<64x32xf32>
    %247 = vector.extract_strided_slice %2 {offsets = [9, 0], sizes = [1, 32], strides = [1, 1]} : vector<22x32xf32> to vector<1x32xf32>
    %248 = vector.broadcast %247 : vector<1x32xf32> to vector<64x32xf32>
    %249 = arith.addf %246, %248 : vector<64x32xf32>
    %cst_57 = arith.constant 0.000000e+00 : f32
    %250 = vector.broadcast %cst_57 : f32 to vector<64x32xf32>
    %c0_i32_58 = arith.constant 0 : i32
    %251 = vector.broadcast %c0_i32_58 : i32 to vector<1x32xi32>
    %252 = arith.cmpi sge, %215, %251 : vector<1x32xi32>
    %c8_i32_59 = arith.constant 8 : i32
    %253 = vector.broadcast %c8_i32_59 : i32 to vector<1x32xi32>
    %254 = arith.cmpi slt, %215, %253 : vector<1x32xi32>
    %255 = arith.andi %252, %254 : vector<1x32xi1>
    %cst_60 = arith.constant 0.000000e+00 : f32
    %256 = vector.shape_cast %255 : vector<1x32xi1> to vector<1x32xi1>
    %257 = vector.broadcast %256 : vector<1x32xi1> to vector<64x32xi1>
    %258 = vector.broadcast %cst_60 : f32 to vector<64x32xf32>
    %259 = arith.select %257, %243, %258 : vector<64x32xi1>, vector<64x32xf32>
    %cst_61 = arith.constant dense<0.000000e+00> : vector<64x64xf32>
    %260 = tpu.matmul %259, %249, %cst_61 {dimension_numbers = #tpu.dot_dimension_numbers<[1], [1], [0], [0], [0, 0, 1, 0], [], []>} : vector<64x32xf32>, vector<64x32xf32>, vector<64x64xf32> -> vector<64x64xf32>
    %cst_62 = arith.constant 0.353553385 : f32
    %261 = vector.broadcast %cst_62 : f32 to vector<64x64xf32>
    %262 = arith.mulf %260, %261 : vector<64x64xf32>
    %cst_63 = arith.constant dense<0xFF800000> : vector<64xf32>
    %263 = vector.multi_reduction <maximumf>, %262, %cst_63 [1] : vector<64x64xf32> to vector<64xf32>
    %264 = vector.shape_cast %263 : vector<64xf32> to vector<64x1xf32>
    %265 = vector.broadcast %264 : vector<64x1xf32> to vector<64x64xf32>
    %266 = arith.subf %262, %265 : vector<64x64xf32>
    %267 = math.exp %266 : vector<64x64xf32>
    %cst_64 = arith.constant dense<0.000000e+00> : vector<64xf32>
    %268 = vector.multi_reduction <add>, %267, %cst_64 [1] : vector<64x64xf32> to vector<64xf32>
    %269 = vector.shape_cast %268 : vector<64xf32> to vector<64x1xf32>
    %270 = tpu.reciprocal %269 {approx = true} : vector<64x1xf32> -> vector<64x1xf32>
    %271 = vector.broadcast %270 : vector<64x1xf32> to vector<64x64xf32>
    %272 = arith.mulf %267, %271 : vector<64x64xf32>
    %c0_65 = arith.constant 0 : index
    %c0_66 = arith.constant 0 : index
    %c0_67 = arith.constant 0 : index
    %273 = vector.load %arg6[%c0_65, %c0_66, %c0_67] : memref<8x32x32xf32, #tpu.memory_space<vmem>>, vector<1x32x32xf32>
    %274 = vector.shape_cast %273 : vector<1x32x32xf32> to vector<32x32xf32>
    %cst_68 = arith.constant dense<0.000000e+00> : vector<64x32xf32>
    %275 = tpu.matmul %237, %274, %cst_68 {dimension_numbers = #tpu.dot_dimension_numbers<[1], [0], [0], [1], [0, 0, 1, 1], [], []>} : vector<64x32xf32>, vector<32x32xf32>, vector<64x32xf32> -> vector<64x32xf32>
    %cst_69 = arith.constant dense<0.000000e+00> : vector<64x32xf32>
    %276 = tpu.matmul %272, %275, %cst_69 {dimension_numbers = #tpu.dot_dimension_numbers<[1], [0], [0], [1], [0, 0, 1, 1], [], []>} : vector<64x64xf32>, vector<64x32xf32>, vector<64x32xf32> -> vector<64x32xf32>
    %277 = arith.addf %250, %276 : vector<64x32xf32>
    %c8_i32_70 = arith.constant 8 : i32
    %278 = vector.broadcast %c8_i32_70 : i32 to vector<1x32xi32>
    %279 = arith.cmpi sge, %215, %278 : vector<1x32xi32>
    %c16_i32 = arith.constant 16 : i32
    %280 = vector.broadcast %c16_i32 : i32 to vector<1x32xi32>
    %281 = arith.cmpi slt, %215, %280 : vector<1x32xi32>
    %282 = arith.andi %279, %281 : vector<1x32xi1>
    %cst_71 = arith.constant 0.000000e+00 : f32
    %283 = vector.shape_cast %282 : vector<1x32xi1> to vector<1x32xi1>
    %284 = vector.broadcast %283 : vector<1x32xi1> to vector<64x32xi1>
    %285 = vector.broadcast %cst_71 : f32 to vector<64x32xf32>
    %286 = arith.select %284, %243, %285 : vector<64x32xi1>, vector<64x32xf32>
    %cst_72 = arith.constant dense<0.000000e+00> : vector<64x64xf32>
    %287 = tpu.matmul %286, %249, %cst_72 {dimension_numbers = #tpu.dot_dimension_numbers<[1], [1], [0], [0], [0, 0, 1, 0], [], []>} : vector<64x32xf32>, vector<64x32xf32>, vector<64x64xf32> -> vector<64x64xf32>
    %cst_73 = arith.constant 0.353553385 : f32
    %288 = vector.broadcast %cst_73 : f32 to vector<64x64xf32>
    %289 = arith.mulf %287, %288 : vector<64x64xf32>
    %cst_74 = arith.constant dense<0xFF800000> : vector<64xf32>
    %290 = vector.multi_reduction <maximumf>, %289, %cst_74 [1] : vector<64x64xf32> to vector<64xf32>
    %291 = vector.shape_cast %290 : vector<64xf32> to vector<64x1xf32>
    %292 = vector.broadcast %291 : vector<64x1xf32> to vector<64x64xf32>
    %293 = arith.subf %289, %292 : vector<64x64xf32>
    %294 = math.exp %293 : vector<64x64xf32>
    %cst_75 = arith.constant dense<0.000000e+00> : vector<64xf32>
    %295 = vector.multi_reduction <add>, %294, %cst_75 [1] : vector<64x64xf32> to vector<64xf32>
    %296 = vector.shape_cast %295 : vector<64xf32> to vector<64x1xf32>
    %297 = tpu.reciprocal %296 {approx = true} : vector<64x1xf32> -> vector<64x1xf32>
    %298 = vector.broadcast %297 : vector<64x1xf32> to vector<64x64xf32>
    %299 = arith.mulf %294, %298 : vector<64x64xf32>
    %c1 = arith.constant 1 : index
    %c0_76 = arith.constant 0 : index
    %c0_77 = arith.constant 0 : index
    %300 = vector.load %arg6[%c1, %c0_76, %c0_77] : memref<8x32x32xf32, #tpu.memory_space<vmem>>, vector<1x32x32xf32>
    %301 = vector.shape_cast %300 : vector<1x32x32xf32> to vector<32x32xf32>
    %cst_78 = arith.constant dense<0.000000e+00> : vector<64x32xf32>
    %302 = tpu.matmul %237, %301, %cst_78 {dimension_numbers = #tpu.dot_dimension_numbers<[1], [0], [0], [1], [0, 0, 1, 1], [], []>} : vector<64x32xf32>, vector<32x32xf32>, vector<64x32xf32> -> vector<64x32xf32>
    %cst_79 = arith.constant dense<0.000000e+00> : vector<64x32xf32>
    %303 = tpu.matmul %299, %302, %cst_79 {dimension_numbers = #tpu.dot_dimension_numbers<[1], [0], [0], [1], [0, 0, 1, 1], [], []>} : vector<64x64xf32>, vector<64x32xf32>, vector<64x32xf32> -> vector<64x32xf32>
    %304 = arith.addf %277, %303 : vector<64x32xf32>
    %c16_i32_80 = arith.constant 16 : i32
    %305 = vector.broadcast %c16_i32_80 : i32 to vector<1x32xi32>
    %306 = arith.cmpi sge, %215, %305 : vector<1x32xi32>
    %c24_i32 = arith.constant 24 : i32
    %307 = vector.broadcast %c24_i32 : i32 to vector<1x32xi32>
    %308 = arith.cmpi slt, %215, %307 : vector<1x32xi32>
    %309 = arith.andi %306, %308 : vector<1x32xi1>
    %cst_81 = arith.constant 0.000000e+00 : f32
    %310 = vector.shape_cast %309 : vector<1x32xi1> to vector<1x32xi1>
    %311 = vector.broadcast %310 : vector<1x32xi1> to vector<64x32xi1>
    %312 = vector.broadcast %cst_81 : f32 to vector<64x32xf32>
    %313 = arith.select %311, %243, %312 : vector<64x32xi1>, vector<64x32xf32>
    %cst_82 = arith.constant dense<0.000000e+00> : vector<64x64xf32>
    %314 = tpu.matmul %313, %249, %cst_82 {dimension_numbers = #tpu.dot_dimension_numbers<[1], [1], [0], [0], [0, 0, 1, 0], [], []>} : vector<64x32xf32>, vector<64x32xf32>, vector<64x64xf32> -> vector<64x64xf32>
    %cst_83 = arith.constant 0.353553385 : f32
    %315 = vector.broadcast %cst_83 : f32 to vector<64x64xf32>
    %316 = arith.mulf %314, %315 : vector<64x64xf32>
    %cst_84 = arith.constant dense<0xFF800000> : vector<64xf32>
    %317 = vector.multi_reduction <maximumf>, %316, %cst_84 [1] : vector<64x64xf32> to vector<64xf32>
    %318 = vector.shape_cast %317 : vector<64xf32> to vector<64x1xf32>
    %319 = vector.broadcast %318 : vector<64x1xf32> to vector<64x64xf32>
    %320 = arith.subf %316, %319 : vector<64x64xf32>
    %321 = math.exp %320 : vector<64x64xf32>
    %cst_85 = arith.constant dense<0.000000e+00> : vector<64xf32>
    %322 = vector.multi_reduction <add>, %321, %cst_85 [1] : vector<64x64xf32> to vector<64xf32>
    %323 = vector.shape_cast %322 : vector<64xf32> to vector<64x1xf32>
    %324 = tpu.reciprocal %323 {approx = true} : vector<64x1xf32> -> vector<64x1xf32>
    %325 = vector.broadcast %324 : vector<64x1xf32> to vector<64x64xf32>
    %326 = arith.mulf %321, %325 : vector<64x64xf32>
    %c2 = arith.constant 2 : index
    %c0_86 = arith.constant 0 : index
    %c0_87 = arith.constant 0 : index
    %327 = vector.load %arg6[%c2, %c0_86, %c0_87] : memref<8x32x32xf32, #tpu.memory_space<vmem>>, vector<1x32x32xf32>
    %328 = vector.shape_cast %327 : vector<1x32x32xf32> to vector<32x32xf32>
    %cst_88 = arith.constant dense<0.000000e+00> : vector<64x32xf32>
    %329 = tpu.matmul %237, %328, %cst_88 {dimension_numbers = #tpu.dot_dimension_numbers<[1], [0], [0], [1], [0, 0, 1, 1], [], []>} : vector<64x32xf32>, vector<32x32xf32>, vector<64x32xf32> -> vector<64x32xf32>
    %cst_89 = arith.constant dense<0.000000e+00> : vector<64x32xf32>
    %330 = tpu.matmul %326, %329, %cst_89 {dimension_numbers = #tpu.dot_dimension_numbers<[1], [0], [0], [1], [0, 0, 1, 1], [], []>} : vector<64x64xf32>, vector<64x32xf32>, vector<64x32xf32> -> vector<64x32xf32>
    %331 = arith.addf %304, %330 : vector<64x32xf32>
    %c24_i32_90 = arith.constant 24 : i32
    %332 = vector.broadcast %c24_i32_90 : i32 to vector<1x32xi32>
    %333 = arith.cmpi sge, %215, %332 : vector<1x32xi32>
    %c32_i32 = arith.constant 32 : i32
    %334 = vector.broadcast %c32_i32 : i32 to vector<1x32xi32>
    %335 = arith.cmpi slt, %215, %334 : vector<1x32xi32>
    %336 = arith.andi %333, %335 : vector<1x32xi1>
    %cst_91 = arith.constant 0.000000e+00 : f32
    %337 = vector.shape_cast %336 : vector<1x32xi1> to vector<1x32xi1>
    %338 = vector.broadcast %337 : vector<1x32xi1> to vector<64x32xi1>
    %339 = vector.broadcast %cst_91 : f32 to vector<64x32xf32>
    %340 = arith.select %338, %243, %339 : vector<64x32xi1>, vector<64x32xf32>
    %cst_92 = arith.constant dense<0.000000e+00> : vector<64x64xf32>
    %341 = tpu.matmul %340, %249, %cst_92 {dimension_numbers = #tpu.dot_dimension_numbers<[1], [1], [0], [0], [0, 0, 1, 0], [], []>} : vector<64x32xf32>, vector<64x32xf32>, vector<64x64xf32> -> vector<64x64xf32>
    %cst_93 = arith.constant 0.353553385 : f32
    %342 = vector.broadcast %cst_93 : f32 to vector<64x64xf32>
    %343 = arith.mulf %341, %342 : vector<64x64xf32>
    %cst_94 = arith.constant dense<0xFF800000> : vector<64xf32>
    %344 = vector.multi_reduction <maximumf>, %343, %cst_94 [1] : vector<64x64xf32> to vector<64xf32>
    %345 = vector.shape_cast %344 : vector<64xf32> to vector<64x1xf32>
    %346 = vector.broadcast %345 : vector<64x1xf32> to vector<64x64xf32>
    %347 = arith.subf %343, %346 : vector<64x64xf32>
    %348 = math.exp %347 : vector<64x64xf32>
    %cst_95 = arith.constant dense<0.000000e+00> : vector<64xf32>
    %349 = vector.multi_reduction <add>, %348, %cst_95 [1] : vector<64x64xf32> to vector<64xf32>
    %350 = vector.shape_cast %349 : vector<64xf32> to vector<64x1xf32>
    %351 = tpu.reciprocal %350 {approx = true} : vector<64x1xf32> -> vector<64x1xf32>
    %352 = vector.broadcast %351 : vector<64x1xf32> to vector<64x64xf32>
    %353 = arith.mulf %348, %352 : vector<64x64xf32>
    %c3 = arith.constant 3 : index
    %c0_96 = arith.constant 0 : index
    %c0_97 = arith.constant 0 : index
    %354 = vector.load %arg6[%c3, %c0_96, %c0_97] : memref<8x32x32xf32, #tpu.memory_space<vmem>>, vector<1x32x32xf32>
    %355 = vector.shape_cast %354 : vector<1x32x32xf32> to vector<32x32xf32>
    %cst_98 = arith.constant dense<0.000000e+00> : vector<64x32xf32>
    %356 = tpu.matmul %237, %355, %cst_98 {dimension_numbers = #tpu.dot_dimension_numbers<[1], [0], [0], [1], [0, 0, 1, 1], [], []>} : vector<64x32xf32>, vector<32x32xf32>, vector<64x32xf32> -> vector<64x32xf32>
    %cst_99 = arith.constant dense<0.000000e+00> : vector<64x32xf32>
    %357 = tpu.matmul %353, %356, %cst_99 {dimension_numbers = #tpu.dot_dimension_numbers<[1], [0], [0], [1], [0, 0, 1, 1], [], []>} : vector<64x64xf32>, vector<64x32xf32>, vector<64x32xf32> -> vector<64x32xf32>
    %358 = arith.addf %331, %357 : vector<64x32xf32>
    %359 = arith.addf %214, %358 : vector<64x32xf32>
    %360 = vector.extract_strided_slice %2 {offsets = [10, 0], sizes = [1, 32], strides = [1, 1]} : vector<22x32xf32> to vector<1x32xf32>
    %361 = vector.broadcast %360 : vector<1x32xf32> to vector<64x32xf32>
    %362 = arith.addf %359, %361 : vector<64x32xf32>
    %363 = vector.extract_strided_slice %2 {offsets = [11, 0], sizes = [1, 32], strides = [1, 1]} : vector<22x32xf32> to vector<1x32xf32>
    %364 = vector.extract_strided_slice %2 {offsets = [12, 0], sizes = [1, 32], strides = [1, 1]} : vector<22x32xf32> to vector<1x32xf32>
    %cst_100 = arith.constant dense<0.000000e+00> : vector<64xf32>
    %365 = vector.multi_reduction <add>, %362, %cst_100 [1] : vector<64x32xf32> to vector<64xf32>
    %366 = vector.shape_cast %365 : vector<64xf32> to vector<64x1xf32>
    %cst_101 = arith.constant 3.200000e+01 : f32
    %367 = vector.broadcast %cst_101 : f32 to vector<64x1xf32>
    %368 = arith.divf %366, %367 : vector<64x1xf32>
    %369 = vector.broadcast %368 : vector<64x1xf32> to vector<64x32xf32>
    %370 = arith.subf %362, %369 : vector<64x32xf32>
    %371 = arith.mulf %370, %370 : vector<64x32xf32>
    %cst_102 = arith.constant dense<0.000000e+00> : vector<64xf32>
    %372 = vector.multi_reduction <add>, %371, %cst_102 [1] : vector<64x32xf32> to vector<64xf32>
    %373 = vector.shape_cast %372 : vector<64xf32> to vector<64x1xf32>
    %cst_103 = arith.constant 3.200000e+01 : f32
    %374 = vector.broadcast %cst_103 : f32 to vector<64x1xf32>
    %375 = arith.divf %373, %374 : vector<64x1xf32>
    %cst_104 = arith.constant 9.99999974E-6 : f32
    %376 = vector.broadcast %cst_104 : f32 to vector<64x1xf32>
    %377 = arith.addf %375, %376 : vector<64x1xf32>
    %378 = math.rsqrt %377 : vector<64x1xf32>
    %379 = vector.broadcast %378 : vector<64x1xf32> to vector<64x32xf32>
    %380 = arith.mulf %370, %379 : vector<64x32xf32>
    %381 = vector.broadcast %363 : vector<1x32xf32> to vector<64x32xf32>
    %382 = arith.mulf %380, %381 : vector<64x32xf32>
    %383 = vector.broadcast %364 : vector<1x32xf32> to vector<64x32xf32>
    %384 = arith.addf %382, %383 : vector<64x32xf32>
    %c0_105 = arith.constant 0 : index
    %c0_106 = arith.constant 0 : index
    %c0_107 = arith.constant 0 : index
    %385 = vector.load %arg7[%c0_105, %c0_106, %c0_107] : memref<2x32x64xf32, #tpu.memory_space<vmem>>, vector<1x32x64xf32>
    %386 = vector.shape_cast %385 : vector<1x32x64xf32> to vector<32x64xf32>
    %cst_108 = arith.constant dense<0.000000e+00> : vector<64x64xf32>
    %387 = tpu.matmul %384, %386, %cst_108 {dimension_numbers = #tpu.dot_dimension_numbers<[1], [0], [0], [1], [0, 0, 1, 1], [], []>} : vector<64x32xf32>, vector<32x64xf32>, vector<64x64xf32> -> vector<64x64xf32>
    %388 = vector.extract_strided_slice %4 {offsets = [0, 0], sizes = [1, 64], strides = [1, 1]} : vector<2x64xf32> to vector<1x64xf32>
    %389 = vector.broadcast %388 : vector<1x64xf32> to vector<64x64xf32>
    %390 = arith.addf %387, %389 : vector<64x64xf32>
    %cst_109 = arith.constant 5.000000e-01 : f32
    %391 = vector.broadcast %cst_109 : f32 to vector<64x64xf32>
    %392 = arith.mulf %391, %390 : vector<64x64xf32>
    %cst_110 = arith.constant 0.707106769 : f32
    %393 = vector.broadcast %cst_110 : f32 to vector<64x64xf32>
    %394 = arith.mulf %390, %393 : vector<64x64xf32>
    %395 = math.erf %394 : vector<64x64xf32>
    %cst_111 = arith.constant 1.000000e+00 : f32
    %396 = vector.broadcast %cst_111 : f32 to vector<64x64xf32>
    %397 = arith.addf %396, %395 : vector<64x64xf32>
    %398 = arith.mulf %392, %397 : vector<64x64xf32>
    %c0_112 = arith.constant 0 : index
    %c0_113 = arith.constant 0 : index
    %c0_114 = arith.constant 0 : index
    %399 = vector.load %arg8[%c0_112, %c0_113, %c0_114] : memref<2x64x32xf32, #tpu.memory_space<vmem>>, vector<1x64x32xf32>
    %400 = vector.shape_cast %399 : vector<1x64x32xf32> to vector<64x32xf32>
    %cst_115 = arith.constant dense<0.000000e+00> : vector<64x32xf32>
    %401 = tpu.matmul %398, %400, %cst_115 {dimension_numbers = #tpu.dot_dimension_numbers<[1], [0], [0], [1], [0, 0, 1, 1], [], []>} : vector<64x64xf32>, vector<64x32xf32>, vector<64x32xf32> -> vector<64x32xf32>
    %402 = arith.addf %362, %401 : vector<64x32xf32>
    %403 = vector.extract_strided_slice %2 {offsets = [13, 0], sizes = [1, 32], strides = [1, 1]} : vector<22x32xf32> to vector<1x32xf32>
    %404 = vector.broadcast %403 : vector<1x32xf32> to vector<64x32xf32>
    %405 = arith.addf %402, %404 : vector<64x32xf32>
    %406 = vector.extract_strided_slice %2 {offsets = [14, 0], sizes = [1, 32], strides = [1, 1]} : vector<22x32xf32> to vector<1x32xf32>
    %407 = vector.extract_strided_slice %2 {offsets = [15, 0], sizes = [1, 32], strides = [1, 1]} : vector<22x32xf32> to vector<1x32xf32>
    %cst_116 = arith.constant dense<0.000000e+00> : vector<64xf32>
    %408 = vector.multi_reduction <add>, %405, %cst_116 [1] : vector<64x32xf32> to vector<64xf32>
    %409 = vector.shape_cast %408 : vector<64xf32> to vector<64x1xf32>
    %cst_117 = arith.constant 3.200000e+01 : f32
    %410 = vector.broadcast %cst_117 : f32 to vector<64x1xf32>
    %411 = arith.divf %409, %410 : vector<64x1xf32>
    %412 = vector.broadcast %411 : vector<64x1xf32> to vector<64x32xf32>
    %413 = arith.subf %405, %412 : vector<64x32xf32>
    %414 = arith.mulf %413, %413 : vector<64x32xf32>
    %cst_118 = arith.constant dense<0.000000e+00> : vector<64xf32>
    %415 = vector.multi_reduction <add>, %414, %cst_118 [1] : vector<64x32xf32> to vector<64xf32>
    %416 = vector.shape_cast %415 : vector<64xf32> to vector<64x1xf32>
    %cst_119 = arith.constant 3.200000e+01 : f32
    %417 = vector.broadcast %cst_119 : f32 to vector<64x1xf32>
    %418 = arith.divf %416, %417 : vector<64x1xf32>
    %cst_120 = arith.constant 9.99999974E-6 : f32
    %419 = vector.broadcast %cst_120 : f32 to vector<64x1xf32>
    %420 = arith.addf %418, %419 : vector<64x1xf32>
    %421 = math.rsqrt %420 : vector<64x1xf32>
    %422 = vector.broadcast %421 : vector<64x1xf32> to vector<64x32xf32>
    %423 = arith.mulf %413, %422 : vector<64x32xf32>
    %424 = vector.broadcast %406 : vector<1x32xf32> to vector<64x32xf32>
    %425 = arith.mulf %423, %424 : vector<64x32xf32>
    %426 = vector.broadcast %407 : vector<1x32xf32> to vector<64x32xf32>
    %427 = arith.addf %425, %426 : vector<64x32xf32>
    %c1_121 = arith.constant 1 : index
    %c0_122 = arith.constant 0 : index
    %c0_123 = arith.constant 0 : index
    %428 = vector.load %arg4[%c1_121, %c0_122, %c0_123] : memref<2x32x32xf32, #tpu.memory_space<vmem>>, vector<1x32x32xf32>
    %429 = vector.shape_cast %428 : vector<1x32x32xf32> to vector<32x32xf32>
    %cst_124 = arith.constant dense<0.000000e+00> : vector<64x32xf32>
    %430 = tpu.matmul %427, %429, %cst_124 {dimension_numbers = #tpu.dot_dimension_numbers<[1], [0], [0], [1], [0, 0, 1, 1], [], []>} : vector<64x32xf32>, vector<32x32xf32>, vector<64x32xf32> -> vector<64x32xf32>
    %431 = vector.extract_strided_slice %2 {offsets = [16, 0], sizes = [1, 32], strides = [1, 1]} : vector<22x32xf32> to vector<1x32xf32>
    %432 = vector.broadcast %431 : vector<1x32xf32> to vector<64x32xf32>
    %433 = arith.addf %430, %432 : vector<64x32xf32>
    %c1_125 = arith.constant 1 : index
    %c0_126 = arith.constant 0 : index
    %c0_127 = arith.constant 0 : index
    %434 = vector.load %arg5[%c1_125, %c0_126, %c0_127] : memref<2x32x32xf32, #tpu.memory_space<vmem>>, vector<1x32x32xf32>
    %435 = vector.shape_cast %434 : vector<1x32x32xf32> to vector<32x32xf32>
    %cst_128 = arith.constant dense<0.000000e+00> : vector<64x32xf32>
    %436 = tpu.matmul %427, %435, %cst_128 {dimension_numbers = #tpu.dot_dimension_numbers<[1], [0], [0], [1], [0, 0, 1, 1], [], []>} : vector<64x32xf32>, vector<32x32xf32>, vector<64x32xf32> -> vector<64x32xf32>
    %437 = vector.extract_strided_slice %2 {offsets = [17, 0], sizes = [1, 32], strides = [1, 1]} : vector<22x32xf32> to vector<1x32xf32>
    %438 = vector.broadcast %437 : vector<1x32xf32> to vector<64x32xf32>
    %439 = arith.addf %436, %438 : vector<64x32xf32>
    %cst_129 = arith.constant 0.000000e+00 : f32
    %440 = vector.broadcast %cst_129 : f32 to vector<64x32xf32>
    %c0_i32_130 = arith.constant 0 : i32
    %441 = vector.broadcast %c0_i32_130 : i32 to vector<1x32xi32>
    %442 = arith.cmpi sge, %215, %441 : vector<1x32xi32>
    %c8_i32_131 = arith.constant 8 : i32
    %443 = vector.broadcast %c8_i32_131 : i32 to vector<1x32xi32>
    %444 = arith.cmpi slt, %215, %443 : vector<1x32xi32>
    %445 = arith.andi %442, %444 : vector<1x32xi1>
    %cst_132 = arith.constant 0.000000e+00 : f32
    %446 = vector.shape_cast %445 : vector<1x32xi1> to vector<1x32xi1>
    %447 = vector.broadcast %446 : vector<1x32xi1> to vector<64x32xi1>
    %448 = vector.broadcast %cst_132 : f32 to vector<64x32xf32>
    %449 = arith.select %447, %433, %448 : vector<64x32xi1>, vector<64x32xf32>
    %cst_133 = arith.constant dense<0.000000e+00> : vector<64x64xf32>
    %450 = tpu.matmul %449, %439, %cst_133 {dimension_numbers = #tpu.dot_dimension_numbers<[1], [1], [0], [0], [0, 0, 1, 0], [], []>} : vector<64x32xf32>, vector<64x32xf32>, vector<64x64xf32> -> vector<64x64xf32>
    %cst_134 = arith.constant 0.353553385 : f32
    %451 = vector.broadcast %cst_134 : f32 to vector<64x64xf32>
    %452 = arith.mulf %450, %451 : vector<64x64xf32>
    %cst_135 = arith.constant dense<0xFF800000> : vector<64xf32>
    %453 = vector.multi_reduction <maximumf>, %452, %cst_135 [1] : vector<64x64xf32> to vector<64xf32>
    %454 = vector.shape_cast %453 : vector<64xf32> to vector<64x1xf32>
    %455 = vector.broadcast %454 : vector<64x1xf32> to vector<64x64xf32>
    %456 = arith.subf %452, %455 : vector<64x64xf32>
    %457 = math.exp %456 : vector<64x64xf32>
    %cst_136 = arith.constant dense<0.000000e+00> : vector<64xf32>
    %458 = vector.multi_reduction <add>, %457, %cst_136 [1] : vector<64x64xf32> to vector<64xf32>
    %459 = vector.shape_cast %458 : vector<64xf32> to vector<64x1xf32>
    %460 = tpu.reciprocal %459 {approx = true} : vector<64x1xf32> -> vector<64x1xf32>
    %461 = vector.broadcast %460 : vector<64x1xf32> to vector<64x64xf32>
    %462 = arith.mulf %457, %461 : vector<64x64xf32>
    %c4 = arith.constant 4 : index
    %c0_137 = arith.constant 0 : index
    %c0_138 = arith.constant 0 : index
    %463 = vector.load %arg6[%c4, %c0_137, %c0_138] : memref<8x32x32xf32, #tpu.memory_space<vmem>>, vector<1x32x32xf32>
    %464 = vector.shape_cast %463 : vector<1x32x32xf32> to vector<32x32xf32>
    %cst_139 = arith.constant dense<0.000000e+00> : vector<64x32xf32>
    %465 = tpu.matmul %427, %464, %cst_139 {dimension_numbers = #tpu.dot_dimension_numbers<[1], [0], [0], [1], [0, 0, 1, 1], [], []>} : vector<64x32xf32>, vector<32x32xf32>, vector<64x32xf32> -> vector<64x32xf32>
    %cst_140 = arith.constant dense<0.000000e+00> : vector<64x32xf32>
    %466 = tpu.matmul %462, %465, %cst_140 {dimension_numbers = #tpu.dot_dimension_numbers<[1], [0], [0], [1], [0, 0, 1, 1], [], []>} : vector<64x64xf32>, vector<64x32xf32>, vector<64x32xf32> -> vector<64x32xf32>
    %467 = arith.addf %440, %466 : vector<64x32xf32>
    %c8_i32_141 = arith.constant 8 : i32
    %468 = vector.broadcast %c8_i32_141 : i32 to vector<1x32xi32>
    %469 = arith.cmpi sge, %215, %468 : vector<1x32xi32>
    %c16_i32_142 = arith.constant 16 : i32
    %470 = vector.broadcast %c16_i32_142 : i32 to vector<1x32xi32>
    %471 = arith.cmpi slt, %215, %470 : vector<1x32xi32>
    %472 = arith.andi %469, %471 : vector<1x32xi1>
    %cst_143 = arith.constant 0.000000e+00 : f32
    %473 = vector.shape_cast %472 : vector<1x32xi1> to vector<1x32xi1>
    %474 = vector.broadcast %473 : vector<1x32xi1> to vector<64x32xi1>
    %475 = vector.broadcast %cst_143 : f32 to vector<64x32xf32>
    %476 = arith.select %474, %433, %475 : vector<64x32xi1>, vector<64x32xf32>
    %cst_144 = arith.constant dense<0.000000e+00> : vector<64x64xf32>
    %477 = tpu.matmul %476, %439, %cst_144 {dimension_numbers = #tpu.dot_dimension_numbers<[1], [1], [0], [0], [0, 0, 1, 0], [], []>} : vector<64x32xf32>, vector<64x32xf32>, vector<64x64xf32> -> vector<64x64xf32>
    %cst_145 = arith.constant 0.353553385 : f32
    %478 = vector.broadcast %cst_145 : f32 to vector<64x64xf32>
    %479 = arith.mulf %477, %478 : vector<64x64xf32>
    %cst_146 = arith.constant dense<0xFF800000> : vector<64xf32>
    %480 = vector.multi_reduction <maximumf>, %479, %cst_146 [1] : vector<64x64xf32> to vector<64xf32>
    %481 = vector.shape_cast %480 : vector<64xf32> to vector<64x1xf32>
    %482 = vector.broadcast %481 : vector<64x1xf32> to vector<64x64xf32>
    %483 = arith.subf %479, %482 : vector<64x64xf32>
    %484 = math.exp %483 : vector<64x64xf32>
    %cst_147 = arith.constant dense<0.000000e+00> : vector<64xf32>
    %485 = vector.multi_reduction <add>, %484, %cst_147 [1] : vector<64x64xf32> to vector<64xf32>
    %486 = vector.shape_cast %485 : vector<64xf32> to vector<64x1xf32>
    %487 = tpu.reciprocal %486 {approx = true} : vector<64x1xf32> -> vector<64x1xf32>
    %488 = vector.broadcast %487 : vector<64x1xf32> to vector<64x64xf32>
    %489 = arith.mulf %484, %488 : vector<64x64xf32>
    %c5 = arith.constant 5 : index
    %c0_148 = arith.constant 0 : index
    %c0_149 = arith.constant 0 : index
    %490 = vector.load %arg6[%c5, %c0_148, %c0_149] : memref<8x32x32xf32, #tpu.memory_space<vmem>>, vector<1x32x32xf32>
    %491 = vector.shape_cast %490 : vector<1x32x32xf32> to vector<32x32xf32>
    %cst_150 = arith.constant dense<0.000000e+00> : vector<64x32xf32>
    %492 = tpu.matmul %427, %491, %cst_150 {dimension_numbers = #tpu.dot_dimension_numbers<[1], [0], [0], [1], [0, 0, 1, 1], [], []>} : vector<64x32xf32>, vector<32x32xf32>, vector<64x32xf32> -> vector<64x32xf32>
    %cst_151 = arith.constant dense<0.000000e+00> : vector<64x32xf32>
    %493 = tpu.matmul %489, %492, %cst_151 {dimension_numbers = #tpu.dot_dimension_numbers<[1], [0], [0], [1], [0, 0, 1, 1], [], []>} : vector<64x64xf32>, vector<64x32xf32>, vector<64x32xf32> -> vector<64x32xf32>
    %494 = arith.addf %467, %493 : vector<64x32xf32>
    %c16_i32_152 = arith.constant 16 : i32
    %495 = vector.broadcast %c16_i32_152 : i32 to vector<1x32xi32>
    %496 = arith.cmpi sge, %215, %495 : vector<1x32xi32>
    %c24_i32_153 = arith.constant 24 : i32
    %497 = vector.broadcast %c24_i32_153 : i32 to vector<1x32xi32>
    %498 = arith.cmpi slt, %215, %497 : vector<1x32xi32>
    %499 = arith.andi %496, %498 : vector<1x32xi1>
    %cst_154 = arith.constant 0.000000e+00 : f32
    %500 = vector.shape_cast %499 : vector<1x32xi1> to vector<1x32xi1>
    %501 = vector.broadcast %500 : vector<1x32xi1> to vector<64x32xi1>
    %502 = vector.broadcast %cst_154 : f32 to vector<64x32xf32>
    %503 = arith.select %501, %433, %502 : vector<64x32xi1>, vector<64x32xf32>
    %cst_155 = arith.constant dense<0.000000e+00> : vector<64x64xf32>
    %504 = tpu.matmul %503, %439, %cst_155 {dimension_numbers = #tpu.dot_dimension_numbers<[1], [1], [0], [0], [0, 0, 1, 0], [], []>} : vector<64x32xf32>, vector<64x32xf32>, vector<64x64xf32> -> vector<64x64xf32>
    %cst_156 = arith.constant 0.353553385 : f32
    %505 = vector.broadcast %cst_156 : f32 to vector<64x64xf32>
    %506 = arith.mulf %504, %505 : vector<64x64xf32>
    %cst_157 = arith.constant dense<0xFF800000> : vector<64xf32>
    %507 = vector.multi_reduction <maximumf>, %506, %cst_157 [1] : vector<64x64xf32> to vector<64xf32>
    %508 = vector.shape_cast %507 : vector<64xf32> to vector<64x1xf32>
    %509 = vector.broadcast %508 : vector<64x1xf32> to vector<64x64xf32>
    %510 = arith.subf %506, %509 : vector<64x64xf32>
    %511 = math.exp %510 : vector<64x64xf32>
    %cst_158 = arith.constant dense<0.000000e+00> : vector<64xf32>
    %512 = vector.multi_reduction <add>, %511, %cst_158 [1] : vector<64x64xf32> to vector<64xf32>
    %513 = vector.shape_cast %512 : vector<64xf32> to vector<64x1xf32>
    %514 = tpu.reciprocal %513 {approx = true} : vector<64x1xf32> -> vector<64x1xf32>
    %515 = vector.broadcast %514 : vector<64x1xf32> to vector<64x64xf32>
    %516 = arith.mulf %511, %515 : vector<64x64xf32>
    %c6 = arith.constant 6 : index
    %c0_159 = arith.constant 0 : index
    %c0_160 = arith.constant 0 : index
    %517 = vector.load %arg6[%c6, %c0_159, %c0_160] : memref<8x32x32xf32, #tpu.memory_space<vmem>>, vector<1x32x32xf32>
    %518 = vector.shape_cast %517 : vector<1x32x32xf32> to vector<32x32xf32>
    %cst_161 = arith.constant dense<0.000000e+00> : vector<64x32xf32>
    %519 = tpu.matmul %427, %518, %cst_161 {dimension_numbers = #tpu.dot_dimension_numbers<[1], [0], [0], [1], [0, 0, 1, 1], [], []>} : vector<64x32xf32>, vector<32x32xf32>, vector<64x32xf32> -> vector<64x32xf32>
    %cst_162 = arith.constant dense<0.000000e+00> : vector<64x32xf32>
    %520 = tpu.matmul %516, %519, %cst_162 {dimension_numbers = #tpu.dot_dimension_numbers<[1], [0], [0], [1], [0, 0, 1, 1], [], []>} : vector<64x64xf32>, vector<64x32xf32>, vector<64x32xf32> -> vector<64x32xf32>
    %521 = arith.addf %494, %520 : vector<64x32xf32>
    %c24_i32_163 = arith.constant 24 : i32
    %522 = vector.broadcast %c24_i32_163 : i32 to vector<1x32xi32>
    %523 = arith.cmpi sge, %215, %522 : vector<1x32xi32>
    %c32_i32_164 = arith.constant 32 : i32
    %524 = vector.broadcast %c32_i32_164 : i32 to vector<1x32xi32>
    %525 = arith.cmpi slt, %215, %524 : vector<1x32xi32>
    %526 = arith.andi %523, %525 : vector<1x32xi1>
    %cst_165 = arith.constant 0.000000e+00 : f32
    %527 = vector.shape_cast %526 : vector<1x32xi1> to vector<1x32xi1>
    %528 = vector.broadcast %527 : vector<1x32xi1> to vector<64x32xi1>
    %529 = vector.broadcast %cst_165 : f32 to vector<64x32xf32>
    %530 = arith.select %528, %433, %529 : vector<64x32xi1>, vector<64x32xf32>
    %cst_166 = arith.constant dense<0.000000e+00> : vector<64x64xf32>
    %531 = tpu.matmul %530, %439, %cst_166 {dimension_numbers = #tpu.dot_dimension_numbers<[1], [1], [0], [0], [0, 0, 1, 0], [], []>} : vector<64x32xf32>, vector<64x32xf32>, vector<64x64xf32> -> vector<64x64xf32>
    %cst_167 = arith.constant 0.353553385 : f32
    %532 = vector.broadcast %cst_167 : f32 to vector<64x64xf32>
    %533 = arith.mulf %531, %532 : vector<64x64xf32>
    %cst_168 = arith.constant dense<0xFF800000> : vector<64xf32>
    %534 = vector.multi_reduction <maximumf>, %533, %cst_168 [1] : vector<64x64xf32> to vector<64xf32>
    %535 = vector.shape_cast %534 : vector<64xf32> to vector<64x1xf32>
    %536 = vector.broadcast %535 : vector<64x1xf32> to vector<64x64xf32>
    %537 = arith.subf %533, %536 : vector<64x64xf32>
    %538 = math.exp %537 : vector<64x64xf32>
    %cst_169 = arith.constant dense<0.000000e+00> : vector<64xf32>
    %539 = vector.multi_reduction <add>, %538, %cst_169 [1] : vector<64x64xf32> to vector<64xf32>
    %540 = vector.shape_cast %539 : vector<64xf32> to vector<64x1xf32>
    %541 = tpu.reciprocal %540 {approx = true} : vector<64x1xf32> -> vector<64x1xf32>
    %542 = vector.broadcast %541 : vector<64x1xf32> to vector<64x64xf32>
    %543 = arith.mulf %538, %542 : vector<64x64xf32>
    %c7 = arith.constant 7 : index
    %c0_170 = arith.constant 0 : index
    %c0_171 = arith.constant 0 : index
    %544 = vector.load %arg6[%c7, %c0_170, %c0_171] : memref<8x32x32xf32, #tpu.memory_space<vmem>>, vector<1x32x32xf32>
    %545 = vector.shape_cast %544 : vector<1x32x32xf32> to vector<32x32xf32>
    %cst_172 = arith.constant dense<0.000000e+00> : vector<64x32xf32>
    %546 = tpu.matmul %427, %545, %cst_172 {dimension_numbers = #tpu.dot_dimension_numbers<[1], [0], [0], [1], [0, 0, 1, 1], [], []>} : vector<64x32xf32>, vector<32x32xf32>, vector<64x32xf32> -> vector<64x32xf32>
    %cst_173 = arith.constant dense<0.000000e+00> : vector<64x32xf32>
    %547 = tpu.matmul %543, %546, %cst_173 {dimension_numbers = #tpu.dot_dimension_numbers<[1], [0], [0], [1], [0, 0, 1, 1], [], []>} : vector<64x64xf32>, vector<64x32xf32>, vector<64x32xf32> -> vector<64x32xf32>
    %548 = arith.addf %521, %547 : vector<64x32xf32>
    %549 = arith.addf %405, %548 : vector<64x32xf32>
    %550 = vector.extract_strided_slice %2 {offsets = [18, 0], sizes = [1, 32], strides = [1, 1]} : vector<22x32xf32> to vector<1x32xf32>
    %551 = vector.broadcast %550 : vector<1x32xf32> to vector<64x32xf32>
    %552 = arith.addf %549, %551 : vector<64x32xf32>
    %553 = vector.extract_strided_slice %2 {offsets = [19, 0], sizes = [1, 32], strides = [1, 1]} : vector<22x32xf32> to vector<1x32xf32>
    %554 = vector.extract_strided_slice %2 {offsets = [20, 0], sizes = [1, 32], strides = [1, 1]} : vector<22x32xf32> to vector<1x32xf32>
    %cst_174 = arith.constant dense<0.000000e+00> : vector<64xf32>
    %555 = vector.multi_reduction <add>, %552, %cst_174 [1] : vector<64x32xf32> to vector<64xf32>
    %556 = vector.shape_cast %555 : vector<64xf32> to vector<64x1xf32>
    %cst_175 = arith.constant 3.200000e+01 : f32
    %557 = vector.broadcast %cst_175 : f32 to vector<64x1xf32>
    %558 = arith.divf %556, %557 : vector<64x1xf32>
    %559 = vector.broadcast %558 : vector<64x1xf32> to vector<64x32xf32>
    %560 = arith.subf %552, %559 : vector<64x32xf32>
    %561 = arith.mulf %560, %560 : vector<64x32xf32>
    %cst_176 = arith.constant dense<0.000000e+00> : vector<64xf32>
    %562 = vector.multi_reduction <add>, %561, %cst_176 [1] : vector<64x32xf32> to vector<64xf32>
    %563 = vector.shape_cast %562 : vector<64xf32> to vector<64x1xf32>
    %cst_177 = arith.constant 3.200000e+01 : f32
    %564 = vector.broadcast %cst_177 : f32 to vector<64x1xf32>
    %565 = arith.divf %563, %564 : vector<64x1xf32>
    %cst_178 = arith.constant 9.99999974E-6 : f32
    %566 = vector.broadcast %cst_178 : f32 to vector<64x1xf32>
    %567 = arith.addf %565, %566 : vector<64x1xf32>
    %568 = math.rsqrt %567 : vector<64x1xf32>
    %569 = vector.broadcast %568 : vector<64x1xf32> to vector<64x32xf32>
    %570 = arith.mulf %560, %569 : vector<64x32xf32>
    %571 = vector.broadcast %553 : vector<1x32xf32> to vector<64x32xf32>
    %572 = arith.mulf %570, %571 : vector<64x32xf32>
    %573 = vector.broadcast %554 : vector<1x32xf32> to vector<64x32xf32>
    %574 = arith.addf %572, %573 : vector<64x32xf32>
    %c1_179 = arith.constant 1 : index
    %c0_180 = arith.constant 0 : index
    %c0_181 = arith.constant 0 : index
    %575 = vector.load %arg7[%c1_179, %c0_180, %c0_181] : memref<2x32x64xf32, #tpu.memory_space<vmem>>, vector<1x32x64xf32>
    %576 = vector.shape_cast %575 : vector<1x32x64xf32> to vector<32x64xf32>
    %cst_182 = arith.constant dense<0.000000e+00> : vector<64x64xf32>
    %577 = tpu.matmul %574, %576, %cst_182 {dimension_numbers = #tpu.dot_dimension_numbers<[1], [0], [0], [1], [0, 0, 1, 1], [], []>} : vector<64x32xf32>, vector<32x64xf32>, vector<64x64xf32> -> vector<64x64xf32>
    %578 = vector.extract_strided_slice %4 {offsets = [1, 0], sizes = [1, 64], strides = [1, 1]} : vector<2x64xf32> to vector<1x64xf32>
    %579 = vector.broadcast %578 : vector<1x64xf32> to vector<64x64xf32>
    %580 = arith.addf %577, %579 : vector<64x64xf32>
    %cst_183 = arith.constant 5.000000e-01 : f32
    %581 = vector.broadcast %cst_183 : f32 to vector<64x64xf32>
    %582 = arith.mulf %581, %580 : vector<64x64xf32>
    %cst_184 = arith.constant 0.707106769 : f32
    %583 = vector.broadcast %cst_184 : f32 to vector<64x64xf32>
    %584 = arith.mulf %580, %583 : vector<64x64xf32>
    %585 = math.erf %584 : vector<64x64xf32>
    %cst_185 = arith.constant 1.000000e+00 : f32
    %586 = vector.broadcast %cst_185 : f32 to vector<64x64xf32>
    %587 = arith.addf %586, %585 : vector<64x64xf32>
    %588 = arith.mulf %582, %587 : vector<64x64xf32>
    %c1_186 = arith.constant 1 : index
    %c0_187 = arith.constant 0 : index
    %c0_188 = arith.constant 0 : index
    %589 = vector.load %arg8[%c1_186, %c0_187, %c0_188] : memref<2x64x32xf32, #tpu.memory_space<vmem>>, vector<1x64x32xf32>
    %590 = vector.shape_cast %589 : vector<1x64x32xf32> to vector<64x32xf32>
    %cst_189 = arith.constant dense<0.000000e+00> : vector<64x32xf32>
    %591 = tpu.matmul %588, %590, %cst_189 {dimension_numbers = #tpu.dot_dimension_numbers<[1], [0], [0], [1], [0, 0, 1, 1], [], []>} : vector<64x64xf32>, vector<64x32xf32>, vector<64x32xf32> -> vector<64x32xf32>
    %592 = arith.addf %552, %591 : vector<64x32xf32>
    %593 = vector.extract_strided_slice %2 {offsets = [21, 0], sizes = [1, 32], strides = [1, 1]} : vector<22x32xf32> to vector<1x32xf32>
    %594 = vector.broadcast %593 : vector<1x32xf32> to vector<64x32xf32>
    %595 = arith.addf %592, %594 : vector<64x32xf32>
    %596 = arith.addf %214, %595 : vector<64x32xf32>
    %c0_190 = arith.constant 0 : index
    %c0_191 = arith.constant 0 : index
    %c0_192 = arith.constant 0 : index
    %597 = vector.load %arg11[%c0_190, %c0_191, %c0_192] : memref<1x64x32xf32, #tpu.memory_space<vmem>>, vector<1x64x32xf32>
    %598 = vector.shape_cast %597 : vector<1x64x32xf32> to vector<64x32xf32>
    %599 = vector.shape_cast %596 : vector<64x32xf32> to vector<1x64x32xf32>
    tpu.vector_store %arg11[%c0_190, %c0_191, %c0_192], %599 {strides = array<i32>} : memref<1x64x32xf32, #tpu.memory_space<vmem>>, vector<1x64x32xf32>,
    return
  }
  func.func @transform_0(%arg0: i32) -> (i32, i32, i32) {
    %c0_i32 = arith.constant 0 : i32
    %c0_i32_0 = arith.constant 0 : i32
    %c0_i32_1 = arith.constant 0 : i32
    return %arg0, %c0_i32, %c0_i32_0 : i32, i32, i32
  }
  func.func @transform_1(%arg0: i32) -> (i32, i32) {
    %c0_i32 = arith.constant 0 : i32
    %c0_i32_0 = arith.constant 0 : i32
    %c0_i32_1 = arith.constant 0 : i32
    return %c0_i32, %c0_i32_0 : i32, i32
  }
  func.func @transform_2(%arg0: i32) -> (i32, i32) {
    %c0_i32 = arith.constant 0 : i32
    %c0_i32_0 = arith.constant 0 : i32
    %c0_i32_1 = arith.constant 0 : i32
    return %c0_i32, %c0_i32_0 : i32, i32
  }
  func.func @transform_3(%arg0: i32) -> (i32, i32, i32) {
    %c0_i32 = arith.constant 0 : i32
    %c0_i32_0 = arith.constant 0 : i32
    %c0_i32_1 = arith.constant 0 : i32
    %c0_i32_2 = arith.constant 0 : i32
    return %c0_i32, %c0_i32_0, %c0_i32_1 : i32, i32, i32
  }
  func.func @transform_4(%arg0: i32) -> (i32, i32, i32) {
    %c0_i32 = arith.constant 0 : i32
    %c0_i32_0 = arith.constant 0 : i32
    %c0_i32_1 = arith.constant 0 : i32
    %c0_i32_2 = arith.constant 0 : i32
    return %c0_i32, %c0_i32_0, %c0_i32_1 : i32, i32, i32
  }
  func.func @transform_5(%arg0: i32) -> (i32, i32, i32) {
    %c0_i32 = arith.constant 0 : i32
    %c0_i32_0 = arith.constant 0 : i32
    %c0_i32_1 = arith.constant 0 : i32
    %c0_i32_2 = arith.constant 0 : i32
    return %c0_i32, %c0_i32_0, %c0_i32_1 : i32, i32, i32
  }
  func.func @transform_6(%arg0: i32) -> (i32, i32, i32) {
    %c0_i32 = arith.constant 0 : i32
    %c0_i32_0 = arith.constant 0 : i32
    %c0_i32_1 = arith.constant 0 : i32
    %c0_i32_2 = arith.constant 0 : i32
    return %c0_i32, %c0_i32_0, %c0_i32_1 : i32, i32, i32
  }
  func.func @transform_7(%arg0: i32) -> (i32, i32, i32) {
    %c0_i32 = arith.constant 0 : i32
    %c0_i32_0 = arith.constant 0 : i32
    %c0_i32_1 = arith.constant 0 : i32
    %c0_i32_2 = arith.constant 0 : i32
    return %c0_i32, %c0_i32_0, %c0_i32_1 : i32, i32, i32
  }
  func.func @transform_8(%arg0: i32) -> (i32, i32) {
    %c0_i32 = arith.constant 0 : i32
    %c0_i32_0 = arith.constant 0 : i32
    %c0_i32_1 = arith.constant 0 : i32
    return %c0_i32, %c0_i32_0 : i32, i32
  }
  func.func @transform_9(%arg0: i32) -> (i32, i32) {
    %c0_i32 = arith.constant 0 : i32
    %c0_i32_0 = arith.constant 0 : i32
    %c0_i32_1 = arith.constant 0 : i32
    return %c0_i32, %c0_i32_0 : i32, i32
  }
  func.func @transform_10(%arg0: i32) -> (i32, i32, i32) {
    %c0_i32 = arith.constant 0 : i32
    %c0_i32_0 = arith.constant 0 : i32
    %c0_i32_1 = arith.constant 0 : i32
    return %arg0, %c0_i32, %c0_i32_0 : i32, i32, i32
  }
}

</mosaic_0001>

<llo_original>
// kernel: mobilevit_block.1
$region0: #{mobilevit_block.1}
  #allocation0 [shape = 'u32[]', space=smem, size = 0x4, offset = 0x4, fixed_abs, tag = 'smem constant byte address 0x4 - core index']
  #allocation1 [shape = 'u32[144,128]{1,0:T(1,128)}', space=vmem, size = 0x12000, scoped, tag = 'internal scratch']
  %s0 = inlined_call_operand.vmem [shape: f32[2,64,32], index: 0, kind: input, shape index: {}]
  %s1 = inlined_call_operand.hbm [shape: f32[9,32], index: 1, kind: input, shape index: {}]
  %s2 = inlined_call_operand.hbm [shape: f32[32,32], index: 2, kind: input, shape index: {}]
  %s3 = inlined_call_operand.vmem [shape: f32[2,32,32], index: 3, kind: input, shape index: {}]
  %s4 = inlined_call_operand.hbm [shape: f32[2,32,32], index: 4, kind: input, shape index: {}]
  %s5 = inlined_call_operand.hbm [shape: f32[8,32,32], index: 5, kind: input, shape index: {}]
  %s6 = inlined_call_operand.hbm [shape: f32[2,32,64], index: 6, kind: input, shape index: {}]
  %s7 = inlined_call_operand.vmem [shape: f32[2,64,32], index: 7, kind: input, shape index: {}]
  %s8 = inlined_call_operand.hbm [shape: f32[22,32], index: 8, kind: input, shape index: {}]
  %s9 = inlined_call_operand.vmem [shape: f32[2,64], index: 9, kind: input, shape index: {}]
  %s10 = inlined_call_operand.hbm [shape: f32[2,64,32], index: 10, kind: output, shape index: {}]
  %s11 = sld [smem:[#allocation0]]
  $region97: #{mobilevit_block.1} parent=0
    _
  %s13 = ssub.s32 1, %s11
  %s14 = scalar_select 0, %s13, %s11
  $region1: #{mobilevit_block.1} parent=0
    #allocation2 [shape = 'u8[8192]{0}', space=vmem, size = 0x2000, scoped, tag = 'input window, operand 1, single buffered']
    #allocation3 [shape = 's32[2]{0}', space=sflag, size = 0x8, scoped, tag = 'scoped memory for mobilevit_block.1']
    #allocation4 [shape = 's32[2]{0}', space=sflag, size = 0x8, scoped, tag = 'scoped memory for mobilevit_block.1']
    #allocation5 [shape = 'u8[16384]{0}', space=vmem, size = 0x4000, scoped, tag = 'input window, operand 2, single buffered']
    #allocation6 [shape = 's32[1]{0}', space=sflag, size = 0x4, scoped, tag = 'scoped memory for mobilevit_block.1']
    #allocation7 [shape = 'u8[32768]{0}', space=vmem, size = 0x8000, scoped, tag = 'input window, operand 4, single buffered']
    #allocation8 [shape = 'u8[131072]{0}', space=vmem, size = 0x20000, scoped, tag = 'input window, operand 5, single buffered']
    #allocation9 [shape = 's32[1]{0}', space=sflag, size = 0x4, scoped, tag = 'scoped memory for mobilevit_block.1']
    #allocation10 [shape = 'u8[32768]{0}', space=vmem, size = 0x8000, scoped, tag = 'input window, operand 6, single buffered']
    #allocation11 [shape = 'u8[12288]{0}', space=vmem, size = 0x3000, scoped, tag = 'input window, operand 8, single buffered']
    #allocation12 [shape = 's32[1]{0}', space=sflag, size = 0x4, scoped, tag = 'scoped memory for mobilevit_block.1']
    #allocation13 [shape = 'u8[65536]{0}', space=vmem, size = 0x10000, scoped, tag = 'output window, operand 0']
    %15 = vsyncpa [#allocation3], 0
    %16 = vsyncpa [#allocation6], 0
    %17 = vsyncpa [#allocation9], 0
    %18 = vsyncpa [#allocation12], 0
    %19 = vsyncpa [#allocation4], 0
    %s20 = scalar_lea.sflag [#allocation4], 1
    %21 = vsyncpa %s20, 0
    loop: start=0, step=1, limit=4
    $region2: #{mobilevit_block.1} parent=1 // loop_pre_header
      _
    $region3: #{mobilevit_block.1} parent=1 // loop_header
      %s23 = sphi 0, %s27
      %p24 = scmp.ge.s32.totalorder %s23, 4
      %s33 = sphi 0, %s35
      %s36 = sphi 0, %s33
      %s37 = sphi 0, %s36
      %s53 = sphi 0, %s37
      %s57 = sphi 0, %s57
      %s59 = sphi 0, %s57
      %s60 = sphi 0, %s59
      %s74 = sphi 0, %s60
      %s78 = sphi 0, %s78
      %s80 = sphi 0, %s78
      %s81 = sphi 0, %s80
      %s95 = sphi 0, %s81
      %s99 = sphi 0, %s99
      %s101 = sphi 0, %s99
      %s102 = sphi 0, %s101
      %s116 = sphi 0, %s102
      %s120 = sphi 0, %s120
      %s122 = sphi 0, %s120
      %s123 = sphi 0, %s122
      %s137 = sphi 0, %s123
      %s141 = sphi 0, %s141
      %s143 = sphi 0, %s141
      %s144 = sphi 0, %s143
      %s158 = sphi 0, %s144
      %s162 = sphi 0, %s162
      %s164 = sphi 0, %s162
      %s165 = sphi 0, %s164
      %s179 = sphi 0, %s165
      %s183 = sphi 0, %s183
      %s185 = sphi 0, %s183
      %s186 = sphi 0, %s185
      %s200 = sphi 0, %s186
      %s204 = sphi 0, %s204
      %s206 = sphi 0, %s204
      %s207 = sphi 0, %s206
      %s221 = sphi 0, %s207
      %s225 = sphi 0, %s225
      %s227 = sphi 0, %s225
      %s228 = sphi 0, %s227
      %s242 = sphi 0, %s228
      %s248 = sphi 0, %s250
      %s251 = sphi 0, %s248
      %s252 = sphi 0, %s251
      %s268 = sphi 0, %s252
    $region4: #{mobilevit_block.1} parent=1 // loop_header_branch
      %26 = sbr.rel (%p24) target = $region8
    $region5: #{mobilevit_block.1} parent=1 // loop_body
      %s28 = ssub.s32 %s23, 1
      %s29 = ssub.s32 %s23, 2
      %s30 = sadd.s32 %s23, 1
      %s31 = ssub.s32 %s23, %s30
      %p32 = scmp.eq.s32.totalorder %s31, 0
      %s34 = sadd.s32 %s33, 1
      %s35 = scalar_select %p32, %s33, %s34
      %p38 = pneg %p32
      %p39 = scmp.eq.s32.totalorder %s23, 1
      %p40 = por %p38, %p39
      %p41 = scmp.ne.s32.totalorder %s33, %s36
      %p42 = scmp.eq.s32.totalorder %s23, 0
      %p43 = por %p41, %p42
      %p44 = scmp.ne.s32.totalorder %s33, %s36
      %p45 = scmp.eq.s32.totalorder %s28, 1
      %p46 = por %p44, %p45
      %p47 = scmp.ne.s32.totalorder %s36, %s37
      %p48 = scmp.eq.s32.totalorder %s28, 0
      %p49 = por %p47, %p48
      %p50 = scmp.ne.s32.totalorder %s36, %s37
      %p51 = scmp.eq.s32.totalorder %s29, 1
      %p52 = por %p50, %p51
      %p54 = scmp.ne.s32.totalorder %s37, %s53
      %p55 = scmp.eq.s32.totalorder %s29, 0
      %p56 = por %p54, %p55
      %s58 = sadd.s32 %s57, 1
      %p61 = scmp.eq.s32.totalorder %s23, 1
      %p62 = scmp.ne.s32.totalorder %s57, %s59
      %p63 = scmp.eq.s32.totalorder %s23, 0
      %p64 = por %p62, %p63
      %p65 = scmp.ne.s32.totalorder %s57, %s59
      %p66 = scmp.eq.s32.totalorder %s28, 1
      %p67 = por %p65, %p66
      %p68 = scmp.ne.s32.totalorder %s59, %s60
      %p69 = scmp.eq.s32.totalorder %s28, 0
      %p70 = por %p68, %p69
      %p71 = scmp.ne.s32.totalorder %s59, %s60
      %p72 = scmp.eq.s32.totalorder %s29, 1
      %p73 = por %p71, %p72
      %p75 = scmp.ne.s32.totalorder %s60, %s74
      %p76 = scmp.eq.s32.totalorder %s29, 0
      %p77 = por %p75, %p76
      %s79 = sadd.s32 %s78, 1
      %p82 = scmp.eq.s32.totalorder %s23, 1
      %p83 = scmp.ne.s32.totalorder %s78, %s80
      %p84 = scmp.eq.s32.totalorder %s23, 0
      %p85 = por %p83, %p84
      %p86 = scmp.ne.s32.totalorder %s78, %s80
      %p87 = scmp.eq.s32.totalorder %s28, 1
      %p88 = por %p86, %p87
      %p89 = scmp.ne.s32.totalorder %s80, %s81
      %p90 = scmp.eq.s32.totalorder %s28, 0
      %p91 = por %p89, %p90
      %p92 = scmp.ne.s32.totalorder %s80, %s81
      %p93 = scmp.eq.s32.totalorder %s29, 1
      %p94 = por %p92, %p93
      %p96 = scmp.ne.s32.totalorder %s81, %s95
      %p97 = scmp.eq.s32.totalorder %s29, 0
      %p98 = por %p96, %p97
      %s100 = sadd.s32 %s99, 1
      %p103 = scmp.eq.s32.totalorder %s23, 1
      %p104 = scmp.ne.s32.totalorder %s99, %s101
      %p105 = scmp.eq.s32.totalorder %s23, 0
      %p106 = por %p104, %p105
      %p107 = scmp.ne.s32.totalorder %s99, %s101
      %p108 = scmp.eq.s32.totalorder %s28, 1
      %p109 = por %p107, %p108
      %p110 = scmp.ne.s32.totalorder %s101, %s102
      %p111 = scmp.eq.s32.totalorder %s28, 0
      %p112 = por %p110, %p111
      %p113 = scmp.ne.s32.totalorder %s101, %s102
      %p114 = scmp.eq.s32.totalorder %s29, 1
      %p115 = por %p113, %p114
      %p117 = scmp.ne.s32.totalorder %s102, %s116
      %p118 = scmp.eq.s32.totalorder %s29, 0
      %p119 = por %p117, %p118
      %s121 = sadd.s32 %s120, 1
      %p124 = scmp.eq.s32.totalorder %s23, 1
      %p125 = scmp.ne.s32.totalorder %s120, %s122
      %p126 = scmp.eq.s32.totalorder %s23, 0
      %p127 = por %p125, %p126
      %p128 = scmp.ne.s32.totalorder %s120, %s122
      %p129 = scmp.eq.s32.totalorder %s28, 1
      %p130 = por %p128, %p129
      %p131 = scmp.ne.s32.totalorder %s122, %s123
      %p132 = scmp.eq.s32.totalorder %s28, 0
      %p133 = por %p131, %p132
      %p134 = scmp.ne.s32.totalorder %s122, %s123
      %p135 = scmp.eq.s32.totalorder %s29, 1
      %p136 = por %p134, %p135
      %p138 = scmp.ne.s32.totalorder %s123, %s137
      %p139 = scmp.eq.s32.totalorder %s29, 0
      %p140 = por %p138, %p139
      %s142 = sadd.s32 %s141, 1
      %p145 = scmp.eq.s32.totalorder %s23, 1
      %p146 = scmp.ne.s32.totalorder %s141, %s143
      %p147 = scmp.eq.s32.totalorder %s23, 0
      %p148 = por %p146, %p147
      %p149 = scmp.ne.s32.totalorder %s141, %s143
      %p150 = scmp.eq.s32.totalorder %s28, 1
      %p151 = por %p149, %p150
      %p152 = scmp.ne.s32.totalorder %s143, %s144
      %p153 = scmp.eq.s32.totalorder %s28, 0
      %p154 = por %p152, %p153
      %p155 = scmp.ne.s32.totalorder %s143, %s144
      %p156 = scmp.eq.s32.totalorder %s29, 1
      %p157 = por %p155, %p156
      %p159 = scmp.ne.s32.totalorder %s144, %s158
      %p160 = scmp.eq.s32.totalorder %s29, 0
      %p161 = por %p159, %p160
      %s163 = sadd.s32 %s162, 1
      %p166 = scmp.eq.s32.totalorder %s23, 1
      %p167 = scmp.ne.s32.totalorder %s162, %s164
      %p168 = scmp.eq.s32.totalorder %s23, 0
      %p169 = por %p167, %p168
      %p170 = scmp.ne.s32.totalorder %s162, %s164
      %p171 = scmp.eq.s32.totalorder %s28, 1
      %p172 = por %p170, %p171
      %p173 = scmp.ne.s32.totalorder %s164, %s165
      %p174 = scmp.eq.s32.totalorder %s28, 0
      %p175 = por %p173, %p174
      %p176 = scmp.ne.s32.totalorder %s164, %s165
      %p177 = scmp.eq.s32.totalorder %s29, 1
      %p178 = por %p176, %p177
      %p180 = scmp.ne.s32.totalorder %s165, %s179
      %p181 = scmp.eq.s32.totalorder %s29, 0
      %p182 = por %p180, %p181
      %s184 = sadd.s32 %s183, 1
      %p187 = scmp.eq.s32.totalorder %s23, 1
      %p188 = scmp.ne.s32.totalorder %s183, %s185
      %p189 = scmp.eq.s32.totalorder %s23, 0
      %p190 = por %p188, %p189
      %p191 = scmp.ne.s32.totalorder %s183, %s185
      %p192 = scmp.eq.s32.totalorder %s28, 1
      %p193 = por %p191, %p192
      %p194 = scmp.ne.s32.totalorder %s185, %s186
      %p195 = scmp.eq.s32.totalorder %s28, 0
      %p196 = por %p194, %p195
      %p197 = scmp.ne.s32.totalorder %s185, %s186
      %p198 = scmp.eq.s32.totalorder %s29, 1
      %p199 = por %p197, %p198
      %p201 = scmp.ne.s32.totalorder %s186, %s200
      %p202 = scmp.eq.s32.totalorder %s29, 0
      %p203 = por %p201, %p202
      %s205 = sadd.s32 %s204, 1
      %p208 = scmp.eq.s32.totalorder %s23, 1
      %p209 = scmp.ne.s32.totalorder %s204, %s206
      %p210 = scmp.eq.s32.totalorder %s23, 0
      %p211 = por %p209, %p210
      %p212 = scmp.ne.s32.totalorder %s204, %s206
      %p213 = scmp.eq.s32.totalorder %s28, 1
      %p214 = por %p212, %p213
      %p215 = scmp.ne.s32.totalorder %s206, %s207
      %p216 = scmp.eq.s32.totalorder %s28, 0
      %p217 = por %p215, %p216
      %p218 = scmp.ne.s32.totalorder %s206, %s207
      %p219 = scmp.eq.s32.totalorder %s29, 1
      %p220 = por %p218, %p219
      %p222 = scmp.ne.s32.totalorder %s207, %s221
      %p223 = scmp.eq.s32.totalorder %s29, 0
      %p224 = por %p222, %p223
      %s226 = sadd.s32 %s225, 1
      %p229 = scmp.eq.s32.totalorder %s23, 1
      %p230 = scmp.ne.s32.totalorder %s225, %s227
      %p231 = scmp.eq.s32.totalorder %s23, 0
      %p232 = por %p230, %p231
      %p233 = scmp.ne.s32.totalorder %s225, %s227
      %p234 = scmp.eq.s32.totalorder %s28, 1
      %p235 = por %p233, %p234
      %p236 = scmp.ne.s32.totalorder %s227, %s228
      %p237 = scmp.eq.s32.totalorder %s28, 0
      %p238 = por %p236, %p237
      %p239 = scmp.ne.s32.totalorder %s227, %s228
      %p240 = scmp.eq.s32.totalorder %s29, 1
      %p241 = por %p239, %p240
      %p243 = scmp.ne.s32.totalorder %s228, %s242
      %p244 = scmp.eq.s32.totalorder %s29, 0
      %p245 = por %p243, %p244
      %s246 = ssub.s32 %s23, %s30
      %p247 = scmp.eq.s32.totalorder %s246, 0
      %s249 = sadd.s32 %s248, 1
      %s250 = scalar_select %p247, %s248, %s249
      %p253 = pneg %p247
      %p254 = scmp.eq.s32.totalorder %s23, 1
      %p255 = por %p253, %p254
      %p256 = scmp.ne.s32.totalorder %s248, %s251
      %p257 = scmp.eq.s32.totalorder %s23, 0
      %p258 = por %p256, %p257
      %p259 = scmp.ne.s32.totalorder %s248, %s251
      %p260 = scmp.eq.s32.totalorder %s28, 1
      %p261 = por %p259, %p260
      %p262 = scmp.ne.s32.totalorder %s251, %s252
      %p263 = scmp.eq.s32.totalorder %s28, 0
      %p264 = por %p262, %p263
      %p265 = scmp.ne.s32.totalorder %s251, %s252
      %p266 = scmp.eq.s32.totalorder %s29, 1
      %p267 = por %p265, %p266
      %p269 = scmp.ne.s32.totalorder %s252, %s268
      %p270 = scmp.eq.s32.totalorder %s29, 0
      %p271 = por %p269, %p270
      %p272 = scmp.le.s32.totalorder 1, %s23
      %p273 = scmp.lt.s32.totalorder %s23, 3
      %p274 = pnand %p272, %p273
      %p275 = pneg %p274
      // Predicated region
      $region9: #{mobilevit_block.1} parent=5 // pred_check
        _
      $region10: #{mobilevit_block.1} parent=5 // pred_check_branch
        %277 = sbr.rel (%p274) target = $region12
      $region11: #{mobilevit_block.1} parent=5 // pred_region
        %s278 = ssub.s32 %s23, 1
        // Predicated region
        $region13: #{mobilevit_block.1} parent=11 // pred_check
          %p279 = pneg %p70
        $region14: #{mobilevit_block.1} parent=11 // pred_check_branch
          %281 = sbr.rel (%p279) target = $region16
        $region15: #{mobilevit_block.1} parent=11 // pred_region
          %s283 = ssub.s32 256, 256
          %284 = vsyncadd [#allocation3], %s283
          %s285 = sshll.u32 [#allocation2], 4
          %s286 = int_to_ptr.vmem [resolvable:$true] %s285
          %291 = dma.hbm_to_vmem [thread:$0]  %s1, 256, %s286, [#allocation3], 128, 128, 8
        $region16: #{mobilevit_block.1} parent=11 // pred_fallthru
          _
        // Predicated region
        $region17: #{mobilevit_block.1} parent=11 // pred_check
          %p292 = pneg %p91
        $region18: #{mobilevit_block.1} parent=11 // pred_check_branch
          %294 = sbr.rel (%p292) target = $region20
        $region19: #{mobilevit_block.1} parent=11 // pred_region
          %s296 = ssub.s32 512, 512
          %297 = vsyncadd [#allocation6], %s296
          %s298 = sshll.u32 [#allocation5], 4
          %s299 = int_to_ptr.vmem [resolvable:$true] %s298
          %304 = dma.hbm_to_vmem [thread:$0]  %s2, 512, %s299, [#allocation6], 128, 128, 8
        $region20: #{mobilevit_block.1} parent=11 // pred_fallthru
          _
        // Predicated region
        $region21: #{mobilevit_block.1} parent=11 // pred_check
          %p305 = pneg %p112
        $region22: #{mobilevit_block.1} parent=11 // pred_check_branch
          %307 = sbr.rel (%p305) target = $region24
        $region23: #{mobilevit_block.1} parent=11 // pred_region
          _
        $region24: #{mobilevit_block.1} parent=11 // pred_fallthru
          _
        // Predicated region
        $region25: #{mobilevit_block.1} parent=11 // pred_check
          %p308 = pneg %p133
        $region26: #{mobilevit_block.1} parent=11 // pred_check_branch
          %310 = sbr.rel (%p308) target = $region28
        $region27: #{mobilevit_block.1} parent=11 // pred_region
          %s312 = ssub.s32 1024, 1024
          %313 = vsyncadd [#allocation6], %s312
          %s314 = sshll.u32 [#allocation7], 4
          %s315 = int_to_ptr.vmem [resolvable:$true] %s314
          %320 = dma.hbm_to_vmem [thread:$0]  %s4, 1024, %s315, [#allocation6], 128, 128, 8
        $region28: #{mobilevit_block.1} parent=11 // pred_fallthru
          _
        // Predicated region
        $region29: #{mobilevit_block.1} parent=11 // pred_check
          %p321 = pneg %p154
        $region30: #{mobilevit_block.1} parent=11 // pred_check_branch
          %323 = sbr.rel (%p321) target = $region32
        $region31: #{mobilevit_block.1} parent=11 // pred_region
          %s325 = ssub.s32 4096, 4096
          %326 = vsyncadd [#allocation9], %s325
          %s327 = sshll.u32 [#allocation8], 4
          %s328 = int_to_ptr.vmem [resolvable:$true] %s327
          %333 = dma.hbm_to_vmem [thread:$0]  %s5, 4096, %s328, [#allocation9], 128, 128, 8
        $region32: #{mobilevit_block.1} parent=11 // pred_fallthru
          _
        // Predicated region
        $region33: #{mobilevit_block.1} parent=11 // pred_check
          %p334 = pneg %p175
        $region34: #{mobilevit_block.1} parent=11 // pred_check_branch
          %336 = sbr.rel (%p334) target = $region36
        $region35: #{mobilevit_block.1} parent=11 // pred_region
          %s338 = ssub.s32 1024, 1024
          %339 = vsyncadd [#allocation9], %s338
          %s340 = sshll.u32 [#allocation10], 4
          %s341 = int_to_ptr.vmem [resolvable:$true] %s340
          %346 = dma.hbm_to_vmem [thread:$0]  %s6, 1024, %s341, [#allocation9], 128, 128, 8
        $region36: #{mobilevit_block.1} parent=11 // pred_fallthru
          _
        // Predicated region
        $region37: #{mobilevit_block.1} parent=11 // pred_check
          %p347 = pneg %p196
        $region38: #{mobilevit_block.1} parent=11 // pred_check_branch
          %349 = sbr.rel (%p347) target = $region40
        $region39: #{mobilevit_block.1} parent=11 // pred_region
          _
        $region40: #{mobilevit_block.1} parent=11 // pred_fallthru
          _
        // Predicated region
        $region41: #{mobilevit_block.1} parent=11 // pred_check
          %p350 = pneg %p217
        $region42: #{mobilevit_block.1} parent=11 // pred_check_branch
          %352 = sbr.rel (%p350) target = $region44
        $region43: #{mobilevit_block.1} parent=11 // pred_region
          %s354 = ssub.s32 384, 384
          %355 = vsyncadd [#allocation12], %s354
          %s356 = sshll.u32 [#allocation11], 4
          %s357 = int_to_ptr.vmem [resolvable:$true] %s356
          %362 = dma.hbm_to_vmem [thread:$0]  %s8, 384, %s357, [#allocation12], 128, 128, 8
        $region44: #{mobilevit_block.1} parent=11 // pred_fallthru
          _
        // Predicated region
        $region45: #{mobilevit_block.1} parent=11 // pred_check
          %p363 = pneg %p238
        $region46: #{mobilevit_block.1} parent=11 // pred_check_branch
          %365 = sbr.rel (%p363) target = $region48
        $region47: #{mobilevit_block.1} parent=11 // pred_region
          _
        $region48: #{mobilevit_block.1} parent=11 // pred_fallthru
          _
      $region12: #{mobilevit_block.1} parent=5 // pred_fallthru
        _
      %p366 = scmp.lt.s32.totalorder %s23, 2
      // Predicated region
      $region49: #{mobilevit_block.1} parent=5 // pred_check
        %p367 = pneg %p366
      $region50: #{mobilevit_block.1} parent=5 // pred_check_branch
        %369 = sbr.rel (%p367) target = $region52
      $region51: #{mobilevit_block.1} parent=5 // pred_region
        // Predicated region
        $region53: #{mobilevit_block.1} parent=51 // pred_check
          %p370 = pneg %p43
        $region54: #{mobilevit_block.1} parent=51 // pred_check_branch
          %372 = sbr.rel (%p370) target = $region56
        $region55: #{mobilevit_block.1} parent=51 // pred_region
          %p373 = scmp.lt.s32.totalorder %s23, 1
          %s374 = scalar_select %p373, %s23, 1
          %s375 = smul.addr %s374, 8
          %s376 = smul.addr %s375, 8
          %s377 = scalar_lea.vmem %s0, %s376
        $region56: #{mobilevit_block.1} parent=51 // pred_fallthru
          _
      $region52: #{mobilevit_block.1} parent=5 // pred_fallthru
        _
      %p378 = scmp.le.s32.totalorder 1, %s23
      %p379 = scmp.lt.s32.totalorder %s23, 3
      %p380 = pnand %p378, %p379
      %p381 = pneg %p380
      // Predicated region
      $region57: #{mobilevit_block.1} parent=5 // pred_check
        _
      $region58: #{mobilevit_block.1} parent=5 // pred_check_branch
        %383 = sbr.rel (%p380) target = $region60
      $region59: #{mobilevit_block.1} parent=5 // pred_region
        %s384 = ssub.s32 %s23, 1
        // Predicated region
        $region61: #{mobilevit_block.1} parent=59 // pred_check
          %p385 = pneg %p70
        $region62: #{mobilevit_block.1} parent=59 // pred_check_branch
          %387 = sbr.rel (%p385) target = $region64
        $region63: #{mobilevit_block.1} parent=59 // pred_region
          %388 = dma.done [#allocation3], 256
        $region64: #{mobilevit_block.1} parent=59 // pred_fallthru
          _
        // Predicated region
        $region65: #{mobilevit_block.1} parent=59 // pred_check
          %p389 = pneg %p91
        $region66: #{mobilevit_block.1} parent=59 // pred_check_branch
          %391 = sbr.rel (%p389) target = $region68
        $region67: #{mobilevit_block.1} parent=59 // pred_region
          %392 = dma.done [#allocation6], 512
        $region68: #{mobilevit_block.1} parent=59 // pred_fallthru
          _
        // Predicated region
        $region69: #{mobilevit_block.1} parent=59 // pred_check
          %p393 = pneg %p133
        $region70: #{mobilevit_block.1} parent=59 // pred_check_branch
          %395 = sbr.rel (%p393) target = $region72
        $region71: #{mobilevit_block.1} parent=59 // pred_region
          %396 = dma.done [#allocation6], 1024
        $region72: #{mobilevit_block.1} parent=59 // pred_fallthru
          _
        // Predicated region
        $region73: #{mobilevit_block.1} parent=59 // pred_check
          %p397 = pneg %p154
        $region74: #{mobilevit_block.1} parent=59 // pred_check_branch
          %399 = sbr.rel (%p397) target = $region76
        $region75: #{mobilevit_block.1} parent=59 // pred_region
          %400 = dma.done [#allocation9], 4096
        $region76: #{mobilevit_block.1} parent=59 // pred_fallthru
          _
        // Predicated region
        $region77: #{mobilevit_block.1} parent=59 // pred_check
          %p401 = pneg %p175
        $region78: #{mobilevit_block.1} parent=59 // pred_check_branch
          %403 = sbr.rel (%p401) target = $region80
        $region79: #{mobilevit_block.1} parent=59 // pred_region
          %404 = dma.done [#allocation9], 1024
        $region80: #{mobilevit_block.1} parent=59 // pred_fallthru
          _
        // Predicated region
        $region81: #{mobilevit_block.1} parent=59 // pred_check
          %p405 = pneg %p217
        $region82: #{mobilevit_block.1} parent=59 // pred_check_branch
          %407 = sbr.rel (%p405) target = $region84
        $region83: #{mobilevit_block.1} parent=59 // pred_region
          %408 = dma.done [#allocation12], 384
        $region84: #{mobilevit_block.1} parent=59 // pred_fallthru
          _
        %p409 = scmp.lt.s32.totalorder %s28, 1
        %s410 = scalar_select %p409, %s28, 1
        %s411 = smul.addr %s410, 8
        %s412 = smul.addr %s411, 8
        %s413 = scalar_lea.vmem %s0, %s412
        %p414 = pneg %p49
        %p415 = pneg %p46
        %p416 = pneg %p70
        %p417 = pneg %p67
        %p418 = pneg %p91
        %p419 = pneg %p88
        %p420 = pneg %p112
        %p421 = pneg %p109
        %p422 = pneg %p133
        %p423 = pneg %p130
        %p424 = pneg %p154
        %p425 = pneg %p151
        %p426 = pneg %p175
        %p427 = pneg %p172
        %p428 = pneg %p196
        %p429 = pneg %p193
        %p430 = pneg %p217
        %p431 = pneg %p214
        %p432 = pneg %p238
        %p433 = pneg %p235
        %p434 = pneg %p264
        %p435 = pneg %p261
        %s436 = sand.u32 %s251, 1
        %s437 = scalar_lea.sflag [#allocation4], %s436
        %s438 = sand.u32 %s251, 1
        %s439 = smul.addr %s438, 64
        %s440 = scalar_lea.vmem [#allocation13], %s439
        %p441 = scmp.lt.s32.totalorder %s28, 1
        %s442 = scalar_select %p441, %s28, 1
        %s443 = smul.addr %s442, 8
        %s444 = smul.addr %s443, 8
        %s445 = scalar_lea.vmem %s0, %s444
        %v446 = vld [vmem:[%s445] sm:$0xff]
        %v447 = vld [vmem:[%s445 + $0x8] sm:$0xff]
        %v448 = vld [vmem:[%s445 + $0x10] sm:$0xff]
        %v449 = vld [vmem:[%s445 + $0x18] sm:$0xff]
        %v450 = vld [vmem:[%s445 + $0x20] sm:$0xff]
        %v451 = vld [vmem:[%s445 + $0x28] sm:$0xff]
        %v452 = vld [vmem:[%s445 + $0x30] sm:$0xff]
        %v453 = vld [vmem:[%s445 + $0x38] sm:$0xff]
        %v454 = vld [vmem:[#allocation11] sm:$0xff]
        %v455 = vld [vmem:[#allocation11 + $0x8] sm:$0xff]
        %v456 = vld [vmem:[#allocation11 + $0x10] sm:$0x3f]
        %v457 = vld [vmem:[#allocation2] sm:$0xff]
        %v458 = vld [vmem:[#allocation2 + $0x8] sm:$0x1]
        %v459 = vld [vmem:[%s9] sm:$0x3]
        %v460 = vlaneseq
        %v461 = vshrl.u32 %v460, 7
        %v462 = vadd.s32 %v461, 8
        %v463 = vadd.s32 %v461, 16
        %v464 = vadd.s32 %v461, 24
        %v465 = vadd.s32 %v461, 32
        %v466 = vadd.s32 %v461, 40
        %v467 = vadd.s32 %v461, 48
        %v468 = vadd.s32 %v461, 56
        %v469 = vand.u32 %v461, 7
        %v470 = vand.u32 %v462, 7
        %v471 = vand.u32 %v463, 7
        %v472 = vand.u32 %v464, 7
        %v473 = vand.u32 %v465, 7
        %v474 = vand.u32 %v466, 7
        %v475 = vand.u32 %v467, 7
        %v476 = vand.u32 %v468, 7
        %v477 = vlaneseq
        %v478 = vshrl.u32 %v477, 7
        %v479 = vsub.s32 4, %v478
        %v480 = vrot.slane %v457, %v479
        %v481 = vmul.f32 %v446, %v480
        %v482 = vmul.f32 %v447, %v480
        %v483 = vmul.f32 %v448, %v480
        %v484 = vmul.f32 %v449, %v480
        %v485 = vmul.f32 %v450, %v480
        %v486 = vmul.f32 %v451, %v480
        %v487 = vmul.f32 %v452, %v480
        %v488 = vmul.f32 %v453, %v480
        %vm491 = vcmask 1040384
        %v492 = vrot.slane %v452, 7
        %v493 = vrot.slane %v453, 7
        %v494 = vsel %vm491, %v492, %v493
        %v503 = vrot.slane %v446, 7
        %v504 = vrot.slane %v447, 7
        %v505 = vsel %vm491, %v503, %v504
        %v506 = vrot.slane %v448, 7
        %v507 = vsel %vm491, %v504, %v506
        %v508 = vrot.slane %v449, 7
        %v509 = vsel %vm491, %v506, %v508
        %v510 = vrot.slane %v450, 7
        %v511 = vsel %vm491, %v508, %v510
        %v512 = vrot.slane %v451, 7
        %v513 = vsel %vm491, %v510, %v512
        %v514 = vsel %vm491, %v512, %v492
        %v522 = vsel %vm491, %v493, %v503
        %vm523 = vcmp.ge.s32.totalorder %v461, 8
        %vm524 = vcmp.ge.s32.totalorder %v462, 8
        %vm525 = vcmp.ge.s32.totalorder %v463, 8
        %vm526 = vcmp.ge.s32.totalorder %v464, 8
        %vm527 = vcmp.ge.s32.totalorder %v465, 8
        %vm528 = vcmp.ge.s32.totalorder %v466, 8
        %vm529 = vcmp.ge.s32.totalorder %v467, 8
        %vm530 = vcmp.ge.s32.totalorder %v468, 8
        %vm531 = vcmp.lt.s32.totalorder %v461, 72
        %vm532 = vcmp.lt.s32.totalorder %v462, 72
        %vm533 = vcmp.lt.s32.totalorder %v463, 72
        %vm534 = vcmp.lt.s32.totalorder %v464, 72
        %vm535 = vcmp.lt.s32.totalorder %v465, 72
        %vm536 = vcmp.lt.s32.totalorder %v466, 72
        %vm537 = vcmp.lt.s32.totalorder %v467, 72
        %vm538 = vcmp.lt.s32.totalorder %v468, 72
        %vm539 = vmand %vm523, %vm531
        %vm540 = vmand %vm524, %vm532
        %vm541 = vmand %vm525, %vm533
        %vm542 = vmand %vm526, %vm534
        %vm543 = vmand %vm527, %vm535
        %vm544 = vmand %vm528, %vm536
        %vm545 = vmand %vm529, %vm537
        %vm546 = vmand %vm530, %vm538
        %vm547 = vcmp.ge.s32.totalorder %v469, 1
        %vm548 = vcmp.ge.s32.totalorder %v470, 1
        %vm549 = vcmp.ge.s32.totalorder %v471, 1
        %vm550 = vcmp.ge.s32.totalorder %v472, 1
        %vm551 = vcmp.ge.s32.totalorder %v473, 1
        %vm552 = vcmp.ge.s32.totalorder %v474, 1
        %vm553 = vcmp.ge.s32.totalorder %v475, 1
        %vm554 = vcmp.ge.s32.totalorder %v476, 1
        %vm555 = vmand %vm539, %vm547
        %vm556 = vmand %vm540, %vm548
        %vm557 = vmand %vm541, %vm549
        %vm558 = vmand %vm542, %vm550
        %vm559 = vmand %vm543, %vm551
        %vm560 = vmand %vm544, %vm552
        %vm561 = vmand %vm545, %vm553
        %vm562 = vmand %vm546, %vm554
        %vm563 = vcmp.lt.s32.totalorder %v469, 9
        %vm564 = vcmp.lt.s32.totalorder %v470, 9
        %vm565 = vcmp.lt.s32.totalorder %v471, 9
        %vm566 = vcmp.lt.s32.totalorder %v472, 9
        %vm567 = vcmp.lt.s32.totalorder %v473, 9
        %vm568 = vcmp.lt.s32.totalorder %v474, 9
        %vm569 = vcmp.lt.s32.totalorder %v475, 9
        %vm570 = vcmp.lt.s32.totalorder %v476, 9
        %vm571 = vmand %vm555, %vm563
        %vm572 = vmand %vm556, %vm564
        %vm573 = vmand %vm557, %vm565
        %vm574 = vmand %vm558, %vm566
        %vm575 = vmand %vm559, %vm567
        %vm576 = vmand %vm560, %vm568
        %vm577 = vmand %vm561, %vm569
        %vm578 = vmand %vm562, %vm570
        %v579 = vsel %vm571, 1, 0
        %v580 = vsel %vm572, 1, 0
        %v581 = vsel %vm573, 1, 0
        %v582 = vsel %vm574, 1, 0
        %v583 = vsel %vm575, 1, 0
        %v584 = vsel %vm576, 1, 0
        %v585 = vsel %vm577, 1, 0
        %v586 = vsel %vm578, 1, 0
        %vm587 = vcmp.eq.s32.totalorder %v579, 1
        %vm588 = vcmp.eq.s32.totalorder %v580, 1
        %vm589 = vcmp.eq.s32.totalorder %v581, 1
        %vm590 = vcmp.eq.s32.totalorder %v582, 1
        %vm591 = vcmp.eq.s32.totalorder %v583, 1
        %vm592 = vcmp.eq.s32.totalorder %v584, 1
        %vm593 = vcmp.eq.s32.totalorder %v585, 1
        %vm594 = vcmp.eq.s32.totalorder %v586, 1
        %v595 = vsel %vm587, %v494, 0.0
        %v596 = vsel %vm588, %v522, 0.0
        %v597 = vsel %vm589, %v505, 0.0
        %v598 = vsel %vm590, %v507, 0.0
        %v599 = vsel %vm591, %v509, 0.0
        %v600 = vsel %vm592, %v511, 0.0
        %v601 = vsel %vm593, %v513, 0.0
        %v602 = vsel %vm594, %v514, 0.0
        %v603 = vlaneseq
        %v604 = vshrl.u32 %v603, 7
        %v605 = vsub.s32 0, %v604
        %v606 = vrot.slane %v457, %v605
        %v607 = vmul.f32 %v595, %v606
        %v608 = vmul.f32 %v596, %v606
        %v609 = vmul.f32 %v597, %v606
        %v610 = vmul.f32 %v598, %v606
        %v611 = vmul.f32 %v599, %v606
        %v612 = vmul.f32 %v600, %v606
        %v613 = vmul.f32 %v601, %v606
        %v614 = vmul.f32 %v602, %v606
        %v615 = vadd.f32 %v481, %v607
        %v616 = vadd.f32 %v482, %v608
        %v617 = vadd.f32 %v483, %v609
        %v618 = vadd.f32 %v484, %v610
        %v619 = vadd.f32 %v485, %v611
        %v620 = vadd.f32 %v486, %v612
        %v621 = vadd.f32 %v487, %v613
        %v622 = vadd.f32 %v488, %v614
        %vm623 = vcmp.ge.s32.totalorder %v469, 0
        %vm624 = vcmp.ge.s32.totalorder %v470, 0
        %vm625 = vcmp.ge.s32.totalorder %v471, 0
        %vm626 = vcmp.ge.s32.totalorder %v472, 0
        %vm627 = vcmp.ge.s32.totalorder %v473, 0
        %vm628 = vcmp.ge.s32.totalorder %v474, 0
        %vm629 = vcmp.ge.s32.totalorder %v475, 0
        %vm630 = vcmp.ge.s32.totalorder %v476, 0
        %vm631 = vmand %vm539, %vm623
        %vm632 = vmand %vm540, %vm624
        %vm633 = vmand %vm541, %vm625
        %vm634 = vmand %vm542, %vm626
        %vm635 = vmand %vm543, %vm627
        %vm636 = vmand %vm544, %vm628
        %vm637 = vmand %vm545, %vm629
        %vm638 = vmand %vm546, %vm630
        %vm639 = vcmp.lt.s32.totalorder %v469, 8
        %vm640 = vcmp.lt.s32.totalorder %v470, 8
        %vm641 = vcmp.lt.s32.totalorder %v471, 8
        %vm642 = vcmp.lt.s32.totalorder %v472, 8
        %vm643 = vcmp.lt.s32.totalorder %v473, 8
        %vm644 = vcmp.lt.s32.totalorder %v474, 8
        %vm645 = vcmp.lt.s32.totalorder %v475, 8
        %vm646 = vcmp.lt.s32.totalorder %v476, 8
        %vm647 = vmand %vm631, %vm639
        %vm648 = vmand %vm632, %vm640
        %vm649 = vmand %vm633, %vm641
        %vm650 = vmand %vm634, %vm642
        %vm651 = vmand %vm635, %vm643
        %vm652 = vmand %vm636, %vm644
        %vm653 = vmand %vm637, %vm645
        %vm654 = vmand %vm638, %vm646
        %v655 = vsel %vm647, 1, 0
        %v656 = vsel %vm648, 1, 0
        %v657 = vsel %vm649, 1, 0
        %v658 = vsel %vm650, 1, 0
        %v659 = vsel %vm651, 1, 0
        %v660 = vsel %vm652, 1, 0
        %v661 = vsel %vm653, 1, 0
        %v662 = vsel %vm654, 1, 0
        %vm663 = vcmp.eq.s32.totalorder %v655, 1
        %vm664 = vcmp.eq.s32.totalorder %v656, 1
        %vm665 = vcmp.eq.s32.totalorder %v657, 1
        %vm666 = vcmp.eq.s32.totalorder %v658, 1
        %vm667 = vcmp.eq.s32.totalorder %v659, 1
        %vm668 = vcmp.eq.s32.totalorder %v660, 1
        %vm669 = vcmp.eq.s32.totalorder %v661, 1
        %vm670 = vcmp.eq.s32.totalorder %v662, 1
        %v671 = vsel %vm663, %v453, 0.0
        %v672 = vsel %vm664, %v446, 0.0
        %v673 = vsel %vm665, %v447, 0.0
        %v674 = vsel %vm666, %v448, 0.0
        %v675 = vsel %vm667, %v449, 0.0
        %v676 = vsel %vm668, %v450, 0.0
        %v677 = vsel %vm669, %v451, 0.0
        %v678 = vsel %vm670, %v452, 0.0
        %v679 = vlaneseq
        %v680 = vshrl.u32 %v679, 7
        %v681 = vsub.s32 1, %v680
        %v682 = vrot.slane %v457, %v681
        %v683 = vmul.f32 %v671, %v682
        %v684 = vmul.f32 %v672, %v682
        %v685 = vmul.f32 %v673, %v682
        %v686 = vmul.f32 %v674, %v682
        %v687 = vmul.f32 %v675, %v682
        %v688 = vmul.f32 %v676, %v682
        %v689 = vmul.f32 %v677, %v682
        %v690 = vmul.f32 %v678, %v682
        %v691 = vadd.f32 %v615, %v683
        %v692 = vadd.f32 %v616, %v684
        %v693 = vadd.f32 %v617, %v685
        %v694 = vadd.f32 %v618, %v686
        %v695 = vadd.f32 %v619, %v687
        %v696 = vadd.f32 %v620, %v688
        %v697 = vadd.f32 %v621, %v689
        %v698 = vadd.f32 %v622, %v690
        %v699 = vrot.slane %v453, 1
        %vm701 = vcmask 1046528
        %v702 = vrot.slane %v446, 1
        %v703 = vrot.slane %v447, 1
        %v704 = vsel %vm701, %v702, %v703
        %v705 = vrot.slane %v448, 1
        %v706 = vsel %vm701, %v703, %v705
        %v707 = vrot.slane %v449, 1
        %v708 = vsel %vm701, %v705, %v707
        %v709 = vrot.slane %v450, 1
        %v710 = vsel %vm701, %v707, %v709
        %v711 = vrot.slane %v451, 1
        %v712 = vsel %vm701, %v709, %v711
        %v713 = vrot.slane %v452, 1
        %v714 = vsel %vm701, %v711, %v713
        %v715 = vsel %vm701, %v713, %v699
        %v724 = vsel %vm701, %v699, %v702
        %vm725 = vcmp.ge.s32.totalorder %v469, 4294967295
        %vm726 = vcmp.ge.s32.totalorder %v470, 4294967295
        %vm727 = vcmp.ge.s32.totalorder %v471, 4294967295
        %vm728 = vcmp.ge.s32.totalorder %v472, 4294967295
        %vm729 = vcmp.ge.s32.totalorder %v473, 4294967295
        %vm730 = vcmp.ge.s32.totalorder %v474, 4294967295
        %vm731 = vcmp.ge.s32.totalorder %v475, 4294967295
        %vm732 = vcmp.ge.s32.totalorder %v476, 4294967295
        %vm733 = vmand %vm539, %vm725
        %vm734 = vmand %vm540, %vm726
        %vm735 = vmand %vm541, %vm727
        %vm736 = vmand %vm542, %vm728
        %vm737 = vmand %vm543, %vm729
        %vm738 = vmand %vm544, %vm730
        %vm739 = vmand %vm545, %vm731
        %vm740 = vmand %vm546, %vm732
        %vm741 = vcmp.lt.s32.totalorder %v469, 7
        %vm742 = vcmp.lt.s32.totalorder %v470, 7
        %vm743 = vcmp.lt.s32.totalorder %v471, 7
        %vm744 = vcmp.lt.s32.totalorder %v472, 7
        %vm745 = vcmp.lt.s32.totalorder %v473, 7
        %vm746 = vcmp.lt.s32.totalorder %v474, 7
        %vm747 = vcmp.lt.s32.totalorder %v475, 7
        %vm748 = vcmp.lt.s32.totalorder %v476, 7
        %vm749 = vmand %vm733, %vm741
        %vm750 = vmand %vm734, %vm742
        %vm751 = vmand %vm735, %vm743
        %vm752 = vmand %vm736, %vm744
        %vm753 = vmand %vm737, %vm745
        %vm754 = vmand %vm738, %vm746
        %vm755 = vmand %vm739, %vm747
        %vm756 = vmand %vm740, %vm748
        %v757 = vsel %vm749, 1, 0
        %v758 = vsel %vm750, 1, 0
        %v759 = vsel %vm751, 1, 0
        %v760 = vsel %vm752, 1, 0
        %v761 = vsel %vm753, 1, 0
        %v762 = vsel %vm754, 1, 0
        %v763 = vsel %vm755, 1, 0
        %v764 = vsel %vm756, 1, 0
        %vm765 = vcmp.eq.s32.totalorder %v757, 1
        %vm766 = vcmp.eq.s32.totalorder %v758, 1
        %vm767 = vcmp.eq.s32.totalorder %v759, 1
        %vm768 = vcmp.eq.s32.totalorder %v760, 1
        %vm769 = vcmp.eq.s32.totalorder %v761, 1
        %vm770 = vcmp.eq.s32.totalorder %v762, 1
        %vm771 = vcmp.eq.s32.totalorder %v763, 1
        %vm772 = vcmp.eq.s32.totalorder %v764, 1
        %v773 = vsel %vm765, %v724, 0.0
        %v774 = vsel %vm766, %v704, 0.0
        %v775 = vsel %vm767, %v706, 0.0
        %v776 = vsel %vm768, %v708, 0.0
        %v777 = vsel %vm769, %v710, 0.0
        %v778 = vsel %vm770, %v712, 0.0
        %v779 = vsel %vm771, %v714, 0.0
        %v780 = vsel %vm772, %v715, 0.0
        %v781 = vlaneseq
        %v782 = vshrl.u32 %v781, 7
        %v783 = vsub.s32 2, %v782
        %v784 = vrot.slane %v457, %v783
        %v785 = vmul.f32 %v773, %v784
        %v786 = vmul.f32 %v774, %v784
        %v787 = vmul.f32 %v775, %v784
        %v788 = vmul.f32 %v776, %v784
        %v789 = vmul.f32 %v777, %v784
        %v790 = vmul.f32 %v778, %v784
        %v791 = vmul.f32 %v779, %v784
        %v792 = vmul.f32 %v780, %v784
        %v793 = vadd.f32 %v691, %v785
        %v794 = vadd.f32 %v692, %v786
        %v795 = vadd.f32 %v693, %v787
        %v796 = vadd.f32 %v694, %v788
        %v797 = vadd.f32 %v695, %v789
        %v798 = vadd.f32 %v696, %v790
        %v799 = vadd.f32 %v697, %v791
        %v800 = vadd.f32 %v698, %v792
        %vm801 = vcmp.ge.s32.totalorder %v461, 0
        %vm802 = vcmp.ge.s32.totalorder %v462, 0
        %vm803 = vcmp.ge.s32.totalorder %v463, 0
        %vm804 = vcmp.ge.s32.totalorder %v464, 0
        %vm805 = vcmp.ge.s32.totalorder %v465, 0
        %vm806 = vcmp.ge.s32.totalorder %v466, 0
        %vm807 = vcmp.ge.s32.totalorder %v467, 0
        %vm808 = vcmp.ge.s32.totalorder %v468, 0
        %vm809 = vcmp.lt.s32.totalorder %v461, 64
        %vm810 = vcmp.lt.s32.totalorder %v462, 64
        %vm811 = vcmp.lt.s32.totalorder %v463, 64
        %vm812 = vcmp.lt.s32.totalorder %v464, 64
        %vm813 = vcmp.lt.s32.totalorder %v465, 64
        %vm814 = vcmp.lt.s32.totalorder %v466, 64
        %vm815 = vcmp.lt.s32.totalorder %v467, 64
        %vm816 = vcmp.lt.s32.totalorder %v468, 64
        %vm817 = vmand %vm801, %vm809
        %vm818 = vmand %vm802, %vm810
        %vm819 = vmand %vm803, %vm811
        %vm820 = vmand %vm804, %vm812
        %vm821 = vmand %vm805, %vm813
        %vm822 = vmand %vm806, %vm814
        %vm823 = vmand %vm807, %vm815
        %vm824 = vmand %vm808, %vm816
        %vm825 = vmand %vm817, %vm547
        %vm826 = vmand %vm818, %vm548
        %vm827 = vmand %vm819, %vm549
        %vm828 = vmand %vm820, %vm550
        %vm829 = vmand %vm821, %vm551
        %vm830 = vmand %vm822, %vm552
        %vm831 = vmand %vm823, %vm553
        %vm832 = vmand %vm824, %vm554
        %vm833 = vmand %vm825, %vm563
        %vm834 = vmand %vm826, %vm564
        %vm835 = vmand %vm827, %vm565
        %vm836 = vmand %vm828, %vm566
        %vm837 = vmand %vm829, %vm567
        %vm838 = vmand %vm830, %vm568
        %vm839 = vmand %vm831, %vm569
        %vm840 = vmand %vm832, %vm570
        %v841 = vsel %vm833, 1, 0
        %v842 = vsel %vm834, 1, 0
        %v843 = vsel %vm835, 1, 0
        %v844 = vsel %vm836, 1, 0
        %v845 = vsel %vm837, 1, 0
        %v846 = vsel %vm838, 1, 0
        %v847 = vsel %vm839, 1, 0
        %v848 = vsel %vm840, 1, 0
        %vm849 = vcmp.eq.s32.totalorder %v841, 1
        %vm850 = vcmp.eq.s32.totalorder %v842, 1
        %vm851 = vcmp.eq.s32.totalorder %v843, 1
        %vm852 = vcmp.eq.s32.totalorder %v844, 1
        %vm853 = vcmp.eq.s32.totalorder %v845, 1
        %vm854 = vcmp.eq.s32.totalorder %v846, 1
        %vm855 = vcmp.eq.s32.totalorder %v847, 1
        %vm856 = vcmp.eq.s32.totalorder %v848, 1
        %v857 = vsel %vm849, %v522, 0.0
        %v858 = vsel %vm850, %v505, 0.0
        %v859 = vsel %vm851, %v507, 0.0
        %v860 = vsel %vm852, %v509, 0.0
        %v861 = vsel %vm853, %v511, 0.0
        %v862 = vsel %vm854, %v513, 0.0
        %v863 = vsel %vm855, %v514, 0.0
        %v864 = vsel %vm856, %v494, 0.0
        %v865 = vlaneseq
        %v866 = vshrl.u32 %v865, 7
        %v867 = vsub.s32 3, %v866
        %v868 = vrot.slane %v457, %v867
        %v869 = vmul.f32 %v857, %v868
        %v870 = vmul.f32 %v858, %v868
        %v871 = vmul.f32 %v859, %v868
        %v872 = vmul.f32 %v860, %v868
        %v873 = vmul.f32 %v861, %v868
        %v874 = vmul.f32 %v862, %v868
        %v875 = vmul.f32 %v863, %v868
        %v876 = vmul.f32 %v864, %v868
        %v877 = vadd.f32 %v793, %v869
        %v878 = vadd.f32 %v794, %v870
        %v879 = vadd.f32 %v795, %v871
        %v880 = vadd.f32 %v796, %v872
        %v881 = vadd.f32 %v797, %v873
        %v882 = vadd.f32 %v798, %v874
        %v883 = vadd.f32 %v799, %v875
        %v884 = vadd.f32 %v800, %v876
        %vm885 = vmand %vm817, %vm725
        %vm886 = vmand %vm818, %vm726
        %vm887 = vmand %vm819, %vm727
        %vm888 = vmand %vm820, %vm728
        %vm889 = vmand %vm821, %vm729
        %vm890 = vmand %vm822, %vm730
        %vm891 = vmand %vm823, %vm731
        %vm892 = vmand %vm824, %vm732
        %vm893 = vmand %vm885, %vm741
        %vm894 = vmand %vm886, %vm742
        %vm895 = vmand %vm887, %vm743
        %vm896 = vmand %vm888, %vm744
        %vm897 = vmand %vm889, %vm745
        %vm898 = vmand %vm890, %vm746
        %vm899 = vmand %vm891, %vm747
        %vm900 = vmand %vm892, %vm748
        %v901 = vsel %vm893, 1, 0
        %v902 = vsel %vm894, 1, 0
        %v903 = vsel %vm895, 1, 0
        %v904 = vsel %vm896, 1, 0
        %v905 = vsel %vm897, 1, 0
        %v906 = vsel %vm898, 1, 0
        %v907 = vsel %vm899, 1, 0
        %v908 = vsel %vm900, 1, 0
        %vm909 = vcmp.eq.s32.totalorder %v901, 1
        %vm910 = vcmp.eq.s32.totalorder %v902, 1
        %vm911 = vcmp.eq.s32.totalorder %v903, 1
        %vm912 = vcmp.eq.s32.totalorder %v904, 1
        %vm913 = vcmp.eq.s32.totalorder %v905, 1
        %vm914 = vcmp.eq.s32.totalorder %v906, 1
        %vm915 = vcmp.eq.s32.totalorder %v907, 1
        %vm916 = vcmp.eq.s32.totalorder %v908, 1
        %v917 = vsel %vm909, %v704, 0.0
        %v918 = vsel %vm910, %v706, 0.0
        %v919 = vsel %vm911, %v708, 0.0
        %v920 = vsel %vm912, %v710, 0.0
        %v921 = vsel %vm913, %v712, 0.0
        %v922 = vsel %vm914, %v714, 0.0
        %v923 = vsel %vm915, %v715, 0.0
        %v924 = vsel %vm916, %v724, 0.0
        %v925 = vlaneseq
        %v926 = vshrl.u32 %v925, 7
        %v927 = vsub.s32 5, %v926
        %v928 = vrot.slane %v457, %v927
        %v929 = vmul.f32 %v917, %v928
        %v930 = vmul.f32 %v918, %v928
        %v931 = vmul.f32 %v919, %v928
        %v932 = vmul.f32 %v920, %v928
        %v933 = vmul.f32 %v921, %v928
        %v934 = vmul.f32 %v922, %v928
        %v935 = vmul.f32 %v923, %v928
        %v936 = vmul.f32 %v924, %v928
        %v937 = vadd.f32 %v877, %v929
        %v938 = vadd.f32 %v878, %v930
        %v939 = vadd.f32 %v879, %v931
        %v940 = vadd.f32 %v880, %v932
        %v941 = vadd.f32 %v881, %v933
        %v942 = vadd.f32 %v882, %v934
        %v943 = vadd.f32 %v883, %v935
        %v944 = vadd.f32 %v884, %v936
        %vm945 = vcmp.ge.s32.totalorder %v461, 4294967288
        %vm946 = vcmp.ge.s32.totalorder %v462, 4294967288
        %vm947 = vcmp.ge.s32.totalorder %v463, 4294967288
        %vm948 = vcmp.ge.s32.totalorder %v464, 4294967288
        %vm949 = vcmp.ge.s32.totalorder %v465, 4294967288
        %vm950 = vcmp.ge.s32.totalorder %v466, 4294967288
        %vm951 = vcmp.ge.s32.totalorder %v467, 4294967288
        %vm952 = vcmp.ge.s32.totalorder %v468, 4294967288
        %vm953 = vcmp.lt.s32.totalorder %v461, 56
        %vm954 = vcmp.lt.s32.totalorder %v462, 56
        %vm955 = vcmp.lt.s32.totalorder %v463, 56
        %vm956 = vcmp.lt.s32.totalorder %v464, 56
        %vm957 = vcmp.lt.s32.totalorder %v465, 56
        %vm958 = vcmp.lt.s32.totalorder %v466, 56
        %vm959 = vcmp.lt.s32.totalorder %v467, 56
        %vm960 = vcmp.lt.s32.totalorder %v468, 56
        %vm961 = vmand %vm945, %vm953
        %vm962 = vmand %vm946, %vm954
        %vm963 = vmand %vm947, %vm955
        %vm964 = vmand %vm948, %vm956
        %vm965 = vmand %vm949, %vm957
        %vm966 = vmand %vm950, %vm958
        %vm967 = vmand %vm951, %vm959
        %vm968 = vmand %vm952, %vm960
        %vm969 = vmand %vm961, %vm547
        %vm970 = vmand %vm962, %vm548
        %vm971 = vmand %vm963, %vm549
        %vm972 = vmand %vm964, %vm550
        %vm973 = vmand %vm965, %vm551
        %vm974 = vmand %vm966, %vm552
        %vm975 = vmand %vm967, %vm553
        %vm976 = vmand %vm968, %vm554
        %vm977 = vmand %vm969, %vm563
        %vm978 = vmand %vm970, %vm564
        %vm979 = vmand %vm971, %vm565
        %vm980 = vmand %vm972, %vm566
        %vm981 = vmand %vm973, %vm567
        %vm982 = vmand %vm974, %vm568
        %vm983 = vmand %vm975, %vm569
        %vm984 = vmand %vm976, %vm570
        %v985 = vsel %vm977, 1, 0
        %v986 = vsel %vm978, 1, 0
        %v987 = vsel %vm979, 1, 0
        %v988 = vsel %vm980, 1, 0
        %v989 = vsel %vm981, 1, 0
        %v990 = vsel %vm982, 1, 0
        %v991 = vsel %vm983, 1, 0
        %v992 = vsel %vm984, 1, 0
        %vm993 = vcmp.eq.s32.totalorder %v985, 1
        %vm994 = vcmp.eq.s32.totalorder %v986, 1
        %vm995 = vcmp.eq.s32.totalorder %v987, 1
        %vm996 = vcmp.eq.s32.totalorder %v988, 1
        %vm997 = vcmp.eq.s32.totalorder %v989, 1
        %vm998 = vcmp.eq.s32.totalorder %v990, 1
        %vm999 = vcmp.eq.s32.totalorder %v991, 1
        %vm1000 = vcmp.eq.s32.totalorder %v992, 1
        %v1001 = vsel %vm993, %v505, 0.0
        %v1002 = vsel %vm994, %v507, 0.0
        %v1003 = vsel %vm995, %v509, 0.0
        %v1004 = vsel %vm996, %v511, 0.0
        %v1005 = vsel %vm997, %v513, 0.0
        %v1006 = vsel %vm998, %v514, 0.0
        %v1007 = vsel %vm999, %v494, 0.0
        %v1008 = vsel %vm1000, %v522, 0.0
        %v1009 = vlaneseq
        %v1010 = vshrl.u32 %v1009, 7
        %v1011 = vsub.s32 6, %v1010
        %v1012 = vrot.slane %v457, %v1011
        %v1013 = vmul.f32 %v1001, %v1012
        %v1014 = vmul.f32 %v1002, %v1012
        %v1015 = vmul.f32 %v1003, %v1012
        %v1016 = vmul.f32 %v1004, %v1012
        %v1017 = vmul.f32 %v1005, %v1012
        %v1018 = vmul.f32 %v1006, %v1012
        %v1019 = vmul.f32 %v1007, %v1012
        %v1020 = vmul.f32 %v1008, %v1012
        %v1021 = vadd.f32 %v937, %v1013
        %v1022 = vadd.f32 %v938, %v1014
        %v1023 = vadd.f32 %v939, %v1015
        %v1024 = vadd.f32 %v940, %v1016
        %v1025 = vadd.f32 %v941, %v1017
        %v1026 = vadd.f32 %v942, %v1018
        %v1027 = vadd.f32 %v943, %v1019
        %v1028 = vadd.f32 %v944, %v1020
        %vm1029 = vmand %vm961, %vm623
        %vm1030 = vmand %vm962, %vm624
        %vm1031 = vmand %vm963, %vm625
        %vm1032 = vmand %vm964, %vm626
        %vm1033 = vmand %vm965, %vm627
        %vm1034 = vmand %vm966, %vm628
        %vm1035 = vmand %vm967, %vm629
        %vm1036 = vmand %vm968, %vm630
        %vm1037 = vmand %vm1029, %vm639
        %vm1038 = vmand %vm1030, %vm640
        %vm1039 = vmand %vm1031, %vm641
        %vm1040 = vmand %vm1032, %vm642
        %vm1041 = vmand %vm1033, %vm643
        %vm1042 = vmand %vm1034, %vm644
        %vm1043 = vmand %vm1035, %vm645
        %vm1044 = vmand %vm1036, %vm646
        %v1045 = vsel %vm1037, 1, 0
        %v1046 = vsel %vm1038, 1, 0
        %v1047 = vsel %vm1039, 1, 0
        %v1048 = vsel %vm1040, 1, 0
        %v1049 = vsel %vm1041, 1, 0
        %v1050 = vsel %vm1042, 1, 0
        %v1051 = vsel %vm1043, 1, 0
        %v1052 = vsel %vm1044, 1, 0
        %vm1053 = vcmp.eq.s32.totalorder %v1045, 1
        %vm1054 = vcmp.eq.s32.totalorder %v1046, 1
        %vm1055 = vcmp.eq.s32.totalorder %v1047, 1
        %vm1056 = vcmp.eq.s32.totalorder %v1048, 1
        %vm1057 = vcmp.eq.s32.totalorder %v1049, 1
        %vm1058 = vcmp.eq.s32.totalorder %v1050, 1
        %vm1059 = vcmp.eq.s32.totalorder %v1051, 1
        %vm1060 = vcmp.eq.s32.totalorder %v1052, 1
        %v1061 = vsel %vm1053, %v447, 0.0
        %v1062 = vsel %vm1054, %v448, 0.0
        %v1063 = vsel %vm1055, %v449, 0.0
        %v1064 = vsel %vm1056, %v450, 0.0
        %v1065 = vsel %vm1057, %v451, 0.0
        %v1066 = vsel %vm1058, %v452, 0.0
        %v1067 = vsel %vm1059, %v453, 0.0
        %v1068 = vsel %vm1060, %v446, 0.0
        %v1069 = vlaneseq
        %v1070 = vshrl.u32 %v1069, 7
        %v1071 = vsub.s32 7, %v1070
        %v1072 = vrot.slane %v457, %v1071
        %v1073 = vmul.f32 %v1061, %v1072
        %v1074 = vmul.f32 %v1062, %v1072
        %v1075 = vmul.f32 %v1063, %v1072
        %v1076 = vmul.f32 %v1064, %v1072
        %v1077 = vmul.f32 %v1065, %v1072
        %v1078 = vmul.f32 %v1066, %v1072
        %v1079 = vmul.f32 %v1067, %v1072
        %v1080 = vmul.f32 %v1068, %v1072
        %v1081 = vadd.f32 %v1021, %v1073
        %v1082 = vadd.f32 %v1022, %v1074
        %v1083 = vadd.f32 %v1023, %v1075
        %v1084 = vadd.f32 %v1024, %v1076
        %v1085 = vadd.f32 %v1025, %v1077
        %v1086 = vadd.f32 %v1026, %v1078
        %v1087 = vadd.f32 %v1027, %v1079
        %v1088 = vadd.f32 %v1028, %v1080
        %vm1089 = vmand %vm961, %vm725
        %vm1090 = vmand %vm962, %vm726
        %vm1091 = vmand %vm963, %vm727
        %vm1092 = vmand %vm964, %vm728
        %vm1093 = vmand %vm965, %vm729
        %vm1094 = vmand %vm966, %vm730
        %vm1095 = vmand %vm967, %vm731
        %vm1096 = vmand %vm968, %vm732
        %vm1097 = vmand %vm1089, %vm741
        %vm1098 = vmand %vm1090, %vm742
        %vm1099 = vmand %vm1091, %vm743
        %vm1100 = vmand %vm1092, %vm744
        %vm1101 = vmand %vm1093, %vm745
        %vm1102 = vmand %vm1094, %vm746
        %vm1103 = vmand %vm1095, %vm747
        %vm1104 = vmand %vm1096, %vm748
        %v1105 = vsel %vm1097, 1, 0
        %v1106 = vsel %vm1098, 1, 0
        %v1107 = vsel %vm1099, 1, 0
        %v1108 = vsel %vm1100, 1, 0
        %v1109 = vsel %vm1101, 1, 0
        %v1110 = vsel %vm1102, 1, 0
        %v1111 = vsel %vm1103, 1, 0
        %v1112 = vsel %vm1104, 1, 0
        %vm1113 = vcmp.eq.s32.totalorder %v1105, 1
        %vm1114 = vcmp.eq.s32.totalorder %v1106, 1
        %vm1115 = vcmp.eq.s32.totalorder %v1107, 1
        %vm1116 = vcmp.eq.s32.totalorder %v1108, 1
        %vm1117 = vcmp.eq.s32.totalorder %v1109, 1
        %vm1118 = vcmp.eq.s32.totalorder %v1110, 1
        %vm1119 = vcmp.eq.s32.totalorder %v1111, 1
        %vm1120 = vcmp.eq.s32.totalorder %v1112, 1
        %v1121 = vsel %vm1113, %v706, 0.0
        %v1122 = vsel %vm1114, %v708, 0.0
        %v1123 = vsel %vm1115, %v710, 0.0
        %v1124 = vsel %vm1116, %v712, 0.0
        %v1125 = vsel %vm1117, %v714, 0.0
        %v1126 = vsel %vm1118, %v715, 0.0
        %v1127 = vsel %vm1119, %v724, 0.0
        %v1128 = vsel %vm1120, %v704, 0.0
        %v1129 = vlaneseq
        %v1130 = vshrl.u32 %v1129, 7
        %v1131 = vsub.s32 0, %v1130
        %v1132 = vrot.slane %v458, %v1131
        %v1133 = vmul.f32 %v1121, %v1132
        %v1134 = vmul.f32 %v1122, %v1132
        %v1135 = vmul.f32 %v1123, %v1132
        %v1136 = vmul.f32 %v1124, %v1132
        %v1137 = vmul.f32 %v1125, %v1132
        %v1138 = vmul.f32 %v1126, %v1132
        %v1139 = vmul.f32 %v1127, %v1132
        %v1140 = vmul.f32 %v1128, %v1132
        %v1141 = vadd.f32 %v1081, %v1133
        %v1142 = vadd.f32 %v1082, %v1134
        %v1143 = vadd.f32 %v1083, %v1135
        %v1144 = vadd.f32 %v1084, %v1136
        %v1145 = vadd.f32 %v1085, %v1137
        %v1146 = vadd.f32 %v1086, %v1138
        %v1147 = vadd.f32 %v1087, %v1139
        %v1148 = vadd.f32 %v1088, %v1140
        %v1149 = vlaneseq
        %v1150 = vshrl.u32 %v1149, 7
        %v1151 = vsub.s32 0, %v1150
        %v1152 = vrot.slane %v454, %v1151
        %v1153 = vadd.f32 %v1141, %v1152
        %v1154 = vadd.f32 %v1142, %v1152
        %v1155 = vadd.f32 %v1143, %v1152
        %v1156 = vadd.f32 %v1144, %v1152
        %v1157 = vadd.f32 %v1145, %v1152
        %v1158 = vadd.f32 %v1146, %v1152
        %v1159 = vadd.f32 %v1147, %v1152
        %v1160 = vadd.f32 %v1148, %v1152
        %v1161 = vlaneseq
        %v1162 = vshrl.u32 %v1161, 7
        %v1163 = vsub.s32 1, %v1162
        %v1164 = vrot.slane %v454, %v1163
        %v1165 = vmul.f32 %v1153, %v1164
        %v1166 = vmul.f32 %v1154, %v1164
        %v1167 = vmul.f32 %v1155, %v1164
        %v1168 = vmul.f32 %v1156, %v1164
        %v1169 = vmul.f32 %v1157, %v1164
        %v1170 = vmul.f32 %v1158, %v1164
        %v1171 = vmul.f32 %v1159, %v1164
        %v1172 = vmul.f32 %v1160, %v1164
        %v1173 = vlaneseq
        %v1174 = vshrl.u32 %v1173, 7
        %v1175 = vsub.s32 2, %v1174
        %v1176 = vrot.slane %v454, %v1175
        %v1177 = vadd.f32 %v1165, %v1176
        %v1178 = vadd.f32 %v1166, %v1176
        %v1179 = vadd.f32 %v1167, %v1176
        %v1180 = vadd.f32 %v1168, %v1176
        %v1181 = vadd.f32 %v1169, %v1176
        %v1182 = vadd.f32 %v1170, %v1176
        %v1183 = vadd.f32 %v1171, %v1176
        %v1184 = vadd.f32 %v1172, %v1176
        %v1185 = vld [vmem:[#allocation5] sm:$0xff]
        %v1186 = vld [vmem:[#allocation5 + $0x8] sm:$0xff]
        %v1187 = vld [vmem:[#allocation5 + $0x10] sm:$0xff]
        %v1188 = vld [vmem:[#allocation5 + $0x18] sm:$0xff]
        %v1189 = vlaneseq
        %v1190 = vshrl.u32 %v1189, 7
        %v1191 = vsub.s32 3, %v1190
        %v1192 = vrot.slane %v454, %v1191
        %vm1193 = vcmask 261120
        %v1195 = vsel %vm1193, %v1177, 0
        %v1198 = vsel %vm1193, %v1178, 0
        %v1201 = vsel %vm1193, %v1179, 0
        %v1204 = vsel %vm1193, %v1180, 0
        %v1207 = vsel %vm1193, %v1181, 0
        %v1210 = vsel %vm1193, %v1182, 0
        %v1213 = vsel %vm1193, %v1183, 0
        %v1216 = vsel %vm1193, %v1184, 0
        %1218 = vmatprep.subr.mxu0 0.0
        %1219 = vmatpush1.msra.mxu0 0.0
        %1220 = vmatprep.subr.mxu0 0.0
        %1221 = vmatpush1.msra.mxu0 0.0
        %1222 = vmatprep.subr.mxu0 0.0
        %1223 = vmatpush1.msra.mxu0 0.0
        %1224 = vmatprep.subr.mxu0 0.0
        %1225 = vmatpush1.msra.mxu0 0.0
        %1226 = vmatprep.subr.mxu0 0.0
        %1227 = vmatpush1.msra.mxu0 0.0
        %1228 = vmatprep.subr.mxu0 0.0
        %1229 = vmatpush1.msra.mxu0 0.0
        %1230 = vmatprep.subr.mxu0 0.0
        %1231 = vmatpush1.msra.mxu0 0.0
        %1232 = vmatprep.subr.mxu0 0.0
        %1233 = vmatpush1.msra.mxu0 0.0
        %1234 = vmatprep.subr.mxu0 0.0
        %1235 = vmatpush1.msra.mxu0 0.0
        %1236 = vmatprep.subr.mxu0 0.0
        %1237 = vmatpush1.msra.mxu0 0.0
        %1238 = vmatprep.subr.mxu0 0.0
        %1239 = vmatpush1.msra.mxu0 0.0
        %1240 = vmatprep.subr.mxu0 0.0
        %1241 = vmatpush1.msra.mxu0 0.0
        %1242 = vmatprep.subr.mxu0 0.0
        %1243 = vmatpush1.msra.mxu0 %v1188
        %1244 = vmatprep.subr.mxu0 0.0
        %1245 = vmatpush1.msra.mxu0 %v1187
        %1246 = vmatprep.subr.mxu0 0.0
        %1247 = vmatpush1.msra.mxu0 %v1186
        %1248 = vmatprep.subr.mxu0 0.0
        %1249 = vmatpush1.msra.mxu0 %v1185
        %1250 = vmatprep.subr.mxu0 0.0
        %1251 = vmatpush2.msra.mxu0 0.0
        %1252 = vmatprep.subr.mxu0 0.0
        %1253 = vmatpush2.msra.mxu0 0.0
        %1254 = vmatprep.subr.mxu0 0.0
        %1255 = vmatpush2.msra.mxu0 0.0
        %1256 = vmatprep.subr.mxu0 0.0
        %1257 = vmatpush2.msra.mxu0 0.0
        %1258 = vmatprep.subr.mxu0 0.0
        %1259 = vmatpush2.msra.mxu0 0.0
        %1260 = vmatprep.subr.mxu0 0.0
        %1261 = vmatpush2.msra.mxu0 0.0
        %1262 = vmatprep.subr.mxu0 0.0
        %1263 = vmatpush2.msra.mxu0 0.0
        %1264 = vmatprep.subr.mxu0 0.0
        %1265 = vmatpush2.msra.mxu0 0.0
        %1266 = vmatprep.subr.mxu0 0.0
        %1267 = vmatpush2.msra.mxu0 0.0
        %1268 = vmatprep.subr.mxu0 0.0
        %1269 = vmatpush2.msra.mxu0 0.0
        %1270 = vmatprep.subr.mxu0 0.0
        %1271 = vmatpush2.msra.mxu0 0.0
        %1272 = vmatprep.subr.mxu0 0.0
        %1273 = vmatpush2.msra.mxu0 0.0
        %1274 = vmatprep.subr.mxu0 0.0
        %1275 = vmatpush2.msra.mxu0 0.0
        %1276 = vmatprep.subr.mxu0 0.0
        %1277 = vmatpush2.msra.mxu0 0.0
        %1278 = vmatprep.subr.mxu0 0.0
        %1279 = vmatpush2.msra.mxu0 0.0
        %1280 = vmatprep.subr.mxu0 0.0
        %1281 = vmatpush2.msra.mxu0 0.0
        %1282 = vmatprep.mubr.f32.mxu0 0.0
        %1283 = vmatmul.mubr.f32.gmra.mxu0 %v1195
        %v1284 = vpop.f32.mrf.mxu0
        %v1285 = vadd.f32 %v1192, %v1284
        %v1286 = vpop.f32.mrf.mxu0
        %1287 = vmatprep.mubr.f32.mxu0 0.0
        %1288 = vmatmul.mubr.f32.gmra.mxu0 %v1198
        %v1289 = vpop.f32.mrf.mxu0
        %v1290 = vadd.f32 %v1192, %v1289
        %v1291 = vpop.f32.mrf.mxu0
        %1292 = vmatprep.mubr.f32.mxu0 0.0
        %1293 = vmatmul.mubr.f32.gmra.mxu0 %v1201
        %v1294 = vpop.f32.mrf.mxu0
        %v1295 = vadd.f32 %v1192, %v1294
        %v1296 = vpop.f32.mrf.mxu0
        %1297 = vmatprep.mubr.f32.mxu0 0.0
        %1298 = vmatmul.mubr.f32.gmra.mxu0 %v1204
        %v1299 = vpop.f32.mrf.mxu0
        %v1300 = vadd.f32 %v1192, %v1299
        %v1301 = vpop.f32.mrf.mxu0
        %1302 = vmatprep.mubr.f32.mxu0 0.0
        %1303 = vmatmul.mubr.f32.gmra.mxu0 %v1207
        %v1304 = vpop.f32.mrf.mxu0
        %v1305 = vadd.f32 %v1192, %v1304
        %v1306 = vpop.f32.mrf.mxu0
        %1307 = vmatprep.mubr.f32.mxu0 0.0
        %1308 = vmatmul.mubr.f32.gmra.mxu0 %v1210
        %v1309 = vpop.f32.mrf.mxu0
        %v1310 = vadd.f32 %v1192, %v1309
        %v1311 = vpop.f32.mrf.mxu0
        %1312 = vmatprep.mubr.f32.mxu0 0.0
        %1313 = vmatmul.mubr.f32.gmra.mxu0 %v1213
        %v1314 = vpop.f32.mrf.mxu0
        %v1315 = vadd.f32 %v1192, %v1314
        %v1316 = vpop.f32.mrf.mxu0
        %1317 = vmatprep.mubr.f32.mxu0 0.0
        %1318 = vmatmul.mubr.f32.gmra.mxu0 %v1216
        %v1319 = vpop.f32.mrf.mxu0
        %v1320 = vadd.f32 %v1192, %v1319
        %v1321 = vpop.f32.mrf.mxu0
        %1322 = vdwg.mxu0
        %v1323 = vlaneseq
        %v1324 = vshrl.u32 %v1323, 7
        %v1325 = vsub.s32 4, %v1324
        %v1326 = vrot.slane %v454, %v1325
        %v1327 = vmul.f32 %v1285, %v1326
        %v1328 = vmul.f32 %v1290, %v1326
        %v1329 = vmul.f32 %v1295, %v1326
        %v1330 = vmul.f32 %v1300, %v1326
        %v1331 = vmul.f32 %v1305, %v1326
        %v1332 = vmul.f32 %v1310, %v1326
        %v1333 = vmul.f32 %v1315, %v1326
        %v1334 = vmul.f32 %v1320, %v1326
        %v1335 = vlaneseq
        %v1336 = vshrl.u32 %v1335, 7
        %v1337 = vsub.s32 5, %v1336
        %v1338 = vrot.slane %v454, %v1337
        %v1339 = vadd.f32 %v1327, %v1338
        %v1340 = vadd.f32 %v1328, %v1338
        %v1341 = vadd.f32 %v1329, %v1338
        %v1342 = vadd.f32 %v1330, %v1338
        %v1343 = vadd.f32 %v1331, %v1338
        %v1344 = vadd.f32 %v1332, %v1338
        %v1345 = vadd.f32 %v1333, %v1338
        %v1346 = vadd.f32 %v1334, %v1338
        %v1347 = vmul.f32 %v1339, 0.5
        %v1348 = vmul.f32 %v1340, 0.5
        %v1349 = vmul.f32 %v1341, 0.5
        %v1350 = vmul.f32 %v1342, 0.5
        %v1351 = vmul.f32 %v1343, 0.5
        %v1352 = vmul.f32 %v1344, 0.5
        %v1353 = vmul.f32 %v1345, 0.5
        %v1354 = vmul.f32 %v1346, 0.5
        %v1355 = vmul.f32 %v1339, 0.70710677
        %v1356 = vmul.f32 %v1340, 0.70710677
        %v1357 = vmul.f32 %v1341, 0.70710677
        %v1358 = vmul.f32 %v1342, 0.70710677
        %v1359 = vmul.f32 %v1343, 0.70710677
        %v1360 = vmul.f32 %v1344, 0.70710677
        %v1361 = vmul.f32 %v1345, 0.70710677
        %v1362 = vmul.f32 %v1346, 0.70710677
        %v1363 = verf.f32.pop %v1355
        %v1364 = verf.f32.pop %v1356
        %v1365 = verf.f32.pop %v1357
        %v1366 = verf.f32.pop %v1358
        %v1367 = verf.f32.pop %v1359
        %v1368 = verf.f32.pop %v1360
        %v1369 = verf.f32.pop %v1361
        %v1370 = verf.f32.pop %v1362
        %v1371 = vadd.f32 %v1363, 1.0
        %v1372 = vadd.f32 %v1364, 1.0
        %v1373 = vadd.f32 %v1365, 1.0
        %v1374 = vadd.f32 %v1366, 1.0
        %v1375 = vadd.f32 %v1367, 1.0
        %v1376 = vadd.f32 %v1368, 1.0
        %v1377 = vadd.f32 %v1369, 1.0
        %v1378 = vadd.f32 %v1370, 1.0
        %v1379 = vmul.f32 %v1347, %v1371
        %v1380 = vmul.f32 %v1348, %v1372
        %v1381 = vmul.f32 %v1349, %v1373
        %v1382 = vmul.f32 %v1350, %v1374
        %v1383 = vmul.f32 %v1351, %v1375
        %v1384 = vmul.f32 %v1352, %v1376
        %v1385 = vmul.f32 %v1353, %v1377
        %v1386 = vmul.f32 %v1354, %v1378
        %v1387 = vlaneseq
        %v1388 = vand.u32 %v1387, 127
        %v1389 = vsel %vm1193, %v1379, 0.0
        %1390 = vadd.xlane.f32.xlu0 %v1389
        %v1391 = vpop.xlane.xlu0 %1390
        %v1392 = vsel %vm1193, %v1380, 0.0
        %1393 = vadd.xlane.f32.xlu0 %v1392
        %v1394 = vpop.xlane.xlu0 %1393
        %v1395 = vsel %vm1193, %v1381, 0.0
        %1396 = vadd.xlane.f32.xlu0 %v1395
        %v1397 = vpop.xlane.xlu0 %1396
        %v1398 = vsel %vm1193, %v1382, 0.0
        %1399 = vadd.xlane.f32.xlu0 %v1398
        %v1400 = vpop.xlane.xlu0 %1399
        %v1401 = vsel %vm1193, %v1383, 0.0
        %1402 = vadd.xlane.f32.xlu0 %v1401
        %v1403 = vpop.xlane.xlu0 %1402
        %v1404 = vsel %vm1193, %v1384, 0.0
        %1405 = vadd.xlane.f32.xlu0 %v1404
        %v1406 = vpop.xlane.xlu0 %1405
        %v1407 = vsel %vm1193, %v1385, 0.0
        %1408 = vadd.xlane.f32.xlu0 %v1407
        %v1409 = vpop.xlane.xlu0 %1408
        %v1410 = vsel %vm1193, %v1386, 0.0
        %1411 = vadd.xlane.f32.xlu0 %v1410
        %v1412 = vpop.xlane.xlu0 %1411
        %v1413 = vrcp.pop 32.0
        %v1414 = vmul.f32 %v1391, %v1413
        %v1415 = vmul.f32 %v1394, %v1413
        %v1416 = vmul.f32 %v1397, %v1413
        %v1417 = vmul.f32 %v1400, %v1413
        %v1418 = vmul.f32 %v1403, %v1413
        %v1419 = vmul.f32 %v1406, %v1413
        %v1420 = vmul.f32 %v1409, %v1413
        %v1421 = vmul.f32 %v1412, %v1413
        %v1422 = vsub.f32 %v1379, %v1414
        %v1423 = vsub.f32 %v1380, %v1415
        %v1424 = vsub.f32 %v1381, %v1416
        %v1425 = vsub.f32 %v1382, %v1417
        %v1426 = vsub.f32 %v1383, %v1418
        %v1427 = vsub.f32 %v1384, %v1419
        %v1428 = vsub.f32 %v1385, %v1420
        %v1429 = vsub.f32 %v1386, %v1421
        %v1430 = vmul.f32 %v1422, %v1422
        %v1431 = vmul.f32 %v1423, %v1423
        %v1432 = vmul.f32 %v1424, %v1424
        %v1433 = vmul.f32 %v1425, %v1425
        %v1434 = vmul.f32 %v1426, %v1426
        %v1435 = vmul.f32 %v1427, %v1427
        %v1436 = vmul.f32 %v1428, %v1428
        %v1437 = vmul.f32 %v1429, %v1429
        %v1438 = vsel %vm1193, %v1430, 0.0
        %1439 = vadd.xlane.f32.xlu0 %v1438
        %v1440 = vpop.xlane.xlu0 %1439
        %v1441 = vsel %vm1193, %v1431, 0.0
        %1442 = vadd.xlane.f32.xlu0 %v1441
        %v1443 = vpop.xlane.xlu0 %1442
        %v1444 = vsel %vm1193, %v1432, 0.0
        %1445 = vadd.xlane.f32.xlu0 %v1444
        %v1446 = vpop.xlane.xlu0 %1445
        %v1447 = vsel %vm1193, %v1433, 0.0
        %1448 = vadd.xlane.f32.xlu0 %v1447
        %v1449 = vpop.xlane.xlu0 %1448
        %v1450 = vsel %vm1193, %v1434, 0.0
        %1451 = vadd.xlane.f32.xlu0 %v1450
        %v1452 = vpop.xlane.xlu0 %1451
        %v1453 = vsel %vm1193, %v1435, 0.0
        %1454 = vadd.xlane.f32.xlu0 %v1453
        %v1455 = vpop.xlane.xlu0 %1454
        %v1456 = vsel %vm1193, %v1436, 0.0
        %1457 = vadd.xlane.f32.xlu0 %v1456
        %v1458 = vpop.xlane.xlu0 %1457
        %v1459 = vsel %vm1193, %v1437, 0.0
        %1460 = vadd.xlane.f32.xlu0 %v1459
        %v1461 = vpop.xlane.xlu0 %1460
        %v1462 = vmul.f32 %v1440, %v1413
        %v1463 = vmul.f32 %v1443, %v1413
        %v1464 = vmul.f32 %v1446, %v1413
        %v1465 = vmul.f32 %v1449, %v1413
        %v1466 = vmul.f32 %v1452, %v1413
        %v1467 = vmul.f32 %v1455, %v1413
        %v1468 = vmul.f32 %v1458, %v1413
        %v1469 = vmul.f32 %v1461, %v1413
        %v1470 = vadd.f32 %v1462, 1e-05
        %v1471 = vadd.f32 %v1463, 1e-05
        %v1472 = vadd.f32 %v1464, 1e-05
        %v1473 = vadd.f32 %v1465, 1e-05
        %v1474 = vadd.f32 %v1466, 1e-05
        %v1475 = vadd.f32 %v1467, 1e-05
        %v1476 = vadd.f32 %v1468, 1e-05
        %v1477 = vadd.f32 %v1469, 1e-05
        %v1478 = vrsqrt.pop %v1470
        %v1479 = vrsqrt.pop %v1471
        %v1480 = vrsqrt.pop %v1472
        %v1481 = vrsqrt.pop %v1473
        %v1482 = vrsqrt.pop %v1474
        %v1483 = vrsqrt.pop %v1475
        %v1484 = vrsqrt.pop %v1476
        %v1485 = vrsqrt.pop %v1477
        %v1486 = vmul.f32 %v1422, %v1478
        %v1487 = vmul.f32 %v1423, %v1479
        %v1488 = vmul.f32 %v1424, %v1480
        %v1489 = vmul.f32 %v1425, %v1481
        %v1490 = vmul.f32 %v1426, %v1482
        %v1491 = vmul.f32 %v1427, %v1483
        %v1492 = vmul.f32 %v1428, %v1484
        %v1493 = vmul.f32 %v1429, %v1485
        %v1494 = vlaneseq
        %v1495 = vshrl.u32 %v1494, 7
        %v1496 = vsub.s32 6, %v1495
        %v1497 = vrot.slane %v454, %v1496
        %v1498 = vmul.f32 %v1486, %v1497
        %v1499 = vmul.f32 %v1487, %v1497
        %v1500 = vmul.f32 %v1488, %v1497
        %v1501 = vmul.f32 %v1489, %v1497
        %v1502 = vmul.f32 %v1490, %v1497
        %v1503 = vmul.f32 %v1491, %v1497
        %v1504 = vmul.f32 %v1492, %v1497
        %v1505 = vmul.f32 %v1493, %v1497
        %v1506 = vlaneseq
        %v1507 = vshrl.u32 %v1506, 7
        %v1508 = vsub.s32 7, %v1507
        %v1509 = vrot.slane %v454, %v1508
        %v1510 = vadd.f32 %v1498, %v1509
        %v1511 = vadd.f32 %v1499, %v1509
        %v1512 = vadd.f32 %v1500, %v1509
        %v1513 = vadd.f32 %v1501, %v1509
        %v1514 = vadd.f32 %v1502, %v1509
        %v1515 = vadd.f32 %v1503, %v1509
        %v1516 = vadd.f32 %v1504, %v1509
        %v1517 = vadd.f32 %v1505, %v1509
        %v1518 = vld [vmem:[%s3] sm:$0xff]
        %v1519 = vld [vmem:[%s3 + $0x8] sm:$0xff]
        %v1520 = vld [vmem:[%s3 + $0x10] sm:$0xff]
        %v1521 = vld [vmem:[%s3 + $0x18] sm:$0xff]
        %v1522 = vlaneseq
        %v1523 = vshrl.u32 %v1522, 7
        %v1524 = vsub.s32 0, %v1523
        %v1525 = vrot.slane %v455, %v1524
        %v1527 = vsel %vm1193, %v1510, 0
        %v1530 = vsel %vm1193, %v1511, 0
        %v1533 = vsel %vm1193, %v1512, 0
        %v1536 = vsel %vm1193, %v1513, 0
        %v1539 = vsel %vm1193, %v1514, 0
        %v1542 = vsel %vm1193, %v1515, 0
        %v1545 = vsel %vm1193, %v1516, 0
        %v1548 = vsel %vm1193, %v1517, 0
        %1550 = vmatprep.subr.mxu0 0.0
        %1551 = vmatpush1.msra.mxu0 0.0
        %1552 = vmatprep.subr.mxu0 0.0
        %1553 = vmatpush1.msra.mxu0 0.0
        %1554 = vmatprep.subr.mxu0 0.0
        %1555 = vmatpush1.msra.mxu0 0.0
        %1556 = vmatprep.subr.mxu0 0.0
        %1557 = vmatpush1.msra.mxu0 0.0
        %1558 = vmatprep.subr.mxu0 0.0
        %1559 = vmatpush1.msra.mxu0 0.0
        %1560 = vmatprep.subr.mxu0 0.0
        %1561 = vmatpush1.msra.mxu0 0.0
        %1562 = vmatprep.subr.mxu0 0.0
        %1563 = vmatpush1.msra.mxu0 0.0
        %1564 = vmatprep.subr.mxu0 0.0
        %1565 = vmatpush1.msra.mxu0 0.0
        %1566 = vmatprep.subr.mxu0 0.0
        %1567 = vmatpush1.msra.mxu0 0.0
        %1568 = vmatprep.subr.mxu0 0.0
        %1569 = vmatpush1.msra.mxu0 0.0
        %1570 = vmatprep.subr.mxu0 0.0
        %1571 = vmatpush1.msra.mxu0 0.0
        %1572 = vmatprep.subr.mxu0 0.0
        %1573 = vmatpush1.msra.mxu0 0.0
        %1574 = vmatprep.subr.mxu0 0.0
        %1575 = vmatpush1.msra.mxu0 %v1521
        %1576 = vmatprep.subr.mxu0 0.0
        %1577 = vmatpush1.msra.mxu0 %v1520
        %1578 = vmatprep.subr.mxu0 0.0
        %1579 = vmatpush1.msra.mxu0 %v1519
        %1580 = vmatprep.subr.mxu0 0.0
        %1581 = vmatpush1.msra.mxu0 %v1518
        %1582 = vmatprep.subr.mxu0 0.0
        %1583 = vmatpush2.msra.mxu0 0.0
        %1584 = vmatprep.subr.mxu0 0.0
        %1585 = vmatpush2.msra.mxu0 0.0
        %1586 = vmatprep.subr.mxu0 0.0
        %1587 = vmatpush2.msra.mxu0 0.0
        %1588 = vmatprep.subr.mxu0 0.0
        %1589 = vmatpush2.msra.mxu0 0.0
        %1590 = vmatprep.subr.mxu0 0.0
        %1591 = vmatpush2.msra.mxu0 0.0
        %1592 = vmatprep.subr.mxu0 0.0
        %1593 = vmatpush2.msra.mxu0 0.0
        %1594 = vmatprep.subr.mxu0 0.0
        %1595 = vmatpush2.msra.mxu0 0.0
        %1596 = vmatprep.subr.mxu0 0.0
        %1597 = vmatpush2.msra.mxu0 0.0
        %1598 = vmatprep.subr.mxu0 0.0
        %1599 = vmatpush2.msra.mxu0 0.0
        %1600 = vmatprep.subr.mxu0 0.0
        %1601 = vmatpush2.msra.mxu0 0.0
        %1602 = vmatprep.subr.mxu0 0.0
        %1603 = vmatpush2.msra.mxu0 0.0
        %1604 = vmatprep.subr.mxu0 0.0
        %1605 = vmatpush2.msra.mxu0 0.0
        %1606 = vmatprep.subr.mxu0 0.0
        %1607 = vmatpush2.msra.mxu0 0.0
        %1608 = vmatprep.subr.mxu0 0.0
        %1609 = vmatpush2.msra.mxu0 0.0
        %1610 = vmatprep.subr.mxu0 0.0
        %1611 = vmatpush2.msra.mxu0 0.0
        %1612 = vmatprep.subr.mxu0 0.0
        %1613 = vmatpush2.msra.mxu0 0.0
        %1614 = vmatprep.mubr.f32.mxu0 0.0
        %1615 = vmatmul.mubr.f32.gmra.mxu0 %v1527
        %v1616 = vpop.f32.mrf.mxu0
        %v1617 = vadd.f32 %v1525, %v1616
        %v1618 = vpop.f32.mrf.mxu0
        %1619 = vmatprep.mubr.f32.mxu0 0.0
        %1620 = vmatmul.mubr.f32.gmra.mxu0 %v1530
        %v1621 = vpop.f32.mrf.mxu0
        %v1622 = vadd.f32 %v1525, %v1621
        %v1623 = vpop.f32.mrf.mxu0
        %1624 = vmatprep.mubr.f32.mxu0 0.0
        %1625 = vmatmul.mubr.f32.gmra.mxu0 %v1533
        %v1626 = vpop.f32.mrf.mxu0
        %v1627 = vadd.f32 %v1525, %v1626
        %v1628 = vpop.f32.mrf.mxu0
        %1629 = vmatprep.mubr.f32.mxu0 0.0
        %1630 = vmatmul.mubr.f32.gmra.mxu0 %v1536
        %v1631 = vpop.f32.mrf.mxu0
        %v1632 = vadd.f32 %v1525, %v1631
        %v1633 = vpop.f32.mrf.mxu0
        %1634 = vmatprep.mubr.f32.mxu0 0.0
        %1635 = vmatmul.mubr.f32.gmra.mxu0 %v1539
        %v1636 = vpop.f32.mrf.mxu0
        %v1637 = vadd.f32 %v1525, %v1636
        %v1638 = vpop.f32.mrf.mxu0
        %1639 = vmatprep.mubr.f32.mxu0 0.0
        %1640 = vmatmul.mubr.f32.gmra.mxu0 %v1542
        %v1641 = vpop.f32.mrf.mxu0
        %v1642 = vadd.f32 %v1525, %v1641
        %v1643 = vpop.f32.mrf.mxu0
        %1644 = vmatprep.mubr.f32.mxu0 0.0
        %1645 = vmatmul.mubr.f32.gmra.mxu0 %v1545
        %v1646 = vpop.f32.mrf.mxu0
        %v1647 = vadd.f32 %v1525, %v1646
        %v1648 = vpop.f32.mrf.mxu0
        %1649 = vmatprep.mubr.f32.mxu0 0.0
        %1650 = vmatmul.mubr.f32.gmra.mxu0 %v1548
        %v1651 = vpop.f32.mrf.mxu0
        %v1652 = vadd.f32 %v1525, %v1651
        %v1653 = vpop.f32.mrf.mxu0
        %1654 = vdwg.mxu0
        %v1655 = vld [vmem:[#allocation7] sm:$0xff]
        %v1656 = vld [vmem:[#allocation7 + $0x8] sm:$0xff]
        %v1657 = vld [vmem:[#allocation7 + $0x10] sm:$0xff]
        %v1658 = vld [vmem:[#allocation7 + $0x18] sm:$0xff]
        %v1659 = vlaneseq
        %v1660 = vshrl.u32 %v1659, 7
        %v1661 = vsub.s32 1, %v1660
        %v1662 = vrot.slane %v455, %v1661
        %1663 = vmatprep.subr.mxu0 0.0
        %1664 = vmatpush1.msra.mxu0 0.0
        %1665 = vmatprep.subr.mxu0 0.0
        %1666 = vmatpush1.msra.mxu0 0.0
        %1667 = vmatprep.subr.mxu0 0.0
        %1668 = vmatpush1.msra.mxu0 0.0
        %1669 = vmatprep.subr.mxu0 0.0
        %1670 = vmatpush1.msra.mxu0 0.0
        %1671 = vmatprep.subr.mxu0 0.0
        %1672 = vmatpush1.msra.mxu0 0.0
        %1673 = vmatprep.subr.mxu0 0.0
        %1674 = vmatpush1.msra.mxu0 0.0
        %1675 = vmatprep.subr.mxu0 0.0
        %1676 = vmatpush1.msra.mxu0 0.0
        %1677 = vmatprep.subr.mxu0 0.0
        %1678 = vmatpush1.msra.mxu0 0.0
        %1679 = vmatprep.subr.mxu0 0.0
        %1680 = vmatpush1.msra.mxu0 0.0
        %1681 = vmatprep.subr.mxu0 0.0
        %1682 = vmatpush1.msra.mxu0 0.0
        %1683 = vmatprep.subr.mxu0 0.0
        %1684 = vmatpush1.msra.mxu0 0.0
        %1685 = vmatprep.subr.mxu0 0.0
        %1686 = vmatpush1.msra.mxu0 0.0
        %1687 = vmatprep.subr.mxu0 0.0
        %1688 = vmatpush1.msra.mxu0 %v1658
        %1689 = vmatprep.subr.mxu0 0.0
        %1690 = vmatpush1.msra.mxu0 %v1657
        %1691 = vmatprep.subr.mxu0 0.0
        %1692 = vmatpush1.msra.mxu0 %v1656
        %1693 = vmatprep.subr.mxu0 0.0
        %1694 = vmatpush1.msra.mxu0 %v1655
        %1695 = vmatprep.subr.mxu0 0.0
        %1696 = vmatpush2.msra.mxu0 0.0
        %1697 = vmatprep.subr.mxu0 0.0
        %1698 = vmatpush2.msra.mxu0 0.0
        %1699 = vmatprep.subr.mxu0 0.0
        %1700 = vmatpush2.msra.mxu0 0.0
        %1701 = vmatprep.subr.mxu0 0.0
        %1702 = vmatpush2.msra.mxu0 0.0
        %1703 = vmatprep.subr.mxu0 0.0
        %1704 = vmatpush2.msra.mxu0 0.0
        %1705 = vmatprep.subr.mxu0 0.0
        %1706 = vmatpush2.msra.mxu0 0.0
        %1707 = vmatprep.subr.mxu0 0.0
        %1708 = vmatpush2.msra.mxu0 0.0
        %1709 = vmatprep.subr.mxu0 0.0
        %1710 = vmatpush2.msra.mxu0 0.0
        %1711 = vmatprep.subr.mxu0 0.0
        %1712 = vmatpush2.msra.mxu0 0.0
        %1713 = vmatprep.subr.mxu0 0.0
        %1714 = vmatpush2.msra.mxu0 0.0
        %1715 = vmatprep.subr.mxu0 0.0
        %1716 = vmatpush2.msra.mxu0 0.0
        %1717 = vmatprep.subr.mxu0 0.0
        %1718 = vmatpush2.msra.mxu0 0.0
        %1719 = vmatprep.subr.mxu0 0.0
        %1720 = vmatpush2.msra.mxu0 0.0
        %1721 = vmatprep.subr.mxu0 0.0
        %1722 = vmatpush2.msra.mxu0 0.0
        %1723 = vmatprep.subr.mxu0 0.0
        %1724 = vmatpush2.msra.mxu0 0.0
        %1725 = vmatprep.subr.mxu0 0.0
        %1726 = vmatpush2.msra.mxu0 0.0
        %1727 = vmatprep.mubr.f32.mxu0 0.0
        %1728 = vmatmul.mubr.f32.gmra.mxu0 %v1527
        %v1729 = vpop.f32.mrf.mxu0
        %v1730 = vadd.f32 %v1662, %v1729
        %v1731 = vpop.f32.mrf.mxu0
        %1732 = vmatprep.mubr.f32.mxu0 0.0
        %1733 = vmatmul.mubr.f32.gmra.mxu0 %v1530
        %v1734 = vpop.f32.mrf.mxu0
        %v1735 = vadd.f32 %v1662, %v1734
        %v1736 = vpop.f32.mrf.mxu0
        %1737 = vmatprep.mubr.f32.mxu0 0.0
        %1738 = vmatmul.mubr.f32.gmra.mxu0 %v1533
        %v1739 = vpop.f32.mrf.mxu0
        %v1740 = vadd.f32 %v1662, %v1739
        %v1741 = vpop.f32.mrf.mxu0
        %1742 = vmatprep.mubr.f32.mxu0 0.0
        %1743 = vmatmul.mubr.f32.gmra.mxu0 %v1536
        %v1744 = vpop.f32.mrf.mxu0
        %v1745 = vadd.f32 %v1662, %v1744
        %v1746 = vpop.f32.mrf.mxu0
        %1747 = vmatprep.mubr.f32.mxu0 0.0
        %1748 = vmatmul.mubr.f32.gmra.mxu0 %v1539
        %v1749 = vpop.f32.mrf.mxu0
        %v1750 = vadd.f32 %v1662, %v1749
        %v1751 = vpop.f32.mrf.mxu0
        %1752 = vmatprep.mubr.f32.mxu0 0.0
        %1753 = vmatmul.mubr.f32.gmra.mxu0 %v1542
        %v1754 = vpop.f32.mrf.mxu0
        %v1755 = vadd.f32 %v1662, %v1754
        %v1756 = vpop.f32.mrf.mxu0
        %1757 = vmatprep.mubr.f32.mxu0 0.0
        %1758 = vmatmul.mubr.f32.gmra.mxu0 %v1545
        %v1759 = vpop.f32.mrf.mxu0
        %v1760 = vadd.f32 %v1662, %v1759
        %v1761 = vpop.f32.mrf.mxu0
        %1762 = vmatprep.mubr.f32.mxu0 0.0
        %1763 = vmatmul.mubr.f32.gmra.mxu0 %v1548
        %v1764 = vpop.f32.mrf.mxu0
        %v1765 = vadd.f32 %v1662, %v1764
        %v1766 = vpop.f32.mrf.mxu0
        %1767 = vdwg.mxu0
        %vm1768 = vcmp.ge.s32.totalorder %v1388, 0
        %vm1769 = vcmp.lt.s32.totalorder %v1388, 8
        %vm1770 = vmand %vm1768, %vm1769
        %v1771 = vsel %vm1770, 1, 0
        %vm1772 = vcmp.eq.s32.totalorder %v1771, 1
        %v1773 = vsel %vm1772, %v1617, 0.0
        %v1774 = vsel %vm1772, %v1622, 0.0
        %v1775 = vsel %vm1772, %v1627, 0.0
        %v1776 = vsel %vm1772, %v1632, 0.0
        %v1777 = vsel %vm1772, %v1637, 0.0
        %v1778 = vsel %vm1772, %v1642, 0.0
        %v1779 = vsel %vm1772, %v1647, 0.0
        %v1780 = vsel %vm1772, %v1652, 0.0
        %v1782 = vsel %vm1193, %v1773, 0
        %v1785 = vsel %vm1193, %v1774, 0
        %v1788 = vsel %vm1193, %v1775, 0
        %v1791 = vsel %vm1193, %v1776, 0
        %v1794 = vsel %vm1193, %v1777, 0
        %v1797 = vsel %vm1193, %v1778, 0
        %v1800 = vsel %vm1193, %v1779, 0
        %v1803 = vsel %vm1193, %v1780, 0
        %v1806 = vsel %vm1193, %v1730, 0
        %v1809 = vsel %vm1193, %v1735, 0
        %v1812 = vsel %vm1193, %v1740, 0
        %v1815 = vsel %vm1193, %v1745, 0
        %v1818 = vsel %vm1193, %v1750, 0
        %v1821 = vsel %vm1193, %v1755, 0
        %v1824 = vsel %vm1193, %v1760, 0
        %v1827 = vsel %vm1193, %v1765, 0
        %1829 = vmatprep.subr.mxu0 0.0
        %1830 = vmatpush1.xpose.msra.mxu0 0.0
        %1831 = vmatprep.subr.mxu0 0.0
        %1832 = vmatpush1.xpose.msra.mxu0 0.0
        %1833 = vmatprep.subr.mxu0 0.0
        %1834 = vmatpush1.xpose.msra.mxu0 0.0
        %1835 = vmatprep.subr.mxu0 0.0
        %1836 = vmatpush1.xpose.msra.mxu0 0.0
        %1837 = vmatprep.subr.mxu0 0.0
        %1838 = vmatpush1.xpose.msra.mxu0 0.0
        %1839 = vmatprep.subr.mxu0 0.0
        %1840 = vmatpush1.xpose.msra.mxu0 0.0
        %1841 = vmatprep.subr.mxu0 0.0
        %1842 = vmatpush1.xpose.msra.mxu0 0.0
        %1843 = vmatprep.subr.mxu0 0.0
        %1844 = vmatpush1.xpose.msra.mxu0 0.0
        %1845 = vmatprep.subr.mxu0 0.0
        %1846 = vmatpush1.xpose.msra.mxu0 %v1827
        %1847 = vmatprep.subr.mxu0 0.0
        %1848 = vmatpush1.xpose.msra.mxu0 %v1824
        %1849 = vmatprep.subr.mxu0 0.0
        %1850 = vmatpush1.xpose.msra.mxu0 %v1821
        %1851 = vmatprep.subr.mxu0 0.0
        %1852 = vmatpush1.xpose.msra.mxu0 %v1818
        %1853 = vmatprep.subr.mxu0 0.0
        %1854 = vmatpush1.xpose.msra.mxu0 %v1815
        %1855 = vmatprep.subr.mxu0 0.0
        %1856 = vmatpush1.xpose.msra.mxu0 %v1812
        %1857 = vmatprep.subr.mxu0 0.0
        %1858 = vmatpush1.xpose.msra.mxu0 %v1809
        %1859 = vmatprep.subr.mxu0 0.0
        %1860 = vmatpush1.xpose.msra.mxu0 %v1806
        %1861 = vmatprep.subr.mxu0 0.0
        %1862 = vmatpush2.xpose.msra.mxu0 0.0
        %1863 = vmatprep.subr.mxu0 0.0
        %1864 = vmatpush2.xpose.msra.mxu0 0.0
        %1865 = vmatprep.subr.mxu0 0.0
        %1866 = vmatpush2.xpose.msra.mxu0 0.0
        %1867 = vmatprep.subr.mxu0 0.0
        %1868 = vmatpush2.xpose.msra.mxu0 0.0
        %1869 = vmatprep.subr.mxu0 0.0
        %1870 = vmatpush2.xpose.msra.mxu0 0.0
        %1871 = vmatprep.subr.mxu0 0.0
        %1872 = vmatpush2.xpose.msra.mxu0 0.0
        %1873 = vmatprep.subr.mxu0 0.0
        %1874 = vmatpush2.xpose.msra.mxu0 0.0
        %1875 = vmatprep.subr.mxu0 0.0
        %1876 = vmatpush2.xpose.msra.mxu0 0.0
        %1877 = vmatprep.subr.mxu0 0.0
        %1878 = vmatpush2.xpose.msra.mxu0 0.0
        %1879 = vmatprep.subr.mxu0 0.0
        %1880 = vmatpush2.xpose.msra.mxu0 0.0
        %1881 = vmatprep.subr.mxu0 0.0
        %1882 = vmatpush2.xpose.msra.mxu0 0.0
        %1883 = vmatprep.subr.mxu0 0.0
        %1884 = vmatpush2.xpose.msra.mxu0 0.0
        %1885 = vmatprep.subr.mxu0 0.0
        %1886 = vmatpush2.xpose.msra.mxu0 0.0
        %1887 = vmatprep.subr.mxu0 0.0
        %1888 = vmatpush2.xpose.msra.mxu0 0.0
        %1889 = vmatprep.subr.mxu0 0.0
        %1890 = vmatpush2.xpose.msra.mxu0 0.0
        %1891 = vmatprep.subr.mxu0 0.0
        %1892 = vmatpush2.xpose.msra.mxu0 0.0
        %1893 = vmatprep.mubr.f32.mxu0 0.0
        %1894 = vmatmul.mubr.f32.gmra.mxu0 %v1782
        %v1895 = vpop.f32.mrf.mxu0
        %v1896 = vadd.f32 0.0, %v1895
        %v1897 = vpop.f32.mrf.mxu0
        %1898 = vmatprep.mubr.f32.mxu0 0.0
        %1899 = vmatmul.mubr.f32.gmra.mxu0 %v1785
        %v1900 = vpop.f32.mrf.mxu0
        %v1901 = vadd.f32 0.0, %v1900
        %v1902 = vpop.f32.mrf.mxu0
        %1903 = vmatprep.mubr.f32.mxu0 0.0
        %1904 = vmatmul.mubr.f32.gmra.mxu0 %v1788
        %v1905 = vpop.f32.mrf.mxu0
        %v1906 = vadd.f32 0.0, %v1905
        %v1907 = vpop.f32.mrf.mxu0
        %1908 = vmatprep.mubr.f32.mxu0 0.0
        %1909 = vmatmul.mubr.f32.gmra.mxu0 %v1791
        %v1910 = vpop.f32.mrf.mxu0
        %v1911 = vadd.f32 0.0, %v1910
        %v1912 = vpop.f32.mrf.mxu0
        %1913 = vmatprep.mubr.f32.mxu0 0.0
        %1914 = vmatmul.mubr.f32.gmra.mxu0 %v1794
        %v1915 = vpop.f32.mrf.mxu0
        %v1916 = vadd.f32 0.0, %v1915
        %v1917 = vpop.f32.mrf.mxu0
        %1918 = vmatprep.mubr.f32.mxu0 0.0
        %1919 = vmatmul.mubr.f32.gmra.mxu0 %v1797
        %v1920 = vpop.f32.mrf.mxu0
        %v1921 = vadd.f32 0.0, %v1920
        %v1922 = vpop.f32.mrf.mxu0
        %1923 = vmatprep.mubr.f32.mxu0 0.0
        %1924 = vmatmul.mubr.f32.gmra.mxu0 %v1800
        %v1925 = vpop.f32.mrf.mxu0
        %v1926 = vadd.f32 0.0, %v1925
        %v1927 = vpop.f32.mrf.mxu0
        %1928 = vmatprep.mubr.f32.mxu0 0.0
        %1929 = vmatmul.mubr.f32.gmra.mxu0 %v1803
        %v1930 = vpop.f32.mrf.mxu0
        %v1931 = vadd.f32 0.0, %v1930
        %v1932 = vpop.f32.mrf.mxu0
        %1933 = vdwg.mxu0
        %v1934 = vmul.f32 %v1896, 0.35355338
        %v1935 = vmul.f32 %v1901, 0.35355338
        %v1936 = vmul.f32 %v1906, 0.35355338
        %v1937 = vmul.f32 %v1911, 0.35355338
        %v1938 = vmul.f32 %v1916, 0.35355338
        %v1939 = vmul.f32 %v1921, 0.35355338
        %v1940 = vmul.f32 %v1926, 0.35355338
        %v1941 = vmul.f32 %v1931, 0.35355338
        %vm1942 = vcmask 523264
        %v1943 = vsel %vm1942, %v1934, -inf
        %1944 = vmax.xlane.f32.xlu0 %v1943
        %v1945 = vpop.xlane.xlu0 %1944
        %v1946 = vsel %vm1942, %v1935, -inf
        %1947 = vmax.xlane.f32.xlu0 %v1946
        %v1948 = vpop.xlane.xlu0 %1947
        %v1949 = vsel %vm1942, %v1936, -inf
        %1950 = vmax.xlane.f32.xlu0 %v1949
        %v1951 = vpop.xlane.xlu0 %1950
        %v1952 = vsel %vm1942, %v1937, -inf
        %1953 = vmax.xlane.f32.xlu0 %v1952
        %v1954 = vpop.xlane.xlu0 %1953
        %v1955 = vsel %vm1942, %v1938, -inf
        %1956 = vmax.xlane.f32.xlu0 %v1955
        %v1957 = vpop.xlane.xlu0 %1956
        %v1958 = vsel %vm1942, %v1939, -inf
        %1959 = vmax.xlane.f32.xlu0 %v1958
        %v1960 = vpop.xlane.xlu0 %1959
        %v1961 = vsel %vm1942, %v1940, -inf
        %1962 = vmax.xlane.f32.xlu0 %v1961
        %v1963 = vpop.xlane.xlu0 %1962
        %v1964 = vsel %vm1942, %v1941, -inf
        %1965 = vmax.xlane.f32.xlu0 %v1964
        %v1966 = vpop.xlane.xlu0 %1965
        %v1967 = vsub.f32 %v1934, %v1945
        %v1968 = vsub.f32 %v1935, %v1948
        %v1969 = vsub.f32 %v1936, %v1951
        %v1970 = vsub.f32 %v1937, %v1954
        %v1971 = vsub.f32 %v1938, %v1957
        %v1972 = vsub.f32 %v1939, %v1960
        %v1973 = vsub.f32 %v1940, %v1963
        %v1974 = vsub.f32 %v1941, %v1966
        %v1975 = vmul.f32 %v1967, 1.442695
        %v1976 = vpow.pop %v1975
        %v1977 = vmul.f32 %v1968, 1.442695
        %v1978 = vpow.pop %v1977
        %v1979 = vmul.f32 %v1969, 1.442695
        %v1980 = vpow.pop %v1979
        %v1981 = vmul.f32 %v1970, 1.442695
        %v1982 = vpow.pop %v1981
        %v1983 = vmul.f32 %v1971, 1.442695
        %v1984 = vpow.pop %v1983
        %v1985 = vmul.f32 %v1972, 1.442695
        %v1986 = vpow.pop %v1985
        %v1987 = vmul.f32 %v1973, 1.442695
        %v1988 = vpow.pop %v1987
        %v1989 = vmul.f32 %v1974, 1.442695
        %v1990 = vpow.pop %v1989
        %v1991 = vsel %vm1942, %v1976, 0.0
        %1992 = vadd.xlane.f32.xlu0 %v1991
        %v1993 = vpop.xlane.xlu0 %1992
        %v1994 = vsel %vm1942, %v1978, 0.0
        %1995 = vadd.xlane.f32.xlu0 %v1994
        %v1996 = vpop.xlane.xlu0 %1995
        %v1997 = vsel %vm1942, %v1980, 0.0
        %1998 = vadd.xlane.f32.xlu0 %v1997
        %v1999 = vpop.xlane.xlu0 %1998
        %v2000 = vsel %vm1942, %v1982, 0.0
        %2001 = vadd.xlane.f32.xlu0 %v2000
        %v2002 = vpop.xlane.xlu0 %2001
        %v2003 = vsel %vm1942, %v1984, 0.0
        %2004 = vadd.xlane.f32.xlu0 %v2003
        %v2005 = vpop.xlane.xlu0 %2004
        %v2006 = vsel %vm1942, %v1986, 0.0
        %2007 = vadd.xlane.f32.xlu0 %v2006
        %v2008 = vpop.xlane.xlu0 %2007
        %v2009 = vsel %vm1942, %v1988, 0.0
        %2010 = vadd.xlane.f32.xlu0 %v2009
        %v2011 = vpop.xlane.xlu0 %2010
        %v2012 = vsel %vm1942, %v1990, 0.0
        %2013 = vadd.xlane.f32.xlu0 %v2012
        %v2014 = vpop.xlane.xlu0 %2013
        %v2015 = vrcp.pop %v1993
        %v2016 = vrcp.pop %v1996
        %v2017 = vrcp.pop %v1999
        %v2018 = vrcp.pop %v2002
        %v2019 = vrcp.pop %v2005
        %v2020 = vrcp.pop %v2008
        %v2021 = vrcp.pop %v2011
        %v2022 = vrcp.pop %v2014
        %v2023 = vmul.f32 %v1976, %v2015
        %v2024 = vmul.f32 %v1978, %v2016
        %v2025 = vmul.f32 %v1980, %v2017
        %v2026 = vmul.f32 %v1982, %v2018
        %v2027 = vmul.f32 %v1984, %v2019
        %v2028 = vmul.f32 %v1986, %v2020
        %v2029 = vmul.f32 %v1988, %v2021
        %v2030 = vmul.f32 %v1990, %v2022
        %v2031 = vld [vmem:[#allocation8] sm:$0xff]
        %v2032 = vld [vmem:[#allocation8 + $0x8] sm:$0xff]
        %v2033 = vld [vmem:[#allocation8 + $0x10] sm:$0xff]
        %v2034 = vld [vmem:[#allocation8 + $0x18] sm:$0xff]
        %2035 = vmatprep.subr.mxu0 0.0
        %2036 = vmatpush1.msra.mxu0 0.0
        %2037 = vmatprep.subr.mxu0 0.0
        %2038 = vmatpush1.msra.mxu0 0.0
        %2039 = vmatprep.subr.mxu0 0.0
        %2040 = vmatpush1.msra.mxu0 0.0
        %2041 = vmatprep.subr.mxu0 0.0
        %2042 = vmatpush1.msra.mxu0 0.0
        %2043 = vmatprep.subr.mxu0 0.0
        %2044 = vmatpush1.msra.mxu0 0.0
        %2045 = vmatprep.subr.mxu0 0.0
        %2046 = vmatpush1.msra.mxu0 0.0
        %2047 = vmatprep.subr.mxu0 0.0
        %2048 = vmatpush1.msra.mxu0 0.0
        %2049 = vmatprep.subr.mxu0 0.0
        %2050 = vmatpush1.msra.mxu0 0.0
        %2051 = vmatprep.subr.mxu0 0.0
        %2052 = vmatpush1.msra.mxu0 0.0
        %2053 = vmatprep.subr.mxu0 0.0
        %2054 = vmatpush1.msra.mxu0 0.0
        %2055 = vmatprep.subr.mxu0 0.0
        %2056 = vmatpush1.msra.mxu0 0.0
        %2057 = vmatprep.subr.mxu0 0.0
        %2058 = vmatpush1.msra.mxu0 0.0
        %2059 = vmatprep.subr.mxu0 0.0
        %2060 = vmatpush1.msra.mxu0 %v2034
        %2061 = vmatprep.subr.mxu0 0.0
        %2062 = vmatpush1.msra.mxu0 %v2033
        %2063 = vmatprep.subr.mxu0 0.0
        %2064 = vmatpush1.msra.mxu0 %v2032
        %2065 = vmatprep.subr.mxu0 0.0
        %2066 = vmatpush1.msra.mxu0 %v2031
        %2067 = vmatprep.subr.mxu0 0.0
        %2068 = vmatpush2.msra.mxu0 0.0
        %2069 = vmatprep.subr.mxu0 0.0
        %2070 = vmatpush2.msra.mxu0 0.0
        %2071 = vmatprep.subr.mxu0 0.0
        %2072 = vmatpush2.msra.mxu0 0.0
        %2073 = vmatprep.subr.mxu0 0.0
        %2074 = vmatpush2.msra.mxu0 0.0
        %2075 = vmatprep.subr.mxu0 0.0
        %2076 = vmatpush2.msra.mxu0 0.0
        %2077 = vmatprep.subr.mxu0 0.0
        %2078 = vmatpush2.msra.mxu0 0.0
        %2079 = vmatprep.subr.mxu0 0.0
        %2080 = vmatpush2.msra.mxu0 0.0
        %2081 = vmatprep.subr.mxu0 0.0
        %2082 = vmatpush2.msra.mxu0 0.0
        %2083 = vmatprep.subr.mxu0 0.0
        %2084 = vmatpush2.msra.mxu0 0.0
        %2085 = vmatprep.subr.mxu0 0.0
        %2086 = vmatpush2.msra.mxu0 0.0
        %2087 = vmatprep.subr.mxu0 0.0
        %2088 = vmatpush2.msra.mxu0 0.0
        %2089 = vmatprep.subr.mxu0 0.0
        %2090 = vmatpush2.msra.mxu0 0.0
        %2091 = vmatprep.subr.mxu0 0.0
        %2092 = vmatpush2.msra.mxu0 0.0
        %2093 = vmatprep.subr.mxu0 0.0
        %2094 = vmatpush2.msra.mxu0 0.0
        %2095 = vmatprep.subr.mxu0 0.0
        %2096 = vmatpush2.msra.mxu0 0.0
        %2097 = vmatprep.subr.mxu0 0.0
        %2098 = vmatpush2.msra.mxu0 0.0
        %2099 = vmatprep.mubr.f32.mxu0 0.0
        %2100 = vmatmul.mubr.f32.gmra.mxu0 %v1527
        %v2101 = vpop.f32.mrf.mxu0
        %v2102 = vadd.f32 0.0, %v2101
        %v2103 = vpop.f32.mrf.mxu0
        %2104 = vmatprep.mubr.f32.mxu0 0.0
        %2105 = vmatmul.mubr.f32.gmra.mxu0 %v1530
        %v2106 = vpop.f32.mrf.mxu0
        %v2107 = vadd.f32 0.0, %v2106
        %v2108 = vpop.f32.mrf.mxu0
        %2109 = vmatprep.mubr.f32.mxu0 0.0
        %2110 = vmatmul.mubr.f32.gmra.mxu0 %v1533
        %v2111 = vpop.f32.mrf.mxu0
        %v2112 = vadd.f32 0.0, %v2111
        %v2113 = vpop.f32.mrf.mxu0
        %2114 = vmatprep.mubr.f32.mxu0 0.0
        %2115 = vmatmul.mubr.f32.gmra.mxu0 %v1536
        %v2116 = vpop.f32.mrf.mxu0
        %v2117 = vadd.f32 0.0, %v2116
        %v2118 = vpop.f32.mrf.mxu0
        %2119 = vmatprep.mubr.f32.mxu0 0.0
        %2120 = vmatmul.mubr.f32.gmra.mxu0 %v1539
        %v2121 = vpop.f32.mrf.mxu0
        %v2122 = vadd.f32 0.0, %v2121
        %v2123 = vpop.f32.mrf.mxu0
        %2124 = vmatprep.mubr.f32.mxu0 0.0
        %2125 = vmatmul.mubr.f32.gmra.mxu0 %v1542
        %v2126 = vpop.f32.mrf.mxu0
        %v2127 = vadd.f32 0.0, %v2126
        %v2128 = vpop.f32.mrf.mxu0
        %2129 = vmatprep.mubr.f32.mxu0 0.0
        %2130 = vmatmul.mubr.f32.gmra.mxu0 %v1545
        %v2131 = vpop.f32.mrf.mxu0
        %v2132 = vadd.f32 0.0, %v2131
        %v2133 = vpop.f32.mrf.mxu0
        %2134 = vmatprep.mubr.f32.mxu0 0.0
        %2135 = vmatmul.mubr.f32.gmra.mxu0 %v1548
        %v2136 = vpop.f32.mrf.mxu0
        %v2137 = vadd.f32 0.0, %v2136
        %v2138 = vpop.f32.mrf.mxu0
        %2139 = vdwg.mxu0
        %vm2140 = vcmp.ge.s32.totalorder %v1388, 8
        %vm2141 = vcmp.lt.s32.totalorder %v1388, 16
        %vm2142 = vmand %vm2140, %vm2141
        %v2143 = vsel %vm2142, 1, 0
        %vm2144 = vcmp.eq.s32.totalorder %v2143, 1
        %v2145 = vsel %vm2144, %v1617, 0.0
        %v2146 = vsel %vm2144, %v1622, 0.0
        %v2147 = vsel %vm2144, %v1627, 0.0
        %v2148 = vsel %vm2144, %v1632, 0.0
        %v2149 = vsel %vm2144, %v1637, 0.0
        %v2150 = vsel %vm2144, %v1642, 0.0
        %v2151 = vsel %vm2144, %v1647, 0.0
        %v2152 = vsel %vm2144, %v1652, 0.0
        %v2154 = vsel %vm1193, %v2145, 0
        %v2157 = vsel %vm1193, %v2146, 0
        %v2160 = vsel %vm1193, %v2147, 0
        %v2163 = vsel %vm1193, %v2148, 0
        %v2166 = vsel %vm1193, %v2149, 0
        %v2169 = vsel %vm1193, %v2150, 0
        %v2172 = vsel %vm1193, %v2151, 0
        %v2175 = vsel %vm1193, %v2152, 0
        %2177 = vmatprep.subr.mxu0 0.0
        %2178 = vmatpush1.xpose.msra.mxu0 0.0
        %2179 = vmatprep.subr.mxu0 0.0
        %2180 = vmatpush1.xpose.msra.mxu0 0.0
        %2181 = vmatprep.subr.mxu0 0.0
        %2182 = vmatpush1.xpose.msra.mxu0 0.0
        %2183 = vmatprep.subr.mxu0 0.0
        %2184 = vmatpush1.xpose.msra.mxu0 0.0
        %2185 = vmatprep.subr.mxu0 0.0
        %2186 = vmatpush1.xpose.msra.mxu0 0.0
        %2187 = vmatprep.subr.mxu0 0.0
        %2188 = vmatpush1.xpose.msra.mxu0 0.0
        %2189 = vmatprep.subr.mxu0 0.0
        %2190 = vmatpush1.xpose.msra.mxu0 0.0
        %2191 = vmatprep.subr.mxu0 0.0
        %2192 = vmatpush1.xpose.msra.mxu0 0.0
        %2193 = vmatprep.subr.mxu0 0.0
        %2194 = vmatpush1.xpose.msra.mxu0 %v1827
        %2195 = vmatprep.subr.mxu0 0.0
        %2196 = vmatpush1.xpose.msra.mxu0 %v1824
        %2197 = vmatprep.subr.mxu0 0.0
        %2198 = vmatpush1.xpose.msra.mxu0 %v1821
        %2199 = vmatprep.subr.mxu0 0.0
        %2200 = vmatpush1.xpose.msra.mxu0 %v1818
        %2201 = vmatprep.subr.mxu0 0.0
        %2202 = vmatpush1.xpose.msra.mxu0 %v1815
        %2203 = vmatprep.subr.mxu0 0.0
        %2204 = vmatpush1.xpose.msra.mxu0 %v1812
        %2205 = vmatprep.subr.mxu0 0.0
        %2206 = vmatpush1.xpose.msra.mxu0 %v1809
        %2207 = vmatprep.subr.mxu0 0.0
        %2208 = vmatpush1.xpose.msra.mxu0 %v1806
        %2209 = vmatprep.subr.mxu0 0.0
        %2210 = vmatpush2.xpose.msra.mxu0 0.0
        %2211 = vmatprep.subr.mxu0 0.0
        %2212 = vmatpush2.xpose.msra.mxu0 0.0
        %2213 = vmatprep.subr.mxu0 0.0
        %2214 = vmatpush2.xpose.msra.mxu0 0.0
        %2215 = vmatprep.subr.mxu0 0.0
        %2216 = vmatpush2.xpose.msra.mxu0 0.0
        %2217 = vmatprep.subr.mxu0 0.0
        %2218 = vmatpush2.xpose.msra.mxu0 0.0
        %2219 = vmatprep.subr.mxu0 0.0
        %2220 = vmatpush2.xpose.msra.mxu0 0.0
        %2221 = vmatprep.subr.mxu0 0.0
        %2222 = vmatpush2.xpose.msra.mxu0 0.0
        %2223 = vmatprep.subr.mxu0 0.0
        %2224 = vmatpush2.xpose.msra.mxu0 0.0
        %2225 = vmatprep.subr.mxu0 0.0
        %2226 = vmatpush2.xpose.msra.mxu0 0.0
        %2227 = vmatprep.subr.mxu0 0.0
        %2228 = vmatpush2.xpose.msra.mxu0 0.0
        %2229 = vmatprep.subr.mxu0 0.0
        %2230 = vmatpush2.xpose.msra.mxu0 0.0
        %2231 = vmatprep.subr.mxu0 0.0
        %2232 = vmatpush2.xpose.msra.mxu0 0.0
        %2233 = vmatprep.subr.mxu0 0.0
        %2234 = vmatpush2.xpose.msra.mxu0 0.0
        %2235 = vmatprep.subr.mxu0 0.0
        %2236 = vmatpush2.xpose.msra.mxu0 0.0
        %2237 = vmatprep.subr.mxu0 0.0
        %2238 = vmatpush2.xpose.msra.mxu0 0.0
        %2239 = vmatprep.subr.mxu0 0.0
        %2240 = vmatpush2.xpose.msra.mxu0 0.0
        %2241 = vmatprep.mubr.f32.mxu0 0.0
        %2242 = vmatmul.mubr.f32.gmra.mxu0 %v2154
        %v2243 = vpop.f32.mrf.mxu0
        %v2244 = vadd.f32 0.0, %v2243
        %v2245 = vpop.f32.mrf.mxu0
        %2246 = vmatprep.mubr.f32.mxu0 0.0
        %2247 = vmatmul.mubr.f32.gmra.mxu0 %v2157
        %v2248 = vpop.f32.mrf.mxu0
        %v2249 = vadd.f32 0.0, %v2248
        %v2250 = vpop.f32.mrf.mxu0
        %2251 = vmatprep.mubr.f32.mxu0 0.0
        %2252 = vmatmul.mubr.f32.gmra.mxu0 %v2160
        %v2253 = vpop.f32.mrf.mxu0
        %v2254 = vadd.f32 0.0, %v2253
        %v2255 = vpop.f32.mrf.mxu0
        %2256 = vmatprep.mubr.f32.mxu0 0.0
        %2257 = vmatmul.mubr.f32.gmra.mxu0 %v2163
        %v2258 = vpop.f32.mrf.mxu0
        %v2259 = vadd.f32 0.0, %v2258
        %v2260 = vpop.f32.mrf.mxu0
        %2261 = vmatprep.mubr.f32.mxu0 0.0
        %2262 = vmatmul.mubr.f32.gmra.mxu0 %v2166
        %v2263 = vpop.f32.mrf.mxu0
        %v2264 = vadd.f32 0.0, %v2263
        %v2265 = vpop.f32.mrf.mxu0
        %2266 = vmatprep.mubr.f32.mxu0 0.0
        %2267 = vmatmul.mubr.f32.gmra.mxu0 %v2169
        %v2268 = vpop.f32.mrf.mxu0
        %v2269 = vadd.f32 0.0, %v2268
        %v2270 = vpop.f32.mrf.mxu0
        %2271 = vmatprep.mubr.f32.mxu0 0.0
        %2272 = vmatmul.mubr.f32.gmra.mxu0 %v2172
        %v2273 = vpop.f32.mrf.mxu0
        %v2274 = vadd.f32 0.0, %v2273
        %v2275 = vpop.f32.mrf.mxu0
        %2276 = vmatprep.mubr.f32.mxu0 0.0
        %2277 = vmatmul.mubr.f32.gmra.mxu0 %v2175
        %v2278 = vpop.f32.mrf.mxu0
        %v2279 = vadd.f32 0.0, %v2278
        %v2280 = vpop.f32.mrf.mxu0
        %2281 = vdwg.mxu0
        %v2282 = vmul.f32 %v2244, 0.35355338
        %v2283 = vmul.f32 %v2249, 0.35355338
        %v2284 = vmul.f32 %v2254, 0.35355338
        %v2285 = vmul.f32 %v2259, 0.35355338
        %v2286 = vmul.f32 %v2264, 0.35355338
        %v2287 = vmul.f32 %v2269, 0.35355338
        %v2288 = vmul.f32 %v2274, 0.35355338
        %v2289 = vmul.f32 %v2279, 0.35355338
        %v2290 = vsel %vm1942, %v2282, -inf
        %2291 = vmax.xlane.f32.xlu0 %v2290
        %v2292 = vpop.xlane.xlu0 %2291
        %v2293 = vsel %vm1942, %v2283, -inf
        %2294 = vmax.xlane.f32.xlu0 %v2293
        %v2295 = vpop.xlane.xlu0 %2294
        %v2296 = vsel %vm1942, %v2284, -inf
        %2297 = vmax.xlane.f32.xlu0 %v2296
        %v2298 = vpop.xlane.xlu0 %2297
        %v2299 = vsel %vm1942, %v2285, -inf
        %2300 = vmax.xlane.f32.xlu0 %v2299
        %v2301 = vpop.xlane.xlu0 %2300
        %v2302 = vsel %vm1942, %v2286, -inf
        %2303 = vmax.xlane.f32.xlu0 %v2302
        %v2304 = vpop.xlane.xlu0 %2303
        %v2305 = vsel %vm1942, %v2287, -inf
        %2306 = vmax.xlane.f32.xlu0 %v2305
        %v2307 = vpop.xlane.xlu0 %2306
        %v2308 = vsel %vm1942, %v2288, -inf
        %2309 = vmax.xlane.f32.xlu0 %v2308
        %v2310 = vpop.xlane.xlu0 %2309
        %v2311 = vsel %vm1942, %v2289, -inf
        %2312 = vmax.xlane.f32.xlu0 %v2311
        %v2313 = vpop.xlane.xlu0 %2312
        %v2314 = vsub.f32 %v2282, %v2292
        %v2315 = vsub.f32 %v2283, %v2295
        %v2316 = vsub.f32 %v2284, %v2298
        %v2317 = vsub.f32 %v2285, %v2301
        %v2318 = vsub.f32 %v2286, %v2304
        %v2319 = vsub.f32 %v2287, %v2307
        %v2320 = vsub.f32 %v2288, %v2310
        %v2321 = vsub.f32 %v2289, %v2313
        %v2322 = vmul.f32 %v2314, 1.442695
        %v2323 = vpow.pop %v2322
        %v2324 = vmul.f32 %v2315, 1.442695
        %v2325 = vpow.pop %v2324
        %v2326 = vmul.f32 %v2316, 1.442695
        %v2327 = vpow.pop %v2326
        %v2328 = vmul.f32 %v2317, 1.442695
        %v2329 = vpow.pop %v2328
        %v2330 = vmul.f32 %v2318, 1.442695
        %v2331 = vpow.pop %v2330
        %v2332 = vmul.f32 %v2319, 1.442695
        %v2333 = vpow.pop %v2332
        %v2334 = vmul.f32 %v2320, 1.442695
        %v2335 = vpow.pop %v2334
        %v2336 = vmul.f32 %v2321, 1.442695
        %v2337 = vpow.pop %v2336
        %v2338 = vsel %vm1942, %v2323, 0.0
        %2339 = vadd.xlane.f32.xlu0 %v2338
        %v2340 = vpop.xlane.xlu0 %2339
        %v2341 = vsel %vm1942, %v2325, 0.0
        %2342 = vadd.xlane.f32.xlu0 %v2341
        %v2343 = vpop.xlane.xlu0 %2342
        %v2344 = vsel %vm1942, %v2327, 0.0
        %2345 = vadd.xlane.f32.xlu0 %v2344
        %v2346 = vpop.xlane.xlu0 %2345
        %v2347 = vsel %vm1942, %v2329, 0.0
        %2348 = vadd.xlane.f32.xlu0 %v2347
        %v2349 = vpop.xlane.xlu0 %2348
        %v2350 = vsel %vm1942, %v2331, 0.0
        %2351 = vadd.xlane.f32.xlu0 %v2350
        %v2352 = vpop.xlane.xlu0 %2351
        %v2353 = vsel %vm1942, %v2333, 0.0
        %2354 = vadd.xlane.f32.xlu0 %v2353
        %v2355 = vpop.xlane.xlu0 %2354
        %v2356 = vsel %vm1942, %v2335, 0.0
        %2357 = vadd.xlane.f32.xlu0 %v2356
        %v2358 = vpop.xlane.xlu0 %2357
        %v2359 = vsel %vm1942, %v2337, 0.0
        %2360 = vadd.xlane.f32.xlu0 %v2359
        %v2361 = vpop.xlane.xlu0 %2360
        %v2362 = vrcp.pop %v2340
        %v2363 = vrcp.pop %v2343
        %v2364 = vrcp.pop %v2346
        %v2365 = vrcp.pop %v2349
        %v2366 = vrcp.pop %v2352
        %v2367 = vrcp.pop %v2355
        %v2368 = vrcp.pop %v2358
        %v2369 = vrcp.pop %v2361
        %v2370 = vmul.f32 %v2323, %v2362
        %v2371 = vmul.f32 %v2325, %v2363
        %v2372 = vmul.f32 %v2327, %v2364
        %v2373 = vmul.f32 %v2329, %v2365
        %v2374 = vmul.f32 %v2331, %v2366
        %v2375 = vmul.f32 %v2333, %v2367
        %v2376 = vmul.f32 %v2335, %v2368
        %v2377 = vmul.f32 %v2337, %v2369
        %s2378 = scalar_lea.vmem [#allocation8], 32
        %v2379 = vld [vmem:[%s2378] sm:$0xff]
        %v2380 = vld [vmem:[%s2378 + $0x8] sm:$0xff]
        %v2381 = vld [vmem:[%s2378 + $0x10] sm:$0xff]
        %v2382 = vld [vmem:[%s2378 + $0x18] sm:$0xff]
        %2383 = vmatprep.subr.mxu0 0.0
        %2384 = vmatpush1.msra.mxu0 0.0
        %2385 = vmatprep.subr.mxu0 0.0
        %2386 = vmatpush1.msra.mxu0 0.0
        %2387 = vmatprep.subr.mxu0 0.0
        %2388 = vmatpush1.msra.mxu0 0.0
        %2389 = vmatprep.subr.mxu0 0.0
        %2390 = vmatpush1.msra.mxu0 0.0
        %2391 = vmatprep.subr.mxu0 0.0
        %2392 = vmatpush1.msra.mxu0 0.0
        %2393 = vmatprep.subr.mxu0 0.0
        %2394 = vmatpush1.msra.mxu0 0.0
        %2395 = vmatprep.subr.mxu0 0.0
        %2396 = vmatpush1.msra.mxu0 0.0
        %2397 = vmatprep.subr.mxu0 0.0
        %2398 = vmatpush1.msra.mxu0 0.0
        %2399 = vmatprep.subr.mxu0 0.0
        %2400 = vmatpush1.msra.mxu0 0.0
        %2401 = vmatprep.subr.mxu0 0.0
        %2402 = vmatpush1.msra.mxu0 0.0
        %2403 = vmatprep.subr.mxu0 0.0
        %2404 = vmatpush1.msra.mxu0 0.0
        %2405 = vmatprep.subr.mxu0 0.0
        %2406 = vmatpush1.msra.mxu0 0.0
        %2407 = vmatprep.subr.mxu0 0.0
        %2408 = vmatpush1.msra.mxu0 %v2382
        %2409 = vmatprep.subr.mxu0 0.0
        %2410 = vmatpush1.msra.mxu0 %v2381
        %2411 = vmatprep.subr.mxu0 0.0
        %2412 = vmatpush1.msra.mxu0 %v2380
        %2413 = vmatprep.subr.mxu0 0.0
        %2414 = vmatpush1.msra.mxu0 %v2379
        %2415 = vmatprep.subr.mxu0 0.0
        %2416 = vmatpush2.msra.mxu0 0.0
        %2417 = vmatprep.subr.mxu0 0.0
        %2418 = vmatpush2.msra.mxu0 0.0
        %2419 = vmatprep.subr.mxu0 0.0
        %2420 = vmatpush2.msra.mxu0 0.0
        %2421 = vmatprep.subr.mxu0 0.0
        %2422 = vmatpush2.msra.mxu0 0.0
        %2423 = vmatprep.subr.mxu0 0.0
        %2424 = vmatpush2.msra.mxu0 0.0
        %2425 = vmatprep.subr.mxu0 0.0
        %2426 = vmatpush2.msra.mxu0 0.0
        %2427 = vmatprep.subr.mxu0 0.0
        %2428 = vmatpush2.msra.mxu0 0.0
        %2429 = vmatprep.subr.mxu0 0.0
        %2430 = vmatpush2.msra.mxu0 0.0
        %2431 = vmatprep.subr.mxu0 0.0
        %2432 = vmatpush2.msra.mxu0 0.0
        %2433 = vmatprep.subr.mxu0 0.0
        %2434 = vmatpush2.msra.mxu0 0.0
        %2435 = vmatprep.subr.mxu0 0.0
        %2436 = vmatpush2.msra.mxu0 0.0
        %2437 = vmatprep.subr.mxu0 0.0
        %2438 = vmatpush2.msra.mxu0 0.0
        %2439 = vmatprep.subr.mxu0 0.0
        %2440 = vmatpush2.msra.mxu0 0.0
        %2441 = vmatprep.subr.mxu0 0.0
        %2442 = vmatpush2.msra.mxu0 0.0
        %2443 = vmatprep.subr.mxu0 0.0
        %2444 = vmatpush2.msra.mxu0 0.0
        %2445 = vmatprep.subr.mxu0 0.0
        %2446 = vmatpush2.msra.mxu0 0.0
        %2447 = vmatprep.mubr.f32.mxu0 0.0
        %2448 = vmatmul.mubr.f32.gmra.mxu0 %v1527
        %v2449 = vpop.f32.mrf.mxu0
        %v2450 = vadd.f32 0.0, %v2449
        %v2451 = vpop.f32.mrf.mxu0
        %2452 = vmatprep.mubr.f32.mxu0 0.0
        %2453 = vmatmul.mubr.f32.gmra.mxu0 %v1530
        %v2454 = vpop.f32.mrf.mxu0
        %v2455 = vadd.f32 0.0, %v2454
        %v2456 = vpop.f32.mrf.mxu0
        %2457 = vmatprep.mubr.f32.mxu0 0.0
        %2458 = vmatmul.mubr.f32.gmra.mxu0 %v1533
        %v2459 = vpop.f32.mrf.mxu0
        %v2460 = vadd.f32 0.0, %v2459
        %v2461 = vpop.f32.mrf.mxu0
        %2462 = vmatprep.mubr.f32.mxu0 0.0
        %2463 = vmatmul.mubr.f32.gmra.mxu0 %v1536
        %v2464 = vpop.f32.mrf.mxu0
        %v2465 = vadd.f32 0.0, %v2464
        %v2466 = vpop.f32.mrf.mxu0
        %2467 = vmatprep.mubr.f32.mxu0 0.0
        %2468 = vmatmul.mubr.f32.gmra.mxu0 %v1539
        %v2469 = vpop.f32.mrf.mxu0
        %v2470 = vadd.f32 0.0, %v2469
        %v2471 = vpop.f32.mrf.mxu0
        %2472 = vmatprep.mubr.f32.mxu0 0.0
        %2473 = vmatmul.mubr.f32.gmra.mxu0 %v1542
        %v2474 = vpop.f32.mrf.mxu0
        %v2475 = vadd.f32 0.0, %v2474
        %v2476 = vpop.f32.mrf.mxu0
        %2477 = vmatprep.mubr.f32.mxu0 0.0
        %2478 = vmatmul.mubr.f32.gmra.mxu0 %v1545
        %v2479 = vpop.f32.mrf.mxu0
        %v2480 = vadd.f32 0.0, %v2479
        %v2481 = vpop.f32.mrf.mxu0
        %2482 = vmatprep.mubr.f32.mxu0 0.0
        %2483 = vmatmul.mubr.f32.gmra.mxu0 %v1548
        %v2484 = vpop.f32.mrf.mxu0
        %v2485 = vadd.f32 0.0, %v2484
        %v2486 = vpop.f32.mrf.mxu0
        %2487 = vdwg.mxu0
        %v2489 = vsel %vm1942, %v2370, 0
        %v2492 = vsel %vm1942, %v2371, 0
        %v2495 = vsel %vm1942, %v2372, 0
        %v2498 = vsel %vm1942, %v2373, 0
        %v2501 = vsel %vm1942, %v2374, 0
        %v2504 = vsel %vm1942, %v2375, 0
        %v2507 = vsel %vm1942, %v2376, 0
        %v2510 = vsel %vm1942, %v2377, 0
        %2512 = vmatprep.subr.mxu0 0.0
        %2513 = vmatpush1.msra.mxu0 0.0
        %2514 = vmatprep.subr.mxu0 0.0
        %2515 = vmatpush1.msra.mxu0 0.0
        %2516 = vmatprep.subr.mxu0 0.0
        %2517 = vmatpush1.msra.mxu0 0.0
        %2518 = vmatprep.subr.mxu0 0.0
        %2519 = vmatpush1.msra.mxu0 0.0
        %2520 = vmatprep.subr.mxu0 0.0
        %2521 = vmatpush1.msra.mxu0 0.0
        %2522 = vmatprep.subr.mxu0 0.0
        %2523 = vmatpush1.msra.mxu0 0.0
        %2524 = vmatprep.subr.mxu0 0.0
        %2525 = vmatpush1.msra.mxu0 0.0
        %2526 = vmatprep.subr.mxu0 0.0
        %2527 = vmatpush1.msra.mxu0 0.0
        %2528 = vmatprep.subr.mxu0 0.0
        %2529 = vmatpush1.msra.mxu0 %v2485
        %2530 = vmatprep.subr.mxu0 0.0
        %2531 = vmatpush1.msra.mxu0 %v2480
        %2532 = vmatprep.subr.mxu0 0.0
        %2533 = vmatpush1.msra.mxu0 %v2475
        %2534 = vmatprep.subr.mxu0 0.0
        %2535 = vmatpush1.msra.mxu0 %v2470
        %2536 = vmatprep.subr.mxu0 0.0
        %2537 = vmatpush1.msra.mxu0 %v2465
        %2538 = vmatprep.subr.mxu0 0.0
        %2539 = vmatpush1.msra.mxu0 %v2460
        %2540 = vmatprep.subr.mxu0 0.0
        %2541 = vmatpush1.msra.mxu0 %v2455
        %2542 = vmatprep.subr.mxu0 0.0
        %2543 = vmatpush1.msra.mxu0 %v2450
        %2544 = vmatprep.subr.mxu0 0.0
        %2545 = vmatpush2.msra.mxu0 0.0
        %2546 = vmatprep.subr.mxu0 0.0
        %2547 = vmatpush2.msra.mxu0 0.0
        %2548 = vmatprep.subr.mxu0 0.0
        %2549 = vmatpush2.msra.mxu0 0.0
        %2550 = vmatprep.subr.mxu0 0.0
        %2551 = vmatpush2.msra.mxu0 0.0
        %2552 = vmatprep.subr.mxu0 0.0
        %2553 = vmatpush2.msra.mxu0 0.0
        %2554 = vmatprep.subr.mxu0 0.0
        %2555 = vmatpush2.msra.mxu0 0.0
        %2556 = vmatprep.subr.mxu0 0.0
        %2557 = vmatpush2.msra.mxu0 0.0
        %2558 = vmatprep.subr.mxu0 0.0
        %2559 = vmatpush2.msra.mxu0 0.0
        %2560 = vmatprep.subr.mxu0 0.0
        %2561 = vmatpush2.msra.mxu0 0.0
        %2562 = vmatprep.subr.mxu0 0.0
        %2563 = vmatpush2.msra.mxu0 0.0
        %2564 = vmatprep.subr.mxu0 0.0
        %2565 = vmatpush2.msra.mxu0 0.0
        %2566 = vmatprep.subr.mxu0 0.0
        %2567 = vmatpush2.msra.mxu0 0.0
        %2568 = vmatprep.subr.mxu0 0.0
        %2569 = vmatpush2.msra.mxu0 0.0
        %2570 = vmatprep.subr.mxu0 0.0
        %2571 = vmatpush2.msra.mxu0 0.0
        %2572 = vmatprep.subr.mxu0 0.0
        %2573 = vmatpush2.msra.mxu0 0.0
        %2574 = vmatprep.subr.mxu0 0.0
        %2575 = vmatpush2.msra.mxu0 0.0
        %2576 = vmatprep.mubr.f32.mxu0 0.0
        %2577 = vmatmul.mubr.f32.gmra.mxu0 %v2489
        %v2578 = vpop.f32.mrf.mxu0
        %v2579 = vadd.f32 0.0, %v2578
        %v2580 = vpop.f32.mrf.mxu0
        %2581 = vmatprep.mubr.f32.mxu0 0.0
        %2582 = vmatmul.mubr.f32.gmra.mxu0 %v2492
        %v2583 = vpop.f32.mrf.mxu0
        %v2584 = vadd.f32 0.0, %v2583
        %v2585 = vpop.f32.mrf.mxu0
        %2586 = vmatprep.mubr.f32.mxu0 0.0
        %2587 = vmatmul.mubr.f32.gmra.mxu0 %v2495
        %v2588 = vpop.f32.mrf.mxu0
        %v2589 = vadd.f32 0.0, %v2588
        %v2590 = vpop.f32.mrf.mxu0
        %2591 = vmatprep.mubr.f32.mxu0 0.0
        %2592 = vmatmul.mubr.f32.gmra.mxu0 %v2498
        %v2593 = vpop.f32.mrf.mxu0
        %v2594 = vadd.f32 0.0, %v2593
        %v2595 = vpop.f32.mrf.mxu0
        %2596 = vmatprep.mubr.f32.mxu0 0.0
        %2597 = vmatmul.mubr.f32.gmra.mxu0 %v2501
        %v2598 = vpop.f32.mrf.mxu0
        %v2599 = vadd.f32 0.0, %v2598
        %v2600 = vpop.f32.mrf.mxu0
        %2601 = vmatprep.mubr.f32.mxu0 0.0
        %2602 = vmatmul.mubr.f32.gmra.mxu0 %v2504
        %v2603 = vpop.f32.mrf.mxu0
        %v2604 = vadd.f32 0.0, %v2603
        %v2605 = vpop.f32.mrf.mxu0
        %2606 = vmatprep.mubr.f32.mxu0 0.0
        %2607 = vmatmul.mubr.f32.gmra.mxu0 %v2507
        %v2608 = vpop.f32.mrf.mxu0
        %v2609 = vadd.f32 0.0, %v2608
        %v2610 = vpop.f32.mrf.mxu0
        %2611 = vmatprep.mubr.f32.mxu0 0.0
        %2612 = vmatmul.mubr.f32.gmra.mxu0 %v2510
        %v2613 = vpop.f32.mrf.mxu0
        %v2614 = vadd.f32 0.0, %v2613
        %v2615 = vpop.f32.mrf.mxu0
        %2616 = vdwg.mxu0
        %v2618 = vsel %vm1942, %v2023, 0
        %v2621 = vsel %vm1942, %v2024, 0
        %v2624 = vsel %vm1942, %v2025, 0
        %v2627 = vsel %vm1942, %v2026, 0
        %v2630 = vsel %vm1942, %v2027, 0
        %v2633 = vsel %vm1942, %v2028, 0
        %v2636 = vsel %vm1942, %v2029, 0
        %v2639 = vsel %vm1942, %v2030, 0
        %2641 = vmatprep.subr.mxu0 0.0
        %2642 = vmatpush1.msra.mxu0 0.0
        %2643 = vmatprep.subr.mxu0 0.0
        %2644 = vmatpush1.msra.mxu0 0.0
        %2645 = vmatprep.subr.mxu0 0.0
        %2646 = vmatpush1.msra.mxu0 0.0
        %2647 = vmatprep.subr.mxu0 0.0
        %2648 = vmatpush1.msra.mxu0 0.0
        %2649 = vmatprep.subr.mxu0 0.0
        %2650 = vmatpush1.msra.mxu0 0.0
        %2651 = vmatprep.subr.mxu0 0.0
        %2652 = vmatpush1.msra.mxu0 0.0
        %2653 = vmatprep.subr.mxu0 0.0
        %2654 = vmatpush1.msra.mxu0 0.0
        %2655 = vmatprep.subr.mxu0 0.0
        %2656 = vmatpush1.msra.mxu0 0.0
        %2657 = vmatprep.subr.mxu0 0.0
        %2658 = vmatpush1.msra.mxu0 %v2137
        %2659 = vmatprep.subr.mxu0 0.0
        %2660 = vmatpush1.msra.mxu0 %v2132
        %2661 = vmatprep.subr.mxu0 0.0
        %2662 = vmatpush1.msra.mxu0 %v2127
        %2663 = vmatprep.subr.mxu0 0.0
        %2664 = vmatpush1.msra.mxu0 %v2122
        %2665 = vmatprep.subr.mxu0 0.0
        %2666 = vmatpush1.msra.mxu0 %v2117
        %2667 = vmatprep.subr.mxu0 0.0
        %2668 = vmatpush1.msra.mxu0 %v2112
        %2669 = vmatprep.subr.mxu0 0.0
        %2670 = vmatpush1.msra.mxu0 %v2107
        %2671 = vmatprep.subr.mxu0 0.0
        %2672 = vmatpush1.msra.mxu0 %v2102
        %2673 = vmatprep.subr.mxu0 0.0
        %2674 = vmatpush2.msra.mxu0 0.0
        %2675 = vmatprep.subr.mxu0 0.0
        %2676 = vmatpush2.msra.mxu0 0.0
        %2677 = vmatprep.subr.mxu0 0.0
        %2678 = vmatpush2.msra.mxu0 0.0
        %2679 = vmatprep.subr.mxu0 0.0
        %2680 = vmatpush2.msra.mxu0 0.0
        %2681 = vmatprep.subr.mxu0 0.0
        %2682 = vmatpush2.msra.mxu0 0.0
        %2683 = vmatprep.subr.mxu0 0.0
        %2684 = vmatpush2.msra.mxu0 0.0
        %2685 = vmatprep.subr.mxu0 0.0
        %2686 = vmatpush2.msra.mxu0 0.0
        %2687 = vmatprep.subr.mxu0 0.0
        %2688 = vmatpush2.msra.mxu0 0.0
        %2689 = vmatprep.subr.mxu0 0.0
        %2690 = vmatpush2.msra.mxu0 0.0
        %2691 = vmatprep.subr.mxu0 0.0
        %2692 = vmatpush2.msra.mxu0 0.0
        %2693 = vmatprep.subr.mxu0 0.0
        %2694 = vmatpush2.msra.mxu0 0.0
        %2695 = vmatprep.subr.mxu0 0.0
        %2696 = vmatpush2.msra.mxu0 0.0
        %2697 = vmatprep.subr.mxu0 0.0
        %2698 = vmatpush2.msra.mxu0 0.0
        %2699 = vmatprep.subr.mxu0 0.0
        %2700 = vmatpush2.msra.mxu0 0.0
        %2701 = vmatprep.subr.mxu0 0.0
        %2702 = vmatpush2.msra.mxu0 0.0
        %2703 = vmatprep.subr.mxu0 0.0
        %2704 = vmatpush2.msra.mxu0 0.0
        %2705 = vmatprep.mubr.f32.mxu0 0.0
        %2706 = vmatmul.mubr.f32.gmra.mxu0 %v2618
        %v2707 = vpop.f32.mrf.mxu0
        %v2708 = vadd.f32 %v2579, %v2707
        %v2709 = vpop.f32.mrf.mxu0
        %2710 = vmatprep.mubr.f32.mxu0 0.0
        %2711 = vmatmul.mubr.f32.gmra.mxu0 %v2621
        %v2712 = vpop.f32.mrf.mxu0
        %v2713 = vadd.f32 %v2584, %v2712
        %v2714 = vpop.f32.mrf.mxu0
        %2715 = vmatprep.mubr.f32.mxu0 0.0
        %2716 = vmatmul.mubr.f32.gmra.mxu0 %v2624
        %v2717 = vpop.f32.mrf.mxu0
        %v2718 = vadd.f32 %v2589, %v2717
        %v2719 = vpop.f32.mrf.mxu0
        %2720 = vmatprep.mubr.f32.mxu0 0.0
        %2721 = vmatmul.mubr.f32.gmra.mxu0 %v2627
        %v2722 = vpop.f32.mrf.mxu0
        %v2723 = vadd.f32 %v2594, %v2722
        %v2724 = vpop.f32.mrf.mxu0
        %2725 = vmatprep.mubr.f32.mxu0 0.0
        %2726 = vmatmul.mubr.f32.gmra.mxu0 %v2630
        %v2727 = vpop.f32.mrf.mxu0
        %v2728 = vadd.f32 %v2599, %v2727
        %v2729 = vpop.f32.mrf.mxu0
        %2730 = vmatprep.mubr.f32.mxu0 0.0
        %2731 = vmatmul.mubr.f32.gmra.mxu0 %v2633
        %v2732 = vpop.f32.mrf.mxu0
        %v2733 = vadd.f32 %v2604, %v2732
        %v2734 = vpop.f32.mrf.mxu0
        %2735 = vmatprep.mubr.f32.mxu0 0.0
        %2736 = vmatmul.mubr.f32.gmra.mxu0 %v2636
        %v2737 = vpop.f32.mrf.mxu0
        %v2738 = vadd.f32 %v2609, %v2737
        %v2739 = vpop.f32.mrf.mxu0
        %2740 = vmatprep.mubr.f32.mxu0 0.0
        %2741 = vmatmul.mubr.f32.gmra.mxu0 %v2639
        %v2742 = vpop.f32.mrf.mxu0
        %v2743 = vadd.f32 %v2614, %v2742
        %v2744 = vpop.f32.mrf.mxu0
        %2745 = vdwg.mxu0
        %vm2746 = vcmp.ge.s32.totalorder %v1388, 16
        %vm2747 = vcmp.lt.s32.totalorder %v1388, 24
        %vm2748 = vmand %vm2746, %vm2747
        %v2749 = vsel %vm2748, 1, 0
        %vm2750 = vcmp.eq.s32.totalorder %v2749, 1
        %v2751 = vsel %vm2750, %v1617, 0.0
        %v2752 = vsel %vm2750, %v1622, 0.0
        %v2753 = vsel %vm2750, %v1627, 0.0
        %v2754 = vsel %vm2750, %v1632, 0.0
        %v2755 = vsel %vm2750, %v1637, 0.0
        %v2756 = vsel %vm2750, %v1642, 0.0
        %v2757 = vsel %vm2750, %v1647, 0.0
        %v2758 = vsel %vm2750, %v1652, 0.0
        %v2760 = vsel %vm1193, %v2751, 0
        %v2763 = vsel %vm1193, %v2752, 0
        %v2766 = vsel %vm1193, %v2753, 0
        %v2769 = vsel %vm1193, %v2754, 0
        %v2772 = vsel %vm1193, %v2755, 0
        %v2775 = vsel %vm1193, %v2756, 0
        %v2778 = vsel %vm1193, %v2757, 0
        %v2781 = vsel %vm1193, %v2758, 0
        %2783 = vmatprep.subr.mxu0 0.0
        %2784 = vmatpush1.xpose.msra.mxu0 0.0
        %2785 = vmatprep.subr.mxu0 0.0
        %2786 = vmatpush1.xpose.msra.mxu0 0.0
        %2787 = vmatprep.subr.mxu0 0.0
        %2788 = vmatpush1.xpose.msra.mxu0 0.0
        %2789 = vmatprep.subr.mxu0 0.0
        %2790 = vmatpush1.xpose.msra.mxu0 0.0
        %2791 = vmatprep.subr.mxu0 0.0
        %2792 = vmatpush1.xpose.msra.mxu0 0.0
        %2793 = vmatprep.subr.mxu0 0.0
        %2794 = vmatpush1.xpose.msra.mxu0 0.0
        %2795 = vmatprep.subr.mxu0 0.0
        %2796 = vmatpush1.xpose.msra.mxu0 0.0
        %2797 = vmatprep.subr.mxu0 0.0
        %2798 = vmatpush1.xpose.msra.mxu0 0.0
        %2799 = vmatprep.subr.mxu0 0.0
        %2800 = vmatpush1.xpose.msra.mxu0 %v1827
        %2801 = vmatprep.subr.mxu0 0.0
        %2802 = vmatpush1.xpose.msra.mxu0 %v1824
        %2803 = vmatprep.subr.mxu0 0.0
        %2804 = vmatpush1.xpose.msra.mxu0 %v1821
        %2805 = vmatprep.subr.mxu0 0.0
        %2806 = vmatpush1.xpose.msra.mxu0 %v1818
        %2807 = vmatprep.subr.mxu0 0.0
        %2808 = vmatpush1.xpose.msra.mxu0 %v1815
        %2809 = vmatprep.subr.mxu0 0.0
        %2810 = vmatpush1.xpose.msra.mxu0 %v1812
        %2811 = vmatprep.subr.mxu0 0.0
        %2812 = vmatpush1.xpose.msra.mxu0 %v1809
        %2813 = vmatprep.subr.mxu0 0.0
        %2814 = vmatpush1.xpose.msra.mxu0 %v1806
        %2815 = vmatprep.subr.mxu0 0.0
        %2816 = vmatpush2.xpose.msra.mxu0 0.0
        %2817 = vmatprep.subr.mxu0 0.0
        %2818 = vmatpush2.xpose.msra.mxu0 0.0
        %2819 = vmatprep.subr.mxu0 0.0
        %2820 = vmatpush2.xpose.msra.mxu0 0.0
        %2821 = vmatprep.subr.mxu0 0.0
        %2822 = vmatpush2.xpose.msra.mxu0 0.0
        %2823 = vmatprep.subr.mxu0 0.0
        %2824 = vmatpush2.xpose.msra.mxu0 0.0
        %2825 = vmatprep.subr.mxu0 0.0
        %2826 = vmatpush2.xpose.msra.mxu0 0.0
        %2827 = vmatprep.subr.mxu0 0.0
        %2828 = vmatpush2.xpose.msra.mxu0 0.0
        %2829 = vmatprep.subr.mxu0 0.0
        %2830 = vmatpush2.xpose.msra.mxu0 0.0
        %2831 = vmatprep.subr.mxu0 0.0
        %2832 = vmatpush2.xpose.msra.mxu0 0.0
        %2833 = vmatprep.subr.mxu0 0.0
        %2834 = vmatpush2.xpose.msra.mxu0 0.0
        %2835 = vmatprep.subr.mxu0 0.0
        %2836 = vmatpush2.xpose.msra.mxu0 0.0
        %2837 = vmatprep.subr.mxu0 0.0
        %2838 = vmatpush2.xpose.msra.mxu0 0.0
        %2839 = vmatprep.subr.mxu0 0.0
        %2840 = vmatpush2.xpose.msra.mxu0 0.0
        %2841 = vmatprep.subr.mxu0 0.0
        %2842 = vmatpush2.xpose.msra.mxu0 0.0
        %2843 = vmatprep.subr.mxu0 0.0
        %2844 = vmatpush2.xpose.msra.mxu0 0.0
        %2845 = vmatprep.subr.mxu0 0.0
        %2846 = vmatpush2.xpose.msra.mxu0 0.0
        %2847 = vmatprep.mubr.f32.mxu0 0.0
        %2848 = vmatmul.mubr.f32.gmra.mxu0 %v2760
        %v2849 = vpop.f32.mrf.mxu0
        %v2850 = vadd.f32 0.0, %v2849
        %v2851 = vpop.f32.mrf.mxu0
        %2852 = vmatprep.mubr.f32.mxu0 0.0
        %2853 = vmatmul.mubr.f32.gmra.mxu0 %v2763
        %v2854 = vpop.f32.mrf.mxu0
        %v2855 = vadd.f32 0.0, %v2854
        %v2856 = vpop.f32.mrf.mxu0
        %2857 = vmatprep.mubr.f32.mxu0 0.0
        %2858 = vmatmul.mubr.f32.gmra.mxu0 %v2766
        %v2859 = vpop.f32.mrf.mxu0
        %v2860 = vadd.f32 0.0, %v2859
        %v2861 = vpop.f32.mrf.mxu0
        %2862 = vmatprep.mubr.f32.mxu0 0.0
        %2863 = vmatmul.mubr.f32.gmra.mxu0 %v2769
        %v2864 = vpop.f32.mrf.mxu0
        %v2865 = vadd.f32 0.0, %v2864
        %v2866 = vpop.f32.mrf.mxu0
        %2867 = vmatprep.mubr.f32.mxu0 0.0
        %2868 = vmatmul.mubr.f32.gmra.mxu0 %v2772
        %v2869 = vpop.f32.mrf.mxu0
        %v2870 = vadd.f32 0.0, %v2869
        %v2871 = vpop.f32.mrf.mxu0
        %2872 = vmatprep.mubr.f32.mxu0 0.0
        %2873 = vmatmul.mubr.f32.gmra.mxu0 %v2775
        %v2874 = vpop.f32.mrf.mxu0
        %v2875 = vadd.f32 0.0, %v2874
        %v2876 = vpop.f32.mrf.mxu0
        %2877 = vmatprep.mubr.f32.mxu0 0.0
        %2878 = vmatmul.mubr.f32.gmra.mxu0 %v2778
        %v2879 = vpop.f32.mrf.mxu0
        %v2880 = vadd.f32 0.0, %v2879
        %v2881 = vpop.f32.mrf.mxu0
        %2882 = vmatprep.mubr.f32.mxu0 0.0
        %2883 = vmatmul.mubr.f32.gmra.mxu0 %v2781
        %v2884 = vpop.f32.mrf.mxu0
        %v2885 = vadd.f32 0.0, %v2884
        %v2886 = vpop.f32.mrf.mxu0
        %2887 = vdwg.mxu0
        %v2888 = vmul.f32 %v2850, 0.35355338
        %v2889 = vmul.f32 %v2855, 0.35355338
        %v2890 = vmul.f32 %v2860, 0.35355338
        %v2891 = vmul.f32 %v2865, 0.35355338
        %v2892 = vmul.f32 %v2870, 0.35355338
        %v2893 = vmul.f32 %v2875, 0.35355338
        %v2894 = vmul.f32 %v2880, 0.35355338
        %v2895 = vmul.f32 %v2885, 0.35355338
        %v2896 = vsel %vm1942, %v2888, -inf
        %2897 = vmax.xlane.f32.xlu0 %v2896
        %v2898 = vpop.xlane.xlu0 %2897
        %v2899 = vsel %vm1942, %v2889, -inf
        %2900 = vmax.xlane.f32.xlu0 %v2899
        %v2901 = vpop.xlane.xlu0 %2900
        %v2902 = vsel %vm1942, %v2890, -inf
        %2903 = vmax.xlane.f32.xlu0 %v2902
        %v2904 = vpop.xlane.xlu0 %2903
        %v2905 = vsel %vm1942, %v2891, -inf
        %2906 = vmax.xlane.f32.xlu0 %v2905
        %v2907 = vpop.xlane.xlu0 %2906
        %v2908 = vsel %vm1942, %v2892, -inf
        %2909 = vmax.xlane.f32.xlu0 %v2908
        %v2910 = vpop.xlane.xlu0 %2909
        %v2911 = vsel %vm1942, %v2893, -inf
        %2912 = vmax.xlane.f32.xlu0 %v2911
        %v2913 = vpop.xlane.xlu0 %2912
        %v2914 = vsel %vm1942, %v2894, -inf
        %2915 = vmax.xlane.f32.xlu0 %v2914
        %v2916 = vpop.xlane.xlu0 %2915
        %v2917 = vsel %vm1942, %v2895, -inf
        %2918 = vmax.xlane.f32.xlu0 %v2917
        %v2919 = vpop.xlane.xlu0 %2918
        %v2920 = vsub.f32 %v2888, %v2898
        %v2921 = vsub.f32 %v2889, %v2901
        %v2922 = vsub.f32 %v2890, %v2904
        %v2923 = vsub.f32 %v2891, %v2907
        %v2924 = vsub.f32 %v2892, %v2910
        %v2925 = vsub.f32 %v2893, %v2913
        %v2926 = vsub.f32 %v2894, %v2916
        %v2927 = vsub.f32 %v2895, %v2919
        %v2928 = vmul.f32 %v2920, 1.442695
        %v2929 = vpow.pop %v2928
        %v2930 = vmul.f32 %v2921, 1.442695
        %v2931 = vpow.pop %v2930
        %v2932 = vmul.f32 %v2922, 1.442695
        %v2933 = vpow.pop %v2932
        %v2934 = vmul.f32 %v2923, 1.442695
        %v2935 = vpow.pop %v2934
        %v2936 = vmul.f32 %v2924, 1.442695
        %v2937 = vpow.pop %v2936
        %v2938 = vmul.f32 %v2925, 1.442695
        %v2939 = vpow.pop %v2938
        %v2940 = vmul.f32 %v2926, 1.442695
        %v2941 = vpow.pop %v2940
        %v2942 = vmul.f32 %v2927, 1.442695
        %v2943 = vpow.pop %v2942
        %v2944 = vsel %vm1942, %v2929, 0.0
        %2945 = vadd.xlane.f32.xlu0 %v2944
        %v2946 = vpop.xlane.xlu0 %2945
        %v2947 = vsel %vm1942, %v2931, 0.0
        %2948 = vadd.xlane.f32.xlu0 %v2947
        %v2949 = vpop.xlane.xlu0 %2948
        %v2950 = vsel %vm1942, %v2933, 0.0
        %2951 = vadd.xlane.f32.xlu0 %v2950
        %v2952 = vpop.xlane.xlu0 %2951
        %v2953 = vsel %vm1942, %v2935, 0.0
        %2954 = vadd.xlane.f32.xlu0 %v2953
        %v2955 = vpop.xlane.xlu0 %2954
        %v2956 = vsel %vm1942, %v2937, 0.0
        %2957 = vadd.xlane.f32.xlu0 %v2956
        %v2958 = vpop.xlane.xlu0 %2957
        %v2959 = vsel %vm1942, %v2939, 0.0
        %2960 = vadd.xlane.f32.xlu0 %v2959
        %v2961 = vpop.xlane.xlu0 %2960
        %v2962 = vsel %vm1942, %v2941, 0.0
        %2963 = vadd.xlane.f32.xlu0 %v2962
        %v2964 = vpop.xlane.xlu0 %2963
        %v2965 = vsel %vm1942, %v2943, 0.0
        %2966 = vadd.xlane.f32.xlu0 %v2965
        %v2967 = vpop.xlane.xlu0 %2966
        %v2968 = vrcp.pop %v2946
        %v2969 = vrcp.pop %v2949
        %v2970 = vrcp.pop %v2952
        %v2971 = vrcp.pop %v2955
        %v2972 = vrcp.pop %v2958
        %v2973 = vrcp.pop %v2961
        %v2974 = vrcp.pop %v2964
        %v2975 = vrcp.pop %v2967
        %v2976 = vmul.f32 %v2929, %v2968
        %v2977 = vmul.f32 %v2931, %v2969
        %v2978 = vmul.f32 %v2933, %v2970
        %v2979 = vmul.f32 %v2935, %v2971
        %v2980 = vmul.f32 %v2937, %v2972
        %v2981 = vmul.f32 %v2939, %v2973
        %v2982 = vmul.f32 %v2941, %v2974
        %v2983 = vmul.f32 %v2943, %v2975
        %s2984 = scalar_lea.vmem [#allocation8], 64
        %v2985 = vld [vmem:[%s2984] sm:$0xff]
        %v2986 = vld [vmem:[%s2984 + $0x8] sm:$0xff]
        %v2987 = vld [vmem:[%s2984 + $0x10] sm:$0xff]
        %v2988 = vld [vmem:[%s2984 + $0x18] sm:$0xff]
        %2989 = vmatprep.subr.mxu0 0.0
        %2990 = vmatpush1.msra.mxu0 0.0
        %2991 = vmatprep.subr.mxu0 0.0
        %2992 = vmatpush1.msra.mxu0 0.0
        %2993 = vmatprep.subr.mxu0 0.0
        %2994 = vmatpush1.msra.mxu0 0.0
        %2995 = vmatprep.subr.mxu0 0.0
        %2996 = vmatpush1.msra.mxu0 0.0
        %2997 = vmatprep.subr.mxu0 0.0
        %2998 = vmatpush1.msra.mxu0 0.0
        %2999 = vmatprep.subr.mxu0 0.0
        %3000 = vmatpush1.msra.mxu0 0.0
        %3001 = vmatprep.subr.mxu0 0.0
        %3002 = vmatpush1.msra.mxu0 0.0
        %3003 = vmatprep.subr.mxu0 0.0
        %3004 = vmatpush1.msra.mxu0 0.0
        %3005 = vmatprep.subr.mxu0 0.0
        %3006 = vmatpush1.msra.mxu0 0.0
        %3007 = vmatprep.subr.mxu0 0.0
        %3008 = vmatpush1.msra.mxu0 0.0
        %3009 = vmatprep.subr.mxu0 0.0
        %3010 = vmatpush1.msra.mxu0 0.0
        %3011 = vmatprep.subr.mxu0 0.0
        %3012 = vmatpush1.msra.mxu0 0.0
        %3013 = vmatprep.subr.mxu0 0.0
        %3014 = vmatpush1.msra.mxu0 %v2988
        %3015 = vmatprep.subr.mxu0 0.0
        %3016 = vmatpush1.msra.mxu0 %v2987
        %3017 = vmatprep.subr.mxu0 0.0
        %3018 = vmatpush1.msra.mxu0 %v2986
        %3019 = vmatprep.subr.mxu0 0.0
        %3020 = vmatpush1.msra.mxu0 %v2985
        %3021 = vmatprep.subr.mxu0 0.0
        %3022 = vmatpush2.msra.mxu0 0.0
        %3023 = vmatprep.subr.mxu0 0.0
        %3024 = vmatpush2.msra.mxu0 0.0
        %3025 = vmatprep.subr.mxu0 0.0
        %3026 = vmatpush2.msra.mxu0 0.0
        %3027 = vmatprep.subr.mxu0 0.0
        %3028 = vmatpush2.msra.mxu0 0.0
        %3029 = vmatprep.subr.mxu0 0.0
        %3030 = vmatpush2.msra.mxu0 0.0
        %3031 = vmatprep.subr.mxu0 0.0
        %3032 = vmatpush2.msra.mxu0 0.0
        %3033 = vmatprep.subr.mxu0 0.0
        %3034 = vmatpush2.msra.mxu0 0.0
        %3035 = vmatprep.subr.mxu0 0.0
        %3036 = vmatpush2.msra.mxu0 0.0
        %3037 = vmatprep.subr.mxu0 0.0
        %3038 = vmatpush2.msra.mxu0 0.0
        %3039 = vmatprep.subr.mxu0 0.0
        %3040 = vmatpush2.msra.mxu0 0.0
        %3041 = vmatprep.subr.mxu0 0.0
        %3042 = vmatpush2.msra.mxu0 0.0
        %3043 = vmatprep.subr.mxu0 0.0
        %3044 = vmatpush2.msra.mxu0 0.0
        %3045 = vmatprep.subr.mxu0 0.0
        %3046 = vmatpush2.msra.mxu0 0.0
        %3047 = vmatprep.subr.mxu0 0.0
        %3048 = vmatpush2.msra.mxu0 0.0
        %3049 = vmatprep.subr.mxu0 0.0
        %3050 = vmatpush2.msra.mxu0 0.0
        %3051 = vmatprep.subr.mxu0 0.0
        %3052 = vmatpush2.msra.mxu0 0.0
        %3053 = vmatprep.mubr.f32.mxu0 0.0
        %3054 = vmatmul.mubr.f32.gmra.mxu0 %v1527
        %v3055 = vpop.f32.mrf.mxu0
        %v3056 = vadd.f32 0.0, %v3055
        %v3057 = vpop.f32.mrf.mxu0
        %3058 = vmatprep.mubr.f32.mxu0 0.0
        %3059 = vmatmul.mubr.f32.gmra.mxu0 %v1530
        %v3060 = vpop.f32.mrf.mxu0
        %v3061 = vadd.f32 0.0, %v3060
        %v3062 = vpop.f32.mrf.mxu0
        %3063 = vmatprep.mubr.f32.mxu0 0.0
        %3064 = vmatmul.mubr.f32.gmra.mxu0 %v1533
        %v3065 = vpop.f32.mrf.mxu0
        %v3066 = vadd.f32 0.0, %v3065
        %v3067 = vpop.f32.mrf.mxu0
        %3068 = vmatprep.mubr.f32.mxu0 0.0
        %3069 = vmatmul.mubr.f32.gmra.mxu0 %v1536
        %v3070 = vpop.f32.mrf.mxu0
        %v3071 = vadd.f32 0.0, %v3070
        %v3072 = vpop.f32.mrf.mxu0
        %3073 = vmatprep.mubr.f32.mxu0 0.0
        %3074 = vmatmul.mubr.f32.gmra.mxu0 %v1539
        %v3075 = vpop.f32.mrf.mxu0
        %v3076 = vadd.f32 0.0, %v3075
        %v3077 = vpop.f32.mrf.mxu0
        %3078 = vmatprep.mubr.f32.mxu0 0.0
        %3079 = vmatmul.mubr.f32.gmra.mxu0 %v1542
        %v3080 = vpop.f32.mrf.mxu0
        %v3081 = vadd.f32 0.0, %v3080
        %v3082 = vpop.f32.mrf.mxu0
        %3083 = vmatprep.mubr.f32.mxu0 0.0
        %3084 = vmatmul.mubr.f32.gmra.mxu0 %v1545
        %v3085 = vpop.f32.mrf.mxu0
        %v3086 = vadd.f32 0.0, %v3085
        %v3087 = vpop.f32.mrf.mxu0
        %3088 = vmatprep.mubr.f32.mxu0 0.0
        %3089 = vmatmul.mubr.f32.gmra.mxu0 %v1548
        %v3090 = vpop.f32.mrf.mxu0
        %v3091 = vadd.f32 0.0, %v3090
        %v3092 = vpop.f32.mrf.mxu0
        %3093 = vdwg.mxu0
        %v3095 = vsel %vm1942, %v2976, 0
        %v3098 = vsel %vm1942, %v2977, 0
        %v3101 = vsel %vm1942, %v2978, 0
        %v3104 = vsel %vm1942, %v2979, 0
        %v3107 = vsel %vm1942, %v2980, 0
        %v3110 = vsel %vm1942, %v2981, 0
        %v3113 = vsel %vm1942, %v2982, 0
        %v3116 = vsel %vm1942, %v2983, 0
        %3118 = vmatprep.subr.mxu0 0.0
        %3119 = vmatpush1.msra.mxu0 0.0
        %3120 = vmatprep.subr.mxu0 0.0
        %3121 = vmatpush1.msra.mxu0 0.0
        %3122 = vmatprep.subr.mxu0 0.0
        %3123 = vmatpush1.msra.mxu0 0.0
        %3124 = vmatprep.subr.mxu0 0.0
        %3125 = vmatpush1.msra.mxu0 0.0
        %3126 = vmatprep.subr.mxu0 0.0
        %3127 = vmatpush1.msra.mxu0 0.0
        %3128 = vmatprep.subr.mxu0 0.0
        %3129 = vmatpush1.msra.mxu0 0.0
        %3130 = vmatprep.subr.mxu0 0.0
        %3131 = vmatpush1.msra.mxu0 0.0
        %3132 = vmatprep.subr.mxu0 0.0
        %3133 = vmatpush1.msra.mxu0 0.0
        %3134 = vmatprep.subr.mxu0 0.0
        %3135 = vmatpush1.msra.mxu0 %v3091
        %3136 = vmatprep.subr.mxu0 0.0
        %3137 = vmatpush1.msra.mxu0 %v3086
        %3138 = vmatprep.subr.mxu0 0.0
        %3139 = vmatpush1.msra.mxu0 %v3081
        %3140 = vmatprep.subr.mxu0 0.0
        %3141 = vmatpush1.msra.mxu0 %v3076
        %3142 = vmatprep.subr.mxu0 0.0
        %3143 = vmatpush1.msra.mxu0 %v3071
        %3144 = vmatprep.subr.mxu0 0.0
        %3145 = vmatpush1.msra.mxu0 %v3066
        %3146 = vmatprep.subr.mxu0 0.0
        %3147 = vmatpush1.msra.mxu0 %v3061
        %3148 = vmatprep.subr.mxu0 0.0
        %3149 = vmatpush1.msra.mxu0 %v3056
        %3150 = vmatprep.subr.mxu0 0.0
        %3151 = vmatpush2.msra.mxu0 0.0
        %3152 = vmatprep.subr.mxu0 0.0
        %3153 = vmatpush2.msra.mxu0 0.0
        %3154 = vmatprep.subr.mxu0 0.0
        %3155 = vmatpush2.msra.mxu0 0.0
        %3156 = vmatprep.subr.mxu0 0.0
        %3157 = vmatpush2.msra.mxu0 0.0
        %3158 = vmatprep.subr.mxu0 0.0
        %3159 = vmatpush2.msra.mxu0 0.0
        %3160 = vmatprep.subr.mxu0 0.0
        %3161 = vmatpush2.msra.mxu0 0.0
        %3162 = vmatprep.subr.mxu0 0.0
        %3163 = vmatpush2.msra.mxu0 0.0
        %3164 = vmatprep.subr.mxu0 0.0
        %3165 = vmatpush2.msra.mxu0 0.0
        %3166 = vmatprep.subr.mxu0 0.0
        %3167 = vmatpush2.msra.mxu0 0.0
        %3168 = vmatprep.subr.mxu0 0.0
        %3169 = vmatpush2.msra.mxu0 0.0
        %3170 = vmatprep.subr.mxu0 0.0
        %3171 = vmatpush2.msra.mxu0 0.0
        %3172 = vmatprep.subr.mxu0 0.0
        %3173 = vmatpush2.msra.mxu0 0.0
        %3174 = vmatprep.subr.mxu0 0.0
        %3175 = vmatpush2.msra.mxu0 0.0
        %3176 = vmatprep.subr.mxu0 0.0
        %3177 = vmatpush2.msra.mxu0 0.0
        %3178 = vmatprep.subr.mxu0 0.0
        %3179 = vmatpush2.msra.mxu0 0.0
        %3180 = vmatprep.subr.mxu0 0.0
        %3181 = vmatpush2.msra.mxu0 0.0
        %3182 = vmatprep.mubr.f32.mxu0 0.0
        %3183 = vmatmul.mubr.f32.gmra.mxu0 %v3095
        %v3184 = vpop.f32.mrf.mxu0
        %v3185 = vadd.f32 0.0, %v3184
        %v3186 = vpop.f32.mrf.mxu0
        %3187 = vmatprep.mubr.f32.mxu0 0.0
        %3188 = vmatmul.mubr.f32.gmra.mxu0 %v3098
        %v3189 = vpop.f32.mrf.mxu0
        %v3190 = vadd.f32 0.0, %v3189
        %v3191 = vpop.f32.mrf.mxu0
        %3192 = vmatprep.mubr.f32.mxu0 0.0
        %3193 = vmatmul.mubr.f32.gmra.mxu0 %v3101
        %v3194 = vpop.f32.mrf.mxu0
        %v3195 = vadd.f32 0.0, %v3194
        %v3196 = vpop.f32.mrf.mxu0
        %3197 = vmatprep.mubr.f32.mxu0 0.0
        %3198 = vmatmul.mubr.f32.gmra.mxu0 %v3104
        %v3199 = vpop.f32.mrf.mxu0
        %v3200 = vadd.f32 0.0, %v3199
        %v3201 = vpop.f32.mrf.mxu0
        %3202 = vmatprep.mubr.f32.mxu0 0.0
        %3203 = vmatmul.mubr.f32.gmra.mxu0 %v3107
        %v3204 = vpop.f32.mrf.mxu0
        %v3205 = vadd.f32 0.0, %v3204
        %v3206 = vpop.f32.mrf.mxu0
        %3207 = vmatprep.mubr.f32.mxu0 0.0
        %3208 = vmatmul.mubr.f32.gmra.mxu0 %v3110
        %v3209 = vpop.f32.mrf.mxu0
        %v3210 = vadd.f32 0.0, %v3209
        %v3211 = vpop.f32.mrf.mxu0
        %3212 = vmatprep.mubr.f32.mxu0 0.0
        %3213 = vmatmul.mubr.f32.gmra.mxu0 %v3113
        %v3214 = vpop.f32.mrf.mxu0
        %v3215 = vadd.f32 0.0, %v3214
        %v3216 = vpop.f32.mrf.mxu0
        %3217 = vmatprep.mubr.f32.mxu0 0.0
        %3218 = vmatmul.mubr.f32.gmra.mxu0 %v3116
        %v3219 = vpop.f32.mrf.mxu0
        %v3220 = vadd.f32 0.0, %v3219
        %v3221 = vpop.f32.mrf.mxu0
        %3222 = vdwg.mxu0
        %v3223 = vadd.f32 %v2708, %v3185
        %v3224 = vadd.f32 %v2713, %v3190
        %v3225 = vadd.f32 %v2718, %v3195
        %v3226 = vadd.f32 %v2723, %v3200
        %v3227 = vadd.f32 %v2728, %v3205
        %v3228 = vadd.f32 %v2733, %v3210
        %v3229 = vadd.f32 %v2738, %v3215
        %v3230 = vadd.f32 %v2743, %v3220
        %vm3231 = vcmp.ge.s32.totalorder %v1388, 24
        %vm3232 = vcmp.lt.s32.totalorder %v1388, 32
        %vm3233 = vmand %vm3231, %vm3232
        %v3234 = vsel %vm3233, 1, 0
        %vm3235 = vcmp.eq.s32.totalorder %v3234, 1
        %v3236 = vsel %vm3235, %v1617, 0.0
        %v3237 = vsel %vm3235, %v1622, 0.0
        %v3238 = vsel %vm3235, %v1627, 0.0
        %v3239 = vsel %vm3235, %v1632, 0.0
        %v3240 = vsel %vm3235, %v1637, 0.0
        %v3241 = vsel %vm3235, %v1642, 0.0
        %v3242 = vsel %vm3235, %v1647, 0.0
        %v3243 = vsel %vm3235, %v1652, 0.0
        %v3245 = vsel %vm1193, %v3236, 0
        %v3248 = vsel %vm1193, %v3237, 0
        %v3251 = vsel %vm1193, %v3238, 0
        %v3254 = vsel %vm1193, %v3239, 0
        %v3257 = vsel %vm1193, %v3240, 0
        %v3260 = vsel %vm1193, %v3241, 0
        %v3263 = vsel %vm1193, %v3242, 0
        %v3266 = vsel %vm1193, %v3243, 0
        %3268 = vmatprep.subr.mxu0 0.0
        %3269 = vmatpush1.xpose.msra.mxu0 0.0
        %3270 = vmatprep.subr.mxu0 0.0
        %3271 = vmatpush1.xpose.msra.mxu0 0.0
        %3272 = vmatprep.subr.mxu0 0.0
        %3273 = vmatpush1.xpose.msra.mxu0 0.0
        %3274 = vmatprep.subr.mxu0 0.0
        %3275 = vmatpush1.xpose.msra.mxu0 0.0
        %3276 = vmatprep.subr.mxu0 0.0
        %3277 = vmatpush1.xpose.msra.mxu0 0.0
        %3278 = vmatprep.subr.mxu0 0.0
        %3279 = vmatpush1.xpose.msra.mxu0 0.0
        %3280 = vmatprep.subr.mxu0 0.0
        %3281 = vmatpush1.xpose.msra.mxu0 0.0
        %3282 = vmatprep.subr.mxu0 0.0
        %3283 = vmatpush1.xpose.msra.mxu0 0.0
        %3284 = vmatprep.subr.mxu0 0.0
        %3285 = vmatpush1.xpose.msra.mxu0 %v1827
        %3286 = vmatprep.subr.mxu0 0.0
        %3287 = vmatpush1.xpose.msra.mxu0 %v1824
        %3288 = vmatprep.subr.mxu0 0.0
        %3289 = vmatpush1.xpose.msra.mxu0 %v1821
        %3290 = vmatprep.subr.mxu0 0.0
        %3291 = vmatpush1.xpose.msra.mxu0 %v1818
        %3292 = vmatprep.subr.mxu0 0.0
        %3293 = vmatpush1.xpose.msra.mxu0 %v1815
        %3294 = vmatprep.subr.mxu0 0.0
        %3295 = vmatpush1.xpose.msra.mxu0 %v1812
        %3296 = vmatprep.subr.mxu0 0.0
        %3297 = vmatpush1.xpose.msra.mxu0 %v1809
        %3298 = vmatprep.subr.mxu0 0.0
        %3299 = vmatpush1.xpose.msra.mxu0 %v1806
        %3300 = vmatprep.subr.mxu0 0.0
        %3301 = vmatpush2.xpose.msra.mxu0 0.0
        %3302 = vmatprep.subr.mxu0 0.0
        %3303 = vmatpush2.xpose.msra.mxu0 0.0
        %3304 = vmatprep.subr.mxu0 0.0
        %3305 = vmatpush2.xpose.msra.mxu0 0.0
        %3306 = vmatprep.subr.mxu0 0.0
        %3307 = vmatpush2.xpose.msra.mxu0 0.0
        %3308 = vmatprep.subr.mxu0 0.0
        %3309 = vmatpush2.xpose.msra.mxu0 0.0
        %3310 = vmatprep.subr.mxu0 0.0
        %3311 = vmatpush2.xpose.msra.mxu0 0.0
        %3312 = vmatprep.subr.mxu0 0.0
        %3313 = vmatpush2.xpose.msra.mxu0 0.0
        %3314 = vmatprep.subr.mxu0 0.0
        %3315 = vmatpush2.xpose.msra.mxu0 0.0
        %3316 = vmatprep.subr.mxu0 0.0
        %3317 = vmatpush2.xpose.msra.mxu0 0.0
        %3318 = vmatprep.subr.mxu0 0.0
        %3319 = vmatpush2.xpose.msra.mxu0 0.0
        %3320 = vmatprep.subr.mxu0 0.0
        %3321 = vmatpush2.xpose.msra.mxu0 0.0
        %3322 = vmatprep.subr.mxu0 0.0
        %3323 = vmatpush2.xpose.msra.mxu0 0.0
        %3324 = vmatprep.subr.mxu0 0.0
        %3325 = vmatpush2.xpose.msra.mxu0 0.0
        %3326 = vmatprep.subr.mxu0 0.0
        %3327 = vmatpush2.xpose.msra.mxu0 0.0
        %3328 = vmatprep.subr.mxu0 0.0
        %3329 = vmatpush2.xpose.msra.mxu0 0.0
        %3330 = vmatprep.subr.mxu0 0.0
        %3331 = vmatpush2.xpose.msra.mxu0 0.0
        %3332 = vmatprep.mubr.f32.mxu0 0.0
        %3333 = vmatmul.mubr.f32.gmra.mxu0 %v3245
        %v3334 = vpop.f32.mrf.mxu0
        %v3335 = vadd.f32 0.0, %v3334
        %v3336 = vpop.f32.mrf.mxu0
        %3337 = vmatprep.mubr.f32.mxu0 0.0
        %3338 = vmatmul.mubr.f32.gmra.mxu0 %v3248
        %v3339 = vpop.f32.mrf.mxu0
        %v3340 = vadd.f32 0.0, %v3339
        %v3341 = vpop.f32.mrf.mxu0
        %3342 = vmatprep.mubr.f32.mxu0 0.0
        %3343 = vmatmul.mubr.f32.gmra.mxu0 %v3251
        %v3344 = vpop.f32.mrf.mxu0
        %v3345 = vadd.f32 0.0, %v3344
        %v3346 = vpop.f32.mrf.mxu0
        %3347 = vmatprep.mubr.f32.mxu0 0.0
        %3348 = vmatmul.mubr.f32.gmra.mxu0 %v3254
        %v3349 = vpop.f32.mrf.mxu0
        %v3350 = vadd.f32 0.0, %v3349
        %v3351 = vpop.f32.mrf.mxu0
        %3352 = vmatprep.mubr.f32.mxu0 0.0
        %3353 = vmatmul.mubr.f32.gmra.mxu0 %v3257
        %v3354 = vpop.f32.mrf.mxu0
        %v3355 = vadd.f32 0.0, %v3354
        %v3356 = vpop.f32.mrf.mxu0
        %3357 = vmatprep.mubr.f32.mxu0 0.0
        %3358 = vmatmul.mubr.f32.gmra.mxu0 %v3260
        %v3359 = vpop.f32.mrf.mxu0
        %v3360 = vadd.f32 0.0, %v3359
        %v3361 = vpop.f32.mrf.mxu0
        %3362 = vmatprep.mubr.f32.mxu0 0.0
        %3363 = vmatmul.mubr.f32.gmra.mxu0 %v3263
        %v3364 = vpop.f32.mrf.mxu0
        %v3365 = vadd.f32 0.0, %v3364
        %v3366 = vpop.f32.mrf.mxu0
        %3367 = vmatprep.mubr.f32.mxu0 0.0
        %3368 = vmatmul.mubr.f32.gmra.mxu0 %v3266
        %v3369 = vpop.f32.mrf.mxu0
        %v3370 = vadd.f32 0.0, %v3369
        %v3371 = vpop.f32.mrf.mxu0
        %3372 = vdwg.mxu0
        %v3373 = vmul.f32 %v3335, 0.35355338
        %v3374 = vmul.f32 %v3340, 0.35355338
        %v3375 = vmul.f32 %v3345, 0.35355338
        %v3376 = vmul.f32 %v3350, 0.35355338
        %v3377 = vmul.f32 %v3355, 0.35355338
        %v3378 = vmul.f32 %v3360, 0.35355338
        %v3379 = vmul.f32 %v3365, 0.35355338
        %v3380 = vmul.f32 %v3370, 0.35355338
        %v3381 = vsel %vm1942, %v3373, -inf
        %3382 = vmax.xlane.f32.xlu0 %v3381
        %v3383 = vpop.xlane.xlu0 %3382
        %v3384 = vsel %vm1942, %v3374, -inf
        %3385 = vmax.xlane.f32.xlu0 %v3384
        %v3386 = vpop.xlane.xlu0 %3385
        %v3387 = vsel %vm1942, %v3375, -inf
        %3388 = vmax.xlane.f32.xlu0 %v3387
        %v3389 = vpop.xlane.xlu0 %3388
        %v3390 = vsel %vm1942, %v3376, -inf
        %3391 = vmax.xlane.f32.xlu0 %v3390
        %v3392 = vpop.xlane.xlu0 %3391
        %v3393 = vsel %vm1942, %v3377, -inf
        %3394 = vmax.xlane.f32.xlu0 %v3393
        %v3395 = vpop.xlane.xlu0 %3394
        %v3396 = vsel %vm1942, %v3378, -inf
        %3397 = vmax.xlane.f32.xlu0 %v3396
        %v3398 = vpop.xlane.xlu0 %3397
        %v3399 = vsel %vm1942, %v3379, -inf
        %3400 = vmax.xlane.f32.xlu0 %v3399
        %v3401 = vpop.xlane.xlu0 %3400
        %v3402 = vsel %vm1942, %v3380, -inf
        %3403 = vmax.xlane.f32.xlu0 %v3402
        %v3404 = vpop.xlane.xlu0 %3403
        %v3405 = vsub.f32 %v3373, %v3383
        %v3406 = vsub.f32 %v3374, %v3386
        %v3407 = vsub.f32 %v3375, %v3389
        %v3408 = vsub.f32 %v3376, %v3392
        %v3409 = vsub.f32 %v3377, %v3395
        %v3410 = vsub.f32 %v3378, %v3398
        %v3411 = vsub.f32 %v3379, %v3401
        %v3412 = vsub.f32 %v3380, %v3404
        %v3413 = vmul.f32 %v3405, 1.442695
        %v3414 = vpow.pop %v3413
        %v3415 = vmul.f32 %v3406, 1.442695
        %v3416 = vpow.pop %v3415
        %v3417 = vmul.f32 %v3407, 1.442695
        %v3418 = vpow.pop %v3417
        %v3419 = vmul.f32 %v3408, 1.442695
        %v3420 = vpow.pop %v3419
        %v3421 = vmul.f32 %v3409, 1.442695
        %v3422 = vpow.pop %v3421
        %v3423 = vmul.f32 %v3410, 1.442695
        %v3424 = vpow.pop %v3423
        %v3425 = vmul.f32 %v3411, 1.442695
        %v3426 = vpow.pop %v3425
        %v3427 = vmul.f32 %v3412, 1.442695
        %v3428 = vpow.pop %v3427
        %v3429 = vsel %vm1942, %v3414, 0.0
        %3430 = vadd.xlane.f32.xlu0 %v3429
        %v3431 = vpop.xlane.xlu0 %3430
        %v3432 = vsel %vm1942, %v3416, 0.0
        %3433 = vadd.xlane.f32.xlu0 %v3432
        %v3434 = vpop.xlane.xlu0 %3433
        %v3435 = vsel %vm1942, %v3418, 0.0
        %3436 = vadd.xlane.f32.xlu0 %v3435
        %v3437 = vpop.xlane.xlu0 %3436
        %v3438 = vsel %vm1942, %v3420, 0.0
        %3439 = vadd.xlane.f32.xlu0 %v3438
        %v3440 = vpop.xlane.xlu0 %3439
        %v3441 = vsel %vm1942, %v3422, 0.0
        %3442 = vadd.xlane.f32.xlu0 %v3441
        %v3443 = vpop.xlane.xlu0 %3442
        %v3444 = vsel %vm1942, %v3424, 0.0
        %3445 = vadd.xlane.f32.xlu0 %v3444
        %v3446 = vpop.xlane.xlu0 %3445
        %v3447 = vsel %vm1942, %v3426, 0.0
        %3448 = vadd.xlane.f32.xlu0 %v3447
        %v3449 = vpop.xlane.xlu0 %3448
        %v3450 = vsel %vm1942, %v3428, 0.0
        %3451 = vadd.xlane.f32.xlu0 %v3450
        %v3452 = vpop.xlane.xlu0 %3451
        %v3453 = vrcp.pop %v3431
        %v3454 = vrcp.pop %v3434
        %v3455 = vrcp.pop %v3437
        %v3456 = vrcp.pop %v3440
        %v3457 = vrcp.pop %v3443
        %v3458 = vrcp.pop %v3446
        %v3459 = vrcp.pop %v3449
        %v3460 = vrcp.pop %v3452
        %v3461 = vmul.f32 %v3414, %v3453
        %v3462 = vmul.f32 %v3416, %v3454
        %v3463 = vmul.f32 %v3418, %v3455
        %v3464 = vmul.f32 %v3420, %v3456
        %v3465 = vmul.f32 %v3422, %v3457
        %v3466 = vmul.f32 %v3424, %v3458
        %v3467 = vmul.f32 %v3426, %v3459
        %v3468 = vmul.f32 %v3428, %v3460
        %s3469 = scalar_lea.vmem [#allocation8], 96
        %v3470 = vld [vmem:[%s3469] sm:$0xff]
        %v3471 = vld [vmem:[%s3469 + $0x8] sm:$0xff]
        %v3472 = vld [vmem:[%s3469 + $0x10] sm:$0xff]
        %v3473 = vld [vmem:[%s3469 + $0x18] sm:$0xff]
        %3474 = vmatprep.subr.mxu0 0.0
        %3475 = vmatpush1.msra.mxu0 0.0
        %3476 = vmatprep.subr.mxu0 0.0
        %3477 = vmatpush1.msra.mxu0 0.0
        %3478 = vmatprep.subr.mxu0 0.0
        %3479 = vmatpush1.msra.mxu0 0.0
        %3480 = vmatprep.subr.mxu0 0.0
        %3481 = vmatpush1.msra.mxu0 0.0
        %3482 = vmatprep.subr.mxu0 0.0
        %3483 = vmatpush1.msra.mxu0 0.0
        %3484 = vmatprep.subr.mxu0 0.0
        %3485 = vmatpush1.msra.mxu0 0.0
        %3486 = vmatprep.subr.mxu0 0.0
        %3487 = vmatpush1.msra.mxu0 0.0
        %3488 = vmatprep.subr.mxu0 0.0
        %3489 = vmatpush1.msra.mxu0 0.0
        %3490 = vmatprep.subr.mxu0 0.0
        %3491 = vmatpush1.msra.mxu0 0.0
        %3492 = vmatprep.subr.mxu0 0.0
        %3493 = vmatpush1.msra.mxu0 0.0
        %3494 = vmatprep.subr.mxu0 0.0
        %3495 = vmatpush1.msra.mxu0 0.0
        %3496 = vmatprep.subr.mxu0 0.0
        %3497 = vmatpush1.msra.mxu0 0.0
        %3498 = vmatprep.subr.mxu0 0.0
        %3499 = vmatpush1.msra.mxu0 %v3473
        %3500 = vmatprep.subr.mxu0 0.0
        %3501 = vmatpush1.msra.mxu0 %v3472
        %3502 = vmatprep.subr.mxu0 0.0
        %3503 = vmatpush1.msra.mxu0 %v3471
        %3504 = vmatprep.subr.mxu0 0.0
        %3505 = vmatpush1.msra.mxu0 %v3470
        %3506 = vmatprep.subr.mxu0 0.0
        %3507 = vmatpush2.msra.mxu0 0.0
        %3508 = vmatprep.subr.mxu0 0.0
        %3509 = vmatpush2.msra.mxu0 0.0
        %3510 = vmatprep.subr.mxu0 0.0
        %3511 = vmatpush2.msra.mxu0 0.0
        %3512 = vmatprep.subr.mxu0 0.0
        %3513 = vmatpush2.msra.mxu0 0.0
        %3514 = vmatprep.subr.mxu0 0.0
        %3515 = vmatpush2.msra.mxu0 0.0
        %3516 = vmatprep.subr.mxu0 0.0
        %3517 = vmatpush2.msra.mxu0 0.0
        %3518 = vmatprep.subr.mxu0 0.0
        %3519 = vmatpush2.msra.mxu0 0.0
        %3520 = vmatprep.subr.mxu0 0.0
        %3521 = vmatpush2.msra.mxu0 0.0
        %3522 = vmatprep.subr.mxu0 0.0
        %3523 = vmatpush2.msra.mxu0 0.0
        %3524 = vmatprep.subr.mxu0 0.0
        %3525 = vmatpush2.msra.mxu0 0.0
        %3526 = vmatprep.subr.mxu0 0.0
        %3527 = vmatpush2.msra.mxu0 0.0
        %3528 = vmatprep.subr.mxu0 0.0
        %3529 = vmatpush2.msra.mxu0 0.0
        %3530 = vmatprep.subr.mxu0 0.0
        %3531 = vmatpush2.msra.mxu0 0.0
        %3532 = vmatprep.subr.mxu0 0.0
        %3533 = vmatpush2.msra.mxu0 0.0
        %3534 = vmatprep.subr.mxu0 0.0
        %3535 = vmatpush2.msra.mxu0 0.0
        %3536 = vmatprep.subr.mxu0 0.0
        %3537 = vmatpush2.msra.mxu0 0.0
        %3538 = vmatprep.mubr.f32.mxu0 0.0
        %3539 = vmatmul.mubr.f32.gmra.mxu0 %v1527
        %v3540 = vpop.f32.mrf.mxu0
        %v3541 = vadd.f32 0.0, %v3540
        %v3542 = vpop.f32.mrf.mxu0
        %3543 = vmatprep.mubr.f32.mxu0 0.0
        %3544 = vmatmul.mubr.f32.gmra.mxu0 %v1530
        %v3545 = vpop.f32.mrf.mxu0
        %v3546 = vadd.f32 0.0, %v3545
        %v3547 = vpop.f32.mrf.mxu0
        %3548 = vmatprep.mubr.f32.mxu0 0.0
        %3549 = vmatmul.mubr.f32.gmra.mxu0 %v1533
        %v3550 = vpop.f32.mrf.mxu0
        %v3551 = vadd.f32 0.0, %v3550
        %v3552 = vpop.f32.mrf.mxu0
        %3553 = vmatprep.mubr.f32.mxu0 0.0
        %3554 = vmatmul.mubr.f32.gmra.mxu0 %v1536
        %v3555 = vpop.f32.mrf.mxu0
        %v3556 = vadd.f32 0.0, %v3555
        %v3557 = vpop.f32.mrf.mxu0
        %3558 = vmatprep.mubr.f32.mxu0 0.0
        %3559 = vmatmul.mubr.f32.gmra.mxu0 %v1539
        %v3560 = vpop.f32.mrf.mxu0
        %v3561 = vadd.f32 0.0, %v3560
        %v3562 = vpop.f32.mrf.mxu0
        %3563 = vmatprep.mubr.f32.mxu0 0.0
        %3564 = vmatmul.mubr.f32.gmra.mxu0 %v1542
        %v3565 = vpop.f32.mrf.mxu0
        %v3566 = vadd.f32 0.0, %v3565
        %v3567 = vpop.f32.mrf.mxu0
        %3568 = vmatprep.mubr.f32.mxu0 0.0
        %3569 = vmatmul.mubr.f32.gmra.mxu0 %v1545
        %v3570 = vpop.f32.mrf.mxu0
        %v3571 = vadd.f32 0.0, %v3570
        %v3572 = vpop.f32.mrf.mxu0
        %3573 = vmatprep.mubr.f32.mxu0 0.0
        %3574 = vmatmul.mubr.f32.gmra.mxu0 %v1548
        %v3575 = vpop.f32.mrf.mxu0
        %v3576 = vadd.f32 0.0, %v3575
        %v3577 = vpop.f32.mrf.mxu0
        %3578 = vdwg.mxu0
        %v3580 = vsel %vm1942, %v3461, 0
        %v3583 = vsel %vm1942, %v3462, 0
        %v3586 = vsel %vm1942, %v3463, 0
        %v3589 = vsel %vm1942, %v3464, 0
        %v3592 = vsel %vm1942, %v3465, 0
        %v3595 = vsel %vm1942, %v3466, 0
        %v3598 = vsel %vm1942, %v3467, 0
        %v3601 = vsel %vm1942, %v3468, 0
        %3603 = vmatprep.subr.mxu0 0.0
        %3604 = vmatpush1.msra.mxu0 0.0
        %3605 = vmatprep.subr.mxu0 0.0
        %3606 = vmatpush1.msra.mxu0 0.0
        %3607 = vmatprep.subr.mxu0 0.0
        %3608 = vmatpush1.msra.mxu0 0.0
        %3609 = vmatprep.subr.mxu0 0.0
        %3610 = vmatpush1.msra.mxu0 0.0
        %3611 = vmatprep.subr.mxu0 0.0
        %3612 = vmatpush1.msra.mxu0 0.0
        %3613 = vmatprep.subr.mxu0 0.0
        %3614 = vmatpush1.msra.mxu0 0.0
        %3615 = vmatprep.subr.mxu0 0.0
        %3616 = vmatpush1.msra.mxu0 0.0
        %3617 = vmatprep.subr.mxu0 0.0
        %3618 = vmatpush1.msra.mxu0 0.0
        %3619 = vmatprep.subr.mxu0 0.0
        %3620 = vmatpush1.msra.mxu0 %v3576
        %3621 = vmatprep.subr.mxu0 0.0
        %3622 = vmatpush1.msra.mxu0 %v3571
        %3623 = vmatprep.subr.mxu0 0.0
        %3624 = vmatpush1.msra.mxu0 %v3566
        %3625 = vmatprep.subr.mxu0 0.0
        %3626 = vmatpush1.msra.mxu0 %v3561
        %3627 = vmatprep.subr.mxu0 0.0
        %3628 = vmatpush1.msra.mxu0 %v3556
        %3629 = vmatprep.subr.mxu0 0.0
        %3630 = vmatpush1.msra.mxu0 %v3551
        %3631 = vmatprep.subr.mxu0 0.0
        %3632 = vmatpush1.msra.mxu0 %v3546
        %3633 = vmatprep.subr.mxu0 0.0
        %3634 = vmatpush1.msra.mxu0 %v3541
        %3635 = vmatprep.subr.mxu0 0.0
        %3636 = vmatpush2.msra.mxu0 0.0
        %3637 = vmatprep.subr.mxu0 0.0
        %3638 = vmatpush2.msra.mxu0 0.0
        %3639 = vmatprep.subr.mxu0 0.0
        %3640 = vmatpush2.msra.mxu0 0.0
        %3641 = vmatprep.subr.mxu0 0.0
        %3642 = vmatpush2.msra.mxu0 0.0
        %3643 = vmatprep.subr.mxu0 0.0
        %3644 = vmatpush2.msra.mxu0 0.0
        %3645 = vmatprep.subr.mxu0 0.0
        %3646 = vmatpush2.msra.mxu0 0.0
        %3647 = vmatprep.subr.mxu0 0.0
        %3648 = vmatpush2.msra.mxu0 0.0
        %3649 = vmatprep.subr.mxu0 0.0
        %3650 = vmatpush2.msra.mxu0 0.0
        %3651 = vmatprep.subr.mxu0 0.0
        %3652 = vmatpush2.msra.mxu0 0.0
        %3653 = vmatprep.subr.mxu0 0.0
        %3654 = vmatpush2.msra.mxu0 0.0
        %3655 = vmatprep.subr.mxu0 0.0
        %3656 = vmatpush2.msra.mxu0 0.0
        %3657 = vmatprep.subr.mxu0 0.0
        %3658 = vmatpush2.msra.mxu0 0.0
        %3659 = vmatprep.subr.mxu0 0.0
        %3660 = vmatpush2.msra.mxu0 0.0
        %3661 = vmatprep.subr.mxu0 0.0
        %3662 = vmatpush2.msra.mxu0 0.0
        %3663 = vmatprep.subr.mxu0 0.0
        %3664 = vmatpush2.msra.mxu0 0.0
        %3665 = vmatprep.subr.mxu0 0.0
        %3666 = vmatpush2.msra.mxu0 0.0
        %3667 = vmatprep.mubr.f32.mxu0 0.0
        %3668 = vmatmul.mubr.f32.gmra.mxu0 %v3580
        %v3669 = vpop.f32.mrf.mxu0
        %v3670 = vadd.f32 0.0, %v3669
        %v3671 = vpop.f32.mrf.mxu0
        %3672 = vmatprep.mubr.f32.mxu0 0.0
        %3673 = vmatmul.mubr.f32.gmra.mxu0 %v3583
        %v3674 = vpop.f32.mrf.mxu0
        %v3675 = vadd.f32 0.0, %v3674
        %v3676 = vpop.f32.mrf.mxu0
        %3677 = vmatprep.mubr.f32.mxu0 0.0
        %3678 = vmatmul.mubr.f32.gmra.mxu0 %v3586
        %v3679 = vpop.f32.mrf.mxu0
        %v3680 = vadd.f32 0.0, %v3679
        %v3681 = vpop.f32.mrf.mxu0
        %3682 = vmatprep.mubr.f32.mxu0 0.0
        %3683 = vmatmul.mubr.f32.gmra.mxu0 %v3589
        %v3684 = vpop.f32.mrf.mxu0
        %v3685 = vadd.f32 0.0, %v3684
        %v3686 = vpop.f32.mrf.mxu0
        %3687 = vmatprep.mubr.f32.mxu0 0.0
        %3688 = vmatmul.mubr.f32.gmra.mxu0 %v3592
        %v3689 = vpop.f32.mrf.mxu0
        %v3690 = vadd.f32 0.0, %v3689
        %v3691 = vpop.f32.mrf.mxu0
        %3692 = vmatprep.mubr.f32.mxu0 0.0
        %3693 = vmatmul.mubr.f32.gmra.mxu0 %v3595
        %v3694 = vpop.f32.mrf.mxu0
        %v3695 = vadd.f32 0.0, %v3694
        %v3696 = vpop.f32.mrf.mxu0
        %3697 = vmatprep.mubr.f32.mxu0 0.0
        %3698 = vmatmul.mubr.f32.gmra.mxu0 %v3598
        %v3699 = vpop.f32.mrf.mxu0
        %v3700 = vadd.f32 0.0, %v3699
        %v3701 = vpop.f32.mrf.mxu0
        %3702 = vmatprep.mubr.f32.mxu0 0.0
        %3703 = vmatmul.mubr.f32.gmra.mxu0 %v3601
        %v3704 = vpop.f32.mrf.mxu0
        %v3705 = vadd.f32 0.0, %v3704
        %v3706 = vpop.f32.mrf.mxu0
        %3707 = vdwg.mxu0
        %v3708 = vadd.f32 %v3223, %v3670
        %v3709 = vadd.f32 %v3224, %v3675
        %v3710 = vadd.f32 %v3225, %v3680
        %v3711 = vadd.f32 %v3226, %v3685
        %v3712 = vadd.f32 %v3227, %v3690
        %v3713 = vadd.f32 %v3228, %v3695
        %v3714 = vadd.f32 %v3229, %v3700
        %v3715 = vadd.f32 %v3230, %v3705
        %v3716 = vadd.f32 %v1379, %v3708
        %v3717 = vadd.f32 %v1380, %v3709
        %v3718 = vadd.f32 %v1381, %v3710
        %v3719 = vadd.f32 %v1382, %v3711
        %v3720 = vadd.f32 %v1383, %v3712
        %v3721 = vadd.f32 %v1384, %v3713
        %v3722 = vadd.f32 %v1385, %v3714
        %v3723 = vadd.f32 %v1386, %v3715
        %v3724 = vlaneseq
        %v3725 = vshrl.u32 %v3724, 7
        %v3726 = vsub.s32 2, %v3725
        %v3727 = vrot.slane %v455, %v3726
        %v3728 = vadd.f32 %v3716, %v3727
        %v3729 = vadd.f32 %v3717, %v3727
        %v3730 = vadd.f32 %v3718, %v3727
        %v3731 = vadd.f32 %v3719, %v3727
        %v3732 = vadd.f32 %v3720, %v3727
        %v3733 = vadd.f32 %v3721, %v3727
        %v3734 = vadd.f32 %v3722, %v3727
        %v3735 = vadd.f32 %v3723, %v3727
        %v3736 = vsel %vm1193, %v3728, 0.0
        %3737 = vadd.xlane.f32.xlu0 %v3736
        %v3738 = vpop.xlane.xlu0 %3737
        %v3739 = vsel %vm1193, %v3729, 0.0
        %3740 = vadd.xlane.f32.xlu0 %v3739
        %v3741 = vpop.xlane.xlu0 %3740
        %v3742 = vsel %vm1193, %v3730, 0.0
        %3743 = vadd.xlane.f32.xlu0 %v3742
        %v3744 = vpop.xlane.xlu0 %3743
        %v3745 = vsel %vm1193, %v3731, 0.0
        %3746 = vadd.xlane.f32.xlu0 %v3745
        %v3747 = vpop.xlane.xlu0 %3746
        %v3748 = vsel %vm1193, %v3732, 0.0
        %3749 = vadd.xlane.f32.xlu0 %v3748
        %v3750 = vpop.xlane.xlu0 %3749
        %v3751 = vsel %vm1193, %v3733, 0.0
        %3752 = vadd.xlane.f32.xlu0 %v3751
        %v3753 = vpop.xlane.xlu0 %3752
        %v3754 = vsel %vm1193, %v3734, 0.0
        %3755 = vadd.xlane.f32.xlu0 %v3754
        %v3756 = vpop.xlane.xlu0 %3755
        %v3757 = vsel %vm1193, %v3735, 0.0
        %3758 = vadd.xlane.f32.xlu0 %v3757
        %v3759 = vpop.xlane.xlu0 %3758
        %v3760 = vmul.f32 %v3738, %v1413
        %v3761 = vmul.f32 %v3741, %v1413
        %v3762 = vmul.f32 %v3744, %v1413
        %v3763 = vmul.f32 %v3747, %v1413
        %v3764 = vmul.f32 %v3750, %v1413
        %v3765 = vmul.f32 %v3753, %v1413
        %v3766 = vmul.f32 %v3756, %v1413
        %v3767 = vmul.f32 %v3759, %v1413
        %v3768 = vsub.f32 %v3728, %v3760
        %v3769 = vsub.f32 %v3729, %v3761
        %v3770 = vsub.f32 %v3730, %v3762
        %v3771 = vsub.f32 %v3731, %v3763
        %v3772 = vsub.f32 %v3732, %v3764
        %v3773 = vsub.f32 %v3733, %v3765
        %v3774 = vsub.f32 %v3734, %v3766
        %v3775 = vsub.f32 %v3735, %v3767
        %v3776 = vmul.f32 %v3768, %v3768
        %v3777 = vmul.f32 %v3769, %v3769
        %v3778 = vmul.f32 %v3770, %v3770
        %v3779 = vmul.f32 %v3771, %v3771
        %v3780 = vmul.f32 %v3772, %v3772
        %v3781 = vmul.f32 %v3773, %v3773
        %v3782 = vmul.f32 %v3774, %v3774
        %v3783 = vmul.f32 %v3775, %v3775
        %v3784 = vsel %vm1193, %v3776, 0.0
        %3785 = vadd.xlane.f32.xlu0 %v3784
        %v3786 = vpop.xlane.xlu0 %3785
        %v3787 = vsel %vm1193, %v3777, 0.0
        %3788 = vadd.xlane.f32.xlu0 %v3787
        %v3789 = vpop.xlane.xlu0 %3788
        %v3790 = vsel %vm1193, %v3778, 0.0
        %3791 = vadd.xlane.f32.xlu0 %v3790
        %v3792 = vpop.xlane.xlu0 %3791
        %v3793 = vsel %vm1193, %v3779, 0.0
        %3794 = vadd.xlane.f32.xlu0 %v3793
        %v3795 = vpop.xlane.xlu0 %3794
        %v3796 = vsel %vm1193, %v3780, 0.0
        %3797 = vadd.xlane.f32.xlu0 %v3796
        %v3798 = vpop.xlane.xlu0 %3797
        %v3799 = vsel %vm1193, %v3781, 0.0
        %3800 = vadd.xlane.f32.xlu0 %v3799
        %v3801 = vpop.xlane.xlu0 %3800
        %v3802 = vsel %vm1193, %v3782, 0.0
        %3803 = vadd.xlane.f32.xlu0 %v3802
        %v3804 = vpop.xlane.xlu0 %3803
        %v3805 = vsel %vm1193, %v3783, 0.0
        %3806 = vadd.xlane.f32.xlu0 %v3805
        %v3807 = vpop.xlane.xlu0 %3806
        %v3808 = vmul.f32 %v3786, %v1413
        %v3809 = vmul.f32 %v3789, %v1413
        %v3810 = vmul.f32 %v3792, %v1413
        %v3811 = vmul.f32 %v3795, %v1413
        %v3812 = vmul.f32 %v3798, %v1413
        %v3813 = vmul.f32 %v3801, %v1413
        %v3814 = vmul.f32 %v3804, %v1413
        %v3815 = vmul.f32 %v3807, %v1413
        %v3816 = vadd.f32 %v3808, 1e-05
        %v3817 = vadd.f32 %v3809, 1e-05
        %v3818 = vadd.f32 %v3810, 1e-05
        %v3819 = vadd.f32 %v3811, 1e-05
        %v3820 = vadd.f32 %v3812, 1e-05
        %v3821 = vadd.f32 %v3813, 1e-05
        %v3822 = vadd.f32 %v3814, 1e-05
        %v3823 = vadd.f32 %v3815, 1e-05
        %v3824 = vrsqrt.pop %v3816
        %v3825 = vrsqrt.pop %v3817
        %v3826 = vrsqrt.pop %v3818
        %v3827 = vrsqrt.pop %v3819
        %v3828 = vrsqrt.pop %v3820
        %v3829 = vrsqrt.pop %v3821
        %v3830 = vrsqrt.pop %v3822
        %v3831 = vrsqrt.pop %v3823
        %v3832 = vmul.f32 %v3768, %v3824
        %v3833 = vmul.f32 %v3769, %v3825
        %v3834 = vmul.f32 %v3770, %v3826
        %v3835 = vmul.f32 %v3771, %v3827
        %v3836 = vmul.f32 %v3772, %v3828
        %v3837 = vmul.f32 %v3773, %v3829
        %v3838 = vmul.f32 %v3774, %v3830
        %v3839 = vmul.f32 %v3775, %v3831
        %v3840 = vlaneseq
        %v3841 = vshrl.u32 %v3840, 7
        %v3842 = vsub.s32 3, %v3841
        %v3843 = vrot.slane %v455, %v3842
        %v3844 = vmul.f32 %v3832, %v3843
        %v3845 = vmul.f32 %v3833, %v3843
        %v3846 = vmul.f32 %v3834, %v3843
        %v3847 = vmul.f32 %v3835, %v3843
        %v3848 = vmul.f32 %v3836, %v3843
        %v3849 = vmul.f32 %v3837, %v3843
        %v3850 = vmul.f32 %v3838, %v3843
        %v3851 = vmul.f32 %v3839, %v3843
        %v3852 = vlaneseq
        %v3853 = vshrl.u32 %v3852, 7
        %v3854 = vsub.s32 4, %v3853
        %v3855 = vrot.slane %v455, %v3854
        %v3856 = vadd.f32 %v3844, %v3855
        %v3857 = vadd.f32 %v3845, %v3855
        %v3858 = vadd.f32 %v3846, %v3855
        %v3859 = vadd.f32 %v3847, %v3855
        %v3860 = vadd.f32 %v3848, %v3855
        %v3861 = vadd.f32 %v3849, %v3855
        %v3862 = vadd.f32 %v3850, %v3855
        %v3863 = vadd.f32 %v3851, %v3855
        %v3864 = vld [vmem:[#allocation10] sm:$0xff]
        %v3865 = vld [vmem:[#allocation10 + $0x8] sm:$0xff]
        %v3866 = vld [vmem:[#allocation10 + $0x10] sm:$0xff]
        %v3867 = vld [vmem:[#allocation10 + $0x18] sm:$0xff]
        %v3868 = vlaneseq
        %v3869 = vshrl.u32 %v3868, 7
        %v3870 = vsub.s32 0, %v3869
        %v3871 = vrot.slane %v459, %v3870
        %v3873 = vsel %vm1193, %v3856, 0
        %v3876 = vsel %vm1193, %v3857, 0
        %v3879 = vsel %vm1193, %v3858, 0
        %v3882 = vsel %vm1193, %v3859, 0
        %v3885 = vsel %vm1193, %v3860, 0
        %v3888 = vsel %vm1193, %v3861, 0
        %v3891 = vsel %vm1193, %v3862, 0
        %v3894 = vsel %vm1193, %v3863, 0
        %3896 = vmatprep.subr.mxu0 0.0
        %3897 = vmatpush1.msra.mxu0 0.0
        %3898 = vmatprep.subr.mxu0 0.0
        %3899 = vmatpush1.msra.mxu0 0.0
        %3900 = vmatprep.subr.mxu0 0.0
        %3901 = vmatpush1.msra.mxu0 0.0
        %3902 = vmatprep.subr.mxu0 0.0
        %3903 = vmatpush1.msra.mxu0 0.0
        %3904 = vmatprep.subr.mxu0 0.0
        %3905 = vmatpush1.msra.mxu0 0.0
        %3906 = vmatprep.subr.mxu0 0.0
        %3907 = vmatpush1.msra.mxu0 0.0
        %3908 = vmatprep.subr.mxu0 0.0
        %3909 = vmatpush1.msra.mxu0 0.0
        %3910 = vmatprep.subr.mxu0 0.0
        %3911 = vmatpush1.msra.mxu0 0.0
        %3912 = vmatprep.subr.mxu0 0.0
        %3913 = vmatpush1.msra.mxu0 0.0
        %3914 = vmatprep.subr.mxu0 0.0
        %3915 = vmatpush1.msra.mxu0 0.0
        %3916 = vmatprep.subr.mxu0 0.0
        %3917 = vmatpush1.msra.mxu0 0.0
        %3918 = vmatprep.subr.mxu0 0.0
        %3919 = vmatpush1.msra.mxu0 0.0
        %3920 = vmatprep.subr.mxu0 0.0
        %3921 = vmatpush1.msra.mxu0 %v3867
        %3922 = vmatprep.subr.mxu0 0.0
        %3923 = vmatpush1.msra.mxu0 %v3866
        %3924 = vmatprep.subr.mxu0 0.0
        %3925 = vmatpush1.msra.mxu0 %v3865
        %3926 = vmatprep.subr.mxu0 0.0
        %3927 = vmatpush1.msra.mxu0 %v3864
        %3928 = vmatprep.subr.mxu0 0.0
        %3929 = vmatpush2.msra.mxu0 0.0
        %3930 = vmatprep.subr.mxu0 0.0
        %3931 = vmatpush2.msra.mxu0 0.0
        %3932 = vmatprep.subr.mxu0 0.0
        %3933 = vmatpush2.msra.mxu0 0.0
        %3934 = vmatprep.subr.mxu0 0.0
        %3935 = vmatpush2.msra.mxu0 0.0
        %3936 = vmatprep.subr.mxu0 0.0
        %3937 = vmatpush2.msra.mxu0 0.0
        %3938 = vmatprep.subr.mxu0 0.0
        %3939 = vmatpush2.msra.mxu0 0.0
        %3940 = vmatprep.subr.mxu0 0.0
        %3941 = vmatpush2.msra.mxu0 0.0
        %3942 = vmatprep.subr.mxu0 0.0
        %3943 = vmatpush2.msra.mxu0 0.0
        %3944 = vmatprep.subr.mxu0 0.0
        %3945 = vmatpush2.msra.mxu0 0.0
        %3946 = vmatprep.subr.mxu0 0.0
        %3947 = vmatpush2.msra.mxu0 0.0
        %3948 = vmatprep.subr.mxu0 0.0
        %3949 = vmatpush2.msra.mxu0 0.0
        %3950 = vmatprep.subr.mxu0 0.0
        %3951 = vmatpush2.msra.mxu0 0.0
        %3952 = vmatprep.subr.mxu0 0.0
        %3953 = vmatpush2.msra.mxu0 0.0
        %3954 = vmatprep.subr.mxu0 0.0
        %3955 = vmatpush2.msra.mxu0 0.0
        %3956 = vmatprep.subr.mxu0 0.0
        %3957 = vmatpush2.msra.mxu0 0.0
        %3958 = vmatprep.subr.mxu0 0.0
        %3959 = vmatpush2.msra.mxu0 0.0
        %3960 = vmatprep.mubr.f32.mxu0 0.0
        %3961 = vmatmul.mubr.f32.gmra.mxu0 %v3873
        %v3962 = vpop.f32.mrf.mxu0
        %v3963 = vadd.f32 %v3871, %v3962
        %v3964 = vpop.f32.mrf.mxu0
        %3965 = vmatprep.mubr.f32.mxu0 0.0
        %3966 = vmatmul.mubr.f32.gmra.mxu0 %v3876
        %v3967 = vpop.f32.mrf.mxu0
        %v3968 = vadd.f32 %v3871, %v3967
        %v3969 = vpop.f32.mrf.mxu0
        %3970 = vmatprep.mubr.f32.mxu0 0.0
        %3971 = vmatmul.mubr.f32.gmra.mxu0 %v3879
        %v3972 = vpop.f32.mrf.mxu0
        %v3973 = vadd.f32 %v3871, %v3972
        %v3974 = vpop.f32.mrf.mxu0
        %3975 = vmatprep.mubr.f32.mxu0 0.0
        %3976 = vmatmul.mubr.f32.gmra.mxu0 %v3882
        %v3977 = vpop.f32.mrf.mxu0
        %v3978 = vadd.f32 %v3871, %v3977
        %v3979 = vpop.f32.mrf.mxu0
        %3980 = vmatprep.mubr.f32.mxu0 0.0
        %3981 = vmatmul.mubr.f32.gmra.mxu0 %v3885
        %v3982 = vpop.f32.mrf.mxu0
        %v3983 = vadd.f32 %v3871, %v3982
        %v3984 = vpop.f32.mrf.mxu0
        %3985 = vmatprep.mubr.f32.mxu0 0.0
        %3986 = vmatmul.mubr.f32.gmra.mxu0 %v3888
        %v3987 = vpop.f32.mrf.mxu0
        %v3988 = vadd.f32 %v3871, %v3987
        %v3989 = vpop.f32.mrf.mxu0
        %3990 = vmatprep.mubr.f32.mxu0 0.0
        %3991 = vmatmul.mubr.f32.gmra.mxu0 %v3891
        %v3992 = vpop.f32.mrf.mxu0
        %v3993 = vadd.f32 %v3871, %v3992
        %v3994 = vpop.f32.mrf.mxu0
        %3995 = vmatprep.mubr.f32.mxu0 0.0
        %3996 = vmatmul.mubr.f32.gmra.mxu0 %v3894
        %v3997 = vpop.f32.mrf.mxu0
        %v3998 = vadd.f32 %v3871, %v3997
        %v3999 = vpop.f32.mrf.mxu0
        %4000 = vdwg.mxu0
        %v4001 = vmul.f32 %v3963, 0.5
        %v4002 = vmul.f32 %v3968, 0.5
        %v4003 = vmul.f32 %v3973, 0.5
        %v4004 = vmul.f32 %v3978, 0.5
        %v4005 = vmul.f32 %v3983, 0.5
        %v4006 = vmul.f32 %v3988, 0.5
        %v4007 = vmul.f32 %v3993, 0.5
        %v4008 = vmul.f32 %v3998, 0.5
        %v4009 = vmul.f32 %v3963, 0.70710677
        %v4010 = vmul.f32 %v3968, 0.70710677
        %v4011 = vmul.f32 %v3973, 0.70710677
        %v4012 = vmul.f32 %v3978, 0.70710677
        %v4013 = vmul.f32 %v3983, 0.70710677
        %v4014 = vmul.f32 %v3988, 0.70710677
        %v4015 = vmul.f32 %v3993, 0.70710677
        %v4016 = vmul.f32 %v3998, 0.70710677
        %v4017 = verf.f32.pop %v4009
        %v4018 = verf.f32.pop %v4010
        %v4019 = verf.f32.pop %v4011
        %v4020 = verf.f32.pop %v4012
        %v4021 = verf.f32.pop %v4013
        %v4022 = verf.f32.pop %v4014
        %v4023 = verf.f32.pop %v4015
        %v4024 = verf.f32.pop %v4016
        %v4025 = vadd.f32 %v4017, 1.0
        %v4026 = vadd.f32 %v4018, 1.0
        %v4027 = vadd.f32 %v4019, 1.0
        %v4028 = vadd.f32 %v4020, 1.0
        %v4029 = vadd.f32 %v4021, 1.0
        %v4030 = vadd.f32 %v4022, 1.0
        %v4031 = vadd.f32 %v4023, 1.0
        %v4032 = vadd.f32 %v4024, 1.0
        %v4033 = vmul.f32 %v4001, %v4025
        %v4034 = vmul.f32 %v4002, %v4026
        %v4035 = vmul.f32 %v4003, %v4027
        %v4036 = vmul.f32 %v4004, %v4028
        %v4037 = vmul.f32 %v4005, %v4029
        %v4038 = vmul.f32 %v4006, %v4030
        %v4039 = vmul.f32 %v4007, %v4031
        %v4040 = vmul.f32 %v4008, %v4032
        %v4041 = vld [vmem:[%s7] sm:$0xff]
        %v4042 = vld [vmem:[%s7 + $0x8] sm:$0xff]
        %v4043 = vld [vmem:[%s7 + $0x10] sm:$0xff]
        %v4044 = vld [vmem:[%s7 + $0x18] sm:$0xff]
        %v4045 = vld [vmem:[%s7 + $0x20] sm:$0xff]
        %v4046 = vld [vmem:[%s7 + $0x28] sm:$0xff]
        %v4047 = vld [vmem:[%s7 + $0x30] sm:$0xff]
        %v4048 = vld [vmem:[%s7 + $0x38] sm:$0xff]
        %v4050 = vsel %vm1942, %v4033, 0
        %v4053 = vsel %vm1942, %v4034, 0
        %v4056 = vsel %vm1942, %v4035, 0
        %v4059 = vsel %vm1942, %v4036, 0
        %v4062 = vsel %vm1942, %v4037, 0
        %v4065 = vsel %vm1942, %v4038, 0
        %v4068 = vsel %vm1942, %v4039, 0
        %v4071 = vsel %vm1942, %v4040, 0
        %4073 = vmatprep.subr.mxu0 0.0
        %4074 = vmatpush1.msra.mxu0 0.0
        %4075 = vmatprep.subr.mxu0 0.0
        %4076 = vmatpush1.msra.mxu0 0.0
        %4077 = vmatprep.subr.mxu0 0.0
        %4078 = vmatpush1.msra.mxu0 0.0
        %4079 = vmatprep.subr.mxu0 0.0
        %4080 = vmatpush1.msra.mxu0 0.0
        %4081 = vmatprep.subr.mxu0 0.0
        %4082 = vmatpush1.msra.mxu0 0.0
        %4083 = vmatprep.subr.mxu0 0.0
        %4084 = vmatpush1.msra.mxu0 0.0
        %4085 = vmatprep.subr.mxu0 0.0
        %4086 = vmatpush1.msra.mxu0 0.0
        %4087 = vmatprep.subr.mxu0 0.0
        %4088 = vmatpush1.msra.mxu0 0.0
        %4089 = vmatprep.subr.mxu0 0.0
        %4090 = vmatpush1.msra.mxu0 %v4048
        %4091 = vmatprep.subr.mxu0 0.0
        %4092 = vmatpush1.msra.mxu0 %v4047
        %4093 = vmatprep.subr.mxu0 0.0
        %4094 = vmatpush1.msra.mxu0 %v4046
        %4095 = vmatprep.subr.mxu0 0.0
        %4096 = vmatpush1.msra.mxu0 %v4045
        %4097 = vmatprep.subr.mxu0 0.0
        %4098 = vmatpush1.msra.mxu0 %v4044
        %4099 = vmatprep.subr.mxu0 0.0
        %4100 = vmatpush1.msra.mxu0 %v4043
        %4101 = vmatprep.subr.mxu0 0.0
        %4102 = vmatpush1.msra.mxu0 %v4042
        %4103 = vmatprep.subr.mxu0 0.0
        %4104 = vmatpush1.msra.mxu0 %v4041
        %4105 = vmatprep.subr.mxu0 0.0
        %4106 = vmatpush2.msra.mxu0 0.0
        %4107 = vmatprep.subr.mxu0 0.0
        %4108 = vmatpush2.msra.mxu0 0.0
        %4109 = vmatprep.subr.mxu0 0.0
        %4110 = vmatpush2.msra.mxu0 0.0
        %4111 = vmatprep.subr.mxu0 0.0
        %4112 = vmatpush2.msra.mxu0 0.0
        %4113 = vmatprep.subr.mxu0 0.0
        %4114 = vmatpush2.msra.mxu0 0.0
        %4115 = vmatprep.subr.mxu0 0.0
        %4116 = vmatpush2.msra.mxu0 0.0
        %4117 = vmatprep.subr.mxu0 0.0
        %4118 = vmatpush2.msra.mxu0 0.0
        %4119 = vmatprep.subr.mxu0 0.0
        %4120 = vmatpush2.msra.mxu0 0.0
        %4121 = vmatprep.subr.mxu0 0.0
        %4122 = vmatpush2.msra.mxu0 0.0
        %4123 = vmatprep.subr.mxu0 0.0
        %4124 = vmatpush2.msra.mxu0 0.0
        %4125 = vmatprep.subr.mxu0 0.0
        %4126 = vmatpush2.msra.mxu0 0.0
        %4127 = vmatprep.subr.mxu0 0.0
        %4128 = vmatpush2.msra.mxu0 0.0
        %4129 = vmatprep.subr.mxu0 0.0
        %4130 = vmatpush2.msra.mxu0 0.0
        %4131 = vmatprep.subr.mxu0 0.0
        %4132 = vmatpush2.msra.mxu0 0.0
        %4133 = vmatprep.subr.mxu0 0.0
        %4134 = vmatpush2.msra.mxu0 0.0
        %4135 = vmatprep.subr.mxu0 0.0
        %4136 = vmatpush2.msra.mxu0 0.0
        %4137 = vmatprep.mubr.f32.mxu0 0.0
        %4138 = vmatmul.mubr.f32.gmra.mxu0 %v4050
        %v4139 = vpop.f32.mrf.mxu0
        %v4140 = vadd.f32 0.0, %v4139
        %v4141 = vpop.f32.mrf.mxu0
        %4142 = vmatprep.mubr.f32.mxu0 0.0
        %4143 = vmatmul.mubr.f32.gmra.mxu0 %v4053
        %v4144 = vpop.f32.mrf.mxu0
        %v4145 = vadd.f32 0.0, %v4144
        %v4146 = vpop.f32.mrf.mxu0
        %4147 = vmatprep.mubr.f32.mxu0 0.0
        %4148 = vmatmul.mubr.f32.gmra.mxu0 %v4056
        %v4149 = vpop.f32.mrf.mxu0
        %v4150 = vadd.f32 0.0, %v4149
        %v4151 = vpop.f32.mrf.mxu0
        %4152 = vmatprep.mubr.f32.mxu0 0.0
        %4153 = vmatmul.mubr.f32.gmra.mxu0 %v4059
        %v4154 = vpop.f32.mrf.mxu0
        %v4155 = vadd.f32 0.0, %v4154
        %v4156 = vpop.f32.mrf.mxu0
        %4157 = vmatprep.mubr.f32.mxu0 0.0
        %4158 = vmatmul.mubr.f32.gmra.mxu0 %v4062
        %v4159 = vpop.f32.mrf.mxu0
        %v4160 = vadd.f32 0.0, %v4159
        %v4161 = vpop.f32.mrf.mxu0
        %4162 = vmatprep.mubr.f32.mxu0 0.0
        %4163 = vmatmul.mubr.f32.gmra.mxu0 %v4065
        %v4164 = vpop.f32.mrf.mxu0
        %v4165 = vadd.f32 0.0, %v4164
        %v4166 = vpop.f32.mrf.mxu0
        %4167 = vmatprep.mubr.f32.mxu0 0.0
        %4168 = vmatmul.mubr.f32.gmra.mxu0 %v4068
        %v4169 = vpop.f32.mrf.mxu0
        %v4170 = vadd.f32 0.0, %v4169
        %v4171 = vpop.f32.mrf.mxu0
        %4172 = vmatprep.mubr.f32.mxu0 0.0
        %4173 = vmatmul.mubr.f32.gmra.mxu0 %v4071
        %v4174 = vpop.f32.mrf.mxu0
        %v4175 = vadd.f32 0.0, %v4174
        %v4176 = vpop.f32.mrf.mxu0
        %4177 = vdwg.mxu0
        %v4178 = vadd.f32 %v3728, %v4140
        %v4179 = vadd.f32 %v3729, %v4145
        %v4180 = vadd.f32 %v3730, %v4150
        %v4181 = vadd.f32 %v3731, %v4155
        %v4182 = vadd.f32 %v3732, %v4160
        %v4183 = vadd.f32 %v3733, %v4165
        %v4184 = vadd.f32 %v3734, %v4170
        %v4185 = vadd.f32 %v3735, %v4175
        %v4186 = vlaneseq
        %v4187 = vshrl.u32 %v4186, 7
        %v4188 = vsub.s32 5, %v4187
        %v4189 = vrot.slane %v455, %v4188
        %v4190 = vadd.f32 %v4178, %v4189
        %v4191 = vadd.f32 %v4179, %v4189
        %v4192 = vadd.f32 %v4180, %v4189
        %v4193 = vadd.f32 %v4181, %v4189
        %v4194 = vadd.f32 %v4182, %v4189
        %v4195 = vadd.f32 %v4183, %v4189
        %v4196 = vadd.f32 %v4184, %v4189
        %v4197 = vadd.f32 %v4185, %v4189
        %v4198 = vsel %vm1193, %v4190, 0.0
        %4199 = vadd.xlane.f32.xlu0 %v4198
        %v4200 = vpop.xlane.xlu0 %4199
        %v4201 = vsel %vm1193, %v4191, 0.0
        %4202 = vadd.xlane.f32.xlu0 %v4201
        %v4203 = vpop.xlane.xlu0 %4202
        %v4204 = vsel %vm1193, %v4192, 0.0
        %4205 = vadd.xlane.f32.xlu0 %v4204
        %v4206 = vpop.xlane.xlu0 %4205
        %v4207 = vsel %vm1193, %v4193, 0.0
        %4208 = vadd.xlane.f32.xlu0 %v4207
        %v4209 = vpop.xlane.xlu0 %4208
        %v4210 = vsel %vm1193, %v4194, 0.0
        %4211 = vadd.xlane.f32.xlu0 %v4210
        %v4212 = vpop.xlane.xlu0 %4211
        %v4213 = vsel %vm1193, %v4195, 0.0
        %4214 = vadd.xlane.f32.xlu0 %v4213
        %v4215 = vpop.xlane.xlu0 %4214
        %v4216 = vsel %vm1193, %v4196, 0.0
        %4217 = vadd.xlane.f32.xlu0 %v4216
        %v4218 = vpop.xlane.xlu0 %4217
        %v4219 = vsel %vm1193, %v4197, 0.0
        %4220 = vadd.xlane.f32.xlu0 %v4219
        %v4221 = vpop.xlane.xlu0 %4220
        %v4222 = vmul.f32 %v4200, %v1413
        %v4223 = vmul.f32 %v4203, %v1413
        %v4224 = vmul.f32 %v4206, %v1413
        %v4225 = vmul.f32 %v4209, %v1413
        %v4226 = vmul.f32 %v4212, %v1413
        %v4227 = vmul.f32 %v4215, %v1413
        %v4228 = vmul.f32 %v4218, %v1413
        %v4229 = vmul.f32 %v4221, %v1413
        %v4230 = vsub.f32 %v4190, %v4222
        %v4231 = vsub.f32 %v4191, %v4223
        %v4232 = vsub.f32 %v4192, %v4224
        %v4233 = vsub.f32 %v4193, %v4225
        %v4234 = vsub.f32 %v4194, %v4226
        %v4235 = vsub.f32 %v4195, %v4227
        %v4236 = vsub.f32 %v4196, %v4228
        %v4237 = vsub.f32 %v4197, %v4229
        %v4238 = vmul.f32 %v4230, %v4230
        %v4239 = vmul.f32 %v4231, %v4231
        %v4240 = vmul.f32 %v4232, %v4232
        %v4241 = vmul.f32 %v4233, %v4233
        %v4242 = vmul.f32 %v4234, %v4234
        %v4243 = vmul.f32 %v4235, %v4235
        %v4244 = vmul.f32 %v4236, %v4236
        %v4245 = vmul.f32 %v4237, %v4237
        %v4246 = vsel %vm1193, %v4238, 0.0
        %4247 = vadd.xlane.f32.xlu0 %v4246
        %v4248 = vpop.xlane.xlu0 %4247
        %v4249 = vsel %vm1193, %v4239, 0.0
        %4250 = vadd.xlane.f32.xlu0 %v4249
        %v4251 = vpop.xlane.xlu0 %4250
        %v4252 = vsel %vm1193, %v4240, 0.0
        %4253 = vadd.xlane.f32.xlu0 %v4252
        %v4254 = vpop.xlane.xlu0 %4253
        %v4255 = vsel %vm1193, %v4241, 0.0
        %4256 = vadd.xlane.f32.xlu0 %v4255
        %v4257 = vpop.xlane.xlu0 %4256
        %v4258 = vsel %vm1193, %v4242, 0.0
        %4259 = vadd.xlane.f32.xlu0 %v4258
        %v4260 = vpop.xlane.xlu0 %4259
        %v4261 = vsel %vm1193, %v4243, 0.0
        %4262 = vadd.xlane.f32.xlu0 %v4261
        %v4263 = vpop.xlane.xlu0 %4262
        %v4264 = vsel %vm1193, %v4244, 0.0
        %4265 = vadd.xlane.f32.xlu0 %v4264
        %v4266 = vpop.xlane.xlu0 %4265
        %v4267 = vsel %vm1193, %v4245, 0.0
        %4268 = vadd.xlane.f32.xlu0 %v4267
        %v4269 = vpop.xlane.xlu0 %4268
        %v4270 = vmul.f32 %v4248, %v1413
        %v4271 = vmul.f32 %v4251, %v1413
        %v4272 = vmul.f32 %v4254, %v1413
        %v4273 = vmul.f32 %v4257, %v1413
        %v4274 = vmul.f32 %v4260, %v1413
        %v4275 = vmul.f32 %v4263, %v1413
        %v4276 = vmul.f32 %v4266, %v1413
        %v4277 = vmul.f32 %v4269, %v1413
        %v4278 = vadd.f32 %v4270, 1e-05
        %v4279 = vadd.f32 %v4271, 1e-05
        %v4280 = vadd.f32 %v4272, 1e-05
        %v4281 = vadd.f32 %v4273, 1e-05
        %v4282 = vadd.f32 %v4274, 1e-05
        %v4283 = vadd.f32 %v4275, 1e-05
        %v4284 = vadd.f32 %v4276, 1e-05
        %v4285 = vadd.f32 %v4277, 1e-05
        %v4286 = vrsqrt.pop %v4278
        %v4287 = vrsqrt.pop %v4279
        %v4288 = vrsqrt.pop %v4280
        %v4289 = vrsqrt.pop %v4281
        %v4290 = vrsqrt.pop %v4282
        %v4291 = vrsqrt.pop %v4283
        %v4292 = vrsqrt.pop %v4284
        %v4293 = vrsqrt.pop %v4285
        %v4294 = vmul.f32 %v4230, %v4286
        %v4295 = vmul.f32 %v4231, %v4287
        %v4296 = vmul.f32 %v4232, %v4288
        %v4297 = vmul.f32 %v4233, %v4289
        %v4298 = vmul.f32 %v4234, %v4290
        %v4299 = vmul.f32 %v4235, %v4291
        %v4300 = vmul.f32 %v4236, %v4292
        %v4301 = vmul.f32 %v4237, %v4293
        %v4302 = vlaneseq
        %v4303 = vshrl.u32 %v4302, 7
        %v4304 = vsub.s32 6, %v4303
        %v4305 = vrot.slane %v455, %v4304
        %v4306 = vmul.f32 %v4294, %v4305
        %v4307 = vmul.f32 %v4295, %v4305
        %v4308 = vmul.f32 %v4296, %v4305
        %v4309 = vmul.f32 %v4297, %v4305
        %v4310 = vmul.f32 %v4298, %v4305
        %v4311 = vmul.f32 %v4299, %v4305
        %v4312 = vmul.f32 %v4300, %v4305
        %v4313 = vmul.f32 %v4301, %v4305
        %v4314 = vlaneseq
        %v4315 = vshrl.u32 %v4314, 7
        %v4316 = vsub.s32 7, %v4315
        %v4317 = vrot.slane %v455, %v4316
        %v4318 = vadd.f32 %v4306, %v4317
        %v4319 = vadd.f32 %v4307, %v4317
        %v4320 = vadd.f32 %v4308, %v4317
        %v4321 = vadd.f32 %v4309, %v4317
        %v4322 = vadd.f32 %v4310, %v4317
        %v4323 = vadd.f32 %v4311, %v4317
        %v4324 = vadd.f32 %v4312, %v4317
        %v4325 = vadd.f32 %v4313, %v4317
        %s4326 = scalar_lea.vmem %s3, 32
        %v4327 = vld [vmem:[%s4326] sm:$0xff]
        %v4328 = vld [vmem:[%s4326 + $0x8] sm:$0xff]
        %v4329 = vld [vmem:[%s4326 + $0x10] sm:$0xff]
        %v4330 = vld [vmem:[%s4326 + $0x18] sm:$0xff]
        %v4331 = vlaneseq
        %v4332 = vshrl.u32 %v4331, 7
        %v4333 = vsub.s32 0, %v4332
        %v4334 = vrot.slane %v456, %v4333
        %v4336 = vsel %vm1193, %v4318, 0
        %v4339 = vsel %vm1193, %v4319, 0
        %v4342 = vsel %vm1193, %v4320, 0
        %v4345 = vsel %vm1193, %v4321, 0
        %v4348 = vsel %vm1193, %v4322, 0
        %v4351 = vsel %vm1193, %v4323, 0
        %v4354 = vsel %vm1193, %v4324, 0
        %v4357 = vsel %vm1193, %v4325, 0
        %4359 = vmatprep.subr.mxu0 0.0
        %4360 = vmatpush1.msra.mxu0 0.0
        %4361 = vmatprep.subr.mxu0 0.0
        %4362 = vmatpush1.msra.mxu0 0.0
        %4363 = vmatprep.subr.mxu0 0.0
        %4364 = vmatpush1.msra.mxu0 0.0
        %4365 = vmatprep.subr.mxu0 0.0
        %4366 = vmatpush1.msra.mxu0 0.0
        %4367 = vmatprep.subr.mxu0 0.0
        %4368 = vmatpush1.msra.mxu0 0.0
        %4369 = vmatprep.subr.mxu0 0.0
        %4370 = vmatpush1.msra.mxu0 0.0
        %4371 = vmatprep.subr.mxu0 0.0
        %4372 = vmatpush1.msra.mxu0 0.0
        %4373 = vmatprep.subr.mxu0 0.0
        %4374 = vmatpush1.msra.mxu0 0.0
        %4375 = vmatprep.subr.mxu0 0.0
        %4376 = vmatpush1.msra.mxu0 0.0
        %4377 = vmatprep.subr.mxu0 0.0
        %4378 = vmatpush1.msra.mxu0 0.0
        %4379 = vmatprep.subr.mxu0 0.0
        %4380 = vmatpush1.msra.mxu0 0.0
        %4381 = vmatprep.subr.mxu0 0.0
        %4382 = vmatpush1.msra.mxu0 0.0
        %4383 = vmatprep.subr.mxu0 0.0
        %4384 = vmatpush1.msra.mxu0 %v4330
        %4385 = vmatprep.subr.mxu0 0.0
        %4386 = vmatpush1.msra.mxu0 %v4329
        %4387 = vmatprep.subr.mxu0 0.0
        %4388 = vmatpush1.msra.mxu0 %v4328
        %4389 = vmatprep.subr.mxu0 0.0
        %4390 = vmatpush1.msra.mxu0 %v4327
        %4391 = vmatprep.subr.mxu0 0.0
        %4392 = vmatpush2.msra.mxu0 0.0
        %4393 = vmatprep.subr.mxu0 0.0
        %4394 = vmatpush2.msra.mxu0 0.0
        %4395 = vmatprep.subr.mxu0 0.0
        %4396 = vmatpush2.msra.mxu0 0.0
        %4397 = vmatprep.subr.mxu0 0.0
        %4398 = vmatpush2.msra.mxu0 0.0
        %4399 = vmatprep.subr.mxu0 0.0
        %4400 = vmatpush2.msra.mxu0 0.0
        %4401 = vmatprep.subr.mxu0 0.0
        %4402 = vmatpush2.msra.mxu0 0.0
        %4403 = vmatprep.subr.mxu0 0.0
        %4404 = vmatpush2.msra.mxu0 0.0
        %4405 = vmatprep.subr.mxu0 0.0
        %4406 = vmatpush2.msra.mxu0 0.0
        %4407 = vmatprep.subr.mxu0 0.0
        %4408 = vmatpush2.msra.mxu0 0.0
        %4409 = vmatprep.subr.mxu0 0.0
        %4410 = vmatpush2.msra.mxu0 0.0
        %4411 = vmatprep.subr.mxu0 0.0
        %4412 = vmatpush2.msra.mxu0 0.0
        %4413 = vmatprep.subr.mxu0 0.0
        %4414 = vmatpush2.msra.mxu0 0.0
        %4415 = vmatprep.subr.mxu0 0.0
        %4416 = vmatpush2.msra.mxu0 0.0
        %4417 = vmatprep.subr.mxu0 0.0
        %4418 = vmatpush2.msra.mxu0 0.0
        %4419 = vmatprep.subr.mxu0 0.0
        %4420 = vmatpush2.msra.mxu0 0.0
        %4421 = vmatprep.subr.mxu0 0.0
        %4422 = vmatpush2.msra.mxu0 0.0
        %4423 = vmatprep.mubr.f32.mxu0 0.0
        %4424 = vmatmul.mubr.f32.gmra.mxu0 %v4336
        %v4425 = vpop.f32.mrf.mxu0
        %v4426 = vadd.f32 %v4334, %v4425
        %v4427 = vpop.f32.mrf.mxu0
        %4428 = vmatprep.mubr.f32.mxu0 0.0
        %4429 = vmatmul.mubr.f32.gmra.mxu0 %v4339
        %v4430 = vpop.f32.mrf.mxu0
        %v4431 = vadd.f32 %v4334, %v4430
        %v4432 = vpop.f32.mrf.mxu0
        %4433 = vmatprep.mubr.f32.mxu0 0.0
        %4434 = vmatmul.mubr.f32.gmra.mxu0 %v4342
        %v4435 = vpop.f32.mrf.mxu0
        %v4436 = vadd.f32 %v4334, %v4435
        %v4437 = vpop.f32.mrf.mxu0
        %4438 = vmatprep.mubr.f32.mxu0 0.0
        %4439 = vmatmul.mubr.f32.gmra.mxu0 %v4345
        %v4440 = vpop.f32.mrf.mxu0
        %v4441 = vadd.f32 %v4334, %v4440
        %v4442 = vpop.f32.mrf.mxu0
        %4443 = vmatprep.mubr.f32.mxu0 0.0
        %4444 = vmatmul.mubr.f32.gmra.mxu0 %v4348
        %v4445 = vpop.f32.mrf.mxu0
        %v4446 = vadd.f32 %v4334, %v4445
        %v4447 = vpop.f32.mrf.mxu0
        %4448 = vmatprep.mubr.f32.mxu0 0.0
        %4449 = vmatmul.mubr.f32.gmra.mxu0 %v4351
        %v4450 = vpop.f32.mrf.mxu0
        %v4451 = vadd.f32 %v4334, %v4450
        %v4452 = vpop.f32.mrf.mxu0
        %4453 = vmatprep.mubr.f32.mxu0 0.0
        %4454 = vmatmul.mubr.f32.gmra.mxu0 %v4354
        %v4455 = vpop.f32.mrf.mxu0
        %v4456 = vadd.f32 %v4334, %v4455
        %v4457 = vpop.f32.mrf.mxu0
        %4458 = vmatprep.mubr.f32.mxu0 0.0
        %4459 = vmatmul.mubr.f32.gmra.mxu0 %v4357
        %v4460 = vpop.f32.mrf.mxu0
        %v4461 = vadd.f32 %v4334, %v4460
        %v4462 = vpop.f32.mrf.mxu0
        %4463 = vdwg.mxu0
        %s4464 = scalar_lea.vmem [#allocation7], 32
        %v4465 = vld [vmem:[%s4464] sm:$0xff]
        %v4466 = vld [vmem:[%s4464 + $0x8] sm:$0xff]
        %v4467 = vld [vmem:[%s4464 + $0x10] sm:$0xff]
        %v4468 = vld [vmem:[%s4464 + $0x18] sm:$0xff]
        %v4469 = vlaneseq
        %v4470 = vshrl.u32 %v4469, 7
        %v4471 = vsub.s32 1, %v4470
        %v4472 = vrot.slane %v456, %v4471
        %4473 = vmatprep.subr.mxu0 0.0
        %4474 = vmatpush1.msra.mxu0 0.0
        %4475 = vmatprep.subr.mxu0 0.0
        %4476 = vmatpush1.msra.mxu0 0.0
        %4477 = vmatprep.subr.mxu0 0.0
        %4478 = vmatpush1.msra.mxu0 0.0
        %4479 = vmatprep.subr.mxu0 0.0
        %4480 = vmatpush1.msra.mxu0 0.0
        %4481 = vmatprep.subr.mxu0 0.0
        %4482 = vmatpush1.msra.mxu0 0.0
        %4483 = vmatprep.subr.mxu0 0.0
        %4484 = vmatpush1.msra.mxu0 0.0
        %4485 = vmatprep.subr.mxu0 0.0
        %4486 = vmatpush1.msra.mxu0 0.0
        %4487 = vmatprep.subr.mxu0 0.0
        %4488 = vmatpush1.msra.mxu0 0.0
        %4489 = vmatprep.subr.mxu0 0.0
        %4490 = vmatpush1.msra.mxu0 0.0
        %4491 = vmatprep.subr.mxu0 0.0
        %4492 = vmatpush1.msra.mxu0 0.0
        %4493 = vmatprep.subr.mxu0 0.0
        %4494 = vmatpush1.msra.mxu0 0.0
        %4495 = vmatprep.subr.mxu0 0.0
        %4496 = vmatpush1.msra.mxu0 0.0
        %4497 = vmatprep.subr.mxu0 0.0
        %4498 = vmatpush1.msra.mxu0 %v4468
        %4499 = vmatprep.subr.mxu0 0.0
        %4500 = vmatpush1.msra.mxu0 %v4467
        %4501 = vmatprep.subr.mxu0 0.0
        %4502 = vmatpush1.msra.mxu0 %v4466
        %4503 = vmatprep.subr.mxu0 0.0
        %4504 = vmatpush1.msra.mxu0 %v4465
        %4505 = vmatprep.subr.mxu0 0.0
        %4506 = vmatpush2.msra.mxu0 0.0
        %4507 = vmatprep.subr.mxu0 0.0
        %4508 = vmatpush2.msra.mxu0 0.0
        %4509 = vmatprep.subr.mxu0 0.0
        %4510 = vmatpush2.msra.mxu0 0.0
        %4511 = vmatprep.subr.mxu0 0.0
        %4512 = vmatpush2.msra.mxu0 0.0
        %4513 = vmatprep.subr.mxu0 0.0
        %4514 = vmatpush2.msra.mxu0 0.0
        %4515 = vmatprep.subr.mxu0 0.0
        %4516 = vmatpush2.msra.mxu0 0.0
        %4517 = vmatprep.subr.mxu0 0.0
        %4518 = vmatpush2.msra.mxu0 0.0
        %4519 = vmatprep.subr.mxu0 0.0
        %4520 = vmatpush2.msra.mxu0 0.0
        %4521 = vmatprep.subr.mxu0 0.0
        %4522 = vmatpush2.msra.mxu0 0.0
        %4523 = vmatprep.subr.mxu0 0.0
        %4524 = vmatpush2.msra.mxu0 0.0
        %4525 = vmatprep.subr.mxu0 0.0
        %4526 = vmatpush2.msra.mxu0 0.0
        %4527 = vmatprep.subr.mxu0 0.0
        %4528 = vmatpush2.msra.mxu0 0.0
        %4529 = vmatprep.subr.mxu0 0.0
        %4530 = vmatpush2.msra.mxu0 0.0
        %4531 = vmatprep.subr.mxu0 0.0
        %4532 = vmatpush2.msra.mxu0 0.0
        %4533 = vmatprep.subr.mxu0 0.0
        %4534 = vmatpush2.msra.mxu0 0.0
        %4535 = vmatprep.subr.mxu0 0.0
        %4536 = vmatpush2.msra.mxu0 0.0
        %4537 = vmatprep.mubr.f32.mxu0 0.0
        %4538 = vmatmul.mubr.f32.gmra.mxu0 %v4336
        %v4539 = vpop.f32.mrf.mxu0
        %v4540 = vadd.f32 %v4472, %v4539
        %v4541 = vpop.f32.mrf.mxu0
        %4542 = vmatprep.mubr.f32.mxu0 0.0
        %4543 = vmatmul.mubr.f32.gmra.mxu0 %v4339
        %v4544 = vpop.f32.mrf.mxu0
        %v4545 = vadd.f32 %v4472, %v4544
        %v4546 = vpop.f32.mrf.mxu0
        %4547 = vmatprep.mubr.f32.mxu0 0.0
        %4548 = vmatmul.mubr.f32.gmra.mxu0 %v4342
        %v4549 = vpop.f32.mrf.mxu0
        %v4550 = vadd.f32 %v4472, %v4549
        %v4551 = vpop.f32.mrf.mxu0
        %4552 = vmatprep.mubr.f32.mxu0 0.0
        %4553 = vmatmul.mubr.f32.gmra.mxu0 %v4345
        %v4554 = vpop.f32.mrf.mxu0
        %v4555 = vadd.f32 %v4472, %v4554
        %v4556 = vpop.f32.mrf.mxu0
        %4557 = vmatprep.mubr.f32.mxu0 0.0
        %4558 = vmatmul.mubr.f32.gmra.mxu0 %v4348
        %v4559 = vpop.f32.mrf.mxu0
        %v4560 = vadd.f32 %v4472, %v4559
        %v4561 = vpop.f32.mrf.mxu0
        %4562 = vmatprep.mubr.f32.mxu0 0.0
        %4563 = vmatmul.mubr.f32.gmra.mxu0 %v4351
        %v4564 = vpop.f32.mrf.mxu0
        %v4565 = vadd.f32 %v4472, %v4564
        %v4566 = vpop.f32.mrf.mxu0
        %4567 = vmatprep.mubr.f32.mxu0 0.0
        %4568 = vmatmul.mubr.f32.gmra.mxu0 %v4354
        %v4569 = vpop.f32.mrf.mxu0
        %v4570 = vadd.f32 %v4472, %v4569
        %v4571 = vpop.f32.mrf.mxu0
        %4572 = vmatprep.mubr.f32.mxu0 0.0
        %4573 = vmatmul.mubr.f32.gmra.mxu0 %v4357
        %v4574 = vpop.f32.mrf.mxu0
        %v4575 = vadd.f32 %v4472, %v4574
        %v4576 = vpop.f32.mrf.mxu0
        %4577 = vdwg.mxu0
        %v4578 = vsel %vm1772, %v4426, 0.0
        %v4579 = vsel %vm1772, %v4431, 0.0
        %v4580 = vsel %vm1772, %v4436, 0.0
        %v4581 = vsel %vm1772, %v4441, 0.0
        %v4582 = vsel %vm1772, %v4446, 0.0
        %v4583 = vsel %vm1772, %v4451, 0.0
        %v4584 = vsel %vm1772, %v4456, 0.0
        %v4585 = vsel %vm1772, %v4461, 0.0
        %v4587 = vsel %vm1193, %v4578, 0
        %v4590 = vsel %vm1193, %v4579, 0
        %v4593 = vsel %vm1193, %v4580, 0
        %v4596 = vsel %vm1193, %v4581, 0
        %v4599 = vsel %vm1193, %v4582, 0
        %v4602 = vsel %vm1193, %v4583, 0
        %v4605 = vsel %vm1193, %v4584, 0
        %v4608 = vsel %vm1193, %v4585, 0
        %v4611 = vsel %vm1193, %v4540, 0
        %v4614 = vsel %vm1193, %v4545, 0
        %v4617 = vsel %vm1193, %v4550, 0
        %v4620 = vsel %vm1193, %v4555, 0
        %v4623 = vsel %vm1193, %v4560, 0
        %v4626 = vsel %vm1193, %v4565, 0
        %v4629 = vsel %vm1193, %v4570, 0
        %v4632 = vsel %vm1193, %v4575, 0
        %4634 = vmatprep.subr.mxu0 0.0
        %4635 = vmatpush1.xpose.msra.mxu0 0.0
        %4636 = vmatprep.subr.mxu0 0.0
        %4637 = vmatpush1.xpose.msra.mxu0 0.0
        %4638 = vmatprep.subr.mxu0 0.0
        %4639 = vmatpush1.xpose.msra.mxu0 0.0
        %4640 = vmatprep.subr.mxu0 0.0
        %4641 = vmatpush1.xpose.msra.mxu0 0.0
        %4642 = vmatprep.subr.mxu0 0.0
        %4643 = vmatpush1.xpose.msra.mxu0 0.0
        %4644 = vmatprep.subr.mxu0 0.0
        %4645 = vmatpush1.xpose.msra.mxu0 0.0
        %4646 = vmatprep.subr.mxu0 0.0
        %4647 = vmatpush1.xpose.msra.mxu0 0.0
        %4648 = vmatprep.subr.mxu0 0.0
        %4649 = vmatpush1.xpose.msra.mxu0 0.0
        %4650 = vmatprep.subr.mxu0 0.0
        %4651 = vmatpush1.xpose.msra.mxu0 %v4632
        %4652 = vmatprep.subr.mxu0 0.0
        %4653 = vmatpush1.xpose.msra.mxu0 %v4629
        %4654 = vmatprep.subr.mxu0 0.0
        %4655 = vmatpush1.xpose.msra.mxu0 %v4626
        %4656 = vmatprep.subr.mxu0 0.0
        %4657 = vmatpush1.xpose.msra.mxu0 %v4623
        %4658 = vmatprep.subr.mxu0 0.0
        %4659 = vmatpush1.xpose.msra.mxu0 %v4620
        %4660 = vmatprep.subr.mxu0 0.0
        %4661 = vmatpush1.xpose.msra.mxu0 %v4617
        %4662 = vmatprep.subr.mxu0 0.0
        %4663 = vmatpush1.xpose.msra.mxu0 %v4614
        %4664 = vmatprep.subr.mxu0 0.0
        %4665 = vmatpush1.xpose.msra.mxu0 %v4611
        %4666 = vmatprep.subr.mxu0 0.0
        %4667 = vmatpush2.xpose.msra.mxu0 0.0
        %4668 = vmatprep.subr.mxu0 0.0
        %4669 = vmatpush2.xpose.msra.mxu0 0.0
        %4670 = vmatprep.subr.mxu0 0.0
        %4671 = vmatpush2.xpose.msra.mxu0 0.0
        %4672 = vmatprep.subr.mxu0 0.0
        %4673 = vmatpush2.xpose.msra.mxu0 0.0
        %4674 = vmatprep.subr.mxu0 0.0
        %4675 = vmatpush2.xpose.msra.mxu0 0.0
        %4676 = vmatprep.subr.mxu0 0.0
        %4677 = vmatpush2.xpose.msra.mxu0 0.0
        %4678 = vmatprep.subr.mxu0 0.0
        %4679 = vmatpush2.xpose.msra.mxu0 0.0
        %4680 = vmatprep.subr.mxu0 0.0
        %4681 = vmatpush2.xpose.msra.mxu0 0.0
        %4682 = vmatprep.subr.mxu0 0.0
        %4683 = vmatpush2.xpose.msra.mxu0 0.0
        %4684 = vmatprep.subr.mxu0 0.0
        %4685 = vmatpush2.xpose.msra.mxu0 0.0
        %4686 = vmatprep.subr.mxu0 0.0
        %4687 = vmatpush2.xpose.msra.mxu0 0.0
        %4688 = vmatprep.subr.mxu0 0.0
        %4689 = vmatpush2.xpose.msra.mxu0 0.0
        %4690 = vmatprep.subr.mxu0 0.0
        %4691 = vmatpush2.xpose.msra.mxu0 0.0
        %4692 = vmatprep.subr.mxu0 0.0
        %4693 = vmatpush2.xpose.msra.mxu0 0.0
        %4694 = vmatprep.subr.mxu0 0.0
        %4695 = vmatpush2.xpose.msra.mxu0 0.0
        %4696 = vmatprep.subr.mxu0 0.0
        %4697 = vmatpush2.xpose.msra.mxu0 0.0
        %4698 = vmatprep.mubr.f32.mxu0 0.0
        %4699 = vmatmul.mubr.f32.gmra.mxu0 %v4587
        %v4700 = vpop.f32.mrf.mxu0
        %v4701 = vadd.f32 0.0, %v4700
        %v4702 = vpop.f32.mrf.mxu0
        %4703 = vmatprep.mubr.f32.mxu0 0.0
        %4704 = vmatmul.mubr.f32.gmra.mxu0 %v4590
        %v4705 = vpop.f32.mrf.mxu0
        %v4706 = vadd.f32 0.0, %v4705
        %v4707 = vpop.f32.mrf.mxu0
        %4708 = vmatprep.mubr.f32.mxu0 0.0
        %4709 = vmatmul.mubr.f32.gmra.mxu0 %v4593
        %v4710 = vpop.f32.mrf.mxu0
        %v4711 = vadd.f32 0.0, %v4710
        %v4712 = vpop.f32.mrf.mxu0
        %4713 = vmatprep.mubr.f32.mxu0 0.0
        %4714 = vmatmul.mubr.f32.gmra.mxu0 %v4596
        %v4715 = vpop.f32.mrf.mxu0
        %v4716 = vadd.f32 0.0, %v4715
        %v4717 = vpop.f32.mrf.mxu0
        %4718 = vmatprep.mubr.f32.mxu0 0.0
        %4719 = vmatmul.mubr.f32.gmra.mxu0 %v4599
        %v4720 = vpop.f32.mrf.mxu0
        %v4721 = vadd.f32 0.0, %v4720
        %v4722 = vpop.f32.mrf.mxu0
        %4723 = vmatprep.mubr.f32.mxu0 0.0
        %4724 = vmatmul.mubr.f32.gmra.mxu0 %v4602
        %v4725 = vpop.f32.mrf.mxu0
        %v4726 = vadd.f32 0.0, %v4725
        %v4727 = vpop.f32.mrf.mxu0
        %4728 = vmatprep.mubr.f32.mxu0 0.0
        %4729 = vmatmul.mubr.f32.gmra.mxu0 %v4605
        %v4730 = vpop.f32.mrf.mxu0
        %v4731 = vadd.f32 0.0, %v4730
        %v4732 = vpop.f32.mrf.mxu0
        %4733 = vmatprep.mubr.f32.mxu0 0.0
        %4734 = vmatmul.mubr.f32.gmra.mxu0 %v4608
        %v4735 = vpop.f32.mrf.mxu0
        %v4736 = vadd.f32 0.0, %v4735
        %v4737 = vpop.f32.mrf.mxu0
        %4738 = vdwg.mxu0
        %v4739 = vmul.f32 %v4701, 0.35355338
        %v4740 = vmul.f32 %v4706, 0.35355338
        %v4741 = vmul.f32 %v4711, 0.35355338
        %v4742 = vmul.f32 %v4716, 0.35355338
        %v4743 = vmul.f32 %v4721, 0.35355338
        %v4744 = vmul.f32 %v4726, 0.35355338
        %v4745 = vmul.f32 %v4731, 0.35355338
        %v4746 = vmul.f32 %v4736, 0.35355338
        %v4747 = vsel %vm1942, %v4739, -inf
        %4748 = vmax.xlane.f32.xlu0 %v4747
        %v4749 = vpop.xlane.xlu0 %4748
        %v4750 = vsel %vm1942, %v4740, -inf
        %4751 = vmax.xlane.f32.xlu0 %v4750
        %v4752 = vpop.xlane.xlu0 %4751
        %v4753 = vsel %vm1942, %v4741, -inf
        %4754 = vmax.xlane.f32.xlu0 %v4753
        %v4755 = vpop.xlane.xlu0 %4754
        %v4756 = vsel %vm1942, %v4742, -inf
        %4757 = vmax.xlane.f32.xlu0 %v4756
        %v4758 = vpop.xlane.xlu0 %4757
        %v4759 = vsel %vm1942, %v4743, -inf
        %4760 = vmax.xlane.f32.xlu0 %v4759
        %v4761 = vpop.xlane.xlu0 %4760
        %v4762 = vsel %vm1942, %v4744, -inf
        %4763 = vmax.xlane.f32.xlu0 %v4762
        %v4764 = vpop.xlane.xlu0 %4763
        %v4765 = vsel %vm1942, %v4745, -inf
        %4766 = vmax.xlane.f32.xlu0 %v4765
        %v4767 = vpop.xlane.xlu0 %4766
        %v4768 = vsel %vm1942, %v4746, -inf
        %4769 = vmax.xlane.f32.xlu0 %v4768
        %v4770 = vpop.xlane.xlu0 %4769
        %v4771 = vsub.f32 %v4739, %v4749
        %v4772 = vsub.f32 %v4740, %v4752
        %v4773 = vsub.f32 %v4741, %v4755
        %v4774 = vsub.f32 %v4742, %v4758
        %v4775 = vsub.f32 %v4743, %v4761
        %v4776 = vsub.f32 %v4744, %v4764
        %v4777 = vsub.f32 %v4745, %v4767
        %v4778 = vsub.f32 %v4746, %v4770
        %v4779 = vmul.f32 %v4771, 1.442695
        %v4780 = vpow.pop %v4779
        %v4781 = vmul.f32 %v4772, 1.442695
        %v4782 = vpow.pop %v4781
        %v4783 = vmul.f32 %v4773, 1.442695
        %v4784 = vpow.pop %v4783
        %v4785 = vmul.f32 %v4774, 1.442695
        %v4786 = vpow.pop %v4785
        %v4787 = vmul.f32 %v4775, 1.442695
        %v4788 = vpow.pop %v4787
        %v4789 = vmul.f32 %v4776, 1.442695
        %v4790 = vpow.pop %v4789
        %v4791 = vmul.f32 %v4777, 1.442695
        %v4792 = vpow.pop %v4791
        %v4793 = vmul.f32 %v4778, 1.442695
        %v4794 = vpow.pop %v4793
        %v4795 = vsel %vm1942, %v4780, 0.0
        %4796 = vadd.xlane.f32.xlu0 %v4795
        %v4797 = vpop.xlane.xlu0 %4796
        %v4798 = vsel %vm1942, %v4782, 0.0
        %4799 = vadd.xlane.f32.xlu0 %v4798
        %v4800 = vpop.xlane.xlu0 %4799
        %v4801 = vsel %vm1942, %v4784, 0.0
        %4802 = vadd.xlane.f32.xlu0 %v4801
        %v4803 = vpop.xlane.xlu0 %4802
        %v4804 = vsel %vm1942, %v4786, 0.0
        %4805 = vadd.xlane.f32.xlu0 %v4804
        %v4806 = vpop.xlane.xlu0 %4805
        %v4807 = vsel %vm1942, %v4788, 0.0
        %4808 = vadd.xlane.f32.xlu0 %v4807
        %v4809 = vpop.xlane.xlu0 %4808
        %v4810 = vsel %vm1942, %v4790, 0.0
        %4811 = vadd.xlane.f32.xlu0 %v4810
        %v4812 = vpop.xlane.xlu0 %4811
        %v4813 = vsel %vm1942, %v4792, 0.0
        %4814 = vadd.xlane.f32.xlu0 %v4813
        %v4815 = vpop.xlane.xlu0 %4814
        %v4816 = vsel %vm1942, %v4794, 0.0
        %4817 = vadd.xlane.f32.xlu0 %v4816
        %v4818 = vpop.xlane.xlu0 %4817
        %v4819 = vrcp.pop %v4797
        %v4820 = vrcp.pop %v4800
        %v4821 = vrcp.pop %v4803
        %v4822 = vrcp.pop %v4806
        %v4823 = vrcp.pop %v4809
        %v4824 = vrcp.pop %v4812
        %v4825 = vrcp.pop %v4815
        %v4826 = vrcp.pop %v4818
        %v4827 = vmul.f32 %v4780, %v4819
        %v4828 = vmul.f32 %v4782, %v4820
        %v4829 = vmul.f32 %v4784, %v4821
        %v4830 = vmul.f32 %v4786, %v4822
        %v4831 = vmul.f32 %v4788, %v4823
        %v4832 = vmul.f32 %v4790, %v4824
        %v4833 = vmul.f32 %v4792, %v4825
        %v4834 = vmul.f32 %v4794, %v4826
        %s4835 = scalar_lea.vmem [#allocation8], 128
        %v4836 = vld [vmem:[%s4835] sm:$0xff]
        %v4837 = vld [vmem:[%s4835 + $0x8] sm:$0xff]
        %v4838 = vld [vmem:[%s4835 + $0x10] sm:$0xff]
        %v4839 = vld [vmem:[%s4835 + $0x18] sm:$0xff]
        %4840 = vmatprep.subr.mxu0 0.0
        %4841 = vmatpush1.msra.mxu0 0.0
        %4842 = vmatprep.subr.mxu0 0.0
        %4843 = vmatpush1.msra.mxu0 0.0
        %4844 = vmatprep.subr.mxu0 0.0
        %4845 = vmatpush1.msra.mxu0 0.0
        %4846 = vmatprep.subr.mxu0 0.0
        %4847 = vmatpush1.msra.mxu0 0.0
        %4848 = vmatprep.subr.mxu0 0.0
        %4849 = vmatpush1.msra.mxu0 0.0
        %4850 = vmatprep.subr.mxu0 0.0
        %4851 = vmatpush1.msra.mxu0 0.0
        %4852 = vmatprep.subr.mxu0 0.0
        %4853 = vmatpush1.msra.mxu0 0.0
        %4854 = vmatprep.subr.mxu0 0.0
        %4855 = vmatpush1.msra.mxu0 0.0
        %4856 = vmatprep.subr.mxu0 0.0
        %4857 = vmatpush1.msra.mxu0 0.0
        %4858 = vmatprep.subr.mxu0 0.0
        %4859 = vmatpush1.msra.mxu0 0.0
        %4860 = vmatprep.subr.mxu0 0.0
        %4861 = vmatpush1.msra.mxu0 0.0
        %4862 = vmatprep.subr.mxu0 0.0
        %4863 = vmatpush1.msra.mxu0 0.0
        %4864 = vmatprep.subr.mxu0 0.0
        %4865 = vmatpush1.msra.mxu0 %v4839
        %4866 = vmatprep.subr.mxu0 0.0
        %4867 = vmatpush1.msra.mxu0 %v4838
        %4868 = vmatprep.subr.mxu0 0.0
        %4869 = vmatpush1.msra.mxu0 %v4837
        %4870 = vmatprep.subr.mxu0 0.0
        %4871 = vmatpush1.msra.mxu0 %v4836
        %4872 = vmatprep.subr.mxu0 0.0
        %4873 = vmatpush2.msra.mxu0 0.0
        %4874 = vmatprep.subr.mxu0 0.0
        %4875 = vmatpush2.msra.mxu0 0.0
        %4876 = vmatprep.subr.mxu0 0.0
        %4877 = vmatpush2.msra.mxu0 0.0
        %4878 = vmatprep.subr.mxu0 0.0
        %4879 = vmatpush2.msra.mxu0 0.0
        %4880 = vmatprep.subr.mxu0 0.0
        %4881 = vmatpush2.msra.mxu0 0.0
        %4882 = vmatprep.subr.mxu0 0.0
        %4883 = vmatpush2.msra.mxu0 0.0
        %4884 = vmatprep.subr.mxu0 0.0
        %4885 = vmatpush2.msra.mxu0 0.0
        %4886 = vmatprep.subr.mxu0 0.0
        %4887 = vmatpush2.msra.mxu0 0.0
        %4888 = vmatprep.subr.mxu0 0.0
        %4889 = vmatpush2.msra.mxu0 0.0
        %4890 = vmatprep.subr.mxu0 0.0
        %4891 = vmatpush2.msra.mxu0 0.0
        %4892 = vmatprep.subr.mxu0 0.0
        %4893 = vmatpush2.msra.mxu0 0.0
        %4894 = vmatprep.subr.mxu0 0.0
        %4895 = vmatpush2.msra.mxu0 0.0
        %4896 = vmatprep.subr.mxu0 0.0
        %4897 = vmatpush2.msra.mxu0 0.0
        %4898 = vmatprep.subr.mxu0 0.0
        %4899 = vmatpush2.msra.mxu0 0.0
        %4900 = vmatprep.subr.mxu0 0.0
        %4901 = vmatpush2.msra.mxu0 0.0
        %4902 = vmatprep.subr.mxu0 0.0
        %4903 = vmatpush2.msra.mxu0 0.0
        %4904 = vmatprep.mubr.f32.mxu0 0.0
        %4905 = vmatmul.mubr.f32.gmra.mxu0 %v4336
        %v4906 = vpop.f32.mrf.mxu0
        %v4907 = vadd.f32 0.0, %v4906
        %v4908 = vpop.f32.mrf.mxu0
        %4909 = vmatprep.mubr.f32.mxu0 0.0
        %4910 = vmatmul.mubr.f32.gmra.mxu0 %v4339
        %v4911 = vpop.f32.mrf.mxu0
        %v4912 = vadd.f32 0.0, %v4911
        %v4913 = vpop.f32.mrf.mxu0
        %4914 = vmatprep.mubr.f32.mxu0 0.0
        %4915 = vmatmul.mubr.f32.gmra.mxu0 %v4342
        %v4916 = vpop.f32.mrf.mxu0
        %v4917 = vadd.f32 0.0, %v4916
        %v4918 = vpop.f32.mrf.mxu0
        %4919 = vmatprep.mubr.f32.mxu0 0.0
        %4920 = vmatmul.mubr.f32.gmra.mxu0 %v4345
        %v4921 = vpop.f32.mrf.mxu0
        %v4922 = vadd.f32 0.0, %v4921
        %v4923 = vpop.f32.mrf.mxu0
        %4924 = vmatprep.mubr.f32.mxu0 0.0
        %4925 = vmatmul.mubr.f32.gmra.mxu0 %v4348
        %v4926 = vpop.f32.mrf.mxu0
        %v4927 = vadd.f32 0.0, %v4926
        %v4928 = vpop.f32.mrf.mxu0
        %4929 = vmatprep.mubr.f32.mxu0 0.0
        %4930 = vmatmul.mubr.f32.gmra.mxu0 %v4351
        %v4931 = vpop.f32.mrf.mxu0
        %v4932 = vadd.f32 0.0, %v4931
        %v4933 = vpop.f32.mrf.mxu0
        %4934 = vmatprep.mubr.f32.mxu0 0.0
        %4935 = vmatmul.mubr.f32.gmra.mxu0 %v4354
        %v4936 = vpop.f32.mrf.mxu0
        %v4937 = vadd.f32 0.0, %v4936
        %v4938 = vpop.f32.mrf.mxu0
        %4939 = vmatprep.mubr.f32.mxu0 0.0
        %4940 = vmatmul.mubr.f32.gmra.mxu0 %v4357
        %v4941 = vpop.f32.mrf.mxu0
        %v4942 = vadd.f32 0.0, %v4941
        %v4943 = vpop.f32.mrf.mxu0
        %4944 = vdwg.mxu0
        %v4945 = vsel %vm2144, %v4426, 0.0
        %v4946 = vsel %vm2144, %v4431, 0.0
        %v4947 = vsel %vm2144, %v4436, 0.0
        %v4948 = vsel %vm2144, %v4441, 0.0
        %v4949 = vsel %vm2144, %v4446, 0.0
        %v4950 = vsel %vm2144, %v4451, 0.0
        %v4951 = vsel %vm2144, %v4456, 0.0
        %v4952 = vsel %vm2144, %v4461, 0.0
        %v4954 = vsel %vm1193, %v4945, 0
        %v4957 = vsel %vm1193, %v4946, 0
        %v4960 = vsel %vm1193, %v4947, 0
        %v4963 = vsel %vm1193, %v4948, 0
        %v4966 = vsel %vm1193, %v4949, 0
        %v4969 = vsel %vm1193, %v4950, 0
        %v4972 = vsel %vm1193, %v4951, 0
        %v4975 = vsel %vm1193, %v4952, 0
        %4977 = vmatprep.subr.mxu0 0.0
        %4978 = vmatpush1.xpose.msra.mxu0 0.0
        %4979 = vmatprep.subr.mxu0 0.0
        %4980 = vmatpush1.xpose.msra.mxu0 0.0
        %4981 = vmatprep.subr.mxu0 0.0
        %4982 = vmatpush1.xpose.msra.mxu0 0.0
        %4983 = vmatprep.subr.mxu0 0.0
        %4984 = vmatpush1.xpose.msra.mxu0 0.0
        %4985 = vmatprep.subr.mxu0 0.0
        %4986 = vmatpush1.xpose.msra.mxu0 0.0
        %4987 = vmatprep.subr.mxu0 0.0
        %4988 = vmatpush1.xpose.msra.mxu0 0.0
        %4989 = vmatprep.subr.mxu0 0.0
        %4990 = vmatpush1.xpose.msra.mxu0 0.0
        %4991 = vmatprep.subr.mxu0 0.0
        %4992 = vmatpush1.xpose.msra.mxu0 0.0
        %4993 = vmatprep.subr.mxu0 0.0
        %4994 = vmatpush1.xpose.msra.mxu0 %v4632
        %4995 = vmatprep.subr.mxu0 0.0
        %4996 = vmatpush1.xpose.msra.mxu0 %v4629
        %4997 = vmatprep.subr.mxu0 0.0
        %4998 = vmatpush1.xpose.msra.mxu0 %v4626
        %4999 = vmatprep.subr.mxu0 0.0
        %5000 = vmatpush1.xpose.msra.mxu0 %v4623
        %5001 = vmatprep.subr.mxu0 0.0
        %5002 = vmatpush1.xpose.msra.mxu0 %v4620
        %5003 = vmatprep.subr.mxu0 0.0
        %5004 = vmatpush1.xpose.msra.mxu0 %v4617
        %5005 = vmatprep.subr.mxu0 0.0
        %5006 = vmatpush1.xpose.msra.mxu0 %v4614
        %5007 = vmatprep.subr.mxu0 0.0
        %5008 = vmatpush1.xpose.msra.mxu0 %v4611
        %5009 = vmatprep.subr.mxu0 0.0
        %5010 = vmatpush2.xpose.msra.mxu0 0.0
        %5011 = vmatprep.subr.mxu0 0.0
        %5012 = vmatpush2.xpose.msra.mxu0 0.0
        %5013 = vmatprep.subr.mxu0 0.0
        %5014 = vmatpush2.xpose.msra.mxu0 0.0
        %5015 = vmatprep.subr.mxu0 0.0
        %5016 = vmatpush2.xpose.msra.mxu0 0.0
        %5017 = vmatprep.subr.mxu0 0.0
        %5018 = vmatpush2.xpose.msra.mxu0 0.0
        %5019 = vmatprep.subr.mxu0 0.0
        %5020 = vmatpush2.xpose.msra.mxu0 0.0
        %5021 = vmatprep.subr.mxu0 0.0
        %5022 = vmatpush2.xpose.msra.mxu0 0.0
        %5023 = vmatprep.subr.mxu0 0.0
        %5024 = vmatpush2.xpose.msra.mxu0 0.0
        %5025 = vmatprep.subr.mxu0 0.0
        %5026 = vmatpush2.xpose.msra.mxu0 0.0
        %5027 = vmatprep.subr.mxu0 0.0
        %5028 = vmatpush2.xpose.msra.mxu0 0.0
        %5029 = vmatprep.subr.mxu0 0.0
        %5030 = vmatpush2.xpose.msra.mxu0 0.0
        %5031 = vmatprep.subr.mxu0 0.0
        %5032 = vmatpush2.xpose.msra.mxu0 0.0
        %5033 = vmatprep.subr.mxu0 0.0
        %5034 = vmatpush2.xpose.msra.mxu0 0.0
        %5035 = vmatprep.subr.mxu0 0.0
        %5036 = vmatpush2.xpose.msra.mxu0 0.0
        %5037 = vmatprep.subr.mxu0 0.0
        %5038 = vmatpush2.xpose.msra.mxu0 0.0
        %5039 = vmatprep.subr.mxu0 0.0
        %5040 = vmatpush2.xpose.msra.mxu0 0.0
        %5041 = vmatprep.mubr.f32.mxu0 0.0
        %5042 = vmatmul.mubr.f32.gmra.mxu0 %v4954
        %v5043 = vpop.f32.mrf.mxu0
        %v5044 = vadd.f32 0.0, %v5043
        %v5045 = vpop.f32.mrf.mxu0
        %5046 = vmatprep.mubr.f32.mxu0 0.0
        %5047 = vmatmul.mubr.f32.gmra.mxu0 %v4957
        %v5048 = vpop.f32.mrf.mxu0
        %v5049 = vadd.f32 0.0, %v5048
        %v5050 = vpop.f32.mrf.mxu0
        %5051 = vmatprep.mubr.f32.mxu0 0.0
        %5052 = vmatmul.mubr.f32.gmra.mxu0 %v4960
        %v5053 = vpop.f32.mrf.mxu0
        %v5054 = vadd.f32 0.0, %v5053
        %v5055 = vpop.f32.mrf.mxu0
        %5056 = vmatprep.mubr.f32.mxu0 0.0
        %5057 = vmatmul.mubr.f32.gmra.mxu0 %v4963
        %v5058 = vpop.f32.mrf.mxu0
        %v5059 = vadd.f32 0.0, %v5058
        %v5060 = vpop.f32.mrf.mxu0
        %5061 = vmatprep.mubr.f32.mxu0 0.0
        %5062 = vmatmul.mubr.f32.gmra.mxu0 %v4966
        %v5063 = vpop.f32.mrf.mxu0
        %v5064 = vadd.f32 0.0, %v5063
        %v5065 = vpop.f32.mrf.mxu0
        %5066 = vmatprep.mubr.f32.mxu0 0.0
        %5067 = vmatmul.mubr.f32.gmra.mxu0 %v4969
        %v5068 = vpop.f32.mrf.mxu0
        %v5069 = vadd.f32 0.0, %v5068
        %v5070 = vpop.f32.mrf.mxu0
        %5071 = vmatprep.mubr.f32.mxu0 0.0
        %5072 = vmatmul.mubr.f32.gmra.mxu0 %v4972
        %v5073 = vpop.f32.mrf.mxu0
        %v5074 = vadd.f32 0.0, %v5073
        %v5075 = vpop.f32.mrf.mxu0
        %5076 = vmatprep.mubr.f32.mxu0 0.0
        %5077 = vmatmul.mubr.f32.gmra.mxu0 %v4975
        %v5078 = vpop.f32.mrf.mxu0
        %v5079 = vadd.f32 0.0, %v5078
        %v5080 = vpop.f32.mrf.mxu0
        %5081 = vdwg.mxu0
        %v5082 = vmul.f32 %v5044, 0.35355338
        %v5083 = vmul.f32 %v5049, 0.35355338
        %v5084 = vmul.f32 %v5054, 0.35355338
        %v5085 = vmul.f32 %v5059, 0.35355338
        %v5086 = vmul.f32 %v5064, 0.35355338
        %v5087 = vmul.f32 %v5069, 0.35355338
        %v5088 = vmul.f32 %v5074, 0.35355338
        %v5089 = vmul.f32 %v5079, 0.35355338
        %v5090 = vsel %vm1942, %v5082, -inf
        %5091 = vmax.xlane.f32.xlu0 %v5090
        %v5092 = vpop.xlane.xlu0 %5091
        %v5093 = vsel %vm1942, %v5083, -inf
        %5094 = vmax.xlane.f32.xlu0 %v5093
        %v5095 = vpop.xlane.xlu0 %5094
        %v5096 = vsel %vm1942, %v5084, -inf
        %5097 = vmax.xlane.f32.xlu0 %v5096
        %v5098 = vpop.xlane.xlu0 %5097
        %v5099 = vsel %vm1942, %v5085, -inf
        %5100 = vmax.xlane.f32.xlu0 %v5099
        %v5101 = vpop.xlane.xlu0 %5100
        %v5102 = vsel %vm1942, %v5086, -inf
        %5103 = vmax.xlane.f32.xlu0 %v5102
        %v5104 = vpop.xlane.xlu0 %5103
        %v5105 = vsel %vm1942, %v5087, -inf
        %5106 = vmax.xlane.f32.xlu0 %v5105
        %v5107 = vpop.xlane.xlu0 %5106
        %v5108 = vsel %vm1942, %v5088, -inf
        %5109 = vmax.xlane.f32.xlu0 %v5108
        %v5110 = vpop.xlane.xlu0 %5109
        %v5111 = vsel %vm1942, %v5089, -inf
        %5112 = vmax.xlane.f32.xlu0 %v5111
        %v5113 = vpop.xlane.xlu0 %5112
        %v5114 = vsub.f32 %v5082, %v5092
        %v5115 = vsub.f32 %v5083, %v5095
        %v5116 = vsub.f32 %v5084, %v5098
        %v5117 = vsub.f32 %v5085, %v5101
        %v5118 = vsub.f32 %v5086, %v5104
        %v5119 = vsub.f32 %v5087, %v5107
        %v5120 = vsub.f32 %v5088, %v5110
        %v5121 = vsub.f32 %v5089, %v5113
        %v5122 = vmul.f32 %v5114, 1.442695
        %v5123 = vpow.pop %v5122
        %v5124 = vmul.f32 %v5115, 1.442695
        %v5125 = vpow.pop %v5124
        %v5126 = vmul.f32 %v5116, 1.442695
        %v5127 = vpow.pop %v5126
        %v5128 = vmul.f32 %v5117, 1.442695
        %v5129 = vpow.pop %v5128
        %v5130 = vmul.f32 %v5118, 1.442695
        %v5131 = vpow.pop %v5130
        %v5132 = vmul.f32 %v5119, 1.442695
        %v5133 = vpow.pop %v5132
        %v5134 = vmul.f32 %v5120, 1.442695
        %v5135 = vpow.pop %v5134
        %v5136 = vmul.f32 %v5121, 1.442695
        %v5137 = vpow.pop %v5136
        %v5138 = vsel %vm1942, %v5123, 0.0
        %5139 = vadd.xlane.f32.xlu0 %v5138
        %v5140 = vpop.xlane.xlu0 %5139
        %v5141 = vsel %vm1942, %v5125, 0.0
        %5142 = vadd.xlane.f32.xlu0 %v5141
        %v5143 = vpop.xlane.xlu0 %5142
        %v5144 = vsel %vm1942, %v5127, 0.0
        %5145 = vadd.xlane.f32.xlu0 %v5144
        %v5146 = vpop.xlane.xlu0 %5145
        %v5147 = vsel %vm1942, %v5129, 0.0
        %5148 = vadd.xlane.f32.xlu0 %v5147
        %v5149 = vpop.xlane.xlu0 %5148
        %v5150 = vsel %vm1942, %v5131, 0.0
        %5151 = vadd.xlane.f32.xlu0 %v5150
        %v5152 = vpop.xlane.xlu0 %5151
        %v5153 = vsel %vm1942, %v5133, 0.0
        %5154 = vadd.xlane.f32.xlu0 %v5153
        %v5155 = vpop.xlane.xlu0 %5154
        %v5156 = vsel %vm1942, %v5135, 0.0
        %5157 = vadd.xlane.f32.xlu0 %v5156
        %v5158 = vpop.xlane.xlu0 %5157
        %v5159 = vsel %vm1942, %v5137, 0.0
        %5160 = vadd.xlane.f32.xlu0 %v5159
        %v5161 = vpop.xlane.xlu0 %5160
        %v5162 = vrcp.pop %v5140
        %v5163 = vrcp.pop %v5143
        %v5164 = vrcp.pop %v5146
        %v5165 = vrcp.pop %v5149
        %v5166 = vrcp.pop %v5152
        %v5167 = vrcp.pop %v5155
        %v5168 = vrcp.pop %v5158
        %v5169 = vrcp.pop %v5161
        %v5170 = vmul.f32 %v5123, %v5162
        %v5171 = vmul.f32 %v5125, %v5163
        %v5172 = vmul.f32 %v5127, %v5164
        %v5173 = vmul.f32 %v5129, %v5165
        %v5174 = vmul.f32 %v5131, %v5166
        %v5175 = vmul.f32 %v5133, %v5167
        %v5176 = vmul.f32 %v5135, %v5168
        %v5177 = vmul.f32 %v5137, %v5169
        %s5178 = scalar_lea.vmem [#allocation8], 160
        %v5179 = vld [vmem:[%s5178] sm:$0xff]
        %v5180 = vld [vmem:[%s5178 + $0x8] sm:$0xff]
        %v5181 = vld [vmem:[%s5178 + $0x10] sm:$0xff]
        %v5182 = vld [vmem:[%s5178 + $0x18] sm:$0xff]
        %5183 = vmatprep.subr.mxu0 0.0
        %5184 = vmatpush1.msra.mxu0 0.0
        %5185 = vmatprep.subr.mxu0 0.0
        %5186 = vmatpush1.msra.mxu0 0.0
        %5187 = vmatprep.subr.mxu0 0.0
        %5188 = vmatpush1.msra.mxu0 0.0
        %5189 = vmatprep.subr.mxu0 0.0
        %5190 = vmatpush1.msra.mxu0 0.0
        %5191 = vmatprep.subr.mxu0 0.0
        %5192 = vmatpush1.msra.mxu0 0.0
        %5193 = vmatprep.subr.mxu0 0.0
        %5194 = vmatpush1.msra.mxu0 0.0
        %5195 = vmatprep.subr.mxu0 0.0
        %5196 = vmatpush1.msra.mxu0 0.0
        %5197 = vmatprep.subr.mxu0 0.0
        %5198 = vmatpush1.msra.mxu0 0.0
        %5199 = vmatprep.subr.mxu0 0.0
        %5200 = vmatpush1.msra.mxu0 0.0
        %5201 = vmatprep.subr.mxu0 0.0
        %5202 = vmatpush1.msra.mxu0 0.0
        %5203 = vmatprep.subr.mxu0 0.0
        %5204 = vmatpush1.msra.mxu0 0.0
        %5205 = vmatprep.subr.mxu0 0.0
        %5206 = vmatpush1.msra.mxu0 0.0
        %5207 = vmatprep.subr.mxu0 0.0
        %5208 = vmatpush1.msra.mxu0 %v5182
        %5209 = vmatprep.subr.mxu0 0.0
        %5210 = vmatpush1.msra.mxu0 %v5181
        %5211 = vmatprep.subr.mxu0 0.0
        %5212 = vmatpush1.msra.mxu0 %v5180
        %5213 = vmatprep.subr.mxu0 0.0
        %5214 = vmatpush1.msra.mxu0 %v5179
        %5215 = vmatprep.subr.mxu0 0.0
        %5216 = vmatpush2.msra.mxu0 0.0
        %5217 = vmatprep.subr.mxu0 0.0
        %5218 = vmatpush2.msra.mxu0 0.0
        %5219 = vmatprep.subr.mxu0 0.0
        %5220 = vmatpush2.msra.mxu0 0.0
        %5221 = vmatprep.subr.mxu0 0.0
        %5222 = vmatpush2.msra.mxu0 0.0
        %5223 = vmatprep.subr.mxu0 0.0
        %5224 = vmatpush2.msra.mxu0 0.0
        %5225 = vmatprep.subr.mxu0 0.0
        %5226 = vmatpush2.msra.mxu0 0.0
        %5227 = vmatprep.subr.mxu0 0.0
        %5228 = vmatpush2.msra.mxu0 0.0
        %5229 = vmatprep.subr.mxu0 0.0
        %5230 = vmatpush2.msra.mxu0 0.0
        %5231 = vmatprep.subr.mxu0 0.0
        %5232 = vmatpush2.msra.mxu0 0.0
        %5233 = vmatprep.subr.mxu0 0.0
        %5234 = vmatpush2.msra.mxu0 0.0
        %5235 = vmatprep.subr.mxu0 0.0
        %5236 = vmatpush2.msra.mxu0 0.0
        %5237 = vmatprep.subr.mxu0 0.0
        %5238 = vmatpush2.msra.mxu0 0.0
        %5239 = vmatprep.subr.mxu0 0.0
        %5240 = vmatpush2.msra.mxu0 0.0
        %5241 = vmatprep.subr.mxu0 0.0
        %5242 = vmatpush2.msra.mxu0 0.0
        %5243 = vmatprep.subr.mxu0 0.0
        %5244 = vmatpush2.msra.mxu0 0.0
        %5245 = vmatprep.subr.mxu0 0.0
        %5246 = vmatpush2.msra.mxu0 0.0
        %5247 = vmatprep.mubr.f32.mxu0 0.0
        %5248 = vmatmul.mubr.f32.gmra.mxu0 %v4336
        %v5249 = vpop.f32.mrf.mxu0
        %v5250 = vadd.f32 0.0, %v5249
        %v5251 = vpop.f32.mrf.mxu0
        %5252 = vmatprep.mubr.f32.mxu0 0.0
        %5253 = vmatmul.mubr.f32.gmra.mxu0 %v4339
        %v5254 = vpop.f32.mrf.mxu0
        %v5255 = vadd.f32 0.0, %v5254
        %v5256 = vpop.f32.mrf.mxu0
        %5257 = vmatprep.mubr.f32.mxu0 0.0
        %5258 = vmatmul.mubr.f32.gmra.mxu0 %v4342
        %v5259 = vpop.f32.mrf.mxu0
        %v5260 = vadd.f32 0.0, %v5259
        %v5261 = vpop.f32.mrf.mxu0
        %5262 = vmatprep.mubr.f32.mxu0 0.0
        %5263 = vmatmul.mubr.f32.gmra.mxu0 %v4345
        %v5264 = vpop.f32.mrf.mxu0
        %v5265 = vadd.f32 0.0, %v5264
        %v5266 = vpop.f32.mrf.mxu0
        %5267 = vmatprep.mubr.f32.mxu0 0.0
        %5268 = vmatmul.mubr.f32.gmra.mxu0 %v4348
        %v5269 = vpop.f32.mrf.mxu0
        %v5270 = vadd.f32 0.0, %v5269
        %v5271 = vpop.f32.mrf.mxu0
        %5272 = vmatprep.mubr.f32.mxu0 0.0
        %5273 = vmatmul.mubr.f32.gmra.mxu0 %v4351
        %v5274 = vpop.f32.mrf.mxu0
        %v5275 = vadd.f32 0.0, %v5274
        %v5276 = vpop.f32.mrf.mxu0
        %5277 = vmatprep.mubr.f32.mxu0 0.0
        %5278 = vmatmul.mubr.f32.gmra.mxu0 %v4354
        %v5279 = vpop.f32.mrf.mxu0
        %v5280 = vadd.f32 0.0, %v5279
        %v5281 = vpop.f32.mrf.mxu0
        %5282 = vmatprep.mubr.f32.mxu0 0.0
        %5283 = vmatmul.mubr.f32.gmra.mxu0 %v4357
        %v5284 = vpop.f32.mrf.mxu0
        %v5285 = vadd.f32 0.0, %v5284
        %v5286 = vpop.f32.mrf.mxu0
        %5287 = vdwg.mxu0
        %v5289 = vsel %vm1942, %v5170, 0
        %v5292 = vsel %vm1942, %v5171, 0
        %v5295 = vsel %vm1942, %v5172, 0
        %v5298 = vsel %vm1942, %v5173, 0
        %v5301 = vsel %vm1942, %v5174, 0
        %v5304 = vsel %vm1942, %v5175, 0
        %v5307 = vsel %vm1942, %v5176, 0
        %v5310 = vsel %vm1942, %v5177, 0
        %5312 = vmatprep.subr.mxu0 0.0
        %5313 = vmatpush1.msra.mxu0 0.0
        %5314 = vmatprep.subr.mxu0 0.0
        %5315 = vmatpush1.msra.mxu0 0.0
        %5316 = vmatprep.subr.mxu0 0.0
        %5317 = vmatpush1.msra.mxu0 0.0
        %5318 = vmatprep.subr.mxu0 0.0
        %5319 = vmatpush1.msra.mxu0 0.0
        %5320 = vmatprep.subr.mxu0 0.0
        %5321 = vmatpush1.msra.mxu0 0.0
        %5322 = vmatprep.subr.mxu0 0.0
        %5323 = vmatpush1.msra.mxu0 0.0
        %5324 = vmatprep.subr.mxu0 0.0
        %5325 = vmatpush1.msra.mxu0 0.0
        %5326 = vmatprep.subr.mxu0 0.0
        %5327 = vmatpush1.msra.mxu0 0.0
        %5328 = vmatprep.subr.mxu0 0.0
        %5329 = vmatpush1.msra.mxu0 %v5285
        %5330 = vmatprep.subr.mxu0 0.0
        %5331 = vmatpush1.msra.mxu0 %v5280
        %5332 = vmatprep.subr.mxu0 0.0
        %5333 = vmatpush1.msra.mxu0 %v5275
        %5334 = vmatprep.subr.mxu0 0.0
        %5335 = vmatpush1.msra.mxu0 %v5270
        %5336 = vmatprep.subr.mxu0 0.0
        %5337 = vmatpush1.msra.mxu0 %v5265
        %5338 = vmatprep.subr.mxu0 0.0
        %5339 = vmatpush1.msra.mxu0 %v5260
        %5340 = vmatprep.subr.mxu0 0.0
        %5341 = vmatpush1.msra.mxu0 %v5255
        %5342 = vmatprep.subr.mxu0 0.0
        %5343 = vmatpush1.msra.mxu0 %v5250
        %5344 = vmatprep.subr.mxu0 0.0
        %5345 = vmatpush2.msra.mxu0 0.0
        %5346 = vmatprep.subr.mxu0 0.0
        %5347 = vmatpush2.msra.mxu0 0.0
        %5348 = vmatprep.subr.mxu0 0.0
        %5349 = vmatpush2.msra.mxu0 0.0
        %5350 = vmatprep.subr.mxu0 0.0
        %5351 = vmatpush2.msra.mxu0 0.0
        %5352 = vmatprep.subr.mxu0 0.0
        %5353 = vmatpush2.msra.mxu0 0.0
        %5354 = vmatprep.subr.mxu0 0.0
        %5355 = vmatpush2.msra.mxu0 0.0
        %5356 = vmatprep.subr.mxu0 0.0
        %5357 = vmatpush2.msra.mxu0 0.0
        %5358 = vmatprep.subr.mxu0 0.0
        %5359 = vmatpush2.msra.mxu0 0.0
        %5360 = vmatprep.subr.mxu0 0.0
        %5361 = vmatpush2.msra.mxu0 0.0
        %5362 = vmatprep.subr.mxu0 0.0
        %5363 = vmatpush2.msra.mxu0 0.0
        %5364 = vmatprep.subr.mxu0 0.0
        %5365 = vmatpush2.msra.mxu0 0.0
        %5366 = vmatprep.subr.mxu0 0.0
        %5367 = vmatpush2.msra.mxu0 0.0
        %5368 = vmatprep.subr.mxu0 0.0
        %5369 = vmatpush2.msra.mxu0 0.0
        %5370 = vmatprep.subr.mxu0 0.0
        %5371 = vmatpush2.msra.mxu0 0.0
        %5372 = vmatprep.subr.mxu0 0.0
        %5373 = vmatpush2.msra.mxu0 0.0
        %5374 = vmatprep.subr.mxu0 0.0
        %5375 = vmatpush2.msra.mxu0 0.0
        %5376 = vmatprep.mubr.f32.mxu0 0.0
        %5377 = vmatmul.mubr.f32.gmra.mxu0 %v5289
        %v5378 = vpop.f32.mrf.mxu0
        %v5379 = vadd.f32 0.0, %v5378
        %v5380 = vpop.f32.mrf.mxu0
        %5381 = vmatprep.mubr.f32.mxu0 0.0
        %5382 = vmatmul.mubr.f32.gmra.mxu0 %v5292
        %v5383 = vpop.f32.mrf.mxu0
        %v5384 = vadd.f32 0.0, %v5383
        %v5385 = vpop.f32.mrf.mxu0
        %5386 = vmatprep.mubr.f32.mxu0 0.0
        %5387 = vmatmul.mubr.f32.gmra.mxu0 %v5295
        %v5388 = vpop.f32.mrf.mxu0
        %v5389 = vadd.f32 0.0, %v5388
        %v5390 = vpop.f32.mrf.mxu0
        %5391 = vmatprep.mubr.f32.mxu0 0.0
        %5392 = vmatmul.mubr.f32.gmra.mxu0 %v5298
        %v5393 = vpop.f32.mrf.mxu0
        %v5394 = vadd.f32 0.0, %v5393
        %v5395 = vpop.f32.mrf.mxu0
        %5396 = vmatprep.mubr.f32.mxu0 0.0
        %5397 = vmatmul.mubr.f32.gmra.mxu0 %v5301
        %v5398 = vpop.f32.mrf.mxu0
        %v5399 = vadd.f32 0.0, %v5398
        %v5400 = vpop.f32.mrf.mxu0
        %5401 = vmatprep.mubr.f32.mxu0 0.0
        %5402 = vmatmul.mubr.f32.gmra.mxu0 %v5304
        %v5403 = vpop.f32.mrf.mxu0
        %v5404 = vadd.f32 0.0, %v5403
        %v5405 = vpop.f32.mrf.mxu0
        %5406 = vmatprep.mubr.f32.mxu0 0.0
        %5407 = vmatmul.mubr.f32.gmra.mxu0 %v5307
        %v5408 = vpop.f32.mrf.mxu0
        %v5409 = vadd.f32 0.0, %v5408
        %v5410 = vpop.f32.mrf.mxu0
        %5411 = vmatprep.mubr.f32.mxu0 0.0
        %5412 = vmatmul.mubr.f32.gmra.mxu0 %v5310
        %v5413 = vpop.f32.mrf.mxu0
        %v5414 = vadd.f32 0.0, %v5413
        %v5415 = vpop.f32.mrf.mxu0
        %5416 = vdwg.mxu0
        %v5418 = vsel %vm1942, %v4827, 0
        %v5421 = vsel %vm1942, %v4828, 0
        %v5424 = vsel %vm1942, %v4829, 0
        %v5427 = vsel %vm1942, %v4830, 0
        %v5430 = vsel %vm1942, %v4831, 0
        %v5433 = vsel %vm1942, %v4832, 0
        %v5436 = vsel %vm1942, %v4833, 0
        %v5439 = vsel %vm1942, %v4834, 0
        %5441 = vmatprep.subr.mxu0 0.0
        %5442 = vmatpush1.msra.mxu0 0.0
        %5443 = vmatprep.subr.mxu0 0.0
        %5444 = vmatpush1.msra.mxu0 0.0
        %5445 = vmatprep.subr.mxu0 0.0
        %5446 = vmatpush1.msra.mxu0 0.0
        %5447 = vmatprep.subr.mxu0 0.0
        %5448 = vmatpush1.msra.mxu0 0.0
        %5449 = vmatprep.subr.mxu0 0.0
        %5450 = vmatpush1.msra.mxu0 0.0
        %5451 = vmatprep.subr.mxu0 0.0
        %5452 = vmatpush1.msra.mxu0 0.0
        %5453 = vmatprep.subr.mxu0 0.0
        %5454 = vmatpush1.msra.mxu0 0.0
        %5455 = vmatprep.subr.mxu0 0.0
        %5456 = vmatpush1.msra.mxu0 0.0
        %5457 = vmatprep.subr.mxu0 0.0
        %5458 = vmatpush1.msra.mxu0 %v4942
        %5459 = vmatprep.subr.mxu0 0.0
        %5460 = vmatpush1.msra.mxu0 %v4937
        %5461 = vmatprep.subr.mxu0 0.0
        %5462 = vmatpush1.msra.mxu0 %v4932
        %5463 = vmatprep.subr.mxu0 0.0
        %5464 = vmatpush1.msra.mxu0 %v4927
        %5465 = vmatprep.subr.mxu0 0.0
        %5466 = vmatpush1.msra.mxu0 %v4922
        %5467 = vmatprep.subr.mxu0 0.0
        %5468 = vmatpush1.msra.mxu0 %v4917
        %5469 = vmatprep.subr.mxu0 0.0
        %5470 = vmatpush1.msra.mxu0 %v4912
        %5471 = vmatprep.subr.mxu0 0.0
        %5472 = vmatpush1.msra.mxu0 %v4907
        %5473 = vmatprep.subr.mxu0 0.0
        %5474 = vmatpush2.msra.mxu0 0.0
        %5475 = vmatprep.subr.mxu0 0.0
        %5476 = vmatpush2.msra.mxu0 0.0
        %5477 = vmatprep.subr.mxu0 0.0
        %5478 = vmatpush2.msra.mxu0 0.0
        %5479 = vmatprep.subr.mxu0 0.0
        %5480 = vmatpush2.msra.mxu0 0.0
        %5481 = vmatprep.subr.mxu0 0.0
        %5482 = vmatpush2.msra.mxu0 0.0
        %5483 = vmatprep.subr.mxu0 0.0
        %5484 = vmatpush2.msra.mxu0 0.0
        %5485 = vmatprep.subr.mxu0 0.0
        %5486 = vmatpush2.msra.mxu0 0.0
        %5487 = vmatprep.subr.mxu0 0.0
        %5488 = vmatpush2.msra.mxu0 0.0
        %5489 = vmatprep.subr.mxu0 0.0
        %5490 = vmatpush2.msra.mxu0 0.0
        %5491 = vmatprep.subr.mxu0 0.0
        %5492 = vmatpush2.msra.mxu0 0.0
        %5493 = vmatprep.subr.mxu0 0.0
        %5494 = vmatpush2.msra.mxu0 0.0
        %5495 = vmatprep.subr.mxu0 0.0
        %5496 = vmatpush2.msra.mxu0 0.0
        %5497 = vmatprep.subr.mxu0 0.0
        %5498 = vmatpush2.msra.mxu0 0.0
        %5499 = vmatprep.subr.mxu0 0.0
        %5500 = vmatpush2.msra.mxu0 0.0
        %5501 = vmatprep.subr.mxu0 0.0
        %5502 = vmatpush2.msra.mxu0 0.0
        %5503 = vmatprep.subr.mxu0 0.0
        %5504 = vmatpush2.msra.mxu0 0.0
        %5505 = vmatprep.mubr.f32.mxu0 0.0
        %5506 = vmatmul.mubr.f32.gmra.mxu0 %v5418
        %v5507 = vpop.f32.mrf.mxu0
        %v5508 = vadd.f32 %v5379, %v5507
        %v5509 = vpop.f32.mrf.mxu0
        %5510 = vmatprep.mubr.f32.mxu0 0.0
        %5511 = vmatmul.mubr.f32.gmra.mxu0 %v5421
        %v5512 = vpop.f32.mrf.mxu0
        %v5513 = vadd.f32 %v5384, %v5512
        %v5514 = vpop.f32.mrf.mxu0
        %5515 = vmatprep.mubr.f32.mxu0 0.0
        %5516 = vmatmul.mubr.f32.gmra.mxu0 %v5424
        %v5517 = vpop.f32.mrf.mxu0
        %v5518 = vadd.f32 %v5389, %v5517
        %v5519 = vpop.f32.mrf.mxu0
        %5520 = vmatprep.mubr.f32.mxu0 0.0
        %5521 = vmatmul.mubr.f32.gmra.mxu0 %v5427
        %v5522 = vpop.f32.mrf.mxu0
        %v5523 = vadd.f32 %v5394, %v5522
        %v5524 = vpop.f32.mrf.mxu0
        %5525 = vmatprep.mubr.f32.mxu0 0.0
        %5526 = vmatmul.mubr.f32.gmra.mxu0 %v5430
        %v5527 = vpop.f32.mrf.mxu0
        %v5528 = vadd.f32 %v5399, %v5527
        %v5529 = vpop.f32.mrf.mxu0
        %5530 = vmatprep.mubr.f32.mxu0 0.0
        %5531 = vmatmul.mubr.f32.gmra.mxu0 %v5433
        %v5532 = vpop.f32.mrf.mxu0
        %v5533 = vadd.f32 %v5404, %v5532
        %v5534 = vpop.f32.mrf.mxu0
        %5535 = vmatprep.mubr.f32.mxu0 0.0
        %5536 = vmatmul.mubr.f32.gmra.mxu0 %v5436
        %v5537 = vpop.f32.mrf.mxu0
        %v5538 = vadd.f32 %v5409, %v5537
        %v5539 = vpop.f32.mrf.mxu0
        %5540 = vmatprep.mubr.f32.mxu0 0.0
        %5541 = vmatmul.mubr.f32.gmra.mxu0 %v5439
        %v5542 = vpop.f32.mrf.mxu0
        %v5543 = vadd.f32 %v5414, %v5542
        %v5544 = vpop.f32.mrf.mxu0
        %5545 = vdwg.mxu0
        %v5546 = vsel %vm2750, %v4426, 0.0
        %v5547 = vsel %vm2750, %v4431, 0.0
        %v5548 = vsel %vm2750, %v4436, 0.0
        %v5549 = vsel %vm2750, %v4441, 0.0
        %v5550 = vsel %vm2750, %v4446, 0.0
        %v5551 = vsel %vm2750, %v4451, 0.0
        %v5552 = vsel %vm2750, %v4456, 0.0
        %v5553 = vsel %vm2750, %v4461, 0.0
        %v5555 = vsel %vm1193, %v5546, 0
        %v5558 = vsel %vm1193, %v5547, 0
        %v5561 = vsel %vm1193, %v5548, 0
        %v5564 = vsel %vm1193, %v5549, 0
        %v5567 = vsel %vm1193, %v5550, 0
        %v5570 = vsel %vm1193, %v5551, 0
        %v5573 = vsel %vm1193, %v5552, 0
        %v5576 = vsel %vm1193, %v5553, 0
        %5578 = vmatprep.subr.mxu0 0.0
        %5579 = vmatpush1.xpose.msra.mxu0 0.0
        %5580 = vmatprep.subr.mxu0 0.0
        %5581 = vmatpush1.xpose.msra.mxu0 0.0
        %5582 = vmatprep.subr.mxu0 0.0
        %5583 = vmatpush1.xpose.msra.mxu0 0.0
        %5584 = vmatprep.subr.mxu0 0.0
        %5585 = vmatpush1.xpose.msra.mxu0 0.0
        %5586 = vmatprep.subr.mxu0 0.0
        %5587 = vmatpush1.xpose.msra.mxu0 0.0
        %5588 = vmatprep.subr.mxu0 0.0
        %5589 = vmatpush1.xpose.msra.mxu0 0.0
        %5590 = vmatprep.subr.mxu0 0.0
        %5591 = vmatpush1.xpose.msra.mxu0 0.0
        %5592 = vmatprep.subr.mxu0 0.0
        %5593 = vmatpush1.xpose.msra.mxu0 0.0
        %5594 = vmatprep.subr.mxu0 0.0
        %5595 = vmatpush1.xpose.msra.mxu0 %v4632
        %5596 = vmatprep.subr.mxu0 0.0
        %5597 = vmatpush1.xpose.msra.mxu0 %v4629
        %5598 = vmatprep.subr.mxu0 0.0
        %5599 = vmatpush1.xpose.msra.mxu0 %v4626
        %5600 = vmatprep.subr.mxu0 0.0
        %5601 = vmatpush1.xpose.msra.mxu0 %v4623
        %5602 = vmatprep.subr.mxu0 0.0
        %5603 = vmatpush1.xpose.msra.mxu0 %v4620
        %5604 = vmatprep.subr.mxu0 0.0
        %5605 = vmatpush1.xpose.msra.mxu0 %v4617
        %5606 = vmatprep.subr.mxu0 0.0
        %5607 = vmatpush1.xpose.msra.mxu0 %v4614
        %5608 = vmatprep.subr.mxu0 0.0
        %5609 = vmatpush1.xpose.msra.mxu0 %v4611
        %5610 = vmatprep.subr.mxu0 0.0
        %5611 = vmatpush2.xpose.msra.mxu0 0.0
        %5612 = vmatprep.subr.mxu0 0.0
        %5613 = vmatpush2.xpose.msra.mxu0 0.0
        %5614 = vmatprep.subr.mxu0 0.0
        %5615 = vmatpush2.xpose.msra.mxu0 0.0
        %5616 = vmatprep.subr.mxu0 0.0
        %5617 = vmatpush2.xpose.msra.mxu0 0.0
        %5618 = vmatprep.subr.mxu0 0.0
        %5619 = vmatpush2.xpose.msra.mxu0 0.0
        %5620 = vmatprep.subr.mxu0 0.0
        %5621 = vmatpush2.xpose.msra.mxu0 0.0
        %5622 = vmatprep.subr.mxu0 0.0
        %5623 = vmatpush2.xpose.msra.mxu0 0.0
        %5624 = vmatprep.subr.mxu0 0.0
        %5625 = vmatpush2.xpose.msra.mxu0 0.0
        %5626 = vmatprep.subr.mxu0 0.0
        %5627 = vmatpush2.xpose.msra.mxu0 0.0
        %5628 = vmatprep.subr.mxu0 0.0
        %5629 = vmatpush2.xpose.msra.mxu0 0.0
        %5630 = vmatprep.subr.mxu0 0.0
        %5631 = vmatpush2.xpose.msra.mxu0 0.0
        %5632 = vmatprep.subr.mxu0 0.0
        %5633 = vmatpush2.xpose.msra.mxu0 0.0
        %5634 = vmatprep.subr.mxu0 0.0
        %5635 = vmatpush2.xpose.msra.mxu0 0.0
        %5636 = vmatprep.subr.mxu0 0.0
        %5637 = vmatpush2.xpose.msra.mxu0 0.0
        %5638 = vmatprep.subr.mxu0 0.0
        %5639 = vmatpush2.xpose.msra.mxu0 0.0
        %5640 = vmatprep.subr.mxu0 0.0
        %5641 = vmatpush2.xpose.msra.mxu0 0.0
        %5642 = vmatprep.mubr.f32.mxu0 0.0
        %5643 = vmatmul.mubr.f32.gmra.mxu0 %v5555
        %v5644 = vpop.f32.mrf.mxu0
        %v5645 = vadd.f32 0.0, %v5644
        %v5646 = vpop.f32.mrf.mxu0
        %5647 = vmatprep.mubr.f32.mxu0 0.0
        %5648 = vmatmul.mubr.f32.gmra.mxu0 %v5558
        %v5649 = vpop.f32.mrf.mxu0
        %v5650 = vadd.f32 0.0, %v5649
        %v5651 = vpop.f32.mrf.mxu0
        %5652 = vmatprep.mubr.f32.mxu0 0.0
        %5653 = vmatmul.mubr.f32.gmra.mxu0 %v5561
        %v5654 = vpop.f32.mrf.mxu0
        %v5655 = vadd.f32 0.0, %v5654
        %v5656 = vpop.f32.mrf.mxu0
        %5657 = vmatprep.mubr.f32.mxu0 0.0
        %5658 = vmatmul.mubr.f32.gmra.mxu0 %v5564
        %v5659 = vpop.f32.mrf.mxu0
        %v5660 = vadd.f32 0.0, %v5659
        %v5661 = vpop.f32.mrf.mxu0
        %5662 = vmatprep.mubr.f32.mxu0 0.0
        %5663 = vmatmul.mubr.f32.gmra.mxu0 %v5567
        %v5664 = vpop.f32.mrf.mxu0
        %v5665 = vadd.f32 0.0, %v5664
        %v5666 = vpop.f32.mrf.mxu0
        %5667 = vmatprep.mubr.f32.mxu0 0.0
        %5668 = vmatmul.mubr.f32.gmra.mxu0 %v5570
        %v5669 = vpop.f32.mrf.mxu0
        %v5670 = vadd.f32 0.0, %v5669
        %v5671 = vpop.f32.mrf.mxu0
        %5672 = vmatprep.mubr.f32.mxu0 0.0
        %5673 = vmatmul.mubr.f32.gmra.mxu0 %v5573
        %v5674 = vpop.f32.mrf.mxu0
        %v5675 = vadd.f32 0.0, %v5674
        %v5676 = vpop.f32.mrf.mxu0
        %5677 = vmatprep.mubr.f32.mxu0 0.0
        %5678 = vmatmul.mubr.f32.gmra.mxu0 %v5576
        %v5679 = vpop.f32.mrf.mxu0
        %v5680 = vadd.f32 0.0, %v5679
        %v5681 = vpop.f32.mrf.mxu0
        %5682 = vdwg.mxu0
        %v5683 = vmul.f32 %v5645, 0.35355338
        %v5684 = vmul.f32 %v5650, 0.35355338
        %v5685 = vmul.f32 %v5655, 0.35355338
        %v5686 = vmul.f32 %v5660, 0.35355338
        %v5687 = vmul.f32 %v5665, 0.35355338
        %v5688 = vmul.f32 %v5670, 0.35355338
        %v5689 = vmul.f32 %v5675, 0.35355338
        %v5690 = vmul.f32 %v5680, 0.35355338
        %v5691 = vsel %vm1942, %v5683, -inf
        %5692 = vmax.xlane.f32.xlu0 %v5691
        %v5693 = vpop.xlane.xlu0 %5692
        %v5694 = vsel %vm1942, %v5684, -inf
        %5695 = vmax.xlane.f32.xlu0 %v5694
        %v5696 = vpop.xlane.xlu0 %5695
        %v5697 = vsel %vm1942, %v5685, -inf
        %5698 = vmax.xlane.f32.xlu0 %v5697
        %v5699 = vpop.xlane.xlu0 %5698
        %v5700 = vsel %vm1942, %v5686, -inf
        %5701 = vmax.xlane.f32.xlu0 %v5700
        %v5702 = vpop.xlane.xlu0 %5701
        %v5703 = vsel %vm1942, %v5687, -inf
        %5704 = vmax.xlane.f32.xlu0 %v5703
        %v5705 = vpop.xlane.xlu0 %5704
        %v5706 = vsel %vm1942, %v5688, -inf
        %5707 = vmax.xlane.f32.xlu0 %v5706
        %v5708 = vpop.xlane.xlu0 %5707
        %v5709 = vsel %vm1942, %v5689, -inf
        %5710 = vmax.xlane.f32.xlu0 %v5709
        %v5711 = vpop.xlane.xlu0 %5710
        %v5712 = vsel %vm1942, %v5690, -inf
        %5713 = vmax.xlane.f32.xlu0 %v5712
        %v5714 = vpop.xlane.xlu0 %5713
        %v5715 = vsub.f32 %v5683, %v5693
        %v5716 = vsub.f32 %v5684, %v5696
        %v5717 = vsub.f32 %v5685, %v5699
        %v5718 = vsub.f32 %v5686, %v5702
        %v5719 = vsub.f32 %v5687, %v5705
        %v5720 = vsub.f32 %v5688, %v5708
        %v5721 = vsub.f32 %v5689, %v5711
        %v5722 = vsub.f32 %v5690, %v5714
        %v5723 = vmul.f32 %v5715, 1.442695
        %v5724 = vpow.pop %v5723
        %v5725 = vmul.f32 %v5716, 1.442695
        %v5726 = vpow.pop %v5725
        %v5727 = vmul.f32 %v5717, 1.442695
        %v5728 = vpow.pop %v5727
        %v5729 = vmul.f32 %v5718, 1.442695
        %v5730 = vpow.pop %v5729
        %v5731 = vmul.f32 %v5719, 1.442695
        %v5732 = vpow.pop %v5731
        %v5733 = vmul.f32 %v5720, 1.442695
        %v5734 = vpow.pop %v5733
        %v5735 = vmul.f32 %v5721, 1.442695
        %v5736 = vpow.pop %v5735
        %v5737 = vmul.f32 %v5722, 1.442695
        %v5738 = vpow.pop %v5737
        %v5739 = vsel %vm1942, %v5724, 0.0
        %5740 = vadd.xlane.f32.xlu0 %v5739
        %v5741 = vpop.xlane.xlu0 %5740
        %v5742 = vsel %vm1942, %v5726, 0.0
        %5743 = vadd.xlane.f32.xlu0 %v5742
        %v5744 = vpop.xlane.xlu0 %5743
        %v5745 = vsel %vm1942, %v5728, 0.0
        %5746 = vadd.xlane.f32.xlu0 %v5745
        %v5747 = vpop.xlane.xlu0 %5746
        %v5748 = vsel %vm1942, %v5730, 0.0
        %5749 = vadd.xlane.f32.xlu0 %v5748
        %v5750 = vpop.xlane.xlu0 %5749
        %v5751 = vsel %vm1942, %v5732, 0.0
        %5752 = vadd.xlane.f32.xlu0 %v5751
        %v5753 = vpop.xlane.xlu0 %5752
        %v5754 = vsel %vm1942, %v5734, 0.0
        %5755 = vadd.xlane.f32.xlu0 %v5754
        %v5756 = vpop.xlane.xlu0 %5755
        %v5757 = vsel %vm1942, %v5736, 0.0
        %5758 = vadd.xlane.f32.xlu0 %v5757
        %v5759 = vpop.xlane.xlu0 %5758
        %v5760 = vsel %vm1942, %v5738, 0.0
        %5761 = vadd.xlane.f32.xlu0 %v5760
        %v5762 = vpop.xlane.xlu0 %5761
        %v5763 = vrcp.pop %v5741
        %v5764 = vrcp.pop %v5744
        %v5765 = vrcp.pop %v5747
        %v5766 = vrcp.pop %v5750
        %v5767 = vrcp.pop %v5753
        %v5768 = vrcp.pop %v5756
        %v5769 = vrcp.pop %v5759
        %v5770 = vrcp.pop %v5762
        %v5771 = vmul.f32 %v5724, %v5763
        %v5772 = vmul.f32 %v5726, %v5764
        %v5773 = vmul.f32 %v5728, %v5765
        %v5774 = vmul.f32 %v5730, %v5766
        %v5775 = vmul.f32 %v5732, %v5767
        %v5776 = vmul.f32 %v5734, %v5768
        %v5777 = vmul.f32 %v5736, %v5769
        %v5778 = vmul.f32 %v5738, %v5770
        %s5779 = scalar_lea.vmem [#allocation8], 192
        %v5780 = vld [vmem:[%s5779] sm:$0xff]
        %v5781 = vld [vmem:[%s5779 + $0x8] sm:$0xff]
        %v5782 = vld [vmem:[%s5779 + $0x10] sm:$0xff]
        %v5783 = vld [vmem:[%s5779 + $0x18] sm:$0xff]
        %5784 = vmatprep.subr.mxu0 0.0
        %5785 = vmatpush1.msra.mxu0 0.0
        %5786 = vmatprep.subr.mxu0 0.0
        %5787 = vmatpush1.msra.mxu0 0.0
        %5788 = vmatprep.subr.mxu0 0.0
        %5789 = vmatpush1.msra.mxu0 0.0
        %5790 = vmatprep.subr.mxu0 0.0
        %5791 = vmatpush1.msra.mxu0 0.0
        %5792 = vmatprep.subr.mxu0 0.0
        %5793 = vmatpush1.msra.mxu0 0.0
        %5794 = vmatprep.subr.mxu0 0.0
        %5795 = vmatpush1.msra.mxu0 0.0
        %5796 = vmatprep.subr.mxu0 0.0
        %5797 = vmatpush1.msra.mxu0 0.0
        %5798 = vmatprep.subr.mxu0 0.0
        %5799 = vmatpush1.msra.mxu0 0.0
        %5800 = vmatprep.subr.mxu0 0.0
        %5801 = vmatpush1.msra.mxu0 0.0
        %5802 = vmatprep.subr.mxu0 0.0
        %5803 = vmatpush1.msra.mxu0 0.0
        %5804 = vmatprep.subr.mxu0 0.0
        %5805 = vmatpush1.msra.mxu0 0.0
        %5806 = vmatprep.subr.mxu0 0.0
        %5807 = vmatpush1.msra.mxu0 0.0
        %5808 = vmatprep.subr.mxu0 0.0
        %5809 = vmatpush1.msra.mxu0 %v5783
        %5810 = vmatprep.subr.mxu0 0.0
        %5811 = vmatpush1.msra.mxu0 %v5782
        %5812 = vmatprep.subr.mxu0 0.0
        %5813 = vmatpush1.msra.mxu0 %v5781
        %5814 = vmatprep.subr.mxu0 0.0
        %5815 = vmatpush1.msra.mxu0 %v5780
        %5816 = vmatprep.subr.mxu0 0.0
        %5817 = vmatpush2.msra.mxu0 0.0
        %5818 = vmatprep.subr.mxu0 0.0
        %5819 = vmatpush2.msra.mxu0 0.0
        %5820 = vmatprep.subr.mxu0 0.0
        %5821 = vmatpush2.msra.mxu0 0.0
        %5822 = vmatprep.subr.mxu0 0.0
        %5823 = vmatpush2.msra.mxu0 0.0
        %5824 = vmatprep.subr.mxu0 0.0
        %5825 = vmatpush2.msra.mxu0 0.0
        %5826 = vmatprep.subr.mxu0 0.0
        %5827 = vmatpush2.msra.mxu0 0.0
        %5828 = vmatprep.subr.mxu0 0.0
        %5829 = vmatpush2.msra.mxu0 0.0
        %5830 = vmatprep.subr.mxu0 0.0
        %5831 = vmatpush2.msra.mxu0 0.0
        %5832 = vmatprep.subr.mxu0 0.0
        %5833 = vmatpush2.msra.mxu0 0.0
        %5834 = vmatprep.subr.mxu0 0.0
        %5835 = vmatpush2.msra.mxu0 0.0
        %5836 = vmatprep.subr.mxu0 0.0
        %5837 = vmatpush2.msra.mxu0 0.0
        %5838 = vmatprep.subr.mxu0 0.0
        %5839 = vmatpush2.msra.mxu0 0.0
        %5840 = vmatprep.subr.mxu0 0.0
        %5841 = vmatpush2.msra.mxu0 0.0
        %5842 = vmatprep.subr.mxu0 0.0
        %5843 = vmatpush2.msra.mxu0 0.0
        %5844 = vmatprep.subr.mxu0 0.0
        %5845 = vmatpush2.msra.mxu0 0.0
        %5846 = vmatprep.subr.mxu0 0.0
        %5847 = vmatpush2.msra.mxu0 0.0
        %5848 = vmatprep.mubr.f32.mxu0 0.0
        %5849 = vmatmul.mubr.f32.gmra.mxu0 %v4336
        %v5850 = vpop.f32.mrf.mxu0
        %v5851 = vadd.f32 0.0, %v5850
        %v5852 = vpop.f32.mrf.mxu0
        %5853 = vmatprep.mubr.f32.mxu0 0.0
        %5854 = vmatmul.mubr.f32.gmra.mxu0 %v4339
        %v5855 = vpop.f32.mrf.mxu0
        %v5856 = vadd.f32 0.0, %v5855
        %v5857 = vpop.f32.mrf.mxu0
        %5858 = vmatprep.mubr.f32.mxu0 0.0
        %5859 = vmatmul.mubr.f32.gmra.mxu0 %v4342
        %v5860 = vpop.f32.mrf.mxu0
        %v5861 = vadd.f32 0.0, %v5860
        %v5862 = vpop.f32.mrf.mxu0
        %5863 = vmatprep.mubr.f32.mxu0 0.0
        %5864 = vmatmul.mubr.f32.gmra.mxu0 %v4345
        %v5865 = vpop.f32.mrf.mxu0
        %v5866 = vadd.f32 0.0, %v5865
        %v5867 = vpop.f32.mrf.mxu0
        %5868 = vmatprep.mubr.f32.mxu0 0.0
        %5869 = vmatmul.mubr.f32.gmra.mxu0 %v4348
        %v5870 = vpop.f32.mrf.mxu0
        %v5871 = vadd.f32 0.0, %v5870
        %v5872 = vpop.f32.mrf.mxu0
        %5873 = vmatprep.mubr.f32.mxu0 0.0
        %5874 = vmatmul.mubr.f32.gmra.mxu0 %v4351
        %v5875 = vpop.f32.mrf.mxu0
        %v5876 = vadd.f32 0.0, %v5875
        %v5877 = vpop.f32.mrf.mxu0
        %5878 = vmatprep.mubr.f32.mxu0 0.0
        %5879 = vmatmul.mubr.f32.gmra.mxu0 %v4354
        %v5880 = vpop.f32.mrf.mxu0
        %v5881 = vadd.f32 0.0, %v5880
        %v5882 = vpop.f32.mrf.mxu0
        %5883 = vmatprep.mubr.f32.mxu0 0.0
        %5884 = vmatmul.mubr.f32.gmra.mxu0 %v4357
        %v5885 = vpop.f32.mrf.mxu0
        %v5886 = vadd.f32 0.0, %v5885
        %v5887 = vpop.f32.mrf.mxu0
        %5888 = vdwg.mxu0
        %v5890 = vsel %vm1942, %v5771, 0
        %v5893 = vsel %vm1942, %v5772, 0
        %v5896 = vsel %vm1942, %v5773, 0
        %v5899 = vsel %vm1942, %v5774, 0
        %v5902 = vsel %vm1942, %v5775, 0
        %v5905 = vsel %vm1942, %v5776, 0
        %v5908 = vsel %vm1942, %v5777, 0
        %v5911 = vsel %vm1942, %v5778, 0
        %5913 = vmatprep.subr.mxu0 0.0
        %5914 = vmatpush1.msra.mxu0 0.0
        %5915 = vmatprep.subr.mxu0 0.0
        %5916 = vmatpush1.msra.mxu0 0.0
        %5917 = vmatprep.subr.mxu0 0.0
        %5918 = vmatpush1.msra.mxu0 0.0
        %5919 = vmatprep.subr.mxu0 0.0
        %5920 = vmatpush1.msra.mxu0 0.0
        %5921 = vmatprep.subr.mxu0 0.0
        %5922 = vmatpush1.msra.mxu0 0.0
        %5923 = vmatprep.subr.mxu0 0.0
        %5924 = vmatpush1.msra.mxu0 0.0
        %5925 = vmatprep.subr.mxu0 0.0
        %5926 = vmatpush1.msra.mxu0 0.0
        %5927 = vmatprep.subr.mxu0 0.0
        %5928 = vmatpush1.msra.mxu0 0.0
        %5929 = vmatprep.subr.mxu0 0.0
        %5930 = vmatpush1.msra.mxu0 %v5886
        %5931 = vmatprep.subr.mxu0 0.0
        %5932 = vmatpush1.msra.mxu0 %v5881
        %5933 = vmatprep.subr.mxu0 0.0
        %5934 = vmatpush1.msra.mxu0 %v5876
        %5935 = vmatprep.subr.mxu0 0.0
        %5936 = vmatpush1.msra.mxu0 %v5871
        %5937 = vmatprep.subr.mxu0 0.0
        %5938 = vmatpush1.msra.mxu0 %v5866
        %5939 = vmatprep.subr.mxu0 0.0
        %5940 = vmatpush1.msra.mxu0 %v5861
        %5941 = vmatprep.subr.mxu0 0.0
        %5942 = vmatpush1.msra.mxu0 %v5856
        %5943 = vmatprep.subr.mxu0 0.0
        %5944 = vmatpush1.msra.mxu0 %v5851
        %5945 = vmatprep.subr.mxu0 0.0
        %5946 = vmatpush2.msra.mxu0 0.0
        %5947 = vmatprep.subr.mxu0 0.0
        %5948 = vmatpush2.msra.mxu0 0.0
        %5949 = vmatprep.subr.mxu0 0.0
        %5950 = vmatpush2.msra.mxu0 0.0
        %5951 = vmatprep.subr.mxu0 0.0
        %5952 = vmatpush2.msra.mxu0 0.0
        %5953 = vmatprep.subr.mxu0 0.0
        %5954 = vmatpush2.msra.mxu0 0.0
        %5955 = vmatprep.subr.mxu0 0.0
        %5956 = vmatpush2.msra.mxu0 0.0
        %5957 = vmatprep.subr.mxu0 0.0
        %5958 = vmatpush2.msra.mxu0 0.0
        %5959 = vmatprep.subr.mxu0 0.0
        %5960 = vmatpush2.msra.mxu0 0.0
        %5961 = vmatprep.subr.mxu0 0.0
        %5962 = vmatpush2.msra.mxu0 0.0
        %5963 = vmatprep.subr.mxu0 0.0
        %5964 = vmatpush2.msra.mxu0 0.0
        %5965 = vmatprep.subr.mxu0 0.0
        %5966 = vmatpush2.msra.mxu0 0.0
        %5967 = vmatprep.subr.mxu0 0.0
        %5968 = vmatpush2.msra.mxu0 0.0
        %5969 = vmatprep.subr.mxu0 0.0
        %5970 = vmatpush2.msra.mxu0 0.0
        %5971 = vmatprep.subr.mxu0 0.0
        %5972 = vmatpush2.msra.mxu0 0.0
        %5973 = vmatprep.subr.mxu0 0.0
        %5974 = vmatpush2.msra.mxu0 0.0
        %5975 = vmatprep.subr.mxu0 0.0
        %5976 = vmatpush2.msra.mxu0 0.0
        %5977 = vmatprep.mubr.f32.mxu0 0.0
        %5978 = vmatmul.mubr.f32.gmra.mxu0 %v5890
        %v5979 = vpop.f32.mrf.mxu0
        %v5980 = vadd.f32 0.0, %v5979
        %v5981 = vpop.f32.mrf.mxu0
        %5982 = vmatprep.mubr.f32.mxu0 0.0
        %5983 = vmatmul.mubr.f32.gmra.mxu0 %v5893
        %v5984 = vpop.f32.mrf.mxu0
        %v5985 = vadd.f32 0.0, %v5984
        %v5986 = vpop.f32.mrf.mxu0
        %5987 = vmatprep.mubr.f32.mxu0 0.0
        %5988 = vmatmul.mubr.f32.gmra.mxu0 %v5896
        %v5989 = vpop.f32.mrf.mxu0
        %v5990 = vadd.f32 0.0, %v5989
        %v5991 = vpop.f32.mrf.mxu0
        %5992 = vmatprep.mubr.f32.mxu0 0.0
        %5993 = vmatmul.mubr.f32.gmra.mxu0 %v5899
        %v5994 = vpop.f32.mrf.mxu0
        %v5995 = vadd.f32 0.0, %v5994
        %v5996 = vpop.f32.mrf.mxu0
        %5997 = vmatprep.mubr.f32.mxu0 0.0
        %5998 = vmatmul.mubr.f32.gmra.mxu0 %v5902
        %v5999 = vpop.f32.mrf.mxu0
        %v6000 = vadd.f32 0.0, %v5999
        %v6001 = vpop.f32.mrf.mxu0
        %6002 = vmatprep.mubr.f32.mxu0 0.0
        %6003 = vmatmul.mubr.f32.gmra.mxu0 %v5905
        %v6004 = vpop.f32.mrf.mxu0
        %v6005 = vadd.f32 0.0, %v6004
        %v6006 = vpop.f32.mrf.mxu0
        %6007 = vmatprep.mubr.f32.mxu0 0.0
        %6008 = vmatmul.mubr.f32.gmra.mxu0 %v5908
        %v6009 = vpop.f32.mrf.mxu0
        %v6010 = vadd.f32 0.0, %v6009
        %v6011 = vpop.f32.mrf.mxu0
        %6012 = vmatprep.mubr.f32.mxu0 0.0
        %6013 = vmatmul.mubr.f32.gmra.mxu0 %v5911
        %v6014 = vpop.f32.mrf.mxu0
        %v6015 = vadd.f32 0.0, %v6014
        %v6016 = vpop.f32.mrf.mxu0
        %6017 = vdwg.mxu0
        %v6018 = vadd.f32 %v5508, %v5980
        %v6019 = vadd.f32 %v5513, %v5985
        %v6020 = vadd.f32 %v5518, %v5990
        %v6021 = vadd.f32 %v5523, %v5995
        %v6022 = vadd.f32 %v5528, %v6000
        %v6023 = vadd.f32 %v5533, %v6005
        %v6024 = vadd.f32 %v5538, %v6010
        %v6025 = vadd.f32 %v5543, %v6015
        %v6026 = vsel %vm3235, %v4426, 0.0
        %v6027 = vsel %vm3235, %v4431, 0.0
        %v6028 = vsel %vm3235, %v4436, 0.0
        %v6029 = vsel %vm3235, %v4441, 0.0
        %v6030 = vsel %vm3235, %v4446, 0.0
        %v6031 = vsel %vm3235, %v4451, 0.0
        %v6032 = vsel %vm3235, %v4456, 0.0
        %v6033 = vsel %vm3235, %v4461, 0.0
        %v6035 = vsel %vm1193, %v6026, 0
        %v6038 = vsel %vm1193, %v6027, 0
        %v6041 = vsel %vm1193, %v6028, 0
        %v6044 = vsel %vm1193, %v6029, 0
        %v6047 = vsel %vm1193, %v6030, 0
        %v6050 = vsel %vm1193, %v6031, 0
        %v6053 = vsel %vm1193, %v6032, 0
        %v6056 = vsel %vm1193, %v6033, 0
        %6058 = vmatprep.subr.mxu0 0.0
        %6059 = vmatpush1.xpose.msra.mxu0 0.0
        %6060 = vmatprep.subr.mxu0 0.0
        %6061 = vmatpush1.xpose.msra.mxu0 0.0
        %6062 = vmatprep.subr.mxu0 0.0
        %6063 = vmatpush1.xpose.msra.mxu0 0.0
        %6064 = vmatprep.subr.mxu0 0.0
        %6065 = vmatpush1.xpose.msra.mxu0 0.0
        %6066 = vmatprep.subr.mxu0 0.0
        %6067 = vmatpush1.xpose.msra.mxu0 0.0
        %6068 = vmatprep.subr.mxu0 0.0
        %6069 = vmatpush1.xpose.msra.mxu0 0.0
        %6070 = vmatprep.subr.mxu0 0.0
        %6071 = vmatpush1.xpose.msra.mxu0 0.0
        %6072 = vmatprep.subr.mxu0 0.0
        %6073 = vmatpush1.xpose.msra.mxu0 0.0
        %6074 = vmatprep.subr.mxu0 0.0
        %6075 = vmatpush1.xpose.msra.mxu0 %v4632
        %6076 = vmatprep.subr.mxu0 0.0
        %6077 = vmatpush1.xpose.msra.mxu0 %v4629
        %6078 = vmatprep.subr.mxu0 0.0
        %6079 = vmatpush1.xpose.msra.mxu0 %v4626
        %6080 = vmatprep.subr.mxu0 0.0
        %6081 = vmatpush1.xpose.msra.mxu0 %v4623
        %6082 = vmatprep.subr.mxu0 0.0
        %6083 = vmatpush1.xpose.msra.mxu0 %v4620
        %6084 = vmatprep.subr.mxu0 0.0
        %6085 = vmatpush1.xpose.msra.mxu0 %v4617
        %6086 = vmatprep.subr.mxu0 0.0
        %6087 = vmatpush1.xpose.msra.mxu0 %v4614
        %6088 = vmatprep.subr.mxu0 0.0
        %6089 = vmatpush1.xpose.msra.mxu0 %v4611
        %6090 = vmatprep.subr.mxu0 0.0
        %6091 = vmatpush2.xpose.msra.mxu0 0.0
        %6092 = vmatprep.subr.mxu0 0.0
        %6093 = vmatpush2.xpose.msra.mxu0 0.0
        %6094 = vmatprep.subr.mxu0 0.0
        %6095 = vmatpush2.xpose.msra.mxu0 0.0
        %6096 = vmatprep.subr.mxu0 0.0
        %6097 = vmatpush2.xpose.msra.mxu0 0.0
        %6098 = vmatprep.subr.mxu0 0.0
        %6099 = vmatpush2.xpose.msra.mxu0 0.0
        %6100 = vmatprep.subr.mxu0 0.0
        %6101 = vmatpush2.xpose.msra.mxu0 0.0
        %6102 = vmatprep.subr.mxu0 0.0
        %6103 = vmatpush2.xpose.msra.mxu0 0.0
        %6104 = vmatprep.subr.mxu0 0.0
        %6105 = vmatpush2.xpose.msra.mxu0 0.0
        %6106 = vmatprep.subr.mxu0 0.0
        %6107 = vmatpush2.xpose.msra.mxu0 0.0
        %6108 = vmatprep.subr.mxu0 0.0
        %6109 = vmatpush2.xpose.msra.mxu0 0.0
        %6110 = vmatprep.subr.mxu0 0.0
        %6111 = vmatpush2.xpose.msra.mxu0 0.0
        %6112 = vmatprep.subr.mxu0 0.0
        %6113 = vmatpush2.xpose.msra.mxu0 0.0
        %6114 = vmatprep.subr.mxu0 0.0
        %6115 = vmatpush2.xpose.msra.mxu0 0.0
        %6116 = vmatprep.subr.mxu0 0.0
        %6117 = vmatpush2.xpose.msra.mxu0 0.0
        %6118 = vmatprep.subr.mxu0 0.0
        %6119 = vmatpush2.xpose.msra.mxu0 0.0
        %6120 = vmatprep.subr.mxu0 0.0
        %6121 = vmatpush2.xpose.msra.mxu0 0.0
        %6122 = vmatprep.mubr.f32.mxu0 0.0
        %6123 = vmatmul.mubr.f32.gmra.mxu0 %v6035
        %v6124 = vpop.f32.mrf.mxu0
        %v6125 = vadd.f32 0.0, %v6124
        %v6126 = vpop.f32.mrf.mxu0
        %6127 = vmatprep.mubr.f32.mxu0 0.0
        %6128 = vmatmul.mubr.f32.gmra.mxu0 %v6038
        %v6129 = vpop.f32.mrf.mxu0
        %v6130 = vadd.f32 0.0, %v6129
        %v6131 = vpop.f32.mrf.mxu0
        %6132 = vmatprep.mubr.f32.mxu0 0.0
        %6133 = vmatmul.mubr.f32.gmra.mxu0 %v6041
        %v6134 = vpop.f32.mrf.mxu0
        %v6135 = vadd.f32 0.0, %v6134
        %v6136 = vpop.f32.mrf.mxu0
        %6137 = vmatprep.mubr.f32.mxu0 0.0
        %6138 = vmatmul.mubr.f32.gmra.mxu0 %v6044
        %v6139 = vpop.f32.mrf.mxu0
        %v6140 = vadd.f32 0.0, %v6139
        %v6141 = vpop.f32.mrf.mxu0
        %6142 = vmatprep.mubr.f32.mxu0 0.0
        %6143 = vmatmul.mubr.f32.gmra.mxu0 %v6047
        %v6144 = vpop.f32.mrf.mxu0
        %v6145 = vadd.f32 0.0, %v6144
        %v6146 = vpop.f32.mrf.mxu0
        %6147 = vmatprep.mubr.f32.mxu0 0.0
        %6148 = vmatmul.mubr.f32.gmra.mxu0 %v6050
        %v6149 = vpop.f32.mrf.mxu0
        %v6150 = vadd.f32 0.0, %v6149
        %v6151 = vpop.f32.mrf.mxu0
        %6152 = vmatprep.mubr.f32.mxu0 0.0
        %6153 = vmatmul.mubr.f32.gmra.mxu0 %v6053
        %v6154 = vpop.f32.mrf.mxu0
        %v6155 = vadd.f32 0.0, %v6154
        %v6156 = vpop.f32.mrf.mxu0
        %6157 = vmatprep.mubr.f32.mxu0 0.0
        %6158 = vmatmul.mubr.f32.gmra.mxu0 %v6056
        %v6159 = vpop.f32.mrf.mxu0
        %v6160 = vadd.f32 0.0, %v6159
        %v6161 = vpop.f32.mrf.mxu0
        %6162 = vdwg.mxu0
        %v6163 = vmul.f32 %v6125, 0.35355338
        %v6164 = vmul.f32 %v6130, 0.35355338
        %v6165 = vmul.f32 %v6135, 0.35355338
        %v6166 = vmul.f32 %v6140, 0.35355338
        %v6167 = vmul.f32 %v6145, 0.35355338
        %v6168 = vmul.f32 %v6150, 0.35355338
        %v6169 = vmul.f32 %v6155, 0.35355338
        %v6170 = vmul.f32 %v6160, 0.35355338
        %v6171 = vsel %vm1942, %v6163, -inf
        %6172 = vmax.xlane.f32.xlu0 %v6171
        %v6173 = vpop.xlane.xlu0 %6172
        %v6174 = vsel %vm1942, %v6164, -inf
        %6175 = vmax.xlane.f32.xlu0 %v6174
        %v6176 = vpop.xlane.xlu0 %6175
        %v6177 = vsel %vm1942, %v6165, -inf
        %6178 = vmax.xlane.f32.xlu0 %v6177
        %v6179 = vpop.xlane.xlu0 %6178
        %v6180 = vsel %vm1942, %v6166, -inf
        %6181 = vmax.xlane.f32.xlu0 %v6180
        %v6182 = vpop.xlane.xlu0 %6181
        %v6183 = vsel %vm1942, %v6167, -inf
        %6184 = vmax.xlane.f32.xlu0 %v6183
        %v6185 = vpop.xlane.xlu0 %6184
        %v6186 = vsel %vm1942, %v6168, -inf
        %6187 = vmax.xlane.f32.xlu0 %v6186
        %v6188 = vpop.xlane.xlu0 %6187
        %v6189 = vsel %vm1942, %v6169, -inf
        %6190 = vmax.xlane.f32.xlu0 %v6189
        %v6191 = vpop.xlane.xlu0 %6190
        %v6192 = vsel %vm1942, %v6170, -inf
        %6193 = vmax.xlane.f32.xlu0 %v6192
        %v6194 = vpop.xlane.xlu0 %6193
        %v6195 = vsub.f32 %v6163, %v6173
        %v6196 = vsub.f32 %v6164, %v6176
        %v6197 = vsub.f32 %v6165, %v6179
        %v6198 = vsub.f32 %v6166, %v6182
        %v6199 = vsub.f32 %v6167, %v6185
        %v6200 = vsub.f32 %v6168, %v6188
        %v6201 = vsub.f32 %v6169, %v6191
        %v6202 = vsub.f32 %v6170, %v6194
        %v6203 = vmul.f32 %v6195, 1.442695
        %v6204 = vpow.pop %v6203
        %v6205 = vmul.f32 %v6196, 1.442695
        %v6206 = vpow.pop %v6205
        %v6207 = vmul.f32 %v6197, 1.442695
        %v6208 = vpow.pop %v6207
        %v6209 = vmul.f32 %v6198, 1.442695
        %v6210 = vpow.pop %v6209
        %v6211 = vmul.f32 %v6199, 1.442695
        %v6212 = vpow.pop %v6211
        %v6213 = vmul.f32 %v6200, 1.442695
        %v6214 = vpow.pop %v6213
        %v6215 = vmul.f32 %v6201, 1.442695
        %v6216 = vpow.pop %v6215
        %v6217 = vmul.f32 %v6202, 1.442695
        %v6218 = vpow.pop %v6217
        %v6219 = vsel %vm1942, %v6204, 0.0
        %6220 = vadd.xlane.f32.xlu0 %v6219
        %v6221 = vpop.xlane.xlu0 %6220
        %v6222 = vsel %vm1942, %v6206, 0.0
        %6223 = vadd.xlane.f32.xlu0 %v6222
        %v6224 = vpop.xlane.xlu0 %6223
        %v6225 = vsel %vm1942, %v6208, 0.0
        %6226 = vadd.xlane.f32.xlu0 %v6225
        %v6227 = vpop.xlane.xlu0 %6226
        %v6228 = vsel %vm1942, %v6210, 0.0
        %6229 = vadd.xlane.f32.xlu0 %v6228
        %v6230 = vpop.xlane.xlu0 %6229
        %v6231 = vsel %vm1942, %v6212, 0.0
        %6232 = vadd.xlane.f32.xlu0 %v6231
        %v6233 = vpop.xlane.xlu0 %6232
        %v6234 = vsel %vm1942, %v6214, 0.0
        %6235 = vadd.xlane.f32.xlu0 %v6234
        %v6236 = vpop.xlane.xlu0 %6235
        %v6237 = vsel %vm1942, %v6216, 0.0
        %6238 = vadd.xlane.f32.xlu0 %v6237
        %v6239 = vpop.xlane.xlu0 %6238
        %v6240 = vsel %vm1942, %v6218, 0.0
        %6241 = vadd.xlane.f32.xlu0 %v6240
        %v6242 = vpop.xlane.xlu0 %6241
        %v6243 = vrcp.pop %v6221
        %v6244 = vrcp.pop %v6224
        %v6245 = vrcp.pop %v6227
        %v6246 = vrcp.pop %v6230
        %v6247 = vrcp.pop %v6233
        %v6248 = vrcp.pop %v6236
        %v6249 = vrcp.pop %v6239
        %v6250 = vrcp.pop %v6242
        %v6251 = vmul.f32 %v6204, %v6243
        %v6252 = vmul.f32 %v6206, %v6244
        %v6253 = vmul.f32 %v6208, %v6245
        %v6254 = vmul.f32 %v6210, %v6246
        %v6255 = vmul.f32 %v6212, %v6247
        %v6256 = vmul.f32 %v6214, %v6248
        %v6257 = vmul.f32 %v6216, %v6249
        %v6258 = vmul.f32 %v6218, %v6250
        %s6259 = scalar_lea.vmem [#allocation8], 224
        %v6260 = vld [vmem:[%s6259] sm:$0xff]
        %v6261 = vld [vmem:[%s6259 + $0x8] sm:$0xff]
        %v6262 = vld [vmem:[%s6259 + $0x10] sm:$0xff]
        %v6263 = vld [vmem:[%s6259 + $0x18] sm:$0xff]
        %6264 = vmatprep.subr.mxu0 0.0
        %6265 = vmatpush1.msra.mxu0 0.0
        %6266 = vmatprep.subr.mxu0 0.0
        %6267 = vmatpush1.msra.mxu0 0.0
        %6268 = vmatprep.subr.mxu0 0.0
        %6269 = vmatpush1.msra.mxu0 0.0
        %6270 = vmatprep.subr.mxu0 0.0
        %6271 = vmatpush1.msra.mxu0 0.0
        %6272 = vmatprep.subr.mxu0 0.0
        %6273 = vmatpush1.msra.mxu0 0.0
        %6274 = vmatprep.subr.mxu0 0.0
        %6275 = vmatpush1.msra.mxu0 0.0
        %6276 = vmatprep.subr.mxu0 0.0
        %6277 = vmatpush1.msra.mxu0 0.0
        %6278 = vmatprep.subr.mxu0 0.0
        %6279 = vmatpush1.msra.mxu0 0.0
        %6280 = vmatprep.subr.mxu0 0.0
        %6281 = vmatpush1.msra.mxu0 0.0
        %6282 = vmatprep.subr.mxu0 0.0
        %6283 = vmatpush1.msra.mxu0 0.0
        %6284 = vmatprep.subr.mxu0 0.0
        %6285 = vmatpush1.msra.mxu0 0.0
        %6286 = vmatprep.subr.mxu0 0.0
        %6287 = vmatpush1.msra.mxu0 0.0
        %6288 = vmatprep.subr.mxu0 0.0
        %6289 = vmatpush1.msra.mxu0 %v6263
        %6290 = vmatprep.subr.mxu0 0.0
        %6291 = vmatpush1.msra.mxu0 %v6262
        %6292 = vmatprep.subr.mxu0 0.0
        %6293 = vmatpush1.msra.mxu0 %v6261
        %6294 = vmatprep.subr.mxu0 0.0
        %6295 = vmatpush1.msra.mxu0 %v6260
        %6296 = vmatprep.subr.mxu0 0.0
        %6297 = vmatpush2.msra.mxu0 0.0
        %6298 = vmatprep.subr.mxu0 0.0
        %6299 = vmatpush2.msra.mxu0 0.0
        %6300 = vmatprep.subr.mxu0 0.0
        %6301 = vmatpush2.msra.mxu0 0.0
        %6302 = vmatprep.subr.mxu0 0.0
        %6303 = vmatpush2.msra.mxu0 0.0
        %6304 = vmatprep.subr.mxu0 0.0
        %6305 = vmatpush2.msra.mxu0 0.0
        %6306 = vmatprep.subr.mxu0 0.0
        %6307 = vmatpush2.msra.mxu0 0.0
        %6308 = vmatprep.subr.mxu0 0.0
        %6309 = vmatpush2.msra.mxu0 0.0
        %6310 = vmatprep.subr.mxu0 0.0
        %6311 = vmatpush2.msra.mxu0 0.0
        %6312 = vmatprep.subr.mxu0 0.0
        %6313 = vmatpush2.msra.mxu0 0.0
        %6314 = vmatprep.subr.mxu0 0.0
        %6315 = vmatpush2.msra.mxu0 0.0
        %6316 = vmatprep.subr.mxu0 0.0
        %6317 = vmatpush2.msra.mxu0 0.0
        %6318 = vmatprep.subr.mxu0 0.0
        %6319 = vmatpush2.msra.mxu0 0.0
        %6320 = vmatprep.subr.mxu0 0.0
        %6321 = vmatpush2.msra.mxu0 0.0
        %6322 = vmatprep.subr.mxu0 0.0
        %6323 = vmatpush2.msra.mxu0 0.0
        %6324 = vmatprep.subr.mxu0 0.0
        %6325 = vmatpush2.msra.mxu0 0.0
        %6326 = vmatprep.subr.mxu0 0.0
        %6327 = vmatpush2.msra.mxu0 0.0
        %6328 = vmatprep.mubr.f32.mxu0 0.0
        %6329 = vmatmul.mubr.f32.gmra.mxu0 %v4336
        %v6330 = vpop.f32.mrf.mxu0
        %v6331 = vadd.f32 0.0, %v6330
        %v6332 = vpop.f32.mrf.mxu0
        %6333 = vmatprep.mubr.f32.mxu0 0.0
        %6334 = vmatmul.mubr.f32.gmra.mxu0 %v4339
        %v6335 = vpop.f32.mrf.mxu0
        %v6336 = vadd.f32 0.0, %v6335
        %v6337 = vpop.f32.mrf.mxu0
        %6338 = vmatprep.mubr.f32.mxu0 0.0
        %6339 = vmatmul.mubr.f32.gmra.mxu0 %v4342
        %v6340 = vpop.f32.mrf.mxu0
        %v6341 = vadd.f32 0.0, %v6340
        %v6342 = vpop.f32.mrf.mxu0
        %6343 = vmatprep.mubr.f32.mxu0 0.0
        %6344 = vmatmul.mubr.f32.gmra.mxu0 %v4345
        %v6345 = vpop.f32.mrf.mxu0
        %v6346 = vadd.f32 0.0, %v6345
        %v6347 = vpop.f32.mrf.mxu0
        %6348 = vmatprep.mubr.f32.mxu0 0.0
        %6349 = vmatmul.mubr.f32.gmra.mxu0 %v4348
        %v6350 = vpop.f32.mrf.mxu0
        %v6351 = vadd.f32 0.0, %v6350
        %v6352 = vpop.f32.mrf.mxu0
        %6353 = vmatprep.mubr.f32.mxu0 0.0
        %6354 = vmatmul.mubr.f32.gmra.mxu0 %v4351
        %v6355 = vpop.f32.mrf.mxu0
        %v6356 = vadd.f32 0.0, %v6355
        %v6357 = vpop.f32.mrf.mxu0
        %6358 = vmatprep.mubr.f32.mxu0 0.0
        %6359 = vmatmul.mubr.f32.gmra.mxu0 %v4354
        %v6360 = vpop.f32.mrf.mxu0
        %v6361 = vadd.f32 0.0, %v6360
        %v6362 = vpop.f32.mrf.mxu0
        %6363 = vmatprep.mubr.f32.mxu0 0.0
        %6364 = vmatmul.mubr.f32.gmra.mxu0 %v4357
        %v6365 = vpop.f32.mrf.mxu0
        %v6366 = vadd.f32 0.0, %v6365
        %v6367 = vpop.f32.mrf.mxu0
        %6368 = vdwg.mxu0
        %v6370 = vsel %vm1942, %v6251, 0
        %v6373 = vsel %vm1942, %v6252, 0
        %v6376 = vsel %vm1942, %v6253, 0
        %v6379 = vsel %vm1942, %v6254, 0
        %v6382 = vsel %vm1942, %v6255, 0
        %v6385 = vsel %vm1942, %v6256, 0
        %v6388 = vsel %vm1942, %v6257, 0
        %v6391 = vsel %vm1942, %v6258, 0
        %6393 = vmatprep.subr.mxu0 0.0
        %6394 = vmatpush1.msra.mxu0 0.0
        %6395 = vmatprep.subr.mxu0 0.0
        %6396 = vmatpush1.msra.mxu0 0.0
        %6397 = vmatprep.subr.mxu0 0.0
        %6398 = vmatpush1.msra.mxu0 0.0
        %6399 = vmatprep.subr.mxu0 0.0
        %6400 = vmatpush1.msra.mxu0 0.0
        %6401 = vmatprep.subr.mxu0 0.0
        %6402 = vmatpush1.msra.mxu0 0.0
        %6403 = vmatprep.subr.mxu0 0.0
        %6404 = vmatpush1.msra.mxu0 0.0
        %6405 = vmatprep.subr.mxu0 0.0
        %6406 = vmatpush1.msra.mxu0 0.0
        %6407 = vmatprep.subr.mxu0 0.0
        %6408 = vmatpush1.msra.mxu0 0.0
        %6409 = vmatprep.subr.mxu0 0.0
        %6410 = vmatpush1.msra.mxu0 %v6366
        %6411 = vmatprep.subr.mxu0 0.0
        %6412 = vmatpush1.msra.mxu0 %v6361
        %6413 = vmatprep.subr.mxu0 0.0
        %6414 = vmatpush1.msra.mxu0 %v6356
        %6415 = vmatprep.subr.mxu0 0.0
        %6416 = vmatpush1.msra.mxu0 %v6351
        %6417 = vmatprep.subr.mxu0 0.0
        %6418 = vmatpush1.msra.mxu0 %v6346
        %6419 = vmatprep.subr.mxu0 0.0
        %6420 = vmatpush1.msra.mxu0 %v6341
        %6421 = vmatprep.subr.mxu0 0.0
        %6422 = vmatpush1.msra.mxu0 %v6336
        %6423 = vmatprep.subr.mxu0 0.0
        %6424 = vmatpush1.msra.mxu0 %v6331
        %6425 = vmatprep.subr.mxu0 0.0
        %6426 = vmatpush2.msra.mxu0 0.0
        %6427 = vmatprep.subr.mxu0 0.0
        %6428 = vmatpush2.msra.mxu0 0.0
        %6429 = vmatprep.subr.mxu0 0.0
        %6430 = vmatpush2.msra.mxu0 0.0
        %6431 = vmatprep.subr.mxu0 0.0
        %6432 = vmatpush2.msra.mxu0 0.0
        %6433 = vmatprep.subr.mxu0 0.0
        %6434 = vmatpush2.msra.mxu0 0.0
        %6435 = vmatprep.subr.mxu0 0.0
        %6436 = vmatpush2.msra.mxu0 0.0
        %6437 = vmatprep.subr.mxu0 0.0
        %6438 = vmatpush2.msra.mxu0 0.0
        %6439 = vmatprep.subr.mxu0 0.0
        %6440 = vmatpush2.msra.mxu0 0.0
        %6441 = vmatprep.subr.mxu0 0.0
        %6442 = vmatpush2.msra.mxu0 0.0
        %6443 = vmatprep.subr.mxu0 0.0
        %6444 = vmatpush2.msra.mxu0 0.0
        %6445 = vmatprep.subr.mxu0 0.0
        %6446 = vmatpush2.msra.mxu0 0.0
        %6447 = vmatprep.subr.mxu0 0.0
        %6448 = vmatpush2.msra.mxu0 0.0
        %6449 = vmatprep.subr.mxu0 0.0
        %6450 = vmatpush2.msra.mxu0 0.0
        %6451 = vmatprep.subr.mxu0 0.0
        %6452 = vmatpush2.msra.mxu0 0.0
        %6453 = vmatprep.subr.mxu0 0.0
        %6454 = vmatpush2.msra.mxu0 0.0
        %6455 = vmatprep.subr.mxu0 0.0
        %6456 = vmatpush2.msra.mxu0 0.0
        %6457 = vmatprep.mubr.f32.mxu0 0.0
        %6458 = vmatmul.mubr.f32.gmra.mxu0 %v6370
        %v6459 = vpop.f32.mrf.mxu0
        %v6460 = vadd.f32 0.0, %v6459
        %v6461 = vpop.f32.mrf.mxu0
        %6462 = vmatprep.mubr.f32.mxu0 0.0
        %6463 = vmatmul.mubr.f32.gmra.mxu0 %v6373
        %v6464 = vpop.f32.mrf.mxu0
        %v6465 = vadd.f32 0.0, %v6464
        %v6466 = vpop.f32.mrf.mxu0
        %6467 = vmatprep.mubr.f32.mxu0 0.0
        %6468 = vmatmul.mubr.f32.gmra.mxu0 %v6376
        %v6469 = vpop.f32.mrf.mxu0
        %v6470 = vadd.f32 0.0, %v6469
        %v6471 = vpop.f32.mrf.mxu0
        %6472 = vmatprep.mubr.f32.mxu0 0.0
        %6473 = vmatmul.mubr.f32.gmra.mxu0 %v6379
        %v6474 = vpop.f32.mrf.mxu0
        %v6475 = vadd.f32 0.0, %v6474
        %v6476 = vpop.f32.mrf.mxu0
        %6477 = vmatprep.mubr.f32.mxu0 0.0
        %6478 = vmatmul.mubr.f32.gmra.mxu0 %v6382
        %v6479 = vpop.f32.mrf.mxu0
        %v6480 = vadd.f32 0.0, %v6479
        %v6481 = vpop.f32.mrf.mxu0
        %6482 = vmatprep.mubr.f32.mxu0 0.0
        %6483 = vmatmul.mubr.f32.gmra.mxu0 %v6385
        %v6484 = vpop.f32.mrf.mxu0
        %v6485 = vadd.f32 0.0, %v6484
        %v6486 = vpop.f32.mrf.mxu0
        %6487 = vmatprep.mubr.f32.mxu0 0.0
        %6488 = vmatmul.mubr.f32.gmra.mxu0 %v6388
        %v6489 = vpop.f32.mrf.mxu0
        %v6490 = vadd.f32 0.0, %v6489
        %v6491 = vpop.f32.mrf.mxu0
        %6492 = vmatprep.mubr.f32.mxu0 0.0
        %6493 = vmatmul.mubr.f32.gmra.mxu0 %v6391
        %v6494 = vpop.f32.mrf.mxu0
        %v6495 = vadd.f32 0.0, %v6494
        %v6496 = vpop.f32.mrf.mxu0
        %6497 = vdwg.mxu0
        %v6498 = vadd.f32 %v6018, %v6460
        %v6499 = vadd.f32 %v6019, %v6465
        %v6500 = vadd.f32 %v6020, %v6470
        %v6501 = vadd.f32 %v6021, %v6475
        %v6502 = vadd.f32 %v6022, %v6480
        %v6503 = vadd.f32 %v6023, %v6485
        %v6504 = vadd.f32 %v6024, %v6490
        %v6505 = vadd.f32 %v6025, %v6495
        %v6506 = vadd.f32 %v4190, %v6498
        %v6507 = vadd.f32 %v4191, %v6499
        %v6508 = vadd.f32 %v4192, %v6500
        %v6509 = vadd.f32 %v4193, %v6501
        %v6510 = vadd.f32 %v4194, %v6502
        %v6511 = vadd.f32 %v4195, %v6503
        %v6512 = vadd.f32 %v4196, %v6504
        %v6513 = vadd.f32 %v4197, %v6505
        %v6514 = vlaneseq
        %v6515 = vshrl.u32 %v6514, 7
        %v6516 = vsub.s32 2, %v6515
        %v6517 = vrot.slane %v456, %v6516
        %v6518 = vadd.f32 %v6506, %v6517
        %v6519 = vadd.f32 %v6507, %v6517
        %v6520 = vadd.f32 %v6508, %v6517
        %v6521 = vadd.f32 %v6509, %v6517
        %v6522 = vadd.f32 %v6510, %v6517
        %v6523 = vadd.f32 %v6511, %v6517
        %v6524 = vadd.f32 %v6512, %v6517
        %v6525 = vadd.f32 %v6513, %v6517
        %v6526 = vsel %vm1193, %v6518, 0.0
        %6527 = vadd.xlane.f32.xlu0 %v6526
        %v6528 = vpop.xlane.xlu0 %6527
        %v6529 = vsel %vm1193, %v6519, 0.0
        %6530 = vadd.xlane.f32.xlu0 %v6529
        %v6531 = vpop.xlane.xlu0 %6530
        %v6532 = vsel %vm1193, %v6520, 0.0
        %6533 = vadd.xlane.f32.xlu0 %v6532
        %v6534 = vpop.xlane.xlu0 %6533
        %v6535 = vsel %vm1193, %v6521, 0.0
        %6536 = vadd.xlane.f32.xlu0 %v6535
        %v6537 = vpop.xlane.xlu0 %6536
        %v6538 = vsel %vm1193, %v6522, 0.0
        %6539 = vadd.xlane.f32.xlu0 %v6538
        %v6540 = vpop.xlane.xlu0 %6539
        %v6541 = vsel %vm1193, %v6523, 0.0
        %6542 = vadd.xlane.f32.xlu0 %v6541
        %v6543 = vpop.xlane.xlu0 %6542
        %v6544 = vsel %vm1193, %v6524, 0.0
        %6545 = vadd.xlane.f32.xlu0 %v6544
        %v6546 = vpop.xlane.xlu0 %6545
        %v6547 = vsel %vm1193, %v6525, 0.0
        %6548 = vadd.xlane.f32.xlu0 %v6547
        %v6549 = vpop.xlane.xlu0 %6548
        %v6550 = vmul.f32 %v6528, %v1413
        %v6551 = vmul.f32 %v6531, %v1413
        %v6552 = vmul.f32 %v6534, %v1413
        %v6553 = vmul.f32 %v6537, %v1413
        %v6554 = vmul.f32 %v6540, %v1413
        %v6555 = vmul.f32 %v6543, %v1413
        %v6556 = vmul.f32 %v6546, %v1413
        %v6557 = vmul.f32 %v6549, %v1413
        %v6558 = vsub.f32 %v6518, %v6550
        %v6559 = vsub.f32 %v6519, %v6551
        %v6560 = vsub.f32 %v6520, %v6552
        %v6561 = vsub.f32 %v6521, %v6553
        %v6562 = vsub.f32 %v6522, %v6554
        %v6563 = vsub.f32 %v6523, %v6555
        %v6564 = vsub.f32 %v6524, %v6556
        %v6565 = vsub.f32 %v6525, %v6557
        %v6566 = vmul.f32 %v6558, %v6558
        %v6567 = vmul.f32 %v6559, %v6559
        %v6568 = vmul.f32 %v6560, %v6560
        %v6569 = vmul.f32 %v6561, %v6561
        %v6570 = vmul.f32 %v6562, %v6562
        %v6571 = vmul.f32 %v6563, %v6563
        %v6572 = vmul.f32 %v6564, %v6564
        %v6573 = vmul.f32 %v6565, %v6565
        %v6574 = vsel %vm1193, %v6566, 0.0
        %6575 = vadd.xlane.f32.xlu0 %v6574
        %v6576 = vpop.xlane.xlu0 %6575
        %v6577 = vsel %vm1193, %v6567, 0.0
        %6578 = vadd.xlane.f32.xlu0 %v6577
        %v6579 = vpop.xlane.xlu0 %6578
        %v6580 = vsel %vm1193, %v6568, 0.0
        %6581 = vadd.xlane.f32.xlu0 %v6580
        %v6582 = vpop.xlane.xlu0 %6581
        %v6583 = vsel %vm1193, %v6569, 0.0
        %6584 = vadd.xlane.f32.xlu0 %v6583
        %v6585 = vpop.xlane.xlu0 %6584
        %v6586 = vsel %vm1193, %v6570, 0.0
        %6587 = vadd.xlane.f32.xlu0 %v6586
        %v6588 = vpop.xlane.xlu0 %6587
        %v6589 = vsel %vm1193, %v6571, 0.0
        %6590 = vadd.xlane.f32.xlu0 %v6589
        %v6591 = vpop.xlane.xlu0 %6590
        %v6592 = vsel %vm1193, %v6572, 0.0
        %6593 = vadd.xlane.f32.xlu0 %v6592
        %v6594 = vpop.xlane.xlu0 %6593
        %v6595 = vsel %vm1193, %v6573, 0.0
        %6596 = vadd.xlane.f32.xlu0 %v6595
        %v6597 = vpop.xlane.xlu0 %6596
        %v6598 = vmul.f32 %v6576, %v1413
        %v6599 = vmul.f32 %v6579, %v1413
        %v6600 = vmul.f32 %v6582, %v1413
        %v6601 = vmul.f32 %v6585, %v1413
        %v6602 = vmul.f32 %v6588, %v1413
        %v6603 = vmul.f32 %v6591, %v1413
        %v6604 = vmul.f32 %v6594, %v1413
        %v6605 = vmul.f32 %v6597, %v1413
        %v6606 = vadd.f32 %v6598, 1e-05
        %v6607 = vadd.f32 %v6599, 1e-05
        %v6608 = vadd.f32 %v6600, 1e-05
        %v6609 = vadd.f32 %v6601, 1e-05
        %v6610 = vadd.f32 %v6602, 1e-05
        %v6611 = vadd.f32 %v6603, 1e-05
        %v6612 = vadd.f32 %v6604, 1e-05
        %v6613 = vadd.f32 %v6605, 1e-05
        %v6614 = vrsqrt.pop %v6606
        %v6615 = vrsqrt.pop %v6607
        %v6616 = vrsqrt.pop %v6608
        %v6617 = vrsqrt.pop %v6609
        %v6618 = vrsqrt.pop %v6610
        %v6619 = vrsqrt.pop %v6611
        %v6620 = vrsqrt.pop %v6612
        %v6621 = vrsqrt.pop %v6613
        %v6622 = vmul.f32 %v6558, %v6614
        %v6623 = vmul.f32 %v6559, %v6615
        %v6624 = vmul.f32 %v6560, %v6616
        %v6625 = vmul.f32 %v6561, %v6617
        %v6626 = vmul.f32 %v6562, %v6618
        %v6627 = vmul.f32 %v6563, %v6619
        %v6628 = vmul.f32 %v6564, %v6620
        %v6629 = vmul.f32 %v6565, %v6621
        %v6630 = vlaneseq
        %v6631 = vshrl.u32 %v6630, 7
        %v6632 = vsub.s32 3, %v6631
        %v6633 = vrot.slane %v456, %v6632
        %v6634 = vmul.f32 %v6622, %v6633
        %v6635 = vmul.f32 %v6623, %v6633
        %v6636 = vmul.f32 %v6624, %v6633
        %v6637 = vmul.f32 %v6625, %v6633
        %v6638 = vmul.f32 %v6626, %v6633
        %v6639 = vmul.f32 %v6627, %v6633
        %v6640 = vmul.f32 %v6628, %v6633
        %v6641 = vmul.f32 %v6629, %v6633
        %v6642 = vlaneseq
        %v6643 = vshrl.u32 %v6642, 7
        %v6644 = vsub.s32 4, %v6643
        %v6645 = vrot.slane %v456, %v6644
        %v6646 = vadd.f32 %v6634, %v6645
        %v6647 = vadd.f32 %v6635, %v6645
        %v6648 = vadd.f32 %v6636, %v6645
        %v6649 = vadd.f32 %v6637, %v6645
        %v6650 = vadd.f32 %v6638, %v6645
        %v6651 = vadd.f32 %v6639, %v6645
        %v6652 = vadd.f32 %v6640, %v6645
        %v6653 = vadd.f32 %v6641, %v6645
        %s6654 = scalar_lea.vmem [#allocation10], 32
        %v6655 = vld [vmem:[%s6654] sm:$0xff]
        %v6656 = vld [vmem:[%s6654 + $0x8] sm:$0xff]
        %v6657 = vld [vmem:[%s6654 + $0x10] sm:$0xff]
        %v6658 = vld [vmem:[%s6654 + $0x18] sm:$0xff]
        %v6659 = vlaneseq
        %v6660 = vshrl.u32 %v6659, 7
        %v6661 = vsub.s32 1, %v6660
        %v6662 = vrot.slane %v459, %v6661
        %v6664 = vsel %vm1193, %v6646, 0
        %v6667 = vsel %vm1193, %v6647, 0
        %v6670 = vsel %vm1193, %v6648, 0
        %v6673 = vsel %vm1193, %v6649, 0
        %v6676 = vsel %vm1193, %v6650, 0
        %v6679 = vsel %vm1193, %v6651, 0
        %v6682 = vsel %vm1193, %v6652, 0
        %v6685 = vsel %vm1193, %v6653, 0
        %6687 = vmatprep.subr.mxu0 0.0
        %6688 = vmatpush1.msra.mxu0 0.0
        %6689 = vmatprep.subr.mxu0 0.0
        %6690 = vmatpush1.msra.mxu0 0.0
        %6691 = vmatprep.subr.mxu0 0.0
        %6692 = vmatpush1.msra.mxu0 0.0
        %6693 = vmatprep.subr.mxu0 0.0
        %6694 = vmatpush1.msra.mxu0 0.0
        %6695 = vmatprep.subr.mxu0 0.0
        %6696 = vmatpush1.msra.mxu0 0.0
        %6697 = vmatprep.subr.mxu0 0.0
        %6698 = vmatpush1.msra.mxu0 0.0
        %6699 = vmatprep.subr.mxu0 0.0
        %6700 = vmatpush1.msra.mxu0 0.0
        %6701 = vmatprep.subr.mxu0 0.0
        %6702 = vmatpush1.msra.mxu0 0.0
        %6703 = vmatprep.subr.mxu0 0.0
        %6704 = vmatpush1.msra.mxu0 0.0
        %6705 = vmatprep.subr.mxu0 0.0
        %6706 = vmatpush1.msra.mxu0 0.0
        %6707 = vmatprep.subr.mxu0 0.0
        %6708 = vmatpush1.msra.mxu0 0.0
        %6709 = vmatprep.subr.mxu0 0.0
        %6710 = vmatpush1.msra.mxu0 0.0
        %6711 = vmatprep.subr.mxu0 0.0
        %6712 = vmatpush1.msra.mxu0 %v6658
        %6713 = vmatprep.subr.mxu0 0.0
        %6714 = vmatpush1.msra.mxu0 %v6657
        %6715 = vmatprep.subr.mxu0 0.0
        %6716 = vmatpush1.msra.mxu0 %v6656
        %6717 = vmatprep.subr.mxu0 0.0
        %6718 = vmatpush1.msra.mxu0 %v6655
        %6719 = vmatprep.subr.mxu0 0.0
        %6720 = vmatpush2.msra.mxu0 0.0
        %6721 = vmatprep.subr.mxu0 0.0
        %6722 = vmatpush2.msra.mxu0 0.0
        %6723 = vmatprep.subr.mxu0 0.0
        %6724 = vmatpush2.msra.mxu0 0.0
        %6725 = vmatprep.subr.mxu0 0.0
        %6726 = vmatpush2.msra.mxu0 0.0
        %6727 = vmatprep.subr.mxu0 0.0
        %6728 = vmatpush2.msra.mxu0 0.0
        %6729 = vmatprep.subr.mxu0 0.0
        %6730 = vmatpush2.msra.mxu0 0.0
        %6731 = vmatprep.subr.mxu0 0.0
        %6732 = vmatpush2.msra.mxu0 0.0
        %6733 = vmatprep.subr.mxu0 0.0
        %6734 = vmatpush2.msra.mxu0 0.0
        %6735 = vmatprep.subr.mxu0 0.0
        %6736 = vmatpush2.msra.mxu0 0.0
        %6737 = vmatprep.subr.mxu0 0.0
        %6738 = vmatpush2.msra.mxu0 0.0
        %6739 = vmatprep.subr.mxu0 0.0
        %6740 = vmatpush2.msra.mxu0 0.0
        %6741 = vmatprep.subr.mxu0 0.0
        %6742 = vmatpush2.msra.mxu0 0.0
        %6743 = vmatprep.subr.mxu0 0.0
        %6744 = vmatpush2.msra.mxu0 0.0
        %6745 = vmatprep.subr.mxu0 0.0
        %6746 = vmatpush2.msra.mxu0 0.0
        %6747 = vmatprep.subr.mxu0 0.0
        %6748 = vmatpush2.msra.mxu0 0.0
        %6749 = vmatprep.subr.mxu0 0.0
        %6750 = vmatpush2.msra.mxu0 0.0
        %6751 = vmatprep.mubr.f32.mxu0 0.0
        %6752 = vmatmul.mubr.f32.gmra.mxu0 %v6664
        %v6753 = vpop.f32.mrf.mxu0
        %v6754 = vadd.f32 %v6662, %v6753
        %v6755 = vpop.f32.mrf.mxu0
        %6756 = vmatprep.mubr.f32.mxu0 0.0
        %6757 = vmatmul.mubr.f32.gmra.mxu0 %v6667
        %v6758 = vpop.f32.mrf.mxu0
        %v6759 = vadd.f32 %v6662, %v6758
        %v6760 = vpop.f32.mrf.mxu0
        %6761 = vmatprep.mubr.f32.mxu0 0.0
        %6762 = vmatmul.mubr.f32.gmra.mxu0 %v6670
        %v6763 = vpop.f32.mrf.mxu0
        %v6764 = vadd.f32 %v6662, %v6763
        %v6765 = vpop.f32.mrf.mxu0
        %6766 = vmatprep.mubr.f32.mxu0 0.0
        %6767 = vmatmul.mubr.f32.gmra.mxu0 %v6673
        %v6768 = vpop.f32.mrf.mxu0
        %v6769 = vadd.f32 %v6662, %v6768
        %v6770 = vpop.f32.mrf.mxu0
        %6771 = vmatprep.mubr.f32.mxu0 0.0
        %6772 = vmatmul.mubr.f32.gmra.mxu0 %v6676
        %v6773 = vpop.f32.mrf.mxu0
        %v6774 = vadd.f32 %v6662, %v6773
        %v6775 = vpop.f32.mrf.mxu0
        %6776 = vmatprep.mubr.f32.mxu0 0.0
        %6777 = vmatmul.mubr.f32.gmra.mxu0 %v6679
        %v6778 = vpop.f32.mrf.mxu0
        %v6779 = vadd.f32 %v6662, %v6778
        %v6780 = vpop.f32.mrf.mxu0
        %6781 = vmatprep.mubr.f32.mxu0 0.0
        %6782 = vmatmul.mubr.f32.gmra.mxu0 %v6682
        %v6783 = vpop.f32.mrf.mxu0
        %v6784 = vadd.f32 %v6662, %v6783
        %v6785 = vpop.f32.mrf.mxu0
        %6786 = vmatprep.mubr.f32.mxu0 0.0
        %6787 = vmatmul.mubr.f32.gmra.mxu0 %v6685
        %v6788 = vpop.f32.mrf.mxu0
        %v6789 = vadd.f32 %v6662, %v6788
        %v6790 = vpop.f32.mrf.mxu0
        %6791 = vdwg.mxu0
        %v6792 = vmul.f32 %v6754, 0.5
        %v6793 = vmul.f32 %v6759, 0.5
        %v6794 = vmul.f32 %v6764, 0.5
        %v6795 = vmul.f32 %v6769, 0.5
        %v6796 = vmul.f32 %v6774, 0.5
        %v6797 = vmul.f32 %v6779, 0.5
        %v6798 = vmul.f32 %v6784, 0.5
        %v6799 = vmul.f32 %v6789, 0.5
        %v6800 = vmul.f32 %v6754, 0.70710677
        %v6801 = vmul.f32 %v6759, 0.70710677
        %v6802 = vmul.f32 %v6764, 0.70710677
        %v6803 = vmul.f32 %v6769, 0.70710677
        %v6804 = vmul.f32 %v6774, 0.70710677
        %v6805 = vmul.f32 %v6779, 0.70710677
        %v6806 = vmul.f32 %v6784, 0.70710677
        %v6807 = vmul.f32 %v6789, 0.70710677
        %v6808 = verf.f32.pop %v6800
        %v6809 = verf.f32.pop %v6801
        %v6810 = verf.f32.pop %v6802
        %v6811 = verf.f32.pop %v6803
        %v6812 = verf.f32.pop %v6804
        %v6813 = verf.f32.pop %v6805
        %v6814 = verf.f32.pop %v6806
        %v6815 = verf.f32.pop %v6807
        %v6816 = vadd.f32 %v6808, 1.0
        %v6817 = vadd.f32 %v6809, 1.0
        %v6818 = vadd.f32 %v6810, 1.0
        %v6819 = vadd.f32 %v6811, 1.0
        %v6820 = vadd.f32 %v6812, 1.0
        %v6821 = vadd.f32 %v6813, 1.0
        %v6822 = vadd.f32 %v6814, 1.0
        %v6823 = vadd.f32 %v6815, 1.0
        %v6824 = vmul.f32 %v6792, %v6816
        %v6825 = vmul.f32 %v6793, %v6817
        %v6826 = vmul.f32 %v6794, %v6818
        %v6827 = vmul.f32 %v6795, %v6819
        %v6828 = vmul.f32 %v6796, %v6820
        %v6829 = vmul.f32 %v6797, %v6821
        %v6830 = vmul.f32 %v6798, %v6822
        %v6831 = vmul.f32 %v6799, %v6823
        %s6832 = scalar_lea.vmem %s7, 64
        %v6833 = vld [vmem:[%s6832] sm:$0xff]
        %v6834 = vld [vmem:[%s6832 + $0x8] sm:$0xff]
        %v6835 = vld [vmem:[%s6832 + $0x10] sm:$0xff]
        %v6836 = vld [vmem:[%s6832 + $0x18] sm:$0xff]
        %v6837 = vld [vmem:[%s6832 + $0x20] sm:$0xff]
        %v6838 = vld [vmem:[%s6832 + $0x28] sm:$0xff]
        %v6839 = vld [vmem:[%s6832 + $0x30] sm:$0xff]
        %v6840 = vld [vmem:[%s6832 + $0x38] sm:$0xff]
        %v6842 = vsel %vm1942, %v6824, 0
        %v6845 = vsel %vm1942, %v6825, 0
        %v6848 = vsel %vm1942, %v6826, 0
        %v6851 = vsel %vm1942, %v6827, 0
        %v6854 = vsel %vm1942, %v6828, 0
        %v6857 = vsel %vm1942, %v6829, 0
        %v6860 = vsel %vm1942, %v6830, 0
        %v6863 = vsel %vm1942, %v6831, 0
        %6865 = vmatprep.subr.mxu0 0.0
        %6866 = vmatpush1.msra.mxu0 0.0
        %6867 = vmatprep.subr.mxu0 0.0
        %6868 = vmatpush1.msra.mxu0 0.0
        %6869 = vmatprep.subr.mxu0 0.0
        %6870 = vmatpush1.msra.mxu0 0.0
        %6871 = vmatprep.subr.mxu0 0.0
        %6872 = vmatpush1.msra.mxu0 0.0
        %6873 = vmatprep.subr.mxu0 0.0
        %6874 = vmatpush1.msra.mxu0 0.0
        %6875 = vmatprep.subr.mxu0 0.0
        %6876 = vmatpush1.msra.mxu0 0.0
        %6877 = vmatprep.subr.mxu0 0.0
        %6878 = vmatpush1.msra.mxu0 0.0
        %6879 = vmatprep.subr.mxu0 0.0
        %6880 = vmatpush1.msra.mxu0 0.0
        %6881 = vmatprep.subr.mxu0 0.0
        %6882 = vmatpush1.msra.mxu0 %v6840
        %6883 = vmatprep.subr.mxu0 0.0
        %6884 = vmatpush1.msra.mxu0 %v6839
        %6885 = vmatprep.subr.mxu0 0.0
        %6886 = vmatpush1.msra.mxu0 %v6838
        %6887 = vmatprep.subr.mxu0 0.0
        %6888 = vmatpush1.msra.mxu0 %v6837
        %6889 = vmatprep.subr.mxu0 0.0
        %6890 = vmatpush1.msra.mxu0 %v6836
        %6891 = vmatprep.subr.mxu0 0.0
        %6892 = vmatpush1.msra.mxu0 %v6835
        %6893 = vmatprep.subr.mxu0 0.0
        %6894 = vmatpush1.msra.mxu0 %v6834
        %6895 = vmatprep.subr.mxu0 0.0
        %6896 = vmatpush1.msra.mxu0 %v6833
        %6897 = vmatprep.subr.mxu0 0.0
        %6898 = vmatpush2.msra.mxu0 0.0
        %6899 = vmatprep.subr.mxu0 0.0
        %6900 = vmatpush2.msra.mxu0 0.0
        %6901 = vmatprep.subr.mxu0 0.0
        %6902 = vmatpush2.msra.mxu0 0.0
        %6903 = vmatprep.subr.mxu0 0.0
        %6904 = vmatpush2.msra.mxu0 0.0
        %6905 = vmatprep.subr.mxu0 0.0
        %6906 = vmatpush2.msra.mxu0 0.0
        %6907 = vmatprep.subr.mxu0 0.0
        %6908 = vmatpush2.msra.mxu0 0.0
        %6909 = vmatprep.subr.mxu0 0.0
        %6910 = vmatpush2.msra.mxu0 0.0
        %6911 = vmatprep.subr.mxu0 0.0
        %6912 = vmatpush2.msra.mxu0 0.0
        %6913 = vmatprep.subr.mxu0 0.0
        %6914 = vmatpush2.msra.mxu0 0.0
        %6915 = vmatprep.subr.mxu0 0.0
        %6916 = vmatpush2.msra.mxu0 0.0
        %6917 = vmatprep.subr.mxu0 0.0
        %6918 = vmatpush2.msra.mxu0 0.0
        %6919 = vmatprep.subr.mxu0 0.0
        %6920 = vmatpush2.msra.mxu0 0.0
        %6921 = vmatprep.subr.mxu0 0.0
        %6922 = vmatpush2.msra.mxu0 0.0
        %6923 = vmatprep.subr.mxu0 0.0
        %6924 = vmatpush2.msra.mxu0 0.0
        %6925 = vmatprep.subr.mxu0 0.0
        %6926 = vmatpush2.msra.mxu0 0.0
        %6927 = vmatprep.subr.mxu0 0.0
        %6928 = vmatpush2.msra.mxu0 0.0
        %6929 = vmatprep.mubr.f32.mxu0 0.0
        %6930 = vmatmul.mubr.f32.gmra.mxu0 %v6842
        %v6931 = vpop.f32.mrf.mxu0
        %v6932 = vadd.f32 0.0, %v6931
        %v6933 = vpop.f32.mrf.mxu0
        %6934 = vmatprep.mubr.f32.mxu0 0.0
        %6935 = vmatmul.mubr.f32.gmra.mxu0 %v6845
        %v6936 = vpop.f32.mrf.mxu0
        %v6937 = vadd.f32 0.0, %v6936
        %v6938 = vpop.f32.mrf.mxu0
        %6939 = vmatprep.mubr.f32.mxu0 0.0
        %6940 = vmatmul.mubr.f32.gmra.mxu0 %v6848
        %v6941 = vpop.f32.mrf.mxu0
        %v6942 = vadd.f32 0.0, %v6941
        %v6943 = vpop.f32.mrf.mxu0
        %6944 = vmatprep.mubr.f32.mxu0 0.0
        %6945 = vmatmul.mubr.f32.gmra.mxu0 %v6851
        %v6946 = vpop.f32.mrf.mxu0
        %v6947 = vadd.f32 0.0, %v6946
        %v6948 = vpop.f32.mrf.mxu0
        %6949 = vmatprep.mubr.f32.mxu0 0.0
        %6950 = vmatmul.mubr.f32.gmra.mxu0 %v6854
        %v6951 = vpop.f32.mrf.mxu0
        %v6952 = vadd.f32 0.0, %v6951
        %v6953 = vpop.f32.mrf.mxu0
        %6954 = vmatprep.mubr.f32.mxu0 0.0
        %6955 = vmatmul.mubr.f32.gmra.mxu0 %v6857
        %v6956 = vpop.f32.mrf.mxu0
        %v6957 = vadd.f32 0.0, %v6956
        %v6958 = vpop.f32.mrf.mxu0
        %6959 = vmatprep.mubr.f32.mxu0 0.0
        %6960 = vmatmul.mubr.f32.gmra.mxu0 %v6860
        %v6961 = vpop.f32.mrf.mxu0
        %v6962 = vadd.f32 0.0, %v6961
        %v6963 = vpop.f32.mrf.mxu0
        %6964 = vmatprep.mubr.f32.mxu0 0.0
        %6965 = vmatmul.mubr.f32.gmra.mxu0 %v6863
        %v6966 = vpop.f32.mrf.mxu0
        %v6967 = vadd.f32 0.0, %v6966
        %v6968 = vpop.f32.mrf.mxu0
        %6969 = vdwg.mxu0
        %v6970 = vadd.f32 %v6518, %v6932
        %v6971 = vadd.f32 %v6519, %v6937
        %v6972 = vadd.f32 %v6520, %v6942
        %v6973 = vadd.f32 %v6521, %v6947
        %v6974 = vadd.f32 %v6522, %v6952
        %v6975 = vadd.f32 %v6523, %v6957
        %v6976 = vadd.f32 %v6524, %v6962
        %v6977 = vadd.f32 %v6525, %v6967
        %v6978 = vlaneseq
        %v6979 = vshrl.u32 %v6978, 7
        %v6980 = vsub.s32 5, %v6979
        %v6981 = vrot.slane %v456, %v6980
        %v6982 = vadd.f32 %v6970, %v6981
        %v6983 = vadd.f32 %v6971, %v6981
        %v6984 = vadd.f32 %v6972, %v6981
        %v6985 = vadd.f32 %v6973, %v6981
        %v6986 = vadd.f32 %v6974, %v6981
        %v6987 = vadd.f32 %v6975, %v6981
        %v6988 = vadd.f32 %v6976, %v6981
        %v6989 = vadd.f32 %v6977, %v6981
        %v6990 = vadd.f32 %v1379, %v6982
        %v6991 = vadd.f32 %v1380, %v6983
        %v6992 = vadd.f32 %v1381, %v6984
        %v6993 = vadd.f32 %v1382, %v6985
        %v6994 = vadd.f32 %v1383, %v6986
        %v6995 = vadd.f32 %v1384, %v6987
        %v6996 = vadd.f32 %v1385, %v6988
        %v6997 = vadd.f32 %v1386, %v6989
        %6998 = vst.msk [vmem:[%s440] sm:$0xff] %vm1193, %v6990
        %6999 = vst.msk [vmem:[%s440 + $0x8] sm:$0xff] %vm1193, %v6991
        %7000 = vst.msk [vmem:[%s440 + $0x10] sm:$0xff] %vm1193, %v6992
        %7001 = vst.msk [vmem:[%s440 + $0x18] sm:$0xff] %vm1193, %v6993
        %7002 = vst.msk [vmem:[%s440 + $0x20] sm:$0xff] %vm1193, %v6994
        %7003 = vst.msk [vmem:[%s440 + $0x28] sm:$0xff] %vm1193, %v6995
        %7004 = vst.msk [vmem:[%s440 + $0x30] sm:$0xff] %vm1193, %v6996
        %7005 = vst.msk [vmem:[%s440 + $0x38] sm:$0xff] %vm1193, %v6997
        %s7006 = sand.u32 %s251, 1
        %s7007 = scalar_lea.sflag [#allocation4], %s7006
        %s7008 = sand.u32 %s251, 1
        %s7009 = smul.addr %s7008, 64
        %s7010 = scalar_lea.vmem [#allocation13], %s7009
        // Predicated region
        $region85: #{mobilevit_block.1} parent=59 // pred_check
          %p7011 = pneg %p261
        $region86: #{mobilevit_block.1} parent=59 // pred_check_branch
          %7013 = sbr.rel (%p7011) target = $region88
        $region87: #{mobilevit_block.1} parent=59 // pred_region
          %s7015 = ssub.s32 1024, 1024
          %7016 = vsyncadd %s7007, %s7015
          %s7017 = smul.addr %s28, 8
          %s7018 = smul.addr %s7017, 128
          %s7019 = scalar_lea.hbm %s10, %s7018
          %s7020 = sshll.u32 %s7010, 4
          %s7021 = int_to_ptr.vmem [resolvable:$true] %s7020
          %7026 = dma.vmem_to_hbm [thread:$0]  %s7021, 1024, %s7019, %s7007, 128, 128, 8
        $region88: #{mobilevit_block.1} parent=59 // pred_fallthru
          _
      $region60: #{mobilevit_block.1} parent=5 // pred_fallthru
        _
      %p7027 = scmp.le.s32.totalorder 2, %s23
      // Predicated region
      $region89: #{mobilevit_block.1} parent=5 // pred_check
        %p7028 = pneg %p7027
      $region90: #{mobilevit_block.1} parent=5 // pred_check_branch
        %7030 = sbr.rel (%p7028) target = $region92
      $region91: #{mobilevit_block.1} parent=5 // pred_region
        %s7031 = ssub.s32 %s23, 2
        // Predicated region
        $region93: #{mobilevit_block.1} parent=91 // pred_check
          %p7032 = pneg %p267
        $region94: #{mobilevit_block.1} parent=91 // pred_check_branch
          %7034 = sbr.rel (%p7032) target = $region96
        $region95: #{mobilevit_block.1} parent=91 // pred_region
          %s7035 = sand.u32 %s252, 1
          %s7036 = scalar_lea.sflag [#allocation4], %s7035
          %s7037 = sand.u32 %s252, 1
          %s7038 = smul.addr %s7037, 64
          %s7039 = scalar_lea.vmem [#allocation13], %s7038
          %7040 = dma.done %s7036, 1024
        $region96: #{mobilevit_block.1} parent=91 // pred_fallthru
          _
      $region92: #{mobilevit_block.1} parent=5 // pred_fallthru
        _
    $region6: #{mobilevit_block.1} parent=1 // loop_footer
      %s27 = sadd.s32 1, %s23
    $region7: #{mobilevit_block.1} parent=1 // loop_footer_branch
      %22 = sbr.rel target = $region3
    $region8: #{mobilevit_block.1} parent=1 // loop_exit
      _
    %7041 = vsyncpa [#allocation3], 1
    %s7042 = scalar_lea.sflag [#allocation3], 1
    %7043 = vsyncpa %s7042, 1
    %7044 = vsyncpa [#allocation6], 1
    %7045 = vsyncpa [#allocation9], 1
    %7046 = vsyncpa [#allocation12], 1
    %7047 = vsyncpa [#allocation4], 1
    %s7048 = scalar_lea.sflag [#allocation4], 1
    %7049 = vsyncpa %s7048, 1

</llo_original>
